<compile_context>
chip_gen: v5e
topology: v5e:2x2
jax: 0.10.0
libtpu: 0.0.40
codegen_flags: <defaults>
</compile_context>

<pallas_src>
import functools

import jax
import jax.numpy as jnp
from jax.experimental import pallas as pl
from jax.experimental.pallas import tpu as pltpu

LANE = 128


def _round_up(x, m):
    return (x + m - 1) // m * m


def _mlp_kernel(x_ref,
                w1_ref, b1_ref,
                w2_ref, b2_ref,
                w3_ref, b3_ref,
                w4_ref, b4_ref,
                w5_ref, b5_ref,
                o_ref):
    """Fused 5x (bf16 matmul + f32 bias + ReLU) on one batch tile."""
    layers = ((w1_ref, b1_ref), (w2_ref, b2_ref), (w3_ref, b3_ref),
              (w4_ref, b4_ref), (w5_ref, b5_ref))
    h = x_ref[...].astype(jnp.float32)
    for w_ref, b_ref in layers:   # unrolled at trace time (5 layers)
        a = h.astype(jnp.bfloat16)                       # bf16 into the MXU
        h = jnp.dot(a, w_ref[...], preferred_element_type=jnp.float32)
        h = jnp.maximum(h + b_ref[...], 0.0)             # bias + ReLU in f32
        # dropout(0.2) after layers 1 and 3 -> identity at inference
    o_ref[...] = h.astype(o_ref.dtype)


@functools.partial(jax.jit, static_argnames=("block_m", "single_buffer_weights"))
def _path_decoder_medium_impl(x, params, block_m, single_buffer_weights):
    B, d_in = x.shape
    d_out = params[-1][0].shape[1]
    n_layers = len(params)

    d_in_p = _round_up(d_in, LANE)      # K of first matmul, lane-aligned
    d_out_p = _round_up(d_out, LANE)    # N of last matmul -> lane-dense stores

    # Zero-pad first-layer input rows and last-layer output cols to 128.
    params_p = []
    for li, (w, b) in enumerate(params):
        kin, kout = w.shape
        kin_p = d_in_p if li == 0 else kin
        kout_p = d_out_p if li == n_layers - 1 else kout
        if (kin_p, kout_p) != (kin, kout):
            w = jnp.pad(w, ((0, kin_p - kin), (0, kout_p - kout)))
            b = jnp.pad(b, ((0, 0), (0, kout_p - kout)))
        params_p.append((w, b))

    # Pad batch to a multiple of the tile (no divisibility requirement on B).
    B_pad = _round_up(B, block_m)
    x_p = jnp.pad(x, ((0, B_pad - B), (0, d_in_p - d_in)))
    grid_m = B_pad // block_m

    # Weights/biases: constant index_map -> resident across the whole grid.
    # Single-buffer them (they never change) when supported.
    w_kwargs = {}
    if single_buffer_weights and hasattr(pl, "Buffered"):
        w_kwargs = dict(pipeline_mode=pl.Buffered(1))

    flat = []
    in_specs = [pl.BlockSpec((block_m, d_in_p), lambda i: (i, 0))]
    for (w, b) in params_p:
        flat.append(w)
        flat.append(b)
        in_specs.append(pl.BlockSpec(w.shape, lambda i: (0, 0), **w_kwargs))
        in_specs.append(pl.BlockSpec(b.shape, lambda i: (0, 0), **w_kwargs))
    out_spec = pl.BlockSpec((block_m, d_out_p), lambda i: (i, 0))

    # Advisory cost estimate (this call is weight-DMA bound).
    weight_bytes = sum(int(t.size) * t.dtype.itemsize for t in flat)
    flops = 2 * B_pad * sum(int(w.shape[0]) * int(w.shape[1]) for w, _ in params_p)
    bytes_accessed = (int(x_p.size) * x_p.dtype.itemsize
                      + B_pad * d_out_p * jnp.dtype(x.dtype).itemsize
                      + weight_bytes)

    out = pl.pallas_call(
        _mlp_kernel,
        out_shape=jax.ShapeDtypeStruct((B_pad, d_out_p), x.dtype),
        grid_spec=pltpu.PrefetchScalarGridSpec(
            num_scalar_prefetch=0,
            grid=(grid_m,),
            in_specs=in_specs,
            out_specs=out_spec,
        ),
        compiler_params=pltpu.CompilerParams(
            dimension_semantics=("parallel",) if grid_m > 1 else ("arbitrary",),
            vmem_limit_bytes=24 * 1024 * 1024,   # fits v7x's 64 MiB physical VMEM
        ),
        cost_estimate=pl.CostEstimate(
            flops=flops, transcendentals=0, bytes_accessed=bytes_accessed),
    )(x_p, *flat)

    return out[:B, :d_out]


def path_decoder_medium(x, params, *, block_m=None, single_buffer_weights=True):
    """x: [B, out_dim] float32.  params: list of (W bf16 [in_f,out_f], b f32 [1,out_f])."""
    B = x.shape[0]
    if block_m is None:
        if B >= 512:
            block_m = 512        # big tiles amortize per-step overhead; fits 24 MiB VMEM
        elif B >= 256:
            block_m = 256
        else:
            block_m = min(_round_up(B, 8), 256)
    try:
        return _path_decoder_medium_impl(
            x, params, block_m=block_m, single_buffer_weights=single_buffer_weights)
    except Exception:
        if single_buffer_weights:
            # Fallback: some jax versions may not honor/accept pl.Buffered(1)
            # on pallas_call BlockSpecs; default double-buffering is correct too.
            return _path_decoder_medium_impl(
                x, params, block_m=block_m, single_buffer_weights=False)
        raise


def init_linear(key, fan_in, fan_out):
    """torch.nn.Linear default init: U(-1/sqrt(fan_in), 1/sqrt(fan_in)).

    Returned W has shape [fan_in, fan_out] (pre-transposed for x @ W) in bf16;
    bias stays f32."""
    kw, kb = jax.random.split(key)
    bound = 1.0 / jnp.sqrt(jnp.float32(fan_in))
    w = jax.random.uniform(kw, (fan_in, fan_out), jnp.float32, minval=-bound, maxval=bound)
    b = jax.random.uniform(kb, (1, fan_out), jnp.float32, minval=-bound, maxval=bound)
    return w.astype(jnp.bfloat16), b


def make_params(key, in_dim, out_dim):
    dims = [(out_dim, 768), (768, 768), (768, 512), (512, 256), (256, in_dim)]
    keys = jax.random.split(key, len(dims))
    return [init_linear(k, fi, fo) for k, (fi, fo) in zip(keys, dims)]


def reference_forward(x, params):
    """Pure-JAX reference mirroring the kernel numerics (bf16 matmul, f32 accumulate)."""
    h = x.astype(jnp.float32)
    for (w, b) in params:
        h = jnp.dot(h.astype(jnp.bfloat16), w.astype(jnp.bfloat16),
                    preferred_element_type=jnp.float32)
        h = jnp.maximum(h + b.astype(jnp.float32), 0.0)
    return h


if __name__ == "__main__":
    key = jax.random.PRNGKey(0)
    k_x, k_p = jax.random.split(key)

    in_dim, out_dim = 32, 32          # layer5 output dim / layer1 input dim
    batch = 16

    x = jax.random.normal(k_x, (batch, out_dim), dtype=jnp.float32)
    params = make_params(k_p, in_dim, out_dim)

    out = path_decoder_medium(x, params)
    out = jax.block_until_ready(out)

    ref = reference_forward(x, params)
    assert out.shape == (batch, in_dim)
    assert jnp.allclose(out, ref, atol=2e-2, rtol=2e-2), "mismatch vs JAX reference"

    print("KERNEL_OK")
</pallas_src>

<mosaic_0001>
module attributes {stable_mosaic.version = 11 : i64} {
  func.func @_mlp_kernel(%arg0: i32, %arg1: memref<16x128xf32, #tpu.memory_space<vmem>>, %arg2: memref<128x768xbf16, #tpu.memory_space<vmem>>, %arg3: memref<1x768xf32, #tpu.memory_space<vmem>>, %arg4: memref<768x768xbf16, #tpu.memory_space<vmem>>, %arg5: memref<1x768xf32, #tpu.memory_space<vmem>>, %arg6: memref<768x512xbf16, #tpu.memory_space<vmem>>, %arg7: memref<1x512xf32, #tpu.memory_space<vmem>>, %arg8: memref<512x256xbf16, #tpu.memory_space<vmem>>, %arg9: memref<1x256xf32, #tpu.memory_space<vmem>>, %arg10: memref<256x128xbf16, #tpu.memory_space<vmem>>, %arg11: memref<1x128xf32, #tpu.memory_space<vmem>>, %arg12: memref<16x128xf32, #tpu.memory_space<vmem>>) attributes {dimension_semantics = [#tpu.dimension_semantics<arbitrary>], iteration_bounds = array<i64: 1>, scalar_prefetch = 0 : i64, scratch_operands = 0 : i64, tpu.core_type = #tpu.core_type<tc>, window_params = [{transform_indices = @transform_0, window_bounds = array<i64: 16, 128>}, {pipeline_mode = #tpu.pipeline_mode<synchronous>, transform_indices = @transform_1, window_bounds = array<i64: 128, 768>}, {pipeline_mode = #tpu.pipeline_mode<synchronous>, transform_indices = @transform_2, window_bounds = array<i64: 1, 768>}, {pipeline_mode = #tpu.pipeline_mode<synchronous>, transform_indices = @transform_3, window_bounds = array<i64: 768, 768>}, {pipeline_mode = #tpu.pipeline_mode<synchronous>, transform_indices = @transform_4, window_bounds = array<i64: 1, 768>}, {pipeline_mode = #tpu.pipeline_mode<synchronous>, transform_indices = @transform_5, window_bounds = array<i64: 768, 512>}, {pipeline_mode = #tpu.pipeline_mode<synchronous>, transform_indices = @transform_6, window_bounds = array<i64: 1, 512>}, {pipeline_mode = #tpu.pipeline_mode<synchronous>, transform_indices = @transform_7, window_bounds = array<i64: 512, 256>}, {pipeline_mode = #tpu.pipeline_mode<synchronous>, transform_indices = @transform_8, window_bounds = array<i64: 1, 256>}, {pipeline_mode = #tpu.pipeline_mode<synchronous>, transform_indices = @transform_9, window_bounds = array<i64: 256, 128>}, {pipeline_mode = #tpu.pipeline_mode<synchronous>, transform_indices = @transform_10, window_bounds = array<i64: 1, 128>}, {transform_indices = @transform_11, window_bounds = array<i64: 16, 128>}]} {
    %c0 = arith.constant 0 : index
    %c0_0 = arith.constant 0 : index
    %0 = vector.load %arg1[%c0, %c0_0] : memref<16x128xf32, #tpu.memory_space<vmem>>, vector<16x128xf32>
    %1 = arith.truncf %0 : vector<16x128xf32> to vector<16x128xbf16>
    %c0_1 = arith.constant 0 : index
    %c0_2 = arith.constant 0 : index
    %2 = vector.load %arg2[%c0_1, %c0_2] : memref<128x768xbf16, #tpu.memory_space<vmem>>, vector<128x768xbf16>
    %cst = arith.constant dense<0.000000e+00> : vector<16x768xf32>
    %3 = tpu.matmul %1, %2, %cst {dimension_numbers = #tpu.dot_dimension_numbers<[1], [0], [0], [1], [0, 0, 1, 1], [], []>} : vector<16x128xbf16>, vector<128x768xbf16>, vector<16x768xf32> -> vector<16x768xf32>
    %c0_3 = arith.constant 0 : index
    %c0_4 = arith.constant 0 : index
    %4 = vector.load %arg3[%c0_3, %c0_4] : memref<1x768xf32, #tpu.memory_space<vmem>>, vector<1x768xf32>
    %5 = vector.broadcast %4 : vector<1x768xf32> to vector<16x768xf32>
    %6 = arith.addf %3, %5 : vector<16x768xf32>
    %cst_5 = arith.constant 0.000000e+00 : f32
    %7 = vector.broadcast %cst_5 : f32 to vector<16x768xf32>
    %8 = arith.maximumf %6, %7 : vector<16x768xf32>
    %9 = arith.truncf %8 : vector<16x768xf32> to vector<16x768xbf16>
    %c0_6 = arith.constant 0 : index
    %c0_7 = arith.constant 0 : index
    %10 = vector.load %arg4[%c0_6, %c0_7] : memref<768x768xbf16, #tpu.memory_space<vmem>>, vector<768x768xbf16>
    %cst_8 = arith.constant dense<0.000000e+00> : vector<16x768xf32>
    %11 = tpu.matmul %9, %10, %cst_8 {dimension_numbers = #tpu.dot_dimension_numbers<[1], [0], [0], [1], [0, 0, 1, 1], [], []>} : vector<16x768xbf16>, vector<768x768xbf16>, vector<16x768xf32> -> vector<16x768xf32>
    %c0_9 = arith.constant 0 : index
    %c0_10 = arith.constant 0 : index
    %12 = vector.load %arg5[%c0_9, %c0_10] : memref<1x768xf32, #tpu.memory_space<vmem>>, vector<1x768xf32>
    %13 = vector.broadcast %12 : vector<1x768xf32> to vector<16x768xf32>
    %14 = arith.addf %11, %13 : vector<16x768xf32>
    %cst_11 = arith.constant 0.000000e+00 : f32
    %15 = vector.broadcast %cst_11 : f32 to vector<16x768xf32>
    %16 = arith.maximumf %14, %15 : vector<16x768xf32>
    %17 = arith.truncf %16 : vector<16x768xf32> to vector<16x768xbf16>
    %c0_12 = arith.constant 0 : index
    %c0_13 = arith.constant 0 : index
    %18 = vector.load %arg6[%c0_12, %c0_13] : memref<768x512xbf16, #tpu.memory_space<vmem>>, vector<768x512xbf16>
    %cst_14 = arith.constant dense<0.000000e+00> : vector<16x512xf32>
    %19 = tpu.matmul %17, %18, %cst_14 {dimension_numbers = #tpu.dot_dimension_numbers<[1], [0], [0], [1], [0, 0, 1, 1], [], []>} : vector<16x768xbf16>, vector<768x512xbf16>, vector<16x512xf32> -> vector<16x512xf32>
    %c0_15 = arith.constant 0 : index
    %c0_16 = arith.constant 0 : index
    %20 = vector.load %arg7[%c0_15, %c0_16] : memref<1x512xf32, #tpu.memory_space<vmem>>, vector<1x512xf32>
    %21 = vector.broadcast %20 : vector<1x512xf32> to vector<16x512xf32>
    %22 = arith.addf %19, %21 : vector<16x512xf32>
    %cst_17 = arith.constant 0.000000e+00 : f32
    %23 = vector.broadcast %cst_17 : f32 to vector<16x512xf32>
    %24 = arith.maximumf %22, %23 : vector<16x512xf32>
    %25 = arith.truncf %24 : vector<16x512xf32> to vector<16x512xbf16>
    %c0_18 = arith.constant 0 : index
    %c0_19 = arith.constant 0 : index
    %26 = vector.load %arg8[%c0_18, %c0_19] : memref<512x256xbf16, #tpu.memory_space<vmem>>, vector<512x256xbf16>
    %cst_20 = arith.constant dense<0.000000e+00> : vector<16x256xf32>
    %27 = tpu.matmul %25, %26, %cst_20 {dimension_numbers = #tpu.dot_dimension_numbers<[1], [0], [0], [1], [0, 0, 1, 1], [], []>} : vector<16x512xbf16>, vector<512x256xbf16>, vector<16x256xf32> -> vector<16x256xf32>
    %c0_21 = arith.constant 0 : index
    %c0_22 = arith.constant 0 : index
    %28 = vector.load %arg9[%c0_21, %c0_22] : memref<1x256xf32, #tpu.memory_space<vmem>>, vector<1x256xf32>
    %29 = vector.broadcast %28 : vector<1x256xf32> to vector<16x256xf32>
    %30 = arith.addf %27, %29 : vector<16x256xf32>
    %cst_23 = arith.constant 0.000000e+00 : f32
    %31 = vector.broadcast %cst_23 : f32 to vector<16x256xf32>
    %32 = arith.maximumf %30, %31 : vector<16x256xf32>
    %33 = arith.truncf %32 : vector<16x256xf32> to vector<16x256xbf16>
    %c0_24 = arith.constant 0 : index
    %c0_25 = arith.constant 0 : index
    %34 = vector.load %arg10[%c0_24, %c0_25] : memref<256x128xbf16, #tpu.memory_space<vmem>>, vector<256x128xbf16>
    %cst_26 = arith.constant dense<0.000000e+00> : vector<16x128xf32>
    %35 = tpu.matmul %33, %34, %cst_26 {dimension_numbers = #tpu.dot_dimension_numbers<[1], [0], [0], [1], [0, 0, 1, 1], [], []>} : vector<16x256xbf16>, vector<256x128xbf16>, vector<16x128xf32> -> vector<16x128xf32>
    %c0_27 = arith.constant 0 : index
    %c0_28 = arith.constant 0 : index
    %36 = vector.load %arg11[%c0_27, %c0_28] : memref<1x128xf32, #tpu.memory_space<vmem>>, vector<1x128xf32>
    %37 = vector.broadcast %36 : vector<1x128xf32> to vector<16x128xf32>
    %38 = arith.addf %35, %37 : vector<16x128xf32>
    %cst_29 = arith.constant 0.000000e+00 : f32
    %39 = vector.broadcast %cst_29 : f32 to vector<16x128xf32>
    %40 = arith.maximumf %38, %39 : vector<16x128xf32>
    %c0_30 = arith.constant 0 : index
    %c0_31 = arith.constant 0 : index
    %41 = vector.load %arg12[%c0_30, %c0_31] : memref<16x128xf32, #tpu.memory_space<vmem>>, vector<16x128xf32>
    tpu.vector_store %arg12[%c0_30, %c0_31], %40 {strides = array<i32>} : memref<16x128xf32, #tpu.memory_space<vmem>>, vector<16x128xf32>,
    return
  }
  func.func @transform_0(%arg0: i32) -> (i32, i32) {
    %c0_i32 = arith.constant 0 : i32
    %c0_i32_0 = arith.constant 0 : i32
    return %arg0, %c0_i32 : i32, i32
  }
  func.func @transform_1(%arg0: i32) -> (i32, i32) {
    %c0_i32 = arith.constant 0 : i32
    %c0_i32_0 = arith.constant 0 : i32
    %c0_i32_1 = arith.constant 0 : i32
    return %c0_i32, %c0_i32_0 : i32, i32
  }
  func.func @transform_2(%arg0: i32) -> (i32, i32) {
    %c0_i32 = arith.constant 0 : i32
    %c0_i32_0 = arith.constant 0 : i32
    %c0_i32_1 = arith.constant 0 : i32
    return %c0_i32, %c0_i32_0 : i32, i32
  }
  func.func @transform_3(%arg0: i32) -> (i32, i32) {
    %c0_i32 = arith.constant 0 : i32
    %c0_i32_0 = arith.constant 0 : i32
    %c0_i32_1 = arith.constant 0 : i32
    return %c0_i32, %c0_i32_0 : i32, i32
  }
  func.func @transform_4(%arg0: i32) -> (i32, i32) {
    %c0_i32 = arith.constant 0 : i32
    %c0_i32_0 = arith.constant 0 : i32
    %c0_i32_1 = arith.constant 0 : i32
    return %c0_i32, %c0_i32_0 : i32, i32
  }
  func.func @transform_5(%arg0: i32) -> (i32, i32) {
    %c0_i32 = arith.constant 0 : i32
    %c0_i32_0 = arith.constant 0 : i32
    %c0_i32_1 = arith.constant 0 : i32
    return %c0_i32, %c0_i32_0 : i32, i32
  }
  func.func @transform_6(%arg0: i32) -> (i32, i32) {
    %c0_i32 = arith.constant 0 : i32
    %c0_i32_0 = arith.constant 0 : i32
    %c0_i32_1 = arith.constant 0 : i32
    return %c0_i32, %c0_i32_0 : i32, i32
  }
  func.func @transform_7(%arg0: i32) -> (i32, i32) {
    %c0_i32 = arith.constant 0 : i32
    %c0_i32_0 = arith.constant 0 : i32
    %c0_i32_1 = arith.constant 0 : i32
    return %c0_i32, %c0_i32_0 : i32, i32
  }
  func.func @transform_8(%arg0: i32) -> (i32, i32) {
    %c0_i32 = arith.constant 0 : i32
    %c0_i32_0 = arith.constant 0 : i32
    %c0_i32_1 = arith.constant 0 : i32
    return %c0_i32, %c0_i32_0 : i32, i32
  }
  func.func @transform_9(%arg0: i32) -> (i32, i32) {
    %c0_i32 = arith.constant 0 : i32
    %c0_i32_0 = arith.constant 0 : i32
    %c0_i32_1 = arith.constant 0 : i32
    return %c0_i32, %c0_i32_0 : i32, i32
  }
  func.func @transform_10(%arg0: i32) -> (i32, i32) {
    %c0_i32 = arith.constant 0 : i32
    %c0_i32_0 = arith.constant 0 : i32
    %c0_i32_1 = arith.constant 0 : i32
    return %c0_i32, %c0_i32_0 : i32, i32
  }
  func.func @transform_11(%arg0: i32) -> (i32, i32) {
    %c0_i32 = arith.constant 0 : i32
    %c0_i32_0 = arith.constant 0 : i32
    return %arg0, %c0_i32 : i32, i32
  }
}

module attributes {stable_mosaic.version = 11 : i64} {
  func.func @_mlp_kernel(%arg0: i32, %arg1: memref<16x128xf32, #tpu.memory_space<vmem>>, %arg2: memref<128x768xbf16, #tpu.memory_space<vmem>>, %arg3: memref<1x768xf32, #tpu.memory_space<vmem>>, %arg4: memref<768x768xbf16, #tpu.memory_space<vmem>>, %arg5: memref<1x768xf32, #tpu.memory_space<vmem>>, %arg6: memref<768x512xbf16, #tpu.memory_space<vmem>>, %arg7: memref<1x512xf32, #tpu.memory_space<vmem>>, %arg8: memref<512x256xbf16, #tpu.memory_space<vmem>>, %arg9: memref<1x256xf32, #tpu.memory_space<vmem>>, %arg10: memref<256x128xbf16, #tpu.memory_space<vmem>>, %arg11: memref<1x128xf32, #tpu.memory_space<vmem>>, %arg12: memref<16x128xf32, #tpu.memory_space<vmem>>) attributes {dimension_semantics = [#tpu.dimension_semantics<arbitrary>], iteration_bounds = array<i64: 1>, scalar_prefetch = 0 : i64, scratch_operands = 0 : i64, tpu.core_type = #tpu.core_type<tc>, window_params = [{transform_indices = @transform_0, window_bounds = array<i64: 16, 128>}, {pipeline_mode = #tpu.pipeline_mode<synchronous>, transform_indices = @transform_1, window_bounds = array<i64: 128, 768>}, {pipeline_mode = #tpu.pipeline_mode<synchronous>, transform_indices = @transform_2, window_bounds = array<i64: 1, 768>}, {pipeline_mode = #tpu.pipeline_mode<synchronous>, transform_indices = @transform_3, window_bounds = array<i64: 768, 768>}, {pipeline_mode = #tpu.pipeline_mode<synchronous>, transform_indices = @transform_4, window_bounds = array<i64: 1, 768>}, {pipeline_mode = #tpu.pipeline_mode<synchronous>, transform_indices = @transform_5, window_bounds = array<i64: 768, 512>}, {pipeline_mode = #tpu.pipeline_mode<synchronous>, transform_indices = @transform_6, window_bounds = array<i64: 1, 512>}, {pipeline_mode = #tpu.pipeline_mode<synchronous>, transform_indices = @transform_7, window_bounds = array<i64: 512, 256>}, {pipeline_mode = #tpu.pipeline_mode<synchronous>, transform_indices = @transform_8, window_bounds = array<i64: 1, 256>}, {pipeline_mode = #tpu.pipeline_mode<synchronous>, transform_indices = @transform_9, window_bounds = array<i64: 256, 128>}, {pipeline_mode = #tpu.pipeline_mode<synchronous>, transform_indices = @transform_10, window_bounds = array<i64: 1, 128>}, {transform_indices = @transform_11, window_bounds = array<i64: 16, 128>}]} {
    %c0 = arith.constant 0 : index
    %c0_0 = arith.constant 0 : index
    %0 = vector.load %arg1[%c0, %c0_0] : memref<16x128xf32, #tpu.memory_space<vmem>>, vector<16x128xf32>
    %1 = arith.truncf %0 : vector<16x128xf32> to vector<16x128xbf16>
    %c0_1 = arith.constant 0 : index
    %c0_2 = arith.constant 0 : index
    %2 = vector.load %arg2[%c0_1, %c0_2] : memref<128x768xbf16, #tpu.memory_space<vmem>>, vector<128x768xbf16>
    %cst = arith.constant dense<0.000000e+00> : vector<16x768xf32>
    %3 = tpu.matmul %1, %2, %cst {dimension_numbers = #tpu.dot_dimension_numbers<[1], [0], [0], [1], [0, 0, 1, 1], [], []>} : vector<16x128xbf16>, vector<128x768xbf16>, vector<16x768xf32> -> vector<16x768xf32>
    %c0_3 = arith.constant 0 : index
    %c0_4 = arith.constant 0 : index
    %4 = vector.load %arg3[%c0_3, %c0_4] : memref<1x768xf32, #tpu.memory_space<vmem>>, vector<1x768xf32>
    %5 = vector.broadcast %4 : vector<1x768xf32> to vector<16x768xf32>
    %6 = arith.addf %3, %5 : vector<16x768xf32>
    %cst_5 = arith.constant 0.000000e+00 : f32
    %7 = vector.broadcast %cst_5 : f32 to vector<16x768xf32>
    %8 = arith.maximumf %6, %7 : vector<16x768xf32>
    %9 = arith.truncf %8 : vector<16x768xf32> to vector<16x768xbf16>
    %c0_6 = arith.constant 0 : index
    %c0_7 = arith.constant 0 : index
    %10 = vector.load %arg4[%c0_6, %c0_7] : memref<768x768xbf16, #tpu.memory_space<vmem>>, vector<768x768xbf16>
    %cst_8 = arith.constant dense<0.000000e+00> : vector<16x768xf32>
    %11 = tpu.matmul %9, %10, %cst_8 {dimension_numbers = #tpu.dot_dimension_numbers<[1], [0], [0], [1], [0, 0, 1, 1], [], []>} : vector<16x768xbf16>, vector<768x768xbf16>, vector<16x768xf32> -> vector<16x768xf32>
    %c0_9 = arith.constant 0 : index
    %c0_10 = arith.constant 0 : index
    %12 = vector.load %arg5[%c0_9, %c0_10] : memref<1x768xf32, #tpu.memory_space<vmem>>, vector<1x768xf32>
    %13 = vector.broadcast %12 : vector<1x768xf32> to vector<16x768xf32>
    %14 = arith.addf %11, %13 : vector<16x768xf32>
    %cst_11 = arith.constant 0.000000e+00 : f32
    %15 = vector.broadcast %cst_11 : f32 to vector<16x768xf32>
    %16 = arith.maximumf %14, %15 : vector<16x768xf32>
    %17 = arith.truncf %16 : vector<16x768xf32> to vector<16x768xbf16>
    %c0_12 = arith.constant 0 : index
    %c0_13 = arith.constant 0 : index
    %18 = vector.load %arg6[%c0_12, %c0_13] : memref<768x512xbf16, #tpu.memory_space<vmem>>, vector<768x512xbf16>
    %cst_14 = arith.constant dense<0.000000e+00> : vector<16x512xf32>
    %19 = tpu.matmul %17, %18, %cst_14 {dimension_numbers = #tpu.dot_dimension_numbers<[1], [0], [0], [1], [0, 0, 1, 1], [], []>} : vector<16x768xbf16>, vector<768x512xbf16>, vector<16x512xf32> -> vector<16x512xf32>
    %c0_15 = arith.constant 0 : index
    %c0_16 = arith.constant 0 : index
    %20 = vector.load %arg7[%c0_15, %c0_16] : memref<1x512xf32, #tpu.memory_space<vmem>>, vector<1x512xf32>
    %21 = vector.broadcast %20 : vector<1x512xf32> to vector<16x512xf32>
    %22 = arith.addf %19, %21 : vector<16x512xf32>
    %cst_17 = arith.constant 0.000000e+00 : f32
    %23 = vector.broadcast %cst_17 : f32 to vector<16x512xf32>
    %24 = arith.maximumf %22, %23 : vector<16x512xf32>
    %25 = arith.truncf %24 : vector<16x512xf32> to vector<16x512xbf16>
    %c0_18 = arith.constant 0 : index
    %c0_19 = arith.constant 0 : index
    %26 = vector.load %arg8[%c0_18, %c0_19] : memref<512x256xbf16, #tpu.memory_space<vmem>>, vector<512x256xbf16>
    %cst_20 = arith.constant dense<0.000000e+00> : vector<16x256xf32>
    %27 = tpu.matmul %25, %26, %cst_20 {dimension_numbers = #tpu.dot_dimension_numbers<[1], [0], [0], [1], [0, 0, 1, 1], [], []>} : vector<16x512xbf16>, vector<512x256xbf16>, vector<16x256xf32> -> vector<16x256xf32>
    %c0_21 = arith.constant 0 : index
    %c0_22 = arith.constant 0 : index
    %28 = vector.load %arg9[%c0_21, %c0_22] : memref<1x256xf32, #tpu.memory_space<vmem>>, vector<1x256xf32>
    %29 = vector.broadcast %28 : vector<1x256xf32> to vector<16x256xf32>
    %30 = arith.addf %27, %29 : vector<16x256xf32>
    %cst_23 = arith.constant 0.000000e+00 : f32
    %31 = vector.broadcast %cst_23 : f32 to vector<16x256xf32>
    %32 = arith.maximumf %30, %31 : vector<16x256xf32>
    %33 = arith.truncf %32 : vector<16x256xf32> to vector<16x256xbf16>
    %c0_24 = arith.constant 0 : index
    %c0_25 = arith.constant 0 : index
    %34 = vector.load %arg10[%c0_24, %c0_25] : memref<256x128xbf16, #tpu.memory_space<vmem>>, vector<256x128xbf16>
    %cst_26 = arith.constant dense<0.000000e+00> : vector<16x128xf32>
    %35 = tpu.matmul %33, %34, %cst_26 {dimension_numbers = #tpu.dot_dimension_numbers<[1], [0], [0], [1], [0, 0, 1, 1], [], []>} : vector<16x256xbf16>, vector<256x128xbf16>, vector<16x128xf32> -> vector<16x128xf32>
    %c0_27 = arith.constant 0 : index
    %c0_28 = arith.constant 0 : index
    %36 = vector.load %arg11[%c0_27, %c0_28] : memref<1x128xf32, #tpu.memory_space<vmem>>, vector<1x128xf32>
    %37 = vector.broadcast %36 : vector<1x128xf32> to vector<16x128xf32>
    %38 = arith.addf %35, %37 : vector<16x128xf32>
    %cst_29 = arith.constant 0.000000e+00 : f32
    %39 = vector.broadcast %cst_29 : f32 to vector<16x128xf32>
    %40 = arith.maximumf %38, %39 : vector<16x128xf32>
    %c0_30 = arith.constant 0 : index
    %c0_31 = arith.constant 0 : index
    %41 = vector.load %arg12[%c0_30, %c0_31] : memref<16x128xf32, #tpu.memory_space<vmem>>, vector<16x128xf32>
    tpu.vector_store %arg12[%c0_30, %c0_31], %40 {strides = array<i32>} : memref<16x128xf32, #tpu.memory_space<vmem>>, vector<16x128xf32>,
    return
  }
  func.func @transform_0(%arg0: i32) -> (i32, i32) {
    %c0_i32 = arith.constant 0 : i32
    %c0_i32_0 = arith.constant 0 : i32
    return %arg0, %c0_i32 : i32, i32
  }
  func.func @transform_1(%arg0: i32) -> (i32, i32) {
    %c0_i32 = arith.constant 0 : i32
    %c0_i32_0 = arith.constant 0 : i32
    %c0_i32_1 = arith.constant 0 : i32
    return %c0_i32, %c0_i32_0 : i32, i32
  }
  func.func @transform_2(%arg0: i32) -> (i32, i32) {
    %c0_i32 = arith.constant 0 : i32
    %c0_i32_0 = arith.constant 0 : i32
    %c0_i32_1 = arith.constant 0 : i32
    return %c0_i32, %c0_i32_0 : i32, i32
  }
  func.func @transform_3(%arg0: i32) -> (i32, i32) {
    %c0_i32 = arith.constant 0 : i32
    %c0_i32_0 = arith.constant 0 : i32
    %c0_i32_1 = arith.constant 0 : i32
    return %c0_i32, %c0_i32_0 : i32, i32
  }
  func.func @transform_4(%arg0: i32) -> (i32, i32) {
    %c0_i32 = arith.constant 0 : i32
    %c0_i32_0 = arith.constant 0 : i32
    %c0_i32_1 = arith.constant 0 : i32
    return %c0_i32, %c0_i32_0 : i32, i32
  }
  func.func @transform_5(%arg0: i32) -> (i32, i32) {
    %c0_i32 = arith.constant 0 : i32
    %c0_i32_0 = arith.constant 0 : i32
    %c0_i32_1 = arith.constant 0 : i32
    return %c0_i32, %c0_i32_0 : i32, i32
  }
  func.func @transform_6(%arg0: i32) -> (i32, i32) {
    %c0_i32 = arith.constant 0 : i32
    %c0_i32_0 = arith.constant 0 : i32
    %c0_i32_1 = arith.constant 0 : i32
    return %c0_i32, %c0_i32_0 : i32, i32
  }
  func.func @transform_7(%arg0: i32) -> (i32, i32) {
    %c0_i32 = arith.constant 0 : i32
    %c0_i32_0 = arith.constant 0 : i32
    %c0_i32_1 = arith.constant 0 : i32
    return %c0_i32, %c0_i32_0 : i32, i32
  }
  func.func @transform_8(%arg0: i32) -> (i32, i32) {
    %c0_i32 = arith.constant 0 : i32
    %c0_i32_0 = arith.constant 0 : i32
    %c0_i32_1 = arith.constant 0 : i32
    return %c0_i32, %c0_i32_0 : i32, i32
  }
  func.func @transform_9(%arg0: i32) -> (i32, i32) {
    %c0_i32 = arith.constant 0 : i32
    %c0_i32_0 = arith.constant 0 : i32
    %c0_i32_1 = arith.constant 0 : i32
    return %c0_i32, %c0_i32_0 : i32, i32
  }
  func.func @transform_10(%arg0: i32) -> (i32, i32) {
    %c0_i32 = arith.constant 0 : i32
    %c0_i32_0 = arith.constant 0 : i32
    %c0_i32_1 = arith.constant 0 : i32
    return %c0_i32, %c0_i32_0 : i32, i32
  }
  func.func @transform_11(%arg0: i32) -> (i32, i32) {
    %c0_i32 = arith.constant 0 : i32
    %c0_i32_0 = arith.constant 0 : i32
    return %arg0, %c0_i32 : i32, i32
  }
}

</mosaic_0001>

<llo_original>
// kernel: _path_decoder_medium_impl.1
$region0: #{_path_decoder_medium_impl.1}
  #allocation0 [shape = 'u32[]', space=smem, size = 0x4, offset = 0x4, fixed_abs, tag = 'smem constant byte address 0x4 - core index']
  #allocation1 [shape = 'u32[72,128]{1,0:T(1,128)}', space=vmem, size = 0x9000, scoped, tag = 'internal scratch']
  %s0 = inlined_call_operand.vmem [shape: f32[16,128], index: 0, kind: input, shape index: {}]
  %s1 = inlined_call_operand.vmem [shape: bf16[128,768], index: 1, kind: input, shape index: {}]
  %s2 = inlined_call_operand.hbm [shape: f32[1,768], index: 2, kind: input, shape index: {}]
  %s3 = inlined_call_operand.hbm [shape: bf16[768,768], index: 3, kind: input, shape index: {}]
  %s4 = inlined_call_operand.hbm [shape: f32[1,768], index: 4, kind: input, shape index: {}]
  %s5 = inlined_call_operand.hbm [shape: bf16[768,512], index: 5, kind: input, shape index: {}]
  %s6 = inlined_call_operand.hbm [shape: f32[1,512], index: 6, kind: input, shape index: {}]
  %s7 = inlined_call_operand.hbm [shape: bf16[512,256], index: 7, kind: input, shape index: {}]
  %s8 = inlined_call_operand.hbm [shape: f32[1,256], index: 8, kind: input, shape index: {}]
  %s9 = inlined_call_operand.vmem [shape: bf16[256,128], index: 9, kind: input, shape index: {}]
  %s10 = inlined_call_operand.vmem [shape: f32[1,128], index: 10, kind: input, shape index: {}]
  %s11 = inlined_call_operand.hbm [shape: f32[16,128], index: 11, kind: output, shape index: {}]
  %s12 = sld [smem:[#allocation0]]
  $region82: #{_path_decoder_medium_impl.1} parent=0
    _
  %s14 = ssub.s32 1, %s12
  %s15 = scalar_select 0, %s14, %s12
  $region1: #{_path_decoder_medium_impl.1} parent=0
    #allocation2 [shape = 'u8[3072]{0}', space=vmem, size = 0xc00, scoped, tag = 'input window, operand 2, single buffered']
    #allocation3 [shape = 's32[1]{0}', space=sflag, size = 0x4, scoped, tag = 'scoped memory for _path_decoder_medium_impl.1']
    #allocation4 [shape = 's32[1]{0}', space=sflag, size = 0x4, scoped, tag = 'scoped memory for _path_decoder_medium_impl.1']
    #allocation5 [shape = 'u8[1179648]{0}', space=vmem, size = 0x120000, scoped, tag = 'input window, operand 3, single buffered']
    #allocation6 [shape = 's32[1]{0}', space=sflag, size = 0x4, scoped, tag = 'scoped memory for _path_decoder_medium_impl.1']
    #allocation7 [shape = 'u8[3072]{0}', space=vmem, size = 0xc00, scoped, tag = 'input window, operand 4, single buffered']
    #allocation8 [shape = 'u8[786432]{0}', space=vmem, size = 0xc0000, scoped, tag = 'input window, operand 5, single buffered']
    #allocation9 [shape = 's32[1]{0}', space=sflag, size = 0x4, scoped, tag = 'scoped memory for _path_decoder_medium_impl.1']
    #allocation10 [shape = 'u8[2048]{0}', space=vmem, size = 0x800, scoped, tag = 'input window, operand 6, single buffered']
    #allocation11 [shape = 'u8[262144]{0}', space=vmem, size = 0x40000, scoped, tag = 'input window, operand 7, single buffered']
    #allocation12 [shape = 's32[1]{0}', space=sflag, size = 0x4, scoped, tag = 'scoped memory for _path_decoder_medium_impl.1']
    #allocation13 [shape = 'u8[1024]{0}', space=vmem, size = 0x400, scoped, tag = 'input window, operand 8, single buffered']
    #allocation14 [shape = 'u8[8192]{0}', space=vmem, size = 0x2000, scoped, tag = 'output window, operand 0, single buffered']
    %16 = vsyncpa [#allocation3], 0
    %17 = vsyncpa [#allocation6], 0
    %18 = vsyncpa [#allocation9], 0
    %19 = vsyncpa [#allocation12], 0
    %20 = vsyncpa [#allocation4], 0
    // Predicated region
    $region2: #{_path_decoder_medium_impl.1} parent=1 // pred_check
      _
    $region3: #{_path_decoder_medium_impl.1} parent=1 // pred_check_branch
      %22 = sbr.rel (0) target = $region5
    $region4: #{_path_decoder_medium_impl.1} parent=1 // pred_region
      _
    $region5: #{_path_decoder_medium_impl.1} parent=1 // pred_fallthru
      _
    // Predicated region
    $region6: #{_path_decoder_medium_impl.1} parent=1 // pred_check
      _
    $region7: #{_path_decoder_medium_impl.1} parent=1 // pred_check_branch
      %24 = sbr.rel (0) target = $region9
    $region8: #{_path_decoder_medium_impl.1} parent=1 // pred_region
      _
    $region9: #{_path_decoder_medium_impl.1} parent=1 // pred_fallthru
      _
    // Predicated region
    $region10: #{_path_decoder_medium_impl.1} parent=1 // pred_check
      _
    $region11: #{_path_decoder_medium_impl.1} parent=1 // pred_check_branch
      %26 = sbr.rel (0) target = $region13
    $region12: #{_path_decoder_medium_impl.1} parent=1 // pred_region
      %28 = vsyncadd [#allocation3], 0
      %s30 = sshll.u32 %s2, 4
      %s31 = int_to_ptr.hbm [resolvable:$true] %s30
      %s32 = sshll.u32 [#allocation2], 4
      %s33 = int_to_ptr.vmem [resolvable:$true] %s32
      %35 = dma.hbm_to_vmem [thread:$0]  %s31, 96, %s33, [#allocation3]
    $region13: #{_path_decoder_medium_impl.1} parent=1 // pred_fallthru
      _
    // Predicated region
    $region14: #{_path_decoder_medium_impl.1} parent=1 // pred_check
      _
    $region15: #{_path_decoder_medium_impl.1} parent=1 // pred_check_branch
      %37 = sbr.rel (0) target = $region17
    $region16: #{_path_decoder_medium_impl.1} parent=1 // pred_region
      %39 = vsyncadd [#allocation6], 0
      %s40 = sshll.u32 %s3, 4
      %s41 = int_to_ptr.hbm [resolvable:$true] %s40
      %s42 = sshll.u32 [#allocation5], 4
      %s43 = int_to_ptr.vmem [resolvable:$true] %s42
      %48 = dma.hbm_to_vmem [thread:$0]  %s41, 36864, %s43, [#allocation6], 384, 384, 24
    $region17: #{_path_decoder_medium_impl.1} parent=1 // pred_fallthru
      _
    // Predicated region
    $region18: #{_path_decoder_medium_impl.1} parent=1 // pred_check
      _
    $region19: #{_path_decoder_medium_impl.1} parent=1 // pred_check_branch
      %50 = sbr.rel (0) target = $region21
    $region20: #{_path_decoder_medium_impl.1} parent=1 // pred_region
      %52 = vsyncadd [#allocation6], 0
      %s54 = sshll.u32 %s4, 4
      %s55 = int_to_ptr.hbm [resolvable:$true] %s54
      %s56 = sshll.u32 [#allocation7], 4
      %s57 = int_to_ptr.vmem [resolvable:$true] %s56
      %59 = dma.hbm_to_vmem [thread:$0]  %s55, 96, %s57, [#allocation6]
    $region21: #{_path_decoder_medium_impl.1} parent=1 // pred_fallthru
      _
    // Predicated region
    $region22: #{_path_decoder_medium_impl.1} parent=1 // pred_check
      _
    $region23: #{_path_decoder_medium_impl.1} parent=1 // pred_check_branch
      %61 = sbr.rel (0) target = $region25
    $region24: #{_path_decoder_medium_impl.1} parent=1 // pred_region
      %63 = vsyncadd [#allocation9], 0
      %s64 = sshll.u32 %s5, 4
      %s65 = int_to_ptr.hbm [resolvable:$true] %s64
      %s66 = sshll.u32 [#allocation8], 4
      %s67 = int_to_ptr.vmem [resolvable:$true] %s66
      %72 = dma.hbm_to_vmem [thread:$0]  %s65, 24576, %s67, [#allocation9], 256, 256, 16
    $region25: #{_path_decoder_medium_impl.1} parent=1 // pred_fallthru
      _
    // Predicated region
    $region26: #{_path_decoder_medium_impl.1} parent=1 // pred_check
      _
    $region27: #{_path_decoder_medium_impl.1} parent=1 // pred_check_branch
      %74 = sbr.rel (0) target = $region29
    $region28: #{_path_decoder_medium_impl.1} parent=1 // pred_region
      %76 = vsyncadd [#allocation9], 0
      %s78 = sshll.u32 %s6, 4
      %s79 = int_to_ptr.hbm [resolvable:$true] %s78
      %s80 = sshll.u32 [#allocation10], 4
      %s81 = int_to_ptr.vmem [resolvable:$true] %s80
      %83 = dma.hbm_to_vmem [thread:$0]  %s79, 64, %s81, [#allocation9]
    $region29: #{_path_decoder_medium_impl.1} parent=1 // pred_fallthru
      _
    // Predicated region
    $region30: #{_path_decoder_medium_impl.1} parent=1 // pred_check
      _
    $region31: #{_path_decoder_medium_impl.1} parent=1 // pred_check_branch
      %85 = sbr.rel (0) target = $region33
    $region32: #{_path_decoder_medium_impl.1} parent=1 // pred_region
      %87 = vsyncadd [#allocation12], 0
      %s88 = sshll.u32 %s7, 4
      %s89 = int_to_ptr.hbm [resolvable:$true] %s88
      %s90 = sshll.u32 [#allocation11], 4
      %s91 = int_to_ptr.vmem [resolvable:$true] %s90
      %96 = dma.hbm_to_vmem [thread:$0]  %s89, 8192, %s91, [#allocation12], 128, 128, 8
    $region33: #{_path_decoder_medium_impl.1} parent=1 // pred_fallthru
      _
    // Predicated region
    $region34: #{_path_decoder_medium_impl.1} parent=1 // pred_check
      _
    $region35: #{_path_decoder_medium_impl.1} parent=1 // pred_check_branch
      %98 = sbr.rel (0) target = $region37
    $region36: #{_path_decoder_medium_impl.1} parent=1 // pred_region
      %100 = vsyncadd [#allocation12], 0
      %s102 = sshll.u32 %s8, 4
      %s103 = int_to_ptr.hbm [resolvable:$true] %s102
      %s104 = sshll.u32 [#allocation13], 4
      %s105 = int_to_ptr.vmem [resolvable:$true] %s104
      %107 = dma.hbm_to_vmem [thread:$0]  %s103, 32, %s105, [#allocation12]
    $region37: #{_path_decoder_medium_impl.1} parent=1 // pred_fallthru
      _
    // Predicated region
    $region38: #{_path_decoder_medium_impl.1} parent=1 // pred_check
      _
    $region39: #{_path_decoder_medium_impl.1} parent=1 // pred_check_branch
      %109 = sbr.rel (0) target = $region41
    $region40: #{_path_decoder_medium_impl.1} parent=1 // pred_region
      _
    $region41: #{_path_decoder_medium_impl.1} parent=1 // pred_fallthru
      _
    // Predicated region
    $region42: #{_path_decoder_medium_impl.1} parent=1 // pred_check
      _
    $region43: #{_path_decoder_medium_impl.1} parent=1 // pred_check_branch
      %111 = sbr.rel (0) target = $region45
    $region44: #{_path_decoder_medium_impl.1} parent=1 // pred_region
      _
    $region45: #{_path_decoder_medium_impl.1} parent=1 // pred_fallthru
      _
    // Predicated region
    $region46: #{_path_decoder_medium_impl.1} parent=1 // pred_check
      _
    $region47: #{_path_decoder_medium_impl.1} parent=1 // pred_check_branch
      %113 = sbr.rel (0) target = $region49
    $region48: #{_path_decoder_medium_impl.1} parent=1 // pred_region
      %115 = dma.done [#allocation3], 96
    $region49: #{_path_decoder_medium_impl.1} parent=1 // pred_fallthru
      _
    // Predicated region
    $region50: #{_path_decoder_medium_impl.1} parent=1 // pred_check
      _
    $region51: #{_path_decoder_medium_impl.1} parent=1 // pred_check_branch
      %117 = sbr.rel (0) target = $region53
    $region52: #{_path_decoder_medium_impl.1} parent=1 // pred_region
      %119 = dma.done [#allocation6], 36864
    $region53: #{_path_decoder_medium_impl.1} parent=1 // pred_fallthru
      _
    // Predicated region
    $region54: #{_path_decoder_medium_impl.1} parent=1 // pred_check
      _
    $region55: #{_path_decoder_medium_impl.1} parent=1 // pred_check_branch
      %121 = sbr.rel (0) target = $region57
    $region56: #{_path_decoder_medium_impl.1} parent=1 // pred_region
      %123 = dma.done [#allocation6], 96
    $region57: #{_path_decoder_medium_impl.1} parent=1 // pred_fallthru
      _
    // Predicated region
    $region58: #{_path_decoder_medium_impl.1} parent=1 // pred_check
      _
    $region59: #{_path_decoder_medium_impl.1} parent=1 // pred_check_branch
      %125 = sbr.rel (0) target = $region61
    $region60: #{_path_decoder_medium_impl.1} parent=1 // pred_region
      %127 = dma.done [#allocation9], 24576
    $region61: #{_path_decoder_medium_impl.1} parent=1 // pred_fallthru
      _
    // Predicated region
    $region62: #{_path_decoder_medium_impl.1} parent=1 // pred_check
      _
    $region63: #{_path_decoder_medium_impl.1} parent=1 // pred_check_branch
      %129 = sbr.rel (0) target = $region65
    $region64: #{_path_decoder_medium_impl.1} parent=1 // pred_region
      %131 = dma.done [#allocation9], 64
    $region65: #{_path_decoder_medium_impl.1} parent=1 // pred_fallthru
      _
    // Predicated region
    $region66: #{_path_decoder_medium_impl.1} parent=1 // pred_check
      _
    $region67: #{_path_decoder_medium_impl.1} parent=1 // pred_check_branch
      %133 = sbr.rel (0) target = $region69
    $region68: #{_path_decoder_medium_impl.1} parent=1 // pred_region
      %135 = dma.done [#allocation12], 8192
    $region69: #{_path_decoder_medium_impl.1} parent=1 // pred_fallthru
      _
    // Predicated region
    $region70: #{_path_decoder_medium_impl.1} parent=1 // pred_check
      _
    $region71: #{_path_decoder_medium_impl.1} parent=1 // pred_check_branch
      %137 = sbr.rel (0) target = $region73
    $region72: #{_path_decoder_medium_impl.1} parent=1 // pred_region
      %139 = dma.done [#allocation12], 32
    $region73: #{_path_decoder_medium_impl.1} parent=1 // pred_fallthru
      _
    %v140 = vld [vmem:[%s0] sm:$0xff]
    %v141 = vld [vmem:[%s0 + $0x8] sm:$0xff]
    %v142 = vpack.c.bf16 %v141, %v140
    %v143 = vld [vmem:[%s1] sm:$0xff]
    %v144 = vld [vmem:[%s1 + $0x8] sm:$0xff]
    %v145 = vld [vmem:[%s1 + $0x10] sm:$0xff]
    %v146 = vld [vmem:[%s1 + $0x18] sm:$0xff]
    %v147 = vld [vmem:[%s1 + $0x20] sm:$0xff]
    %v148 = vld [vmem:[%s1 + $0x28] sm:$0xff]
    %v149 = vld [vmem:[%s1 + $0x30] sm:$0xff]
    %v150 = vld [vmem:[%s1 + $0x38] sm:$0xff]
    %v151 = vld [vmem:[%s1 + $0x40] sm:$0xff]
    %v152 = vld [vmem:[%s1 + $0x48] sm:$0xff]
    %v153 = vld [vmem:[%s1 + $0x50] sm:$0xff]
    %v154 = vld [vmem:[%s1 + $0x58] sm:$0xff]
    %v155 = vld [vmem:[%s1 + $0x60] sm:$0xff]
    %v156 = vld [vmem:[%s1 + $0x68] sm:$0xff]
    %v157 = vld [vmem:[%s1 + $0x70] sm:$0xff]
    %v158 = vld [vmem:[%s1 + $0x78] sm:$0xff]
    %v159 = vld [vmem:[%s1 + $0x80] sm:$0xff]
    %v160 = vld [vmem:[%s1 + $0x88] sm:$0xff]
    %v161 = vld [vmem:[%s1 + $0x90] sm:$0xff]
    %v162 = vld [vmem:[%s1 + $0x98] sm:$0xff]
    %v163 = vld [vmem:[%s1 + $0xa0] sm:$0xff]
    %v164 = vld [vmem:[%s1 + $0xa8] sm:$0xff]
    %v165 = vld [vmem:[%s1 + $0xb0] sm:$0xff]
    %v166 = vld [vmem:[%s1 + $0xb8] sm:$0xff]
    %v167 = vld [vmem:[%s1 + $0xc0] sm:$0xff]
    %v168 = vld [vmem:[%s1 + $0xc8] sm:$0xff]
    %v169 = vld [vmem:[%s1 + $0xd0] sm:$0xff]
    %v170 = vld [vmem:[%s1 + $0xd8] sm:$0xff]
    %v171 = vld [vmem:[%s1 + $0xe0] sm:$0xff]
    %v172 = vld [vmem:[%s1 + $0xe8] sm:$0xff]
    %v173 = vld [vmem:[%s1 + $0xf0] sm:$0xff]
    %v174 = vld [vmem:[%s1 + $0xf8] sm:$0xff]
    %v175 = vld [vmem:[%s1 + $0x100] sm:$0xff]
    %v176 = vld [vmem:[%s1 + $0x108] sm:$0xff]
    %v177 = vld [vmem:[%s1 + $0x110] sm:$0xff]
    %v178 = vld [vmem:[%s1 + $0x118] sm:$0xff]
    %v179 = vld [vmem:[%s1 + $0x120] sm:$0xff]
    %v180 = vld [vmem:[%s1 + $0x128] sm:$0xff]
    %v181 = vld [vmem:[%s1 + $0x130] sm:$0xff]
    %v182 = vld [vmem:[%s1 + $0x138] sm:$0xff]
    %v183 = vld [vmem:[%s1 + $0x140] sm:$0xff]
    %v184 = vld [vmem:[%s1 + $0x148] sm:$0xff]
    %v185 = vld [vmem:[%s1 + $0x150] sm:$0xff]
    %v186 = vld [vmem:[%s1 + $0x158] sm:$0xff]
    %v187 = vld [vmem:[%s1 + $0x160] sm:$0xff]
    %v188 = vld [vmem:[%s1 + $0x168] sm:$0xff]
    %v189 = vld [vmem:[%s1 + $0x170] sm:$0xff]
    %v190 = vld [vmem:[%s1 + $0x178] sm:$0xff]
    %v191 = vld [vmem:[#allocation2] sm:$0x3f]
    %v193 = vperm.slane %v191, 0
    %v194 = vperm.slane %v191, 1
    %v195 = vperm.slane %v191, 2
    %v196 = vperm.slane %v191, 3
    %v197 = vperm.slane %v191, 4
    %v198 = vperm.slane %v191, 5
    %v253 = vunpack.c.l.b16 %v143
    %v254 = vunpack.c.h.b16 %v143
    %v255 = vunpack.c.l.b16 %v144
    %v256 = vunpack.c.h.b16 %v144
    %v257 = vunpack.c.l.b16 %v145
    %v258 = vunpack.c.h.b16 %v145
    %v259 = vunpack.c.l.b16 %v146
    %v260 = vunpack.c.h.b16 %v146
    %v261 = vunpack.c.l.b16 %v147
    %v262 = vunpack.c.h.b16 %v147
    %v263 = vunpack.c.l.b16 %v148
    %v264 = vunpack.c.h.b16 %v148
    %v265 = vunpack.c.l.b16 %v149
    %v266 = vunpack.c.h.b16 %v149
    %v267 = vunpack.c.l.b16 %v150
    %v268 = vunpack.c.h.b16 %v150
    %v269 = vunpack.c.l.b16 %v151
    %v270 = vunpack.c.h.b16 %v151
    %v271 = vunpack.c.l.b16 %v152
    %v272 = vunpack.c.h.b16 %v152
    %v273 = vunpack.c.l.b16 %v153
    %v274 = vunpack.c.h.b16 %v153
    %v275 = vunpack.c.l.b16 %v154
    %v276 = vunpack.c.h.b16 %v154
    %v277 = vunpack.c.l.b16 %v155
    %v278 = vunpack.c.h.b16 %v155
    %v279 = vunpack.c.l.b16 %v156
    %v280 = vunpack.c.h.b16 %v156
    %v281 = vunpack.c.l.b16 %v157
    %v282 = vunpack.c.h.b16 %v157
    %v283 = vunpack.c.l.b16 %v158
    %v284 = vunpack.c.h.b16 %v158
    %v285 = vunpack.c.l.b16 %v159
    %v286 = vunpack.c.h.b16 %v159
    %v287 = vunpack.c.l.b16 %v160
    %v288 = vunpack.c.h.b16 %v160
    %v289 = vunpack.c.l.b16 %v161
    %v290 = vunpack.c.h.b16 %v161
    %v291 = vunpack.c.l.b16 %v162
    %v292 = vunpack.c.h.b16 %v162
    %v293 = vunpack.c.l.b16 %v163
    %v294 = vunpack.c.h.b16 %v163
    %v295 = vunpack.c.l.b16 %v164
    %v296 = vunpack.c.h.b16 %v164
    %v297 = vunpack.c.l.b16 %v165
    %v298 = vunpack.c.h.b16 %v165
    %v299 = vunpack.c.l.b16 %v166
    %v300 = vunpack.c.h.b16 %v166
    %v301 = vunpack.c.l.b16 %v167
    %v302 = vunpack.c.h.b16 %v167
    %v303 = vunpack.c.l.b16 %v168
    %v304 = vunpack.c.h.b16 %v168
    %v305 = vunpack.c.l.b16 %v169
    %v306 = vunpack.c.h.b16 %v169
    %v307 = vunpack.c.l.b16 %v170
    %v308 = vunpack.c.h.b16 %v170
    %v309 = vunpack.c.l.b16 %v171
    %v310 = vunpack.c.h.b16 %v171
    %v311 = vunpack.c.l.b16 %v172
    %v312 = vunpack.c.h.b16 %v172
    %v313 = vunpack.c.l.b16 %v173
    %v314 = vunpack.c.h.b16 %v173
    %v315 = vunpack.c.l.b16 %v174
    %v316 = vunpack.c.h.b16 %v174
    %v317 = vunpack.c.l.b16 %v175
    %v318 = vunpack.c.h.b16 %v175
    %v319 = vunpack.c.l.b16 %v176
    %v320 = vunpack.c.h.b16 %v176
    %v321 = vunpack.c.l.b16 %v177
    %v322 = vunpack.c.h.b16 %v177
    %v323 = vunpack.c.l.b16 %v178
    %v324 = vunpack.c.h.b16 %v178
    %v325 = vunpack.c.l.b16 %v179
    %v326 = vunpack.c.h.b16 %v179
    %v327 = vunpack.c.l.b16 %v180
    %v328 = vunpack.c.h.b16 %v180
    %v329 = vunpack.c.l.b16 %v181
    %v330 = vunpack.c.h.b16 %v181
    %v331 = vunpack.c.l.b16 %v182
    %v332 = vunpack.c.h.b16 %v182
    %v333 = vunpack.c.l.b16 %v183
    %v334 = vunpack.c.h.b16 %v183
    %v335 = vunpack.c.l.b16 %v184
    %v336 = vunpack.c.h.b16 %v184
    %v337 = vunpack.c.l.b16 %v185
    %v338 = vunpack.c.h.b16 %v185
    %v339 = vunpack.c.l.b16 %v186
    %v340 = vunpack.c.h.b16 %v186
    %v341 = vunpack.c.l.b16 %v187
    %v342 = vunpack.c.h.b16 %v187
    %v343 = vunpack.c.l.b16 %v188
    %v344 = vunpack.c.h.b16 %v188
    %v345 = vunpack.c.l.b16 %v189
    %v346 = vunpack.c.h.b16 %v189
    %v347 = vunpack.c.l.b16 %v190
    %v348 = vunpack.c.h.b16 %v190
    %v349 = vpack.c.b16 %v259, %v253
    %v350 = vpack.c.b16 %v260, %v254
    %v351 = vpack.c.b16 %v261, %v255
    %v352 = vpack.c.b16 %v262, %v256
    %v353 = vpack.c.b16 %v263, %v257
    %v354 = vpack.c.b16 %v264, %v258
    %v355 = vpack.c.b16 %v271, %v265
    %v356 = vpack.c.b16 %v272, %v266
    %v357 = vpack.c.b16 %v273, %v267
    %v358 = vpack.c.b16 %v274, %v268
    %v359 = vpack.c.b16 %v275, %v269
    %v360 = vpack.c.b16 %v276, %v270
    %v361 = vpack.c.b16 %v283, %v277
    %v362 = vpack.c.b16 %v284, %v278
    %v363 = vpack.c.b16 %v285, %v279
    %v364 = vpack.c.b16 %v286, %v280
    %v365 = vpack.c.b16 %v287, %v281
    %v366 = vpack.c.b16 %v288, %v282
    %v367 = vpack.c.b16 %v295, %v289
    %v368 = vpack.c.b16 %v296, %v290
    %v369 = vpack.c.b16 %v297, %v291
    %v370 = vpack.c.b16 %v298, %v292
    %v371 = vpack.c.b16 %v299, %v293
    %v372 = vpack.c.b16 %v300, %v294
    %v373 = vpack.c.b16 %v307, %v301
    %v374 = vpack.c.b16 %v308, %v302
    %v375 = vpack.c.b16 %v309, %v303
    %v376 = vpack.c.b16 %v310, %v304
    %v377 = vpack.c.b16 %v311, %v305
    %v378 = vpack.c.b16 %v312, %v306
    %v379 = vpack.c.b16 %v319, %v313
    %v380 = vpack.c.b16 %v320, %v314
    %v381 = vpack.c.b16 %v321, %v315
    %v382 = vpack.c.b16 %v322, %v316
    %v383 = vpack.c.b16 %v323, %v317
    %v384 = vpack.c.b16 %v324, %v318
    %v385 = vpack.c.b16 %v331, %v325
    %v386 = vpack.c.b16 %v332, %v326
    %v387 = vpack.c.b16 %v333, %v327
    %v388 = vpack.c.b16 %v334, %v328
    %v389 = vpack.c.b16 %v335, %v329
    %v390 = vpack.c.b16 %v336, %v330
    %v391 = vpack.c.b16 %v343, %v337
    %v392 = vpack.c.b16 %v344, %v338
    %v393 = vpack.c.b16 %v345, %v339
    %v394 = vpack.c.b16 %v346, %v340
    %v395 = vpack.c.b16 %v347, %v341
    %v396 = vpack.c.b16 %v348, %v342
    %445 = vmatpush.bf16.msra.mxu0 %v391
    %446 = vmatpush.bf16.msra.mxu0 %v385
    %447 = vmatpush.bf16.msra.mxu0 %v379
    %448 = vmatpush.bf16.msra.mxu0 %v373
    %449 = vmatpush.bf16.msra.mxu0 %v367
    %450 = vmatpush.bf16.msra.mxu0 %v361
    %451 = vmatpush.bf16.msra.mxu0 %v355
    %452 = vmatpush.bf16.msra.mxu0 %v349
    %453 = vmatmul.bf16.gmra.mxu0 %v142
    %v454 = vpop.f32.mrf.mxu0
    %v455 = vadd.f32 %v193, %v454
    %v456 = vpop.f32.mrf.mxu0
    %v457 = vadd.f32 %v193, %v456
    %458 = vdwg.mxu0
    %459 = vmatpush.bf16.msra.mxu0 %v392
    %460 = vmatpush.bf16.msra.mxu0 %v386
    %461 = vmatpush.bf16.msra.mxu0 %v380
    %462 = vmatpush.bf16.msra.mxu0 %v374
    %463 = vmatpush.bf16.msra.mxu0 %v368
    %464 = vmatpush.bf16.msra.mxu0 %v362
    %465 = vmatpush.bf16.msra.mxu0 %v356
    %466 = vmatpush.bf16.msra.mxu0 %v350
    %467 = vmatmul.bf16.gmra.mxu0 %v142
    %v468 = vpop.f32.mrf.mxu0
    %v469 = vadd.f32 %v194, %v468
    %v470 = vpop.f32.mrf.mxu0
    %v471 = vadd.f32 %v194, %v470
    %472 = vdwg.mxu0
    %473 = vmatpush.bf16.msra.mxu0 %v393
    %474 = vmatpush.bf16.msra.mxu0 %v387
    %475 = vmatpush.bf16.msra.mxu0 %v381
    %476 = vmatpush.bf16.msra.mxu0 %v375
    %477 = vmatpush.bf16.msra.mxu0 %v369
    %478 = vmatpush.bf16.msra.mxu0 %v363
    %479 = vmatpush.bf16.msra.mxu0 %v357
    %480 = vmatpush.bf16.msra.mxu0 %v351
    %481 = vmatmul.bf16.gmra.mxu0 %v142
    %v482 = vpop.f32.mrf.mxu0
    %v483 = vadd.f32 %v195, %v482
    %v484 = vpop.f32.mrf.mxu0
    %v485 = vadd.f32 %v195, %v484
    %486 = vdwg.mxu0
    %487 = vmatpush.bf16.msra.mxu0 %v394
    %488 = vmatpush.bf16.msra.mxu0 %v388
    %489 = vmatpush.bf16.msra.mxu0 %v382
    %490 = vmatpush.bf16.msra.mxu0 %v376
    %491 = vmatpush.bf16.msra.mxu0 %v370
    %492 = vmatpush.bf16.msra.mxu0 %v364
    %493 = vmatpush.bf16.msra.mxu0 %v358
    %494 = vmatpush.bf16.msra.mxu0 %v352
    %495 = vmatmul.bf16.gmra.mxu0 %v142
    %v496 = vpop.f32.mrf.mxu0
    %v497 = vadd.f32 %v196, %v496
    %v498 = vpop.f32.mrf.mxu0
    %v499 = vadd.f32 %v196, %v498
    %500 = vdwg.mxu0
    %501 = vmatpush.bf16.msra.mxu0 %v395
    %502 = vmatpush.bf16.msra.mxu0 %v389
    %503 = vmatpush.bf16.msra.mxu0 %v383
    %504 = vmatpush.bf16.msra.mxu0 %v377
    %505 = vmatpush.bf16.msra.mxu0 %v371
    %506 = vmatpush.bf16.msra.mxu0 %v365
    %507 = vmatpush.bf16.msra.mxu0 %v359
    %508 = vmatpush.bf16.msra.mxu0 %v353
    %509 = vmatmul.bf16.gmra.mxu0 %v142
    %v510 = vpop.f32.mrf.mxu0
    %v511 = vadd.f32 %v197, %v510
    %v512 = vpop.f32.mrf.mxu0
    %v513 = vadd.f32 %v197, %v512
    %514 = vdwg.mxu0
    %515 = vmatpush.bf16.msra.mxu0 %v396
    %516 = vmatpush.bf16.msra.mxu0 %v390
    %517 = vmatpush.bf16.msra.mxu0 %v384
    %518 = vmatpush.bf16.msra.mxu0 %v378
    %519 = vmatpush.bf16.msra.mxu0 %v372
    %520 = vmatpush.bf16.msra.mxu0 %v366
    %521 = vmatpush.bf16.msra.mxu0 %v360
    %522 = vmatpush.bf16.msra.mxu0 %v354
    %523 = vmatmul.bf16.gmra.mxu0 %v142
    %v524 = vpop.f32.mrf.mxu0
    %v525 = vadd.f32 %v198, %v524
    %v526 = vpop.f32.mrf.mxu0
    %v527 = vadd.f32 %v198, %v526
    %528 = vdwg.mxu0
    %v529 = vmax.f32 %v455, 0.0
    %v530 = vmax.f32 %v469, 0.0
    %v531 = vmax.f32 %v483, 0.0
    %v532 = vmax.f32 %v497, 0.0
    %v533 = vmax.f32 %v511, 0.0
    %v534 = vmax.f32 %v525, 0.0
    %v535 = vmax.f32 %v457, 0.0
    %v536 = vmax.f32 %v471, 0.0
    %v537 = vmax.f32 %v485, 0.0
    %v538 = vmax.f32 %v499, 0.0
    %v539 = vmax.f32 %v513, 0.0
    %v540 = vmax.f32 %v527, 0.0
    %v541 = vpack.c.bf16 %v535, %v529
    %v542 = vpack.c.bf16 %v536, %v530
    %v543 = vpack.c.bf16 %v537, %v531
    %v544 = vpack.c.bf16 %v538, %v532
    %v545 = vpack.c.bf16 %v539, %v533
    %v546 = vpack.c.bf16 %v540, %v534
    %v547 = vld [vmem:[#allocation5] sm:$0xff]
    %v548 = vld [vmem:[#allocation5 + $0x8] sm:$0xff]
    %v549 = vld [vmem:[#allocation5 + $0x10] sm:$0xff]
    %v550 = vld [vmem:[#allocation5 + $0x18] sm:$0xff]
    %v551 = vld [vmem:[#allocation5 + $0x20] sm:$0xff]
    %v552 = vld [vmem:[#allocation5 + $0x28] sm:$0xff]
    %v553 = vld [vmem:[#allocation5 + $0x30] sm:$0xff]
    %v554 = vld [vmem:[#allocation5 + $0x38] sm:$0xff]
    %v555 = vld [vmem:[#allocation5 + $0x40] sm:$0xff]
    %v556 = vld [vmem:[#allocation5 + $0x48] sm:$0xff]
    %v557 = vld [vmem:[#allocation5 + $0x50] sm:$0xff]
    %v558 = vld [vmem:[#allocation5 + $0x58] sm:$0xff]
    %v559 = vld [vmem:[#allocation5 + $0x60] sm:$0xff]
    %v560 = vld [vmem:[#allocation5 + $0x68] sm:$0xff]
    %v561 = vld [vmem:[#allocation5 + $0x70] sm:$0xff]
    %v562 = vld [vmem:[#allocation5 + $0x78] sm:$0xff]
    %v563 = vld [vmem:[#allocation5 + $0x80] sm:$0xff]
    %v564 = vld [vmem:[#allocation5 + $0x88] sm:$0xff]
    %v565 = vld [vmem:[#allocation5 + $0x90] sm:$0xff]
    %v566 = vld [vmem:[#allocation5 + $0x98] sm:$0xff]
    %v567 = vld [vmem:[#allocation5 + $0xa0] sm:$0xff]
    %v568 = vld [vmem:[#allocation5 + $0xa8] sm:$0xff]
    %v569 = vld [vmem:[#allocation5 + $0xb0] sm:$0xff]
    %v570 = vld [vmem:[#allocation5 + $0xb8] sm:$0xff]
    %v571 = vld [vmem:[#allocation5 + $0xc0] sm:$0xff]
    %v572 = vld [vmem:[#allocation5 + $0xc8] sm:$0xff]
    %v573 = vld [vmem:[#allocation5 + $0xd0] sm:$0xff]
    %v574 = vld [vmem:[#allocation5 + $0xd8] sm:$0xff]
    %v575 = vld [vmem:[#allocation5 + $0xe0] sm:$0xff]
    %v576 = vld [vmem:[#allocation5 + $0xe8] sm:$0xff]
    %v577 = vld [vmem:[#allocation5 + $0xf0] sm:$0xff]
    %v578 = vld [vmem:[#allocation5 + $0xf8] sm:$0xff]
    %v579 = vld [vmem:[#allocation5 + $0x100] sm:$0xff]
    %v580 = vld [vmem:[#allocation5 + $0x108] sm:$0xff]
    %v581 = vld [vmem:[#allocation5 + $0x110] sm:$0xff]
    %v582 = vld [vmem:[#allocation5 + $0x118] sm:$0xff]
    %v583 = vld [vmem:[#allocation5 + $0x120] sm:$0xff]
    %v584 = vld [vmem:[#allocation5 + $0x128] sm:$0xff]
    %v585 = vld [vmem:[#allocation5 + $0x130] sm:$0xff]
    %v586 = vld [vmem:[#allocation5 + $0x138] sm:$0xff]
    %v587 = vld [vmem:[#allocation5 + $0x140] sm:$0xff]
    %v588 = vld [vmem:[#allocation5 + $0x148] sm:$0xff]
    %v589 = vld [vmem:[#allocation5 + $0x150] sm:$0xff]
    %v590 = vld [vmem:[#allocation5 + $0x158] sm:$0xff]
    %v591 = vld [vmem:[#allocation5 + $0x160] sm:$0xff]
    %v592 = vld [vmem:[#allocation5 + $0x168] sm:$0xff]
    %v593 = vld [vmem:[#allocation5 + $0x170] sm:$0xff]
    %v594 = vld [vmem:[#allocation5 + $0x178] sm:$0xff]
    %v595 = vld [vmem:[#allocation5 + $0x180] sm:$0xff]
    %v596 = vld [vmem:[#allocation5 + $0x188] sm:$0xff]
    %v597 = vld [vmem:[#allocation5 + $0x190] sm:$0xff]
    %v598 = vld [vmem:[#allocation5 + $0x198] sm:$0xff]
    %v599 = vld [vmem:[#allocation5 + $0x1a0] sm:$0xff]
    %v600 = vld [vmem:[#allocation5 + $0x1a8] sm:$0xff]
    %v601 = vld [vmem:[#allocation5 + $0x1b0] sm:$0xff]
    %v602 = vld [vmem:[#allocation5 + $0x1b8] sm:$0xff]
    %v603 = vld [vmem:[#allocation5 + $0x1c0] sm:$0xff]
    %v604 = vld [vmem:[#allocation5 + $0x1c8] sm:$0xff]
    %v605 = vld [vmem:[#allocation5 + $0x1d0] sm:$0xff]
    %v606 = vld [vmem:[#allocation5 + $0x1d8] sm:$0xff]
    %v607 = vld [vmem:[#allocation5 + $0x1e0] sm:$0xff]
    %v608 = vld [vmem:[#allocation5 + $0x1e8] sm:$0xff]
    %v609 = vld [vmem:[#allocation5 + $0x1f0] sm:$0xff]
    %v610 = vld [vmem:[#allocation5 + $0x1f8] sm:$0xff]
    %v611 = vld [vmem:[#allocation5 + $0x200] sm:$0xff]
    %v612 = vld [vmem:[#allocation5 + $0x208] sm:$0xff]
    %v613 = vld [vmem:[#allocation5 + $0x210] sm:$0xff]
    %v614 = vld [vmem:[#allocation5 + $0x218] sm:$0xff]
    %v615 = vld [vmem:[#allocation5 + $0x220] sm:$0xff]
    %v616 = vld [vmem:[#allocation5 + $0x228] sm:$0xff]
    %v617 = vld [vmem:[#allocation5 + $0x230] sm:$0xff]
    %v618 = vld [vmem:[#allocation5 + $0x238] sm:$0xff]
    %v619 = vld [vmem:[#allocation5 + $0x240] sm:$0xff]
    %v620 = vld [vmem:[#allocation5 + $0x248] sm:$0xff]
    %v621 = vld [vmem:[#allocation5 + $0x250] sm:$0xff]
    %v622 = vld [vmem:[#allocation5 + $0x258] sm:$0xff]
    %v623 = vld [vmem:[#allocation5 + $0x260] sm:$0xff]
    %v624 = vld [vmem:[#allocation5 + $0x268] sm:$0xff]
    %v625 = vld [vmem:[#allocation5 + $0x270] sm:$0xff]
    %v626 = vld [vmem:[#allocation5 + $0x278] sm:$0xff]
    %v627 = vld [vmem:[#allocation5 + $0x280] sm:$0xff]
    %v628 = vld [vmem:[#allocation5 + $0x288] sm:$0xff]
    %v629 = vld [vmem:[#allocation5 + $0x290] sm:$0xff]
    %v630 = vld [vmem:[#allocation5 + $0x298] sm:$0xff]
    %v631 = vld [vmem:[#allocation5 + $0x2a0] sm:$0xff]
    %v632 = vld [vmem:[#allocation5 + $0x2a8] sm:$0xff]
    %v633 = vld [vmem:[#allocation5 + $0x2b0] sm:$0xff]
    %v634 = vld [vmem:[#allocation5 + $0x2b8] sm:$0xff]
    %v635 = vld [vmem:[#allocation5 + $0x2c0] sm:$0xff]
    %v636 = vld [vmem:[#allocation5 + $0x2c8] sm:$0xff]
    %v637 = vld [vmem:[#allocation5 + $0x2d0] sm:$0xff]
    %v638 = vld [vmem:[#allocation5 + $0x2d8] sm:$0xff]
    %v639 = vld [vmem:[#allocation5 + $0x2e0] sm:$0xff]
    %v640 = vld [vmem:[#allocation5 + $0x2e8] sm:$0xff]
    %v641 = vld [vmem:[#allocation5 + $0x2f0] sm:$0xff]
    %v642 = vld [vmem:[#allocation5 + $0x2f8] sm:$0xff]
    %v643 = vld [vmem:[#allocation5 + $0x300] sm:$0xff]
    %v644 = vld [vmem:[#allocation5 + $0x308] sm:$0xff]
    %v645 = vld [vmem:[#allocation5 + $0x310] sm:$0xff]
    %v646 = vld [vmem:[#allocation5 + $0x318] sm:$0xff]
    %v647 = vld [vmem:[#allocation5 + $0x320] sm:$0xff]
    %v648 = vld [vmem:[#allocation5 + $0x328] sm:$0xff]
    %v649 = vld [vmem:[#allocation5 + $0x330] sm:$0xff]
    %v650 = vld [vmem:[#allocation5 + $0x338] sm:$0xff]
    %v651 = vld [vmem:[#allocation5 + $0x340] sm:$0xff]
    %v652 = vld [vmem:[#allocation5 + $0x348] sm:$0xff]
    %v653 = vld [vmem:[#allocation5 + $0x350] sm:$0xff]
    %v654 = vld [vmem:[#allocation5 + $0x358] sm:$0xff]
    %v655 = vld [vmem:[#allocation5 + $0x360] sm:$0xff]
    %v656 = vld [vmem:[#allocation5 + $0x368] sm:$0xff]
    %v657 = vld [vmem:[#allocation5 + $0x370] sm:$0xff]
    %v658 = vld [vmem:[#allocation5 + $0x378] sm:$0xff]
    %v659 = vld [vmem:[#allocation5 + $0x380] sm:$0xff]
    %v660 = vld [vmem:[#allocation5 + $0x388] sm:$0xff]
    %v661 = vld [vmem:[#allocation5 + $0x390] sm:$0xff]
    %v662 = vld [vmem:[#allocation5 + $0x398] sm:$0xff]
    %v663 = vld [vmem:[#allocation5 + $0x3a0] sm:$0xff]
    %v664 = vld [vmem:[#allocation5 + $0x3a8] sm:$0xff]
    %v665 = vld [vmem:[#allocation5 + $0x3b0] sm:$0xff]
    %v666 = vld [vmem:[#allocation5 + $0x3b8] sm:$0xff]
    %v667 = vld [vmem:[#allocation5 + $0x3c0] sm:$0xff]
    %v668 = vld [vmem:[#allocation5 + $0x3c8] sm:$0xff]
    %v669 = vld [vmem:[#allocation5 + $0x3d0] sm:$0xff]
    %v670 = vld [vmem:[#allocation5 + $0x3d8] sm:$0xff]
    %v671 = vld [vmem:[#allocation5 + $0x3e0] sm:$0xff]
    %v672 = vld [vmem:[#allocation5 + $0x3e8] sm:$0xff]
    %v673 = vld [vmem:[#allocation5 + $0x3f0] sm:$0xff]
    %v674 = vld [vmem:[#allocation5 + $0x3f8] sm:$0xff]
    %v675 = vld [vmem:[#allocation5 + $0x400] sm:$0xff]
    %v676 = vld [vmem:[#allocation5 + $0x408] sm:$0xff]
    %v677 = vld [vmem:[#allocation5 + $0x410] sm:$0xff]
    %v678 = vld [vmem:[#allocation5 + $0x418] sm:$0xff]
    %v679 = vld [vmem:[#allocation5 + $0x420] sm:$0xff]
    %v680 = vld [vmem:[#allocation5 + $0x428] sm:$0xff]
    %v681 = vld [vmem:[#allocation5 + $0x430] sm:$0xff]
    %v682 = vld [vmem:[#allocation5 + $0x438] sm:$0xff]
    %v683 = vld [vmem:[#allocation5 + $0x440] sm:$0xff]
    %v684 = vld [vmem:[#allocation5 + $0x448] sm:$0xff]
    %v685 = vld [vmem:[#allocation5 + $0x450] sm:$0xff]
    %v686 = vld [vmem:[#allocation5 + $0x458] sm:$0xff]
    %v687 = vld [vmem:[#allocation5 + $0x460] sm:$0xff]
    %v688 = vld [vmem:[#allocation5 + $0x468] sm:$0xff]
    %v689 = vld [vmem:[#allocation5 + $0x470] sm:$0xff]
    %v690 = vld [vmem:[#allocation5 + $0x478] sm:$0xff]
    %v691 = vld [vmem:[#allocation5 + $0x480] sm:$0xff]
    %v692 = vld [vmem:[#allocation5 + $0x488] sm:$0xff]
    %v693 = vld [vmem:[#allocation5 + $0x490] sm:$0xff]
    %v694 = vld [vmem:[#allocation5 + $0x498] sm:$0xff]
    %v695 = vld [vmem:[#allocation5 + $0x4a0] sm:$0xff]
    %v696 = vld [vmem:[#allocation5 + $0x4a8] sm:$0xff]
    %v697 = vld [vmem:[#allocation5 + $0x4b0] sm:$0xff]
    %v698 = vld [vmem:[#allocation5 + $0x4b8] sm:$0xff]
    %v699 = vld [vmem:[#allocation5 + $0x4c0] sm:$0xff]
    %v700 = vld [vmem:[#allocation5 + $0x4c8] sm:$0xff]
    %v701 = vld [vmem:[#allocation5 + $0x4d0] sm:$0xff]
    %v702 = vld [vmem:[#allocation5 + $0x4d8] sm:$0xff]
    %v703 = vld [vmem:[#allocation5 + $0x4e0] sm:$0xff]
    %v704 = vld [vmem:[#allocation5 + $0x4e8] sm:$0xff]
    %v705 = vld [vmem:[#allocation5 + $0x4f0] sm:$0xff]
    %v706 = vld [vmem:[#allocation5 + $0x4f8] sm:$0xff]
    %v707 = vld [vmem:[#allocation5 + $0x500] sm:$0xff]
    %v708 = vld [vmem:[#allocation5 + $0x508] sm:$0xff]
    %v709 = vld [vmem:[#allocation5 + $0x510] sm:$0xff]
    %v710 = vld [vmem:[#allocation5 + $0x518] sm:$0xff]
    %v711 = vld [vmem:[#allocation5 + $0x520] sm:$0xff]
    %v712 = vld [vmem:[#allocation5 + $0x528] sm:$0xff]
    %v713 = vld [vmem:[#allocation5 + $0x530] sm:$0xff]
    %v714 = vld [vmem:[#allocation5 + $0x538] sm:$0xff]
    %v715 = vld [vmem:[#allocation5 + $0x540] sm:$0xff]
    %v716 = vld [vmem:[#allocation5 + $0x548] sm:$0xff]
    %v717 = vld [vmem:[#allocation5 + $0x550] sm:$0xff]
    %v718 = vld [vmem:[#allocation5 + $0x558] sm:$0xff]
    %v719 = vld [vmem:[#allocation5 + $0x560] sm:$0xff]
    %v720 = vld [vmem:[#allocation5 + $0x568] sm:$0xff]
    %v721 = vld [vmem:[#allocation5 + $0x570] sm:$0xff]
    %v722 = vld [vmem:[#allocation5 + $0x578] sm:$0xff]
    %v723 = vld [vmem:[#allocation5 + $0x580] sm:$0xff]
    %v724 = vld [vmem:[#allocation5 + $0x588] sm:$0xff]
    %v725 = vld [vmem:[#allocation5 + $0x590] sm:$0xff]
    %v726 = vld [vmem:[#allocation5 + $0x598] sm:$0xff]
    %v727 = vld [vmem:[#allocation5 + $0x5a0] sm:$0xff]
    %v728 = vld [vmem:[#allocation5 + $0x5a8] sm:$0xff]
    %v729 = vld [vmem:[#allocation5 + $0x5b0] sm:$0xff]
    %v730 = vld [vmem:[#allocation5 + $0x5b8] sm:$0xff]
    %v731 = vld [vmem:[#allocation5 + $0x5c0] sm:$0xff]
    %v732 = vld [vmem:[#allocation5 + $0x5c8] sm:$0xff]
    %v733 = vld [vmem:[#allocation5 + $0x5d0] sm:$0xff]
    %v734 = vld [vmem:[#allocation5 + $0x5d8] sm:$0xff]
    %v735 = vld [vmem:[#allocation5 + $0x5e0] sm:$0xff]
    %v736 = vld [vmem:[#allocation5 + $0x5e8] sm:$0xff]
    %v737 = vld [vmem:[#allocation5 + $0x5f0] sm:$0xff]
    %v738 = vld [vmem:[#allocation5 + $0x5f8] sm:$0xff]
    %v739 = vld [vmem:[#allocation5 + $0x600] sm:$0xff]
    %v740 = vld [vmem:[#allocation5 + $0x608] sm:$0xff]
    %v741 = vld [vmem:[#allocation5 + $0x610] sm:$0xff]
    %v742 = vld [vmem:[#allocation5 + $0x618] sm:$0xff]
    %v743 = vld [vmem:[#allocation5 + $0x620] sm:$0xff]
    %v744 = vld [vmem:[#allocation5 + $0x628] sm:$0xff]
    %v745 = vld [vmem:[#allocation5 + $0x630] sm:$0xff]
    %v746 = vld [vmem:[#allocation5 + $0x638] sm:$0xff]
    %v747 = vld [vmem:[#allocation5 + $0x640] sm:$0xff]
    %v748 = vld [vmem:[#allocation5 + $0x648] sm:$0xff]
    %v749 = vld [vmem:[#allocation5 + $0x650] sm:$0xff]
    %v750 = vld [vmem:[#allocation5 + $0x658] sm:$0xff]
    %v751 = vld [vmem:[#allocation5 + $0x660] sm:$0xff]
    %v752 = vld [vmem:[#allocation5 + $0x668] sm:$0xff]
    %v753 = vld [vmem:[#allocation5 + $0x670] sm:$0xff]
    %v754 = vld [vmem:[#allocation5 + $0x678] sm:$0xff]
    %v755 = vld [vmem:[#allocation5 + $0x680] sm:$0xff]
    %v756 = vld [vmem:[#allocation5 + $0x688] sm:$0xff]
    %v757 = vld [vmem:[#allocation5 + $0x690] sm:$0xff]
    %v758 = vld [vmem:[#allocation5 + $0x698] sm:$0xff]
    %v759 = vld [vmem:[#allocation5 + $0x6a0] sm:$0xff]
    %v760 = vld [vmem:[#allocation5 + $0x6a8] sm:$0xff]
    %v761 = vld [vmem:[#allocation5 + $0x6b0] sm:$0xff]
    %v762 = vld [vmem:[#allocation5 + $0x6b8] sm:$0xff]
    %v763 = vld [vmem:[#allocation5 + $0x6c0] sm:$0xff]
    %v764 = vld [vmem:[#allocation5 + $0x6c8] sm:$0xff]
    %v765 = vld [vmem:[#allocation5 + $0x6d0] sm:$0xff]
    %v766 = vld [vmem:[#allocation5 + $0x6d8] sm:$0xff]
    %v767 = vld [vmem:[#allocation5 + $0x6e0] sm:$0xff]
    %v768 = vld [vmem:[#allocation5 + $0x6e8] sm:$0xff]
    %v769 = vld [vmem:[#allocation5 + $0x6f0] sm:$0xff]
    %v770 = vld [vmem:[#allocation5 + $0x6f8] sm:$0xff]
    %v771 = vld [vmem:[#allocation5 + $0x700] sm:$0xff]
    %v772 = vld [vmem:[#allocation5 + $0x708] sm:$0xff]
    %v773 = vld [vmem:[#allocation5 + $0x710] sm:$0xff]
    %v774 = vld [vmem:[#allocation5 + $0x718] sm:$0xff]
    %v775 = vld [vmem:[#allocation5 + $0x720] sm:$0xff]
    %v776 = vld [vmem:[#allocation5 + $0x728] sm:$0xff]
    %v777 = vld [vmem:[#allocation5 + $0x730] sm:$0xff]
    %v778 = vld [vmem:[#allocation5 + $0x738] sm:$0xff]
    %v779 = vld [vmem:[#allocation5 + $0x740] sm:$0xff]
    %v780 = vld [vmem:[#allocation5 + $0x748] sm:$0xff]
    %v781 = vld [vmem:[#allocation5 + $0x750] sm:$0xff]
    %v782 = vld [vmem:[#allocation5 + $0x758] sm:$0xff]
    %v783 = vld [vmem:[#allocation5 + $0x760] sm:$0xff]
    %v784 = vld [vmem:[#allocation5 + $0x768] sm:$0xff]
    %v785 = vld [vmem:[#allocation5 + $0x770] sm:$0xff]
    %v786 = vld [vmem:[#allocation5 + $0x778] sm:$0xff]
    %v787 = vld [vmem:[#allocation5 + $0x780] sm:$0xff]
    %v788 = vld [vmem:[#allocation5 + $0x788] sm:$0xff]
    %v789 = vld [vmem:[#allocation5 + $0x790] sm:$0xff]
    %v790 = vld [vmem:[#allocation5 + $0x798] sm:$0xff]
    %v791 = vld [vmem:[#allocation5 + $0x7a0] sm:$0xff]
    %v792 = vld [vmem:[#allocation5 + $0x7a8] sm:$0xff]
    %v793 = vld [vmem:[#allocation5 + $0x7b0] sm:$0xff]
    %v794 = vld [vmem:[#allocation5 + $0x7b8] sm:$0xff]
    %v795 = vld [vmem:[#allocation5 + $0x7c0] sm:$0xff]
    %v796 = vld [vmem:[#allocation5 + $0x7c8] sm:$0xff]
    %v797 = vld [vmem:[#allocation5 + $0x7d0] sm:$0xff]
    %v798 = vld [vmem:[#allocation5 + $0x7d8] sm:$0xff]
    %v799 = vld [vmem:[#allocation5 + $0x7e0] sm:$0xff]
    %v800 = vld [vmem:[#allocation5 + $0x7e8] sm:$0xff]
    %v801 = vld [vmem:[#allocation5 + $0x7f0] sm:$0xff]
    %v802 = vld [vmem:[#allocation5 + $0x7f8] sm:$0xff]
    %v803 = vld [vmem:[#allocation5 + $0x800] sm:$0xff]
    %v804 = vld [vmem:[#allocation5 + $0x808] sm:$0xff]
    %v805 = vld [vmem:[#allocation5 + $0x810] sm:$0xff]
    %v806 = vld [vmem:[#allocation5 + $0x818] sm:$0xff]
    %v807 = vld [vmem:[#allocation5 + $0x820] sm:$0xff]
    %v808 = vld [vmem:[#allocation5 + $0x828] sm:$0xff]
    %v809 = vld [vmem:[#allocation5 + $0x830] sm:$0xff]
    %v810 = vld [vmem:[#allocation5 + $0x838] sm:$0xff]
    %v811 = vld [vmem:[#allocation5 + $0x840] sm:$0xff]
    %v812 = vld [vmem:[#allocation5 + $0x848] sm:$0xff]
    %v813 = vld [vmem:[#allocation5 + $0x850] sm:$0xff]
    %v814 = vld [vmem:[#allocation5 + $0x858] sm:$0xff]
    %v815 = vld [vmem:[#allocation5 + $0x860] sm:$0xff]
    %v816 = vld [vmem:[#allocation5 + $0x868] sm:$0xff]
    %v817 = vld [vmem:[#allocation5 + $0x870] sm:$0xff]
    %v818 = vld [vmem:[#allocation5 + $0x878] sm:$0xff]
    %v819 = vld [vmem:[#allocation5 + $0x880] sm:$0xff]
    %v820 = vld [vmem:[#allocation5 + $0x888] sm:$0xff]
    %v821 = vld [vmem:[#allocation5 + $0x890] sm:$0xff]
    %v822 = vld [vmem:[#allocation5 + $0x898] sm:$0xff]
    %v823 = vld [vmem:[#allocation5 + $0x8a0] sm:$0xff]
    %v824 = vld [vmem:[#allocation5 + $0x8a8] sm:$0xff]
    %v825 = vld [vmem:[#allocation5 + $0x8b0] sm:$0xff]
    %v826 = vld [vmem:[#allocation5 + $0x8b8] sm:$0xff]
    %v827 = vld [vmem:[#allocation5 + $0x8c0] sm:$0xff]
    %v828 = vld [vmem:[#allocation5 + $0x8c8] sm:$0xff]
    %v829 = vld [vmem:[#allocation5 + $0x8d0] sm:$0xff]
    %v830 = vld [vmem:[#allocation5 + $0x8d8] sm:$0xff]
    %v831 = vld [vmem:[#allocation5 + $0x8e0] sm:$0xff]
    %v832 = vld [vmem:[#allocation5 + $0x8e8] sm:$0xff]
    %v833 = vld [vmem:[#allocation5 + $0x8f0] sm:$0xff]
    %v834 = vld [vmem:[#allocation5 + $0x8f8] sm:$0xff]
    %v835 = vld [vmem:[#allocation7] sm:$0x3f]
    %v837 = vperm.slane %v835, 0
    %v838 = vperm.slane %v835, 1
    %v839 = vperm.slane %v835, 2
    %v840 = vperm.slane %v835, 3
    %v841 = vperm.slane %v835, 4
    %v842 = vperm.slane %v835, 5
    %v1137 = vunpack.c.l.b16 %v547
    %v1138 = vunpack.c.h.b16 %v547
    %v1139 = vunpack.c.l.b16 %v548
    %v1140 = vunpack.c.h.b16 %v548
    %v1141 = vunpack.c.l.b16 %v549
    %v1142 = vunpack.c.h.b16 %v549
    %v1143 = vunpack.c.l.b16 %v550
    %v1144 = vunpack.c.h.b16 %v550
    %v1145 = vunpack.c.l.b16 %v551
    %v1146 = vunpack.c.h.b16 %v551
    %v1147 = vunpack.c.l.b16 %v552
    %v1148 = vunpack.c.h.b16 %v552
    %v1149 = vunpack.c.l.b16 %v553
    %v1150 = vunpack.c.h.b16 %v553
    %v1151 = vunpack.c.l.b16 %v554
    %v1152 = vunpack.c.h.b16 %v554
    %v1153 = vunpack.c.l.b16 %v555
    %v1154 = vunpack.c.h.b16 %v555
    %v1155 = vunpack.c.l.b16 %v556
    %v1156 = vunpack.c.h.b16 %v556
    %v1157 = vunpack.c.l.b16 %v557
    %v1158 = vunpack.c.h.b16 %v557
    %v1159 = vunpack.c.l.b16 %v558
    %v1160 = vunpack.c.h.b16 %v558
    %v1161 = vunpack.c.l.b16 %v559
    %v1162 = vunpack.c.h.b16 %v559
    %v1163 = vunpack.c.l.b16 %v560
    %v1164 = vunpack.c.h.b16 %v560
    %v1165 = vunpack.c.l.b16 %v561
    %v1166 = vunpack.c.h.b16 %v561
    %v1167 = vunpack.c.l.b16 %v562
    %v1168 = vunpack.c.h.b16 %v562
    %v1169 = vunpack.c.l.b16 %v563
    %v1170 = vunpack.c.h.b16 %v563
    %v1171 = vunpack.c.l.b16 %v564
    %v1172 = vunpack.c.h.b16 %v564
    %v1173 = vunpack.c.l.b16 %v565
    %v1174 = vunpack.c.h.b16 %v565
    %v1175 = vunpack.c.l.b16 %v566
    %v1176 = vunpack.c.h.b16 %v566
    %v1177 = vunpack.c.l.b16 %v567
    %v1178 = vunpack.c.h.b16 %v567
    %v1179 = vunpack.c.l.b16 %v568
    %v1180 = vunpack.c.h.b16 %v568
    %v1181 = vunpack.c.l.b16 %v569
    %v1182 = vunpack.c.h.b16 %v569
    %v1183 = vunpack.c.l.b16 %v570
    %v1184 = vunpack.c.h.b16 %v570
    %v1185 = vunpack.c.l.b16 %v571
    %v1186 = vunpack.c.h.b16 %v571
    %v1187 = vunpack.c.l.b16 %v572
    %v1188 = vunpack.c.h.b16 %v572
    %v1189 = vunpack.c.l.b16 %v573
    %v1190 = vunpack.c.h.b16 %v573
    %v1191 = vunpack.c.l.b16 %v574
    %v1192 = vunpack.c.h.b16 %v574
    %v1193 = vunpack.c.l.b16 %v575
    %v1194 = vunpack.c.h.b16 %v575
    %v1195 = vunpack.c.l.b16 %v576
    %v1196 = vunpack.c.h.b16 %v576
    %v1197 = vunpack.c.l.b16 %v577
    %v1198 = vunpack.c.h.b16 %v577
    %v1199 = vunpack.c.l.b16 %v578
    %v1200 = vunpack.c.h.b16 %v578
    %v1201 = vunpack.c.l.b16 %v579
    %v1202 = vunpack.c.h.b16 %v579
    %v1203 = vunpack.c.l.b16 %v580
    %v1204 = vunpack.c.h.b16 %v580
    %v1205 = vunpack.c.l.b16 %v581
    %v1206 = vunpack.c.h.b16 %v581
    %v1207 = vunpack.c.l.b16 %v582
    %v1208 = vunpack.c.h.b16 %v582
    %v1209 = vunpack.c.l.b16 %v583
    %v1210 = vunpack.c.h.b16 %v583
    %v1211 = vunpack.c.l.b16 %v584
    %v1212 = vunpack.c.h.b16 %v584
    %v1213 = vunpack.c.l.b16 %v585
    %v1214 = vunpack.c.h.b16 %v585
    %v1215 = vunpack.c.l.b16 %v586
    %v1216 = vunpack.c.h.b16 %v586
    %v1217 = vunpack.c.l.b16 %v587
    %v1218 = vunpack.c.h.b16 %v587
    %v1219 = vunpack.c.l.b16 %v588
    %v1220 = vunpack.c.h.b16 %v588
    %v1221 = vunpack.c.l.b16 %v589
    %v1222 = vunpack.c.h.b16 %v589
    %v1223 = vunpack.c.l.b16 %v590
    %v1224 = vunpack.c.h.b16 %v590
    %v1225 = vunpack.c.l.b16 %v591
    %v1226 = vunpack.c.h.b16 %v591
    %v1227 = vunpack.c.l.b16 %v592
    %v1228 = vunpack.c.h.b16 %v592
    %v1229 = vunpack.c.l.b16 %v593
    %v1230 = vunpack.c.h.b16 %v593
    %v1231 = vunpack.c.l.b16 %v594
    %v1232 = vunpack.c.h.b16 %v594
    %v1233 = vunpack.c.l.b16 %v595
    %v1234 = vunpack.c.h.b16 %v595
    %v1235 = vunpack.c.l.b16 %v596
    %v1236 = vunpack.c.h.b16 %v596
    %v1237 = vunpack.c.l.b16 %v597
    %v1238 = vunpack.c.h.b16 %v597
    %v1239 = vunpack.c.l.b16 %v598
    %v1240 = vunpack.c.h.b16 %v598
    %v1241 = vunpack.c.l.b16 %v599
    %v1242 = vunpack.c.h.b16 %v599
    %v1243 = vunpack.c.l.b16 %v600
    %v1244 = vunpack.c.h.b16 %v600
    %v1245 = vunpack.c.l.b16 %v601
    %v1246 = vunpack.c.h.b16 %v601
    %v1247 = vunpack.c.l.b16 %v602
    %v1248 = vunpack.c.h.b16 %v602
    %v1249 = vunpack.c.l.b16 %v603
    %v1250 = vunpack.c.h.b16 %v603
    %v1251 = vunpack.c.l.b16 %v604
    %v1252 = vunpack.c.h.b16 %v604
    %v1253 = vunpack.c.l.b16 %v605
    %v1254 = vunpack.c.h.b16 %v605
    %v1255 = vunpack.c.l.b16 %v606
    %v1256 = vunpack.c.h.b16 %v606
    %v1257 = vunpack.c.l.b16 %v607
    %v1258 = vunpack.c.h.b16 %v607
    %v1259 = vunpack.c.l.b16 %v608
    %v1260 = vunpack.c.h.b16 %v608
    %v1261 = vunpack.c.l.b16 %v609
    %v1262 = vunpack.c.h.b16 %v609
    %v1263 = vunpack.c.l.b16 %v610
    %v1264 = vunpack.c.h.b16 %v610
    %v1265 = vunpack.c.l.b16 %v611
    %v1266 = vunpack.c.h.b16 %v611
    %v1267 = vunpack.c.l.b16 %v612
    %v1268 = vunpack.c.h.b16 %v612
    %v1269 = vunpack.c.l.b16 %v613
    %v1270 = vunpack.c.h.b16 %v613
    %v1271 = vunpack.c.l.b16 %v614
    %v1272 = vunpack.c.h.b16 %v614
    %v1273 = vunpack.c.l.b16 %v615
    %v1274 = vunpack.c.h.b16 %v615
    %v1275 = vunpack.c.l.b16 %v616
    %v1276 = vunpack.c.h.b16 %v616
    %v1277 = vunpack.c.l.b16 %v617
    %v1278 = vunpack.c.h.b16 %v617
    %v1279 = vunpack.c.l.b16 %v618
    %v1280 = vunpack.c.h.b16 %v618
    %v1281 = vunpack.c.l.b16 %v619
    %v1282 = vunpack.c.h.b16 %v619
    %v1283 = vunpack.c.l.b16 %v620
    %v1284 = vunpack.c.h.b16 %v620
    %v1285 = vunpack.c.l.b16 %v621
    %v1286 = vunpack.c.h.b16 %v621
    %v1287 = vunpack.c.l.b16 %v622
    %v1288 = vunpack.c.h.b16 %v622
    %v1289 = vunpack.c.l.b16 %v623
    %v1290 = vunpack.c.h.b16 %v623
    %v1291 = vunpack.c.l.b16 %v624
    %v1292 = vunpack.c.h.b16 %v624
    %v1293 = vunpack.c.l.b16 %v625
    %v1294 = vunpack.c.h.b16 %v625
    %v1295 = vunpack.c.l.b16 %v626
    %v1296 = vunpack.c.h.b16 %v626
    %v1297 = vunpack.c.l.b16 %v627
    %v1298 = vunpack.c.h.b16 %v627
    %v1299 = vunpack.c.l.b16 %v628
    %v1300 = vunpack.c.h.b16 %v628
    %v1301 = vunpack.c.l.b16 %v629
    %v1302 = vunpack.c.h.b16 %v629
    %v1303 = vunpack.c.l.b16 %v630
    %v1304 = vunpack.c.h.b16 %v630
    %v1305 = vunpack.c.l.b16 %v631
    %v1306 = vunpack.c.h.b16 %v631
    %v1307 = vunpack.c.l.b16 %v632
    %v1308 = vunpack.c.h.b16 %v632
    %v1309 = vunpack.c.l.b16 %v633
    %v1310 = vunpack.c.h.b16 %v633
    %v1311 = vunpack.c.l.b16 %v634
    %v1312 = vunpack.c.h.b16 %v634
    %v1313 = vunpack.c.l.b16 %v635
    %v1314 = vunpack.c.h.b16 %v635
    %v1315 = vunpack.c.l.b16 %v636
    %v1316 = vunpack.c.h.b16 %v636
    %v1317 = vunpack.c.l.b16 %v637
    %v1318 = vunpack.c.h.b16 %v637
    %v1319 = vunpack.c.l.b16 %v638
    %v1320 = vunpack.c.h.b16 %v638
    %v1321 = vunpack.c.l.b16 %v639
    %v1322 = vunpack.c.h.b16 %v639
    %v1323 = vunpack.c.l.b16 %v640
    %v1324 = vunpack.c.h.b16 %v640
    %v1325 = vunpack.c.l.b16 %v641
    %v1326 = vunpack.c.h.b16 %v641
    %v1327 = vunpack.c.l.b16 %v642
    %v1328 = vunpack.c.h.b16 %v642
    %v1329 = vunpack.c.l.b16 %v643
    %v1330 = vunpack.c.h.b16 %v643
    %v1331 = vunpack.c.l.b16 %v644
    %v1332 = vunpack.c.h.b16 %v644
    %v1333 = vunpack.c.l.b16 %v645
    %v1334 = vunpack.c.h.b16 %v645
    %v1335 = vunpack.c.l.b16 %v646
    %v1336 = vunpack.c.h.b16 %v646
    %v1337 = vunpack.c.l.b16 %v647
    %v1338 = vunpack.c.h.b16 %v647
    %v1339 = vunpack.c.l.b16 %v648
    %v1340 = vunpack.c.h.b16 %v648
    %v1341 = vunpack.c.l.b16 %v649
    %v1342 = vunpack.c.h.b16 %v649
    %v1343 = vunpack.c.l.b16 %v650
    %v1344 = vunpack.c.h.b16 %v650
    %v1345 = vunpack.c.l.b16 %v651
    %v1346 = vunpack.c.h.b16 %v651
    %v1347 = vunpack.c.l.b16 %v652
    %v1348 = vunpack.c.h.b16 %v652
    %v1349 = vunpack.c.l.b16 %v653
    %v1350 = vunpack.c.h.b16 %v653
    %v1351 = vunpack.c.l.b16 %v654
    %v1352 = vunpack.c.h.b16 %v654
    %v1353 = vunpack.c.l.b16 %v655
    %v1354 = vunpack.c.h.b16 %v655
    %v1355 = vunpack.c.l.b16 %v656
    %v1356 = vunpack.c.h.b16 %v656
    %v1357 = vunpack.c.l.b16 %v657
    %v1358 = vunpack.c.h.b16 %v657
    %v1359 = vunpack.c.l.b16 %v658
    %v1360 = vunpack.c.h.b16 %v658
    %v1361 = vunpack.c.l.b16 %v659
    %v1362 = vunpack.c.h.b16 %v659
    %v1363 = vunpack.c.l.b16 %v660
    %v1364 = vunpack.c.h.b16 %v660
    %v1365 = vunpack.c.l.b16 %v661
    %v1366 = vunpack.c.h.b16 %v661
    %v1367 = vunpack.c.l.b16 %v662
    %v1368 = vunpack.c.h.b16 %v662
    %v1369 = vunpack.c.l.b16 %v663
    %v1370 = vunpack.c.h.b16 %v663
    %v1371 = vunpack.c.l.b16 %v664
    %v1372 = vunpack.c.h.b16 %v664
    %v1373 = vunpack.c.l.b16 %v665
    %v1374 = vunpack.c.h.b16 %v665
    %v1375 = vunpack.c.l.b16 %v666
    %v1376 = vunpack.c.h.b16 %v666
    %v1377 = vunpack.c.l.b16 %v667
    %v1378 = vunpack.c.h.b16 %v667
    %v1379 = vunpack.c.l.b16 %v668
    %v1380 = vunpack.c.h.b16 %v668
    %v1381 = vunpack.c.l.b16 %v669
    %v1382 = vunpack.c.h.b16 %v669
    %v1383 = vunpack.c.l.b16 %v670
    %v1384 = vunpack.c.h.b16 %v670
    %v1385 = vunpack.c.l.b16 %v671
    %v1386 = vunpack.c.h.b16 %v671
    %v1387 = vunpack.c.l.b16 %v672
    %v1388 = vunpack.c.h.b16 %v672
    %v1389 = vunpack.c.l.b16 %v673
    %v1390 = vunpack.c.h.b16 %v673
    %v1391 = vunpack.c.l.b16 %v674
    %v1392 = vunpack.c.h.b16 %v674
    %v1393 = vunpack.c.l.b16 %v675
    %v1394 = vunpack.c.h.b16 %v675
    %v1395 = vunpack.c.l.b16 %v676
    %v1396 = vunpack.c.h.b16 %v676
    %v1397 = vunpack.c.l.b16 %v677
    %v1398 = vunpack.c.h.b16 %v677
    %v1399 = vunpack.c.l.b16 %v678
    %v1400 = vunpack.c.h.b16 %v678
    %v1401 = vunpack.c.l.b16 %v679
    %v1402 = vunpack.c.h.b16 %v679
    %v1403 = vunpack.c.l.b16 %v680
    %v1404 = vunpack.c.h.b16 %v680
    %v1405 = vunpack.c.l.b16 %v681
    %v1406 = vunpack.c.h.b16 %v681
    %v1407 = vunpack.c.l.b16 %v682
    %v1408 = vunpack.c.h.b16 %v682
    %v1409 = vunpack.c.l.b16 %v683
    %v1410 = vunpack.c.h.b16 %v683
    %v1411 = vunpack.c.l.b16 %v684
    %v1412 = vunpack.c.h.b16 %v684
    %v1413 = vunpack.c.l.b16 %v685
    %v1414 = vunpack.c.h.b16 %v685
    %v1415 = vunpack.c.l.b16 %v686
    %v1416 = vunpack.c.h.b16 %v686
    %v1417 = vunpack.c.l.b16 %v687
    %v1418 = vunpack.c.h.b16 %v687
    %v1419 = vunpack.c.l.b16 %v688
    %v1420 = vunpack.c.h.b16 %v688
    %v1421 = vunpack.c.l.b16 %v689
    %v1422 = vunpack.c.h.b16 %v689
    %v1423 = vunpack.c.l.b16 %v690
    %v1424 = vunpack.c.h.b16 %v690
    %v1425 = vunpack.c.l.b16 %v691
    %v1426 = vunpack.c.h.b16 %v691
    %v1427 = vunpack.c.l.b16 %v692
    %v1428 = vunpack.c.h.b16 %v692
    %v1429 = vunpack.c.l.b16 %v693
    %v1430 = vunpack.c.h.b16 %v693
    %v1431 = vunpack.c.l.b16 %v694
    %v1432 = vunpack.c.h.b16 %v694
    %v1433 = vunpack.c.l.b16 %v695
    %v1434 = vunpack.c.h.b16 %v695
    %v1435 = vunpack.c.l.b16 %v696
    %v1436 = vunpack.c.h.b16 %v696
    %v1437 = vunpack.c.l.b16 %v697
    %v1438 = vunpack.c.h.b16 %v697
    %v1439 = vunpack.c.l.b16 %v698
    %v1440 = vunpack.c.h.b16 %v698
    %v1441 = vunpack.c.l.b16 %v699
    %v1442 = vunpack.c.h.b16 %v699
    %v1443 = vunpack.c.l.b16 %v700
    %v1444 = vunpack.c.h.b16 %v700
    %v1445 = vunpack.c.l.b16 %v701
    %v1446 = vunpack.c.h.b16 %v701
    %v1447 = vunpack.c.l.b16 %v702
    %v1448 = vunpack.c.h.b16 %v702
    %v1449 = vunpack.c.l.b16 %v703
    %v1450 = vunpack.c.h.b16 %v703
    %v1451 = vunpack.c.l.b16 %v704
    %v1452 = vunpack.c.h.b16 %v704
    %v1453 = vunpack.c.l.b16 %v705
    %v1454 = vunpack.c.h.b16 %v705
    %v1455 = vunpack.c.l.b16 %v706
    %v1456 = vunpack.c.h.b16 %v706
    %v1457 = vunpack.c.l.b16 %v707
    %v1458 = vunpack.c.h.b16 %v707
    %v1459 = vunpack.c.l.b16 %v708
    %v1460 = vunpack.c.h.b16 %v708
    %v1461 = vunpack.c.l.b16 %v709
    %v1462 = vunpack.c.h.b16 %v709
    %v1463 = vunpack.c.l.b16 %v710
    %v1464 = vunpack.c.h.b16 %v710
    %v1465 = vunpack.c.l.b16 %v711
    %v1466 = vunpack.c.h.b16 %v711
    %v1467 = vunpack.c.l.b16 %v712
    %v1468 = vunpack.c.h.b16 %v712
    %v1469 = vunpack.c.l.b16 %v713
    %v1470 = vunpack.c.h.b16 %v713
    %v1471 = vunpack.c.l.b16 %v714
    %v1472 = vunpack.c.h.b16 %v714
    %v1473 = vunpack.c.l.b16 %v715
    %v1474 = vunpack.c.h.b16 %v715
    %v1475 = vunpack.c.l.b16 %v716
    %v1476 = vunpack.c.h.b16 %v716
    %v1477 = vunpack.c.l.b16 %v717
    %v1478 = vunpack.c.h.b16 %v717
    %v1479 = vunpack.c.l.b16 %v718
    %v1480 = vunpack.c.h.b16 %v718
    %v1481 = vunpack.c.l.b16 %v719
    %v1482 = vunpack.c.h.b16 %v719
    %v1483 = vunpack.c.l.b16 %v720
    %v1484 = vunpack.c.h.b16 %v720
    %v1485 = vunpack.c.l.b16 %v721
    %v1486 = vunpack.c.h.b16 %v721
    %v1487 = vunpack.c.l.b16 %v722
    %v1488 = vunpack.c.h.b16 %v722
    %v1489 = vunpack.c.l.b16 %v723
    %v1490 = vunpack.c.h.b16 %v723
    %v1491 = vunpack.c.l.b16 %v724
    %v1492 = vunpack.c.h.b16 %v724
    %v1493 = vunpack.c.l.b16 %v725
    %v1494 = vunpack.c.h.b16 %v725
    %v1495 = vunpack.c.l.b16 %v726
    %v1496 = vunpack.c.h.b16 %v726
    %v1497 = vunpack.c.l.b16 %v727
    %v1498 = vunpack.c.h.b16 %v727
    %v1499 = vunpack.c.l.b16 %v728
    %v1500 = vunpack.c.h.b16 %v728
    %v1501 = vunpack.c.l.b16 %v729
    %v1502 = vunpack.c.h.b16 %v729
    %v1503 = vunpack.c.l.b16 %v730
    %v1504 = vunpack.c.h.b16 %v730
    %v1505 = vunpack.c.l.b16 %v731
    %v1506 = vunpack.c.h.b16 %v731
    %v1507 = vunpack.c.l.b16 %v732
    %v1508 = vunpack.c.h.b16 %v732
    %v1509 = vunpack.c.l.b16 %v733
    %v1510 = vunpack.c.h.b16 %v733
    %v1511 = vunpack.c.l.b16 %v734
    %v1512 = vunpack.c.h.b16 %v734
    %v1513 = vunpack.c.l.b16 %v735
    %v1514 = vunpack.c.h.b16 %v735
    %v1515 = vunpack.c.l.b16 %v736
    %v1516 = vunpack.c.h.b16 %v736
    %v1517 = vunpack.c.l.b16 %v737
    %v1518 = vunpack.c.h.b16 %v737
    %v1519 = vunpack.c.l.b16 %v738
    %v1520 = vunpack.c.h.b16 %v738
    %v1521 = vunpack.c.l.b16 %v739
    %v1522 = vunpack.c.h.b16 %v739
    %v1523 = vunpack.c.l.b16 %v740
    %v1524 = vunpack.c.h.b16 %v740
    %v1525 = vunpack.c.l.b16 %v741
    %v1526 = vunpack.c.h.b16 %v741
    %v1527 = vunpack.c.l.b16 %v742
    %v1528 = vunpack.c.h.b16 %v742
    %v1529 = vunpack.c.l.b16 %v743
    %v1530 = vunpack.c.h.b16 %v743
    %v1531 = vunpack.c.l.b16 %v744
    %v1532 = vunpack.c.h.b16 %v744
    %v1533 = vunpack.c.l.b16 %v745
    %v1534 = vunpack.c.h.b16 %v745
    %v1535 = vunpack.c.l.b16 %v746
    %v1536 = vunpack.c.h.b16 %v746
    %v1537 = vunpack.c.l.b16 %v747
    %v1538 = vunpack.c.h.b16 %v747
    %v1539 = vunpack.c.l.b16 %v748
    %v1540 = vunpack.c.h.b16 %v748
    %v1541 = vunpack.c.l.b16 %v749
    %v1542 = vunpack.c.h.b16 %v749
    %v1543 = vunpack.c.l.b16 %v750
    %v1544 = vunpack.c.h.b16 %v750
    %v1545 = vunpack.c.l.b16 %v751
    %v1546 = vunpack.c.h.b16 %v751
    %v1547 = vunpack.c.l.b16 %v752
    %v1548 = vunpack.c.h.b16 %v752
    %v1549 = vunpack.c.l.b16 %v753
    %v1550 = vunpack.c.h.b16 %v753
    %v1551 = vunpack.c.l.b16 %v754
    %v1552 = vunpack.c.h.b16 %v754
    %v1553 = vunpack.c.l.b16 %v755
    %v1554 = vunpack.c.h.b16 %v755
    %v1555 = vunpack.c.l.b16 %v756
    %v1556 = vunpack.c.h.b16 %v756
    %v1557 = vunpack.c.l.b16 %v757
    %v1558 = vunpack.c.h.b16 %v757
    %v1559 = vunpack.c.l.b16 %v758
    %v1560 = vunpack.c.h.b16 %v758
    %v1561 = vunpack.c.l.b16 %v759
    %v1562 = vunpack.c.h.b16 %v759
    %v1563 = vunpack.c.l.b16 %v760
    %v1564 = vunpack.c.h.b16 %v760
    %v1565 = vunpack.c.l.b16 %v761
    %v1566 = vunpack.c.h.b16 %v761
    %v1567 = vunpack.c.l.b16 %v762
    %v1568 = vunpack.c.h.b16 %v762
    %v1569 = vunpack.c.l.b16 %v763
    %v1570 = vunpack.c.h.b16 %v763
    %v1571 = vunpack.c.l.b16 %v764
    %v1572 = vunpack.c.h.b16 %v764
    %v1573 = vunpack.c.l.b16 %v765
    %v1574 = vunpack.c.h.b16 %v765
    %v1575 = vunpack.c.l.b16 %v766
    %v1576 = vunpack.c.h.b16 %v766
    %v1577 = vunpack.c.l.b16 %v767
    %v1578 = vunpack.c.h.b16 %v767
    %v1579 = vunpack.c.l.b16 %v768
    %v1580 = vunpack.c.h.b16 %v768
    %v1581 = vunpack.c.l.b16 %v769
    %v1582 = vunpack.c.h.b16 %v769
    %v1583 = vunpack.c.l.b16 %v770
    %v1584 = vunpack.c.h.b16 %v770
    %v1585 = vunpack.c.l.b16 %v771
    %v1586 = vunpack.c.h.b16 %v771
    %v1587 = vunpack.c.l.b16 %v772
    %v1588 = vunpack.c.h.b16 %v772
    %v1589 = vunpack.c.l.b16 %v773
    %v1590 = vunpack.c.h.b16 %v773
    %v1591 = vunpack.c.l.b16 %v774
    %v1592 = vunpack.c.h.b16 %v774
    %v1593 = vunpack.c.l.b16 %v775
    %v1594 = vunpack.c.h.b16 %v775
    %v1595 = vunpack.c.l.b16 %v776
    %v1596 = vunpack.c.h.b16 %v776
    %v1597 = vunpack.c.l.b16 %v777
    %v1598 = vunpack.c.h.b16 %v777
    %v1599 = vunpack.c.l.b16 %v778
    %v1600 = vunpack.c.h.b16 %v778
    %v1601 = vunpack.c.l.b16 %v779
    %v1602 = vunpack.c.h.b16 %v779
    %v1603 = vunpack.c.l.b16 %v780
    %v1604 = vunpack.c.h.b16 %v780
    %v1605 = vunpack.c.l.b16 %v781
    %v1606 = vunpack.c.h.b16 %v781
    %v1607 = vunpack.c.l.b16 %v782
    %v1608 = vunpack.c.h.b16 %v782
    %v1609 = vunpack.c.l.b16 %v783
    %v1610 = vunpack.c.h.b16 %v783
    %v1611 = vunpack.c.l.b16 %v784
    %v1612 = vunpack.c.h.b16 %v784
    %v1613 = vunpack.c.l.b16 %v785
    %v1614 = vunpack.c.h.b16 %v785
    %v1615 = vunpack.c.l.b16 %v786
    %v1616 = vunpack.c.h.b16 %v786
    %v1617 = vunpack.c.l.b16 %v787
    %v1618 = vunpack.c.h.b16 %v787
    %v1619 = vunpack.c.l.b16 %v788
    %v1620 = vunpack.c.h.b16 %v788
    %v1621 = vunpack.c.l.b16 %v789
    %v1622 = vunpack.c.h.b16 %v789
    %v1623 = vunpack.c.l.b16 %v790
    %v1624 = vunpack.c.h.b16 %v790
    %v1625 = vunpack.c.l.b16 %v791
    %v1626 = vunpack.c.h.b16 %v791
    %v1627 = vunpack.c.l.b16 %v792
    %v1628 = vunpack.c.h.b16 %v792
    %v1629 = vunpack.c.l.b16 %v793
    %v1630 = vunpack.c.h.b16 %v793
    %v1631 = vunpack.c.l.b16 %v794
    %v1632 = vunpack.c.h.b16 %v794
    %v1633 = vunpack.c.l.b16 %v795
    %v1634 = vunpack.c.h.b16 %v795
    %v1635 = vunpack.c.l.b16 %v796
    %v1636 = vunpack.c.h.b16 %v796
    %v1637 = vunpack.c.l.b16 %v797
    %v1638 = vunpack.c.h.b16 %v797
    %v1639 = vunpack.c.l.b16 %v798
    %v1640 = vunpack.c.h.b16 %v798
    %v1641 = vunpack.c.l.b16 %v799
    %v1642 = vunpack.c.h.b16 %v799
    %v1643 = vunpack.c.l.b16 %v800
    %v1644 = vunpack.c.h.b16 %v800
    %v1645 = vunpack.c.l.b16 %v801
    %v1646 = vunpack.c.h.b16 %v801
    %v1647 = vunpack.c.l.b16 %v802
    %v1648 = vunpack.c.h.b16 %v802
    %v1649 = vunpack.c.l.b16 %v803
    %v1650 = vunpack.c.h.b16 %v803
    %v1651 = vunpack.c.l.b16 %v804
    %v1652 = vunpack.c.h.b16 %v804
    %v1653 = vunpack.c.l.b16 %v805
    %v1654 = vunpack.c.h.b16 %v805
    %v1655 = vunpack.c.l.b16 %v806
    %v1656 = vunpack.c.h.b16 %v806
    %v1657 = vunpack.c.l.b16 %v807
    %v1658 = vunpack.c.h.b16 %v807
    %v1659 = vunpack.c.l.b16 %v808
    %v1660 = vunpack.c.h.b16 %v808
    %v1661 = vunpack.c.l.b16 %v809
    %v1662 = vunpack.c.h.b16 %v809
    %v1663 = vunpack.c.l.b16 %v810
    %v1664 = vunpack.c.h.b16 %v810
    %v1665 = vunpack.c.l.b16 %v811
    %v1666 = vunpack.c.h.b16 %v811
    %v1667 = vunpack.c.l.b16 %v812
    %v1668 = vunpack.c.h.b16 %v812
    %v1669 = vunpack.c.l.b16 %v813
    %v1670 = vunpack.c.h.b16 %v813
    %v1671 = vunpack.c.l.b16 %v814
    %v1672 = vunpack.c.h.b16 %v814
    %v1673 = vunpack.c.l.b16 %v815
    %v1674 = vunpack.c.h.b16 %v815
    %v1675 = vunpack.c.l.b16 %v816
    %v1676 = vunpack.c.h.b16 %v816
    %v1677 = vunpack.c.l.b16 %v817
    %v1678 = vunpack.c.h.b16 %v817
    %v1679 = vunpack.c.l.b16 %v818
    %v1680 = vunpack.c.h.b16 %v818
    %v1681 = vunpack.c.l.b16 %v819
    %v1682 = vunpack.c.h.b16 %v819
    %v1683 = vunpack.c.l.b16 %v820
    %v1684 = vunpack.c.h.b16 %v820
    %v1685 = vunpack.c.l.b16 %v821
    %v1686 = vunpack.c.h.b16 %v821
    %v1687 = vunpack.c.l.b16 %v822
    %v1688 = vunpack.c.h.b16 %v822
    %v1689 = vunpack.c.l.b16 %v823
    %v1690 = vunpack.c.h.b16 %v823
    %v1691 = vunpack.c.l.b16 %v824
    %v1692 = vunpack.c.h.b16 %v824
    %v1693 = vunpack.c.l.b16 %v825
    %v1694 = vunpack.c.h.b16 %v825
    %v1695 = vunpack.c.l.b16 %v826
    %v1696 = vunpack.c.h.b16 %v826
    %v1697 = vunpack.c.l.b16 %v827
    %v1698 = vunpack.c.h.b16 %v827
    %v1699 = vunpack.c.l.b16 %v828
    %v1700 = vunpack.c.h.b16 %v828
    %v1701 = vunpack.c.l.b16 %v829
    %v1702 = vunpack.c.h.b16 %v829
    %v1703 = vunpack.c.l.b16 %v830
    %v1704 = vunpack.c.h.b16 %v830
    %v1705 = vunpack.c.l.b16 %v831
    %v1706 = vunpack.c.h.b16 %v831
    %v1707 = vunpack.c.l.b16 %v832
    %v1708 = vunpack.c.h.b16 %v832
    %v1709 = vunpack.c.l.b16 %v833
    %v1710 = vunpack.c.h.b16 %v833
    %v1711 = vunpack.c.l.b16 %v834
    %v1712 = vunpack.c.h.b16 %v834
    %v1713 = vpack.c.b16 %v1143, %v1137
    %v1714 = vpack.c.b16 %v1144, %v1138
    %v1715 = vpack.c.b16 %v1145, %v1139
    %v1716 = vpack.c.b16 %v1146, %v1140
    %v1717 = vpack.c.b16 %v1147, %v1141
    %v1718 = vpack.c.b16 %v1148, %v1142
    %v1719 = vpack.c.b16 %v1155, %v1149
    %v1720 = vpack.c.b16 %v1156, %v1150
    %v1721 = vpack.c.b16 %v1157, %v1151
    %v1722 = vpack.c.b16 %v1158, %v1152
    %v1723 = vpack.c.b16 %v1159, %v1153
    %v1724 = vpack.c.b16 %v1160, %v1154
    %v1725 = vpack.c.b16 %v1167, %v1161
    %v1726 = vpack.c.b16 %v1168, %v1162
    %v1727 = vpack.c.b16 %v1169, %v1163
    %v1728 = vpack.c.b16 %v1170, %v1164
    %v1729 = vpack.c.b16 %v1171, %v1165
    %v1730 = vpack.c.b16 %v1172, %v1166
    %v1731 = vpack.c.b16 %v1179, %v1173
    %v1732 = vpack.c.b16 %v1180, %v1174
    %v1733 = vpack.c.b16 %v1181, %v1175
    %v1734 = vpack.c.b16 %v1182, %v1176
    %v1735 = vpack.c.b16 %v1183, %v1177
    %v1736 = vpack.c.b16 %v1184, %v1178
    %v1737 = vpack.c.b16 %v1191, %v1185
    %v1738 = vpack.c.b16 %v1192, %v1186
    %v1739 = vpack.c.b16 %v1193, %v1187
    %v1740 = vpack.c.b16 %v1194, %v1188
    %v1741 = vpack.c.b16 %v1195, %v1189
    %v1742 = vpack.c.b16 %v1196, %v1190
    %v1743 = vpack.c.b16 %v1203, %v1197
    %v1744 = vpack.c.b16 %v1204, %v1198
    %v1745 = vpack.c.b16 %v1205, %v1199
    %v1746 = vpack.c.b16 %v1206, %v1200
    %v1747 = vpack.c.b16 %v1207, %v1201
    %v1748 = vpack.c.b16 %v1208, %v1202
    %v1749 = vpack.c.b16 %v1215, %v1209
    %v1750 = vpack.c.b16 %v1216, %v1210
    %v1751 = vpack.c.b16 %v1217, %v1211
    %v1752 = vpack.c.b16 %v1218, %v1212
    %v1753 = vpack.c.b16 %v1219, %v1213
    %v1754 = vpack.c.b16 %v1220, %v1214
    %v1755 = vpack.c.b16 %v1227, %v1221
    %v1756 = vpack.c.b16 %v1228, %v1222
    %v1757 = vpack.c.b16 %v1229, %v1223
    %v1758 = vpack.c.b16 %v1230, %v1224
    %v1759 = vpack.c.b16 %v1231, %v1225
    %v1760 = vpack.c.b16 %v1232, %v1226
    %v1761 = vpack.c.b16 %v1239, %v1233
    %v1762 = vpack.c.b16 %v1240, %v1234
    %v1763 = vpack.c.b16 %v1241, %v1235
    %v1764 = vpack.c.b16 %v1242, %v1236
    %v1765 = vpack.c.b16 %v1243, %v1237
    %v1766 = vpack.c.b16 %v1244, %v1238
    %v1767 = vpack.c.b16 %v1251, %v1245
    %v1768 = vpack.c.b16 %v1252, %v1246
    %v1769 = vpack.c.b16 %v1253, %v1247
    %v1770 = vpack.c.b16 %v1254, %v1248
    %v1771 = vpack.c.b16 %v1255, %v1249
    %v1772 = vpack.c.b16 %v1256, %v1250
    %v1773 = vpack.c.b16 %v1263, %v1257
    %v1774 = vpack.c.b16 %v1264, %v1258
    %v1775 = vpack.c.b16 %v1265, %v1259
    %v1776 = vpack.c.b16 %v1266, %v1260
    %v1777 = vpack.c.b16 %v1267, %v1261
    %v1778 = vpack.c.b16 %v1268, %v1262
    %v1779 = vpack.c.b16 %v1275, %v1269
    %v1780 = vpack.c.b16 %v1276, %v1270
    %v1781 = vpack.c.b16 %v1277, %v1271
    %v1782 = vpack.c.b16 %v1278, %v1272
    %v1783 = vpack.c.b16 %v1279, %v1273
    %v1784 = vpack.c.b16 %v1280, %v1274
    %v1785 = vpack.c.b16 %v1287, %v1281
    %v1786 = vpack.c.b16 %v1288, %v1282
    %v1787 = vpack.c.b16 %v1289, %v1283
    %v1788 = vpack.c.b16 %v1290, %v1284
    %v1789 = vpack.c.b16 %v1291, %v1285
    %v1790 = vpack.c.b16 %v1292, %v1286
    %v1791 = vpack.c.b16 %v1299, %v1293
    %v1792 = vpack.c.b16 %v1300, %v1294
    %v1793 = vpack.c.b16 %v1301, %v1295
    %v1794 = vpack.c.b16 %v1302, %v1296
    %v1795 = vpack.c.b16 %v1303, %v1297
    %v1796 = vpack.c.b16 %v1304, %v1298
    %v1797 = vpack.c.b16 %v1311, %v1305
    %v1798 = vpack.c.b16 %v1312, %v1306
    %v1799 = vpack.c.b16 %v1313, %v1307
    %v1800 = vpack.c.b16 %v1314, %v1308
    %v1801 = vpack.c.b16 %v1315, %v1309
    %v1802 = vpack.c.b16 %v1316, %v1310
    %v1803 = vpack.c.b16 %v1323, %v1317
    %v1804 = vpack.c.b16 %v1324, %v1318
    %v1805 = vpack.c.b16 %v1325, %v1319
    %v1806 = vpack.c.b16 %v1326, %v1320
    %v1807 = vpack.c.b16 %v1327, %v1321
    %v1808 = vpack.c.b16 %v1328, %v1322
    %v1809 = vpack.c.b16 %v1335, %v1329
    %v1810 = vpack.c.b16 %v1336, %v1330
    %v1811 = vpack.c.b16 %v1337, %v1331
    %v1812 = vpack.c.b16 %v1338, %v1332
    %v1813 = vpack.c.b16 %v1339, %v1333
    %v1814 = vpack.c.b16 %v1340, %v1334
    %v1815 = vpack.c.b16 %v1347, %v1341
    %v1816 = vpack.c.b16 %v1348, %v1342
    %v1817 = vpack.c.b16 %v1349, %v1343
    %v1818 = vpack.c.b16 %v1350, %v1344
    %v1819 = vpack.c.b16 %v1351, %v1345
    %v1820 = vpack.c.b16 %v1352, %v1346
    %v1821 = vpack.c.b16 %v1359, %v1353
    %v1822 = vpack.c.b16 %v1360, %v1354
    %v1823 = vpack.c.b16 %v1361, %v1355
    %v1824 = vpack.c.b16 %v1362, %v1356
    %v1825 = vpack.c.b16 %v1363, %v1357
    %v1826 = vpack.c.b16 %v1364, %v1358
    %v1827 = vpack.c.b16 %v1371, %v1365
    %v1828 = vpack.c.b16 %v1372, %v1366
    %v1829 = vpack.c.b16 %v1373, %v1367
    %v1830 = vpack.c.b16 %v1374, %v1368
    %v1831 = vpack.c.b16 %v1375, %v1369
    %v1832 = vpack.c.b16 %v1376, %v1370
    %v1833 = vpack.c.b16 %v1383, %v1377
    %v1834 = vpack.c.b16 %v1384, %v1378
    %v1835 = vpack.c.b16 %v1385, %v1379
    %v1836 = vpack.c.b16 %v1386, %v1380
    %v1837 = vpack.c.b16 %v1387, %v1381
    %v1838 = vpack.c.b16 %v1388, %v1382
    %v1839 = vpack.c.b16 %v1395, %v1389
    %v1840 = vpack.c.b16 %v1396, %v1390
    %v1841 = vpack.c.b16 %v1397, %v1391
    %v1842 = vpack.c.b16 %v1398, %v1392
    %v1843 = vpack.c.b16 %v1399, %v1393
    %v1844 = vpack.c.b16 %v1400, %v1394
    %v1845 = vpack.c.b16 %v1407, %v1401
    %v1846 = vpack.c.b16 %v1408, %v1402
    %v1847 = vpack.c.b16 %v1409, %v1403
    %v1848 = vpack.c.b16 %v1410, %v1404
    %v1849 = vpack.c.b16 %v1411, %v1405
    %v1850 = vpack.c.b16 %v1412, %v1406
    %v1851 = vpack.c.b16 %v1419, %v1413
    %v1852 = vpack.c.b16 %v1420, %v1414
    %v1853 = vpack.c.b16 %v1421, %v1415
    %v1854 = vpack.c.b16 %v1422, %v1416
    %v1855 = vpack.c.b16 %v1423, %v1417
    %v1856 = vpack.c.b16 %v1424, %v1418
    %v1857 = vpack.c.b16 %v1431, %v1425
    %v1858 = vpack.c.b16 %v1432, %v1426
    %v1859 = vpack.c.b16 %v1433, %v1427
    %v1860 = vpack.c.b16 %v1434, %v1428
    %v1861 = vpack.c.b16 %v1435, %v1429
    %v1862 = vpack.c.b16 %v1436, %v1430
    %v1863 = vpack.c.b16 %v1443, %v1437
    %v1864 = vpack.c.b16 %v1444, %v1438
    %v1865 = vpack.c.b16 %v1445, %v1439
    %v1866 = vpack.c.b16 %v1446, %v1440
    %v1867 = vpack.c.b16 %v1447, %v1441
    %v1868 = vpack.c.b16 %v1448, %v1442
    %v1869 = vpack.c.b16 %v1455, %v1449
    %v1870 = vpack.c.b16 %v1456, %v1450
    %v1871 = vpack.c.b16 %v1457, %v1451
    %v1872 = vpack.c.b16 %v1458, %v1452
    %v1873 = vpack.c.b16 %v1459, %v1453
    %v1874 = vpack.c.b16 %v1460, %v1454
    %v1875 = vpack.c.b16 %v1467, %v1461
    %v1876 = vpack.c.b16 %v1468, %v1462
    %v1877 = vpack.c.b16 %v1469, %v1463
    %v1878 = vpack.c.b16 %v1470, %v1464
    %v1879 = vpack.c.b16 %v1471, %v1465
    %v1880 = vpack.c.b16 %v1472, %v1466
    %v1881 = vpack.c.b16 %v1479, %v1473
    %v1882 = vpack.c.b16 %v1480, %v1474
    %v1883 = vpack.c.b16 %v1481, %v1475
    %v1884 = vpack.c.b16 %v1482, %v1476
    %v1885 = vpack.c.b16 %v1483, %v1477
    %v1886 = vpack.c.b16 %v1484, %v1478
    %v1887 = vpack.c.b16 %v1491, %v1485
    %v1888 = vpack.c.b16 %v1492, %v1486
    %v1889 = vpack.c.b16 %v1493, %v1487
    %v1890 = vpack.c.b16 %v1494, %v1488
    %v1891 = vpack.c.b16 %v1495, %v1489
    %v1892 = vpack.c.b16 %v1496, %v1490
    %v1893 = vpack.c.b16 %v1503, %v1497
    %v1894 = vpack.c.b16 %v1504, %v1498
    %v1895 = vpack.c.b16 %v1505, %v1499
    %v1896 = vpack.c.b16 %v1506, %v1500
    %v1897 = vpack.c.b16 %v1507, %v1501
    %v1898 = vpack.c.b16 %v1508, %v1502
    %v1899 = vpack.c.b16 %v1515, %v1509
    %v1900 = vpack.c.b16 %v1516, %v1510
    %v1901 = vpack.c.b16 %v1517, %v1511
    %v1902 = vpack.c.b16 %v1518, %v1512
    %v1903 = vpack.c.b16 %v1519, %v1513
    %v1904 = vpack.c.b16 %v1520, %v1514
    %v1905 = vpack.c.b16 %v1527, %v1521
    %v1906 = vpack.c.b16 %v1528, %v1522
    %v1907 = vpack.c.b16 %v1529, %v1523
    %v1908 = vpack.c.b16 %v1530, %v1524
    %v1909 = vpack.c.b16 %v1531, %v1525
    %v1910 = vpack.c.b16 %v1532, %v1526
    %v1911 = vpack.c.b16 %v1539, %v1533
    %v1912 = vpack.c.b16 %v1540, %v1534
    %v1913 = vpack.c.b16 %v1541, %v1535
    %v1914 = vpack.c.b16 %v1542, %v1536
    %v1915 = vpack.c.b16 %v1543, %v1537
    %v1916 = vpack.c.b16 %v1544, %v1538
    %v1917 = vpack.c.b16 %v1551, %v1545
    %v1918 = vpack.c.b16 %v1552, %v1546
    %v1919 = vpack.c.b16 %v1553, %v1547
    %v1920 = vpack.c.b16 %v1554, %v1548
    %v1921 = vpack.c.b16 %v1555, %v1549
    %v1922 = vpack.c.b16 %v1556, %v1550
    %v1923 = vpack.c.b16 %v1563, %v1557
    %v1924 = vpack.c.b16 %v1564, %v1558
    %v1925 = vpack.c.b16 %v1565, %v1559
    %v1926 = vpack.c.b16 %v1566, %v1560
    %v1927 = vpack.c.b16 %v1567, %v1561
    %v1928 = vpack.c.b16 %v1568, %v1562
    %v1929 = vpack.c.b16 %v1575, %v1569
    %v1930 = vpack.c.b16 %v1576, %v1570
    %v1931 = vpack.c.b16 %v1577, %v1571
    %v1932 = vpack.c.b16 %v1578, %v1572
    %v1933 = vpack.c.b16 %v1579, %v1573
    %v1934 = vpack.c.b16 %v1580, %v1574
    %v1935 = vpack.c.b16 %v1587, %v1581
    %v1936 = vpack.c.b16 %v1588, %v1582
    %v1937 = vpack.c.b16 %v1589, %v1583
    %v1938 = vpack.c.b16 %v1590, %v1584
    %v1939 = vpack.c.b16 %v1591, %v1585
    %v1940 = vpack.c.b16 %v1592, %v1586
    %v1941 = vpack.c.b16 %v1599, %v1593
    %v1942 = vpack.c.b16 %v1600, %v1594
    %v1943 = vpack.c.b16 %v1601, %v1595
    %v1944 = vpack.c.b16 %v1602, %v1596
    %v1945 = vpack.c.b16 %v1603, %v1597
    %v1946 = vpack.c.b16 %v1604, %v1598
    %v1947 = vpack.c.b16 %v1611, %v1605
    %v1948 = vpack.c.b16 %v1612, %v1606
    %v1949 = vpack.c.b16 %v1613, %v1607
    %v1950 = vpack.c.b16 %v1614, %v1608
    %v1951 = vpack.c.b16 %v1615, %v1609
    %v1952 = vpack.c.b16 %v1616, %v1610
    %v1953 = vpack.c.b16 %v1623, %v1617
    %v1954 = vpack.c.b16 %v1624, %v1618
    %v1955 = vpack.c.b16 %v1625, %v1619
    %v1956 = vpack.c.b16 %v1626, %v1620
    %v1957 = vpack.c.b16 %v1627, %v1621
    %v1958 = vpack.c.b16 %v1628, %v1622
    %v1959 = vpack.c.b16 %v1635, %v1629
    %v1960 = vpack.c.b16 %v1636, %v1630
    %v1961 = vpack.c.b16 %v1637, %v1631
    %v1962 = vpack.c.b16 %v1638, %v1632
    %v1963 = vpack.c.b16 %v1639, %v1633
    %v1964 = vpack.c.b16 %v1640, %v1634
    %v1965 = vpack.c.b16 %v1647, %v1641
    %v1966 = vpack.c.b16 %v1648, %v1642
    %v1967 = vpack.c.b16 %v1649, %v1643
    %v1968 = vpack.c.b16 %v1650, %v1644
    %v1969 = vpack.c.b16 %v1651, %v1645
    %v1970 = vpack.c.b16 %v1652, %v1646
    %v1971 = vpack.c.b16 %v1659, %v1653
    %v1972 = vpack.c.b16 %v1660, %v1654
    %v1973 = vpack.c.b16 %v1661, %v1655
    %v1974 = vpack.c.b16 %v1662, %v1656
    %v1975 = vpack.c.b16 %v1663, %v1657
    %v1976 = vpack.c.b16 %v1664, %v1658
    %v1977 = vpack.c.b16 %v1671, %v1665
    %v1978 = vpack.c.b16 %v1672, %v1666
    %v1979 = vpack.c.b16 %v1673, %v1667
    %v1980 = vpack.c.b16 %v1674, %v1668
    %v1981 = vpack.c.b16 %v1675, %v1669
    %v1982 = vpack.c.b16 %v1676, %v1670
    %v1983 = vpack.c.b16 %v1683, %v1677
    %v1984 = vpack.c.b16 %v1684, %v1678
    %v1985 = vpack.c.b16 %v1685, %v1679
    %v1986 = vpack.c.b16 %v1686, %v1680
    %v1987 = vpack.c.b16 %v1687, %v1681
    %v1988 = vpack.c.b16 %v1688, %v1682
    %v1989 = vpack.c.b16 %v1695, %v1689
    %v1990 = vpack.c.b16 %v1696, %v1690
    %v1991 = vpack.c.b16 %v1697, %v1691
    %v1992 = vpack.c.b16 %v1698, %v1692
    %v1993 = vpack.c.b16 %v1699, %v1693
    %v1994 = vpack.c.b16 %v1700, %v1694
    %v1995 = vpack.c.b16 %v1707, %v1701
    %v1996 = vpack.c.b16 %v1708, %v1702
    %v1997 = vpack.c.b16 %v1709, %v1703
    %v1998 = vpack.c.b16 %v1710, %v1704
    %v1999 = vpack.c.b16 %v1711, %v1705
    %v2000 = vpack.c.b16 %v1712, %v1706
    %2289 = vmatpush.bf16.msra.mxu0 %v1755
    %2290 = vmatpush.bf16.msra.mxu0 %v1749
    %2291 = vmatpush.bf16.msra.mxu0 %v1743
    %2292 = vmatpush.bf16.msra.mxu0 %v1737
    %2293 = vmatpush.bf16.msra.mxu0 %v1731
    %2294 = vmatpush.bf16.msra.mxu0 %v1725
    %2295 = vmatpush.bf16.msra.mxu0 %v1719
    %2296 = vmatpush.bf16.msra.mxu0 %v1713
    %2297 = vmatmul.bf16.gmra.mxu0 %v541
    %v2298 = vpop.f32.mrf.mxu0
    %v2299 = vadd.f32 %v837, %v2298
    %v2300 = vpop.f32.mrf.mxu0
    %v2301 = vadd.f32 %v837, %v2300
    %2302 = vdwg.mxu0
    %2303 = vmatpush.bf16.msra.mxu0 %v1803
    %2304 = vmatpush.bf16.msra.mxu0 %v1797
    %2305 = vmatpush.bf16.msra.mxu0 %v1791
    %2306 = vmatpush.bf16.msra.mxu0 %v1785
    %2307 = vmatpush.bf16.msra.mxu0 %v1779
    %2308 = vmatpush.bf16.msra.mxu0 %v1773
    %2309 = vmatpush.bf16.msra.mxu0 %v1767
    %2310 = vmatpush.bf16.msra.mxu0 %v1761
    %2311 = vmatmul.bf16.gmra.mxu0 %v542
    %v2312 = vpop.f32.mrf.mxu0
    %v2313 = vadd.f32 %v2299, %v2312
    %v2314 = vpop.f32.mrf.mxu0
    %v2315 = vadd.f32 %v2301, %v2314
    %2316 = vdwg.mxu0
    %2317 = vmatpush.bf16.msra.mxu0 %v1851
    %2318 = vmatpush.bf16.msra.mxu0 %v1845
    %2319 = vmatpush.bf16.msra.mxu0 %v1839
    %2320 = vmatpush.bf16.msra.mxu0 %v1833
    %2321 = vmatpush.bf16.msra.mxu0 %v1827
    %2322 = vmatpush.bf16.msra.mxu0 %v1821
    %2323 = vmatpush.bf16.msra.mxu0 %v1815
    %2324 = vmatpush.bf16.msra.mxu0 %v1809
    %2325 = vmatmul.bf16.gmra.mxu0 %v543
    %v2326 = vpop.f32.mrf.mxu0
    %v2327 = vadd.f32 %v2313, %v2326
    %v2328 = vpop.f32.mrf.mxu0
    %v2329 = vadd.f32 %v2315, %v2328
    %2330 = vdwg.mxu0
    %2331 = vmatpush.bf16.msra.mxu0 %v1899
    %2332 = vmatpush.bf16.msra.mxu0 %v1893
    %2333 = vmatpush.bf16.msra.mxu0 %v1887
    %2334 = vmatpush.bf16.msra.mxu0 %v1881
    %2335 = vmatpush.bf16.msra.mxu0 %v1875
    %2336 = vmatpush.bf16.msra.mxu0 %v1869
    %2337 = vmatpush.bf16.msra.mxu0 %v1863
    %2338 = vmatpush.bf16.msra.mxu0 %v1857
    %2339 = vmatmul.bf16.gmra.mxu0 %v544
    %v2340 = vpop.f32.mrf.mxu0
    %v2341 = vadd.f32 %v2327, %v2340
    %v2342 = vpop.f32.mrf.mxu0
    %v2343 = vadd.f32 %v2329, %v2342
    %2344 = vdwg.mxu0
    %2345 = vmatpush.bf16.msra.mxu0 %v1947
    %2346 = vmatpush.bf16.msra.mxu0 %v1941
    %2347 = vmatpush.bf16.msra.mxu0 %v1935
    %2348 = vmatpush.bf16.msra.mxu0 %v1929
    %2349 = vmatpush.bf16.msra.mxu0 %v1923
    %2350 = vmatpush.bf16.msra.mxu0 %v1917
    %2351 = vmatpush.bf16.msra.mxu0 %v1911
    %2352 = vmatpush.bf16.msra.mxu0 %v1905
    %2353 = vmatmul.bf16.gmra.mxu0 %v545
    %v2354 = vpop.f32.mrf.mxu0
    %v2355 = vadd.f32 %v2341, %v2354
    %v2356 = vpop.f32.mrf.mxu0
    %v2357 = vadd.f32 %v2343, %v2356
    %2358 = vdwg.mxu0
    %2359 = vmatpush.bf16.msra.mxu0 %v1995
    %2360 = vmatpush.bf16.msra.mxu0 %v1989
    %2361 = vmatpush.bf16.msra.mxu0 %v1983
    %2362 = vmatpush.bf16.msra.mxu0 %v1977
    %2363 = vmatpush.bf16.msra.mxu0 %v1971
    %2364 = vmatpush.bf16.msra.mxu0 %v1965
    %2365 = vmatpush.bf16.msra.mxu0 %v1959
    %2366 = vmatpush.bf16.msra.mxu0 %v1953
    %2367 = vmatmul.bf16.gmra.mxu0 %v546
    %v2368 = vpop.f32.mrf.mxu0
    %v2369 = vadd.f32 %v2355, %v2368
    %v2370 = vpop.f32.mrf.mxu0
    %v2371 = vadd.f32 %v2357, %v2370
    %2372 = vdwg.mxu0
    %2373 = vmatpush.bf16.msra.mxu0 %v1756
    %2374 = vmatpush.bf16.msra.mxu0 %v1750
    %2375 = vmatpush.bf16.msra.mxu0 %v1744
    %2376 = vmatpush.bf16.msra.mxu0 %v1738
    %2377 = vmatpush.bf16.msra.mxu0 %v1732
    %2378 = vmatpush.bf16.msra.mxu0 %v1726
    %2379 = vmatpush.bf16.msra.mxu0 %v1720
    %2380 = vmatpush.bf16.msra.mxu0 %v1714
    %2381 = vmatmul.bf16.gmra.mxu0 %v541
    %v2382 = vpop.f32.mrf.mxu0
    %v2383 = vadd.f32 %v838, %v2382
    %v2384 = vpop.f32.mrf.mxu0
    %v2385 = vadd.f32 %v838, %v2384
    %2386 = vdwg.mxu0
    %2387 = vmatpush.bf16.msra.mxu0 %v1804
    %2388 = vmatpush.bf16.msra.mxu0 %v1798
    %2389 = vmatpush.bf16.msra.mxu0 %v1792
    %2390 = vmatpush.bf16.msra.mxu0 %v1786
    %2391 = vmatpush.bf16.msra.mxu0 %v1780
    %2392 = vmatpush.bf16.msra.mxu0 %v1774
    %2393 = vmatpush.bf16.msra.mxu0 %v1768
    %2394 = vmatpush.bf16.msra.mxu0 %v1762
    %2395 = vmatmul.bf16.gmra.mxu0 %v542
    %v2396 = vpop.f32.mrf.mxu0
    %v2397 = vadd.f32 %v2383, %v2396
    %v2398 = vpop.f32.mrf.mxu0
    %v2399 = vadd.f32 %v2385, %v2398
    %2400 = vdwg.mxu0
    %2401 = vmatpush.bf16.msra.mxu0 %v1852
    %2402 = vmatpush.bf16.msra.mxu0 %v1846
    %2403 = vmatpush.bf16.msra.mxu0 %v1840
    %2404 = vmatpush.bf16.msra.mxu0 %v1834
    %2405 = vmatpush.bf16.msra.mxu0 %v1828
    %2406 = vmatpush.bf16.msra.mxu0 %v1822
    %2407 = vmatpush.bf16.msra.mxu0 %v1816
    %2408 = vmatpush.bf16.msra.mxu0 %v1810
    %2409 = vmatmul.bf16.gmra.mxu0 %v543
    %v2410 = vpop.f32.mrf.mxu0
    %v2411 = vadd.f32 %v2397, %v2410
    %v2412 = vpop.f32.mrf.mxu0
    %v2413 = vadd.f32 %v2399, %v2412
    %2414 = vdwg.mxu0
    %2415 = vmatpush.bf16.msra.mxu0 %v1900
    %2416 = vmatpush.bf16.msra.mxu0 %v1894
    %2417 = vmatpush.bf16.msra.mxu0 %v1888
    %2418 = vmatpush.bf16.msra.mxu0 %v1882
    %2419 = vmatpush.bf16.msra.mxu0 %v1876
    %2420 = vmatpush.bf16.msra.mxu0 %v1870
    %2421 = vmatpush.bf16.msra.mxu0 %v1864
    %2422 = vmatpush.bf16.msra.mxu0 %v1858
    %2423 = vmatmul.bf16.gmra.mxu0 %v544
    %v2424 = vpop.f32.mrf.mxu0
    %v2425 = vadd.f32 %v2411, %v2424
    %v2426 = vpop.f32.mrf.mxu0
    %v2427 = vadd.f32 %v2413, %v2426
    %2428 = vdwg.mxu0
    %2429 = vmatpush.bf16.msra.mxu0 %v1948
    %2430 = vmatpush.bf16.msra.mxu0 %v1942
    %2431 = vmatpush.bf16.msra.mxu0 %v1936
    %2432 = vmatpush.bf16.msra.mxu0 %v1930
    %2433 = vmatpush.bf16.msra.mxu0 %v1924
    %2434 = vmatpush.bf16.msra.mxu0 %v1918
    %2435 = vmatpush.bf16.msra.mxu0 %v1912
    %2436 = vmatpush.bf16.msra.mxu0 %v1906
    %2437 = vmatmul.bf16.gmra.mxu0 %v545
    %v2438 = vpop.f32.mrf.mxu0
    %v2439 = vadd.f32 %v2425, %v2438
    %v2440 = vpop.f32.mrf.mxu0
    %v2441 = vadd.f32 %v2427, %v2440
    %2442 = vdwg.mxu0
    %2443 = vmatpush.bf16.msra.mxu0 %v1996
    %2444 = vmatpush.bf16.msra.mxu0 %v1990
    %2445 = vmatpush.bf16.msra.mxu0 %v1984
    %2446 = vmatpush.bf16.msra.mxu0 %v1978
    %2447 = vmatpush.bf16.msra.mxu0 %v1972
    %2448 = vmatpush.bf16.msra.mxu0 %v1966
    %2449 = vmatpush.bf16.msra.mxu0 %v1960
    %2450 = vmatpush.bf16.msra.mxu0 %v1954
    %2451 = vmatmul.bf16.gmra.mxu0 %v546
    %v2452 = vpop.f32.mrf.mxu0
    %v2453 = vadd.f32 %v2439, %v2452
    %v2454 = vpop.f32.mrf.mxu0
    %v2455 = vadd.f32 %v2441, %v2454
    %2456 = vdwg.mxu0
    %2457 = vmatpush.bf16.msra.mxu0 %v1757
    %2458 = vmatpush.bf16.msra.mxu0 %v1751
    %2459 = vmatpush.bf16.msra.mxu0 %v1745
    %2460 = vmatpush.bf16.msra.mxu0 %v1739
    %2461 = vmatpush.bf16.msra.mxu0 %v1733
    %2462 = vmatpush.bf16.msra.mxu0 %v1727
    %2463 = vmatpush.bf16.msra.mxu0 %v1721
    %2464 = vmatpush.bf16.msra.mxu0 %v1715
    %2465 = vmatmul.bf16.gmra.mxu0 %v541
    %v2466 = vpop.f32.mrf.mxu0
    %v2467 = vadd.f32 %v839, %v2466
    %v2468 = vpop.f32.mrf.mxu0
    %v2469 = vadd.f32 %v839, %v2468
    %2470 = vdwg.mxu0
    %2471 = vmatpush.bf16.msra.mxu0 %v1805
    %2472 = vmatpush.bf16.msra.mxu0 %v1799
    %2473 = vmatpush.bf16.msra.mxu0 %v1793
    %2474 = vmatpush.bf16.msra.mxu0 %v1787
    %2475 = vmatpush.bf16.msra.mxu0 %v1781
    %2476 = vmatpush.bf16.msra.mxu0 %v1775
    %2477 = vmatpush.bf16.msra.mxu0 %v1769
    %2478 = vmatpush.bf16.msra.mxu0 %v1763
    %2479 = vmatmul.bf16.gmra.mxu0 %v542
    %v2480 = vpop.f32.mrf.mxu0
    %v2481 = vadd.f32 %v2467, %v2480
    %v2482 = vpop.f32.mrf.mxu0
    %v2483 = vadd.f32 %v2469, %v2482
    %2484 = vdwg.mxu0
    %2485 = vmatpush.bf16.msra.mxu0 %v1853
    %2486 = vmatpush.bf16.msra.mxu0 %v1847
    %2487 = vmatpush.bf16.msra.mxu0 %v1841
    %2488 = vmatpush.bf16.msra.mxu0 %v1835
    %2489 = vmatpush.bf16.msra.mxu0 %v1829
    %2490 = vmatpush.bf16.msra.mxu0 %v1823
    %2491 = vmatpush.bf16.msra.mxu0 %v1817
    %2492 = vmatpush.bf16.msra.mxu0 %v1811
    %2493 = vmatmul.bf16.gmra.mxu0 %v543
    %v2494 = vpop.f32.mrf.mxu0
    %v2495 = vadd.f32 %v2481, %v2494
    %v2496 = vpop.f32.mrf.mxu0
    %v2497 = vadd.f32 %v2483, %v2496
    %2498 = vdwg.mxu0
    %2499 = vmatpush.bf16.msra.mxu0 %v1901
    %2500 = vmatpush.bf16.msra.mxu0 %v1895
    %2501 = vmatpush.bf16.msra.mxu0 %v1889
    %2502 = vmatpush.bf16.msra.mxu0 %v1883
    %2503 = vmatpush.bf16.msra.mxu0 %v1877
    %2504 = vmatpush.bf16.msra.mxu0 %v1871
    %2505 = vmatpush.bf16.msra.mxu0 %v1865
    %2506 = vmatpush.bf16.msra.mxu0 %v1859
    %2507 = vmatmul.bf16.gmra.mxu0 %v544
    %v2508 = vpop.f32.mrf.mxu0
    %v2509 = vadd.f32 %v2495, %v2508
    %v2510 = vpop.f32.mrf.mxu0
    %v2511 = vadd.f32 %v2497, %v2510
    %2512 = vdwg.mxu0
    %2513 = vmatpush.bf16.msra.mxu0 %v1949
    %2514 = vmatpush.bf16.msra.mxu0 %v1943
    %2515 = vmatpush.bf16.msra.mxu0 %v1937
    %2516 = vmatpush.bf16.msra.mxu0 %v1931
    %2517 = vmatpush.bf16.msra.mxu0 %v1925
    %2518 = vmatpush.bf16.msra.mxu0 %v1919
    %2519 = vmatpush.bf16.msra.mxu0 %v1913
    %2520 = vmatpush.bf16.msra.mxu0 %v1907
    %2521 = vmatmul.bf16.gmra.mxu0 %v545
    %v2522 = vpop.f32.mrf.mxu0
    %v2523 = vadd.f32 %v2509, %v2522
    %v2524 = vpop.f32.mrf.mxu0
    %v2525 = vadd.f32 %v2511, %v2524
    %2526 = vdwg.mxu0
    %2527 = vmatpush.bf16.msra.mxu0 %v1997
    %2528 = vmatpush.bf16.msra.mxu0 %v1991
    %2529 = vmatpush.bf16.msra.mxu0 %v1985
    %2530 = vmatpush.bf16.msra.mxu0 %v1979
    %2531 = vmatpush.bf16.msra.mxu0 %v1973
    %2532 = vmatpush.bf16.msra.mxu0 %v1967
    %2533 = vmatpush.bf16.msra.mxu0 %v1961
    %2534 = vmatpush.bf16.msra.mxu0 %v1955
    %2535 = vmatmul.bf16.gmra.mxu0 %v546
    %v2536 = vpop.f32.mrf.mxu0
    %v2537 = vadd.f32 %v2523, %v2536
    %v2538 = vpop.f32.mrf.mxu0
    %v2539 = vadd.f32 %v2525, %v2538
    %2540 = vdwg.mxu0
    %2541 = vmatpush.bf16.msra.mxu0 %v1758
    %2542 = vmatpush.bf16.msra.mxu0 %v1752
    %2543 = vmatpush.bf16.msra.mxu0 %v1746
    %2544 = vmatpush.bf16.msra.mxu0 %v1740
    %2545 = vmatpush.bf16.msra.mxu0 %v1734
    %2546 = vmatpush.bf16.msra.mxu0 %v1728
    %2547 = vmatpush.bf16.msra.mxu0 %v1722
    %2548 = vmatpush.bf16.msra.mxu0 %v1716
    %2549 = vmatmul.bf16.gmra.mxu0 %v541
    %v2550 = vpop.f32.mrf.mxu0
    %v2551 = vadd.f32 %v840, %v2550
    %v2552 = vpop.f32.mrf.mxu0
    %v2553 = vadd.f32 %v840, %v2552
    %2554 = vdwg.mxu0
    %2555 = vmatpush.bf16.msra.mxu0 %v1806
    %2556 = vmatpush.bf16.msra.mxu0 %v1800
    %2557 = vmatpush.bf16.msra.mxu0 %v1794
    %2558 = vmatpush.bf16.msra.mxu0 %v1788
    %2559 = vmatpush.bf16.msra.mxu0 %v1782
    %2560 = vmatpush.bf16.msra.mxu0 %v1776
    %2561 = vmatpush.bf16.msra.mxu0 %v1770
    %2562 = vmatpush.bf16.msra.mxu0 %v1764
    %2563 = vmatmul.bf16.gmra.mxu0 %v542
    %v2564 = vpop.f32.mrf.mxu0
    %v2565 = vadd.f32 %v2551, %v2564
    %v2566 = vpop.f32.mrf.mxu0
    %v2567 = vadd.f32 %v2553, %v2566
    %2568 = vdwg.mxu0
    %2569 = vmatpush.bf16.msra.mxu0 %v1854
    %2570 = vmatpush.bf16.msra.mxu0 %v1848
    %2571 = vmatpush.bf16.msra.mxu0 %v1842
    %2572 = vmatpush.bf16.msra.mxu0 %v1836
    %2573 = vmatpush.bf16.msra.mxu0 %v1830
    %2574 = vmatpush.bf16.msra.mxu0 %v1824
    %2575 = vmatpush.bf16.msra.mxu0 %v1818
    %2576 = vmatpush.bf16.msra.mxu0 %v1812
    %2577 = vmatmul.bf16.gmra.mxu0 %v543
    %v2578 = vpop.f32.mrf.mxu0
    %v2579 = vadd.f32 %v2565, %v2578
    %v2580 = vpop.f32.mrf.mxu0
    %v2581 = vadd.f32 %v2567, %v2580
    %2582 = vdwg.mxu0
    %2583 = vmatpush.bf16.msra.mxu0 %v1902
    %2584 = vmatpush.bf16.msra.mxu0 %v1896
    %2585 = vmatpush.bf16.msra.mxu0 %v1890
    %2586 = vmatpush.bf16.msra.mxu0 %v1884
    %2587 = vmatpush.bf16.msra.mxu0 %v1878
    %2588 = vmatpush.bf16.msra.mxu0 %v1872
    %2589 = vmatpush.bf16.msra.mxu0 %v1866
    %2590 = vmatpush.bf16.msra.mxu0 %v1860
    %2591 = vmatmul.bf16.gmra.mxu0 %v544
    %v2592 = vpop.f32.mrf.mxu0
    %v2593 = vadd.f32 %v2579, %v2592
    %v2594 = vpop.f32.mrf.mxu0
    %v2595 = vadd.f32 %v2581, %v2594
    %2596 = vdwg.mxu0
    %2597 = vmatpush.bf16.msra.mxu0 %v1950
    %2598 = vmatpush.bf16.msra.mxu0 %v1944
    %2599 = vmatpush.bf16.msra.mxu0 %v1938
    %2600 = vmatpush.bf16.msra.mxu0 %v1932
    %2601 = vmatpush.bf16.msra.mxu0 %v1926
    %2602 = vmatpush.bf16.msra.mxu0 %v1920
    %2603 = vmatpush.bf16.msra.mxu0 %v1914
    %2604 = vmatpush.bf16.msra.mxu0 %v1908
    %2605 = vmatmul.bf16.gmra.mxu0 %v545
    %v2606 = vpop.f32.mrf.mxu0
    %v2607 = vadd.f32 %v2593, %v2606
    %v2608 = vpop.f32.mrf.mxu0
    %v2609 = vadd.f32 %v2595, %v2608
    %2610 = vdwg.mxu0
    %2611 = vmatpush.bf16.msra.mxu0 %v1998
    %2612 = vmatpush.bf16.msra.mxu0 %v1992
    %2613 = vmatpush.bf16.msra.mxu0 %v1986
    %2614 = vmatpush.bf16.msra.mxu0 %v1980
    %2615 = vmatpush.bf16.msra.mxu0 %v1974
    %2616 = vmatpush.bf16.msra.mxu0 %v1968
    %2617 = vmatpush.bf16.msra.mxu0 %v1962
    %2618 = vmatpush.bf16.msra.mxu0 %v1956
    %2619 = vmatmul.bf16.gmra.mxu0 %v546
    %v2620 = vpop.f32.mrf.mxu0
    %v2621 = vadd.f32 %v2607, %v2620
    %v2622 = vpop.f32.mrf.mxu0
    %v2623 = vadd.f32 %v2609, %v2622
    %2624 = vdwg.mxu0
    %2625 = vmatpush.bf16.msra.mxu0 %v1759
    %2626 = vmatpush.bf16.msra.mxu0 %v1753
    %2627 = vmatpush.bf16.msra.mxu0 %v1747
    %2628 = vmatpush.bf16.msra.mxu0 %v1741
    %2629 = vmatpush.bf16.msra.mxu0 %v1735
    %2630 = vmatpush.bf16.msra.mxu0 %v1729
    %2631 = vmatpush.bf16.msra.mxu0 %v1723
    %2632 = vmatpush.bf16.msra.mxu0 %v1717
    %2633 = vmatmul.bf16.gmra.mxu0 %v541
    %v2634 = vpop.f32.mrf.mxu0
    %v2635 = vadd.f32 %v841, %v2634
    %v2636 = vpop.f32.mrf.mxu0
    %v2637 = vadd.f32 %v841, %v2636
    %2638 = vdwg.mxu0
    %2639 = vmatpush.bf16.msra.mxu0 %v1807
    %2640 = vmatpush.bf16.msra.mxu0 %v1801
    %2641 = vmatpush.bf16.msra.mxu0 %v1795
    %2642 = vmatpush.bf16.msra.mxu0 %v1789
    %2643 = vmatpush.bf16.msra.mxu0 %v1783
    %2644 = vmatpush.bf16.msra.mxu0 %v1777
    %2645 = vmatpush.bf16.msra.mxu0 %v1771
    %2646 = vmatpush.bf16.msra.mxu0 %v1765
    %2647 = vmatmul.bf16.gmra.mxu0 %v542
    %v2648 = vpop.f32.mrf.mxu0
    %v2649 = vadd.f32 %v2635, %v2648
    %v2650 = vpop.f32.mrf.mxu0
    %v2651 = vadd.f32 %v2637, %v2650
    %2652 = vdwg.mxu0
    %2653 = vmatpush.bf16.msra.mxu0 %v1855
    %2654 = vmatpush.bf16.msra.mxu0 %v1849
    %2655 = vmatpush.bf16.msra.mxu0 %v1843
    %2656 = vmatpush.bf16.msra.mxu0 %v1837
    %2657 = vmatpush.bf16.msra.mxu0 %v1831
    %2658 = vmatpush.bf16.msra.mxu0 %v1825
    %2659 = vmatpush.bf16.msra.mxu0 %v1819
    %2660 = vmatpush.bf16.msra.mxu0 %v1813
    %2661 = vmatmul.bf16.gmra.mxu0 %v543
    %v2662 = vpop.f32.mrf.mxu0
    %v2663 = vadd.f32 %v2649, %v2662
    %v2664 = vpop.f32.mrf.mxu0
    %v2665 = vadd.f32 %v2651, %v2664
    %2666 = vdwg.mxu0
    %2667 = vmatpush.bf16.msra.mxu0 %v1903
    %2668 = vmatpush.bf16.msra.mxu0 %v1897
    %2669 = vmatpush.bf16.msra.mxu0 %v1891
    %2670 = vmatpush.bf16.msra.mxu0 %v1885
    %2671 = vmatpush.bf16.msra.mxu0 %v1879
    %2672 = vmatpush.bf16.msra.mxu0 %v1873
    %2673 = vmatpush.bf16.msra.mxu0 %v1867
    %2674 = vmatpush.bf16.msra.mxu0 %v1861
    %2675 = vmatmul.bf16.gmra.mxu0 %v544
    %v2676 = vpop.f32.mrf.mxu0
    %v2677 = vadd.f32 %v2663, %v2676
    %v2678 = vpop.f32.mrf.mxu0
    %v2679 = vadd.f32 %v2665, %v2678
    %2680 = vdwg.mxu0
    %2681 = vmatpush.bf16.msra.mxu0 %v1951
    %2682 = vmatpush.bf16.msra.mxu0 %v1945
    %2683 = vmatpush.bf16.msra.mxu0 %v1939
    %2684 = vmatpush.bf16.msra.mxu0 %v1933
    %2685 = vmatpush.bf16.msra.mxu0 %v1927
    %2686 = vmatpush.bf16.msra.mxu0 %v1921
    %2687 = vmatpush.bf16.msra.mxu0 %v1915
    %2688 = vmatpush.bf16.msra.mxu0 %v1909
    %2689 = vmatmul.bf16.gmra.mxu0 %v545
    %v2690 = vpop.f32.mrf.mxu0
    %v2691 = vadd.f32 %v2677, %v2690
    %v2692 = vpop.f32.mrf.mxu0
    %v2693 = vadd.f32 %v2679, %v2692
    %2694 = vdwg.mxu0
    %2695 = vmatpush.bf16.msra.mxu0 %v1999
    %2696 = vmatpush.bf16.msra.mxu0 %v1993
    %2697 = vmatpush.bf16.msra.mxu0 %v1987
    %2698 = vmatpush.bf16.msra.mxu0 %v1981
    %2699 = vmatpush.bf16.msra.mxu0 %v1975
    %2700 = vmatpush.bf16.msra.mxu0 %v1969
    %2701 = vmatpush.bf16.msra.mxu0 %v1963
    %2702 = vmatpush.bf16.msra.mxu0 %v1957
    %2703 = vmatmul.bf16.gmra.mxu0 %v546
    %v2704 = vpop.f32.mrf.mxu0
    %v2705 = vadd.f32 %v2691, %v2704
    %v2706 = vpop.f32.mrf.mxu0
    %v2707 = vadd.f32 %v2693, %v2706
    %2708 = vdwg.mxu0
    %2709 = vmatpush.bf16.msra.mxu0 %v1760
    %2710 = vmatpush.bf16.msra.mxu0 %v1754
    %2711 = vmatpush.bf16.msra.mxu0 %v1748
    %2712 = vmatpush.bf16.msra.mxu0 %v1742
    %2713 = vmatpush.bf16.msra.mxu0 %v1736
    %2714 = vmatpush.bf16.msra.mxu0 %v1730
    %2715 = vmatpush.bf16.msra.mxu0 %v1724
    %2716 = vmatpush.bf16.msra.mxu0 %v1718
    %2717 = vmatmul.bf16.gmra.mxu0 %v541
    %v2718 = vpop.f32.mrf.mxu0
    %v2719 = vadd.f32 %v842, %v2718
    %v2720 = vpop.f32.mrf.mxu0
    %v2721 = vadd.f32 %v842, %v2720
    %2722 = vdwg.mxu0
    %2723 = vmatpush.bf16.msra.mxu0 %v1808
    %2724 = vmatpush.bf16.msra.mxu0 %v1802
    %2725 = vmatpush.bf16.msra.mxu0 %v1796
    %2726 = vmatpush.bf16.msra.mxu0 %v1790
    %2727 = vmatpush.bf16.msra.mxu0 %v1784
    %2728 = vmatpush.bf16.msra.mxu0 %v1778
    %2729 = vmatpush.bf16.msra.mxu0 %v1772
    %2730 = vmatpush.bf16.msra.mxu0 %v1766
    %2731 = vmatmul.bf16.gmra.mxu0 %v542
    %v2732 = vpop.f32.mrf.mxu0
    %v2733 = vadd.f32 %v2719, %v2732
    %v2734 = vpop.f32.mrf.mxu0
    %v2735 = vadd.f32 %v2721, %v2734
    %2736 = vdwg.mxu0
    %2737 = vmatpush.bf16.msra.mxu0 %v1856
    %2738 = vmatpush.bf16.msra.mxu0 %v1850
    %2739 = vmatpush.bf16.msra.mxu0 %v1844
    %2740 = vmatpush.bf16.msra.mxu0 %v1838
    %2741 = vmatpush.bf16.msra.mxu0 %v1832
    %2742 = vmatpush.bf16.msra.mxu0 %v1826
    %2743 = vmatpush.bf16.msra.mxu0 %v1820
    %2744 = vmatpush.bf16.msra.mxu0 %v1814
    %2745 = vmatmul.bf16.gmra.mxu0 %v543
    %v2746 = vpop.f32.mrf.mxu0
    %v2747 = vadd.f32 %v2733, %v2746
    %v2748 = vpop.f32.mrf.mxu0
    %v2749 = vadd.f32 %v2735, %v2748
    %2750 = vdwg.mxu0
    %2751 = vmatpush.bf16.msra.mxu0 %v1904
    %2752 = vmatpush.bf16.msra.mxu0 %v1898
    %2753 = vmatpush.bf16.msra.mxu0 %v1892
    %2754 = vmatpush.bf16.msra.mxu0 %v1886
    %2755 = vmatpush.bf16.msra.mxu0 %v1880
    %2756 = vmatpush.bf16.msra.mxu0 %v1874
    %2757 = vmatpush.bf16.msra.mxu0 %v1868
    %2758 = vmatpush.bf16.msra.mxu0 %v1862
    %2759 = vmatmul.bf16.gmra.mxu0 %v544
    %v2760 = vpop.f32.mrf.mxu0
    %v2761 = vadd.f32 %v2747, %v2760
    %v2762 = vpop.f32.mrf.mxu0
    %v2763 = vadd.f32 %v2749, %v2762
    %2764 = vdwg.mxu0
    %2765 = vmatpush.bf16.msra.mxu0 %v1952
    %2766 = vmatpush.bf16.msra.mxu0 %v1946
    %2767 = vmatpush.bf16.msra.mxu0 %v1940
    %2768 = vmatpush.bf16.msra.mxu0 %v1934
    %2769 = vmatpush.bf16.msra.mxu0 %v1928
    %2770 = vmatpush.bf16.msra.mxu0 %v1922
    %2771 = vmatpush.bf16.msra.mxu0 %v1916
    %2772 = vmatpush.bf16.msra.mxu0 %v1910
    %2773 = vmatmul.bf16.gmra.mxu0 %v545
    %v2774 = vpop.f32.mrf.mxu0
    %v2775 = vadd.f32 %v2761, %v2774
    %v2776 = vpop.f32.mrf.mxu0
    %v2777 = vadd.f32 %v2763, %v2776
    %2778 = vdwg.mxu0
    %2779 = vmatpush.bf16.msra.mxu0 %v2000
    %2780 = vmatpush.bf16.msra.mxu0 %v1994
    %2781 = vmatpush.bf16.msra.mxu0 %v1988
    %2782 = vmatpush.bf16.msra.mxu0 %v1982
    %2783 = vmatpush.bf16.msra.mxu0 %v1976
    %2784 = vmatpush.bf16.msra.mxu0 %v1970
    %2785 = vmatpush.bf16.msra.mxu0 %v1964
    %2786 = vmatpush.bf16.msra.mxu0 %v1958
    %2787 = vmatmul.bf16.gmra.mxu0 %v546
    %v2788 = vpop.f32.mrf.mxu0
    %v2789 = vadd.f32 %v2775, %v2788
    %v2790 = vpop.f32.mrf.mxu0
    %v2791 = vadd.f32 %v2777, %v2790
    %2792 = vdwg.mxu0
    %v2793 = vmax.f32 %v2369, 0.0
    %v2794 = vmax.f32 %v2453, 0.0
    %v2795 = vmax.f32 %v2537, 0.0
    %v2796 = vmax.f32 %v2621, 0.0
    %v2797 = vmax.f32 %v2705, 0.0
    %v2798 = vmax.f32 %v2789, 0.0
    %v2799 = vmax.f32 %v2371, 0.0
    %v2800 = vmax.f32 %v2455, 0.0
    %v2801 = vmax.f32 %v2539, 0.0
    %v2802 = vmax.f32 %v2623, 0.0
    %v2803 = vmax.f32 %v2707, 0.0
    %v2804 = vmax.f32 %v2791, 0.0
    %v2805 = vpack.c.bf16 %v2799, %v2793
    %v2806 = vpack.c.bf16 %v2800, %v2794
    %v2807 = vpack.c.bf16 %v2801, %v2795
    %v2808 = vpack.c.bf16 %v2802, %v2796
    %v2809 = vpack.c.bf16 %v2803, %v2797
    %v2810 = vpack.c.bf16 %v2804, %v2798
    %v2811 = vld [vmem:[#allocation8] sm:$0xff]
    %v2812 = vld [vmem:[#allocation8 + $0x8] sm:$0xff]
    %v2813 = vld [vmem:[#allocation8 + $0x10] sm:$0xff]
    %v2814 = vld [vmem:[#allocation8 + $0x18] sm:$0xff]
    %v2815 = vld [vmem:[#allocation8 + $0x20] sm:$0xff]
    %v2816 = vld [vmem:[#allocation8 + $0x28] sm:$0xff]
    %v2817 = vld [vmem:[#allocation8 + $0x30] sm:$0xff]
    %v2818 = vld [vmem:[#allocation8 + $0x38] sm:$0xff]
    %v2819 = vld [vmem:[#allocation8 + $0x40] sm:$0xff]
    %v2820 = vld [vmem:[#allocation8 + $0x48] sm:$0xff]
    %v2821 = vld [vmem:[#allocation8 + $0x50] sm:$0xff]
    %v2822 = vld [vmem:[#allocation8 + $0x58] sm:$0xff]
    %v2823 = vld [vmem:[#allocation8 + $0x60] sm:$0xff]
    %v2824 = vld [vmem:[#allocation8 + $0x68] sm:$0xff]
    %v2825 = vld [vmem:[#allocation8 + $0x70] sm:$0xff]
    %v2826 = vld [vmem:[#allocation8 + $0x78] sm:$0xff]
    %v2827 = vld [vmem:[#allocation8 + $0x80] sm:$0xff]
    %v2828 = vld [vmem:[#allocation8 + $0x88] sm:$0xff]
    %v2829 = vld [vmem:[#allocation8 + $0x90] sm:$0xff]
    %v2830 = vld [vmem:[#allocation8 + $0x98] sm:$0xff]
    %v2831 = vld [vmem:[#allocation8 + $0xa0] sm:$0xff]
    %v2832 = vld [vmem:[#allocation8 + $0xa8] sm:$0xff]
    %v2833 = vld [vmem:[#allocation8 + $0xb0] sm:$0xff]
    %v2834 = vld [vmem:[#allocation8 + $0xb8] sm:$0xff]
    %v2835 = vld [vmem:[#allocation8 + $0xc0] sm:$0xff]
    %v2836 = vld [vmem:[#allocation8 + $0xc8] sm:$0xff]
    %v2837 = vld [vmem:[#allocation8 + $0xd0] sm:$0xff]
    %v2838 = vld [vmem:[#allocation8 + $0xd8] sm:$0xff]
    %v2839 = vld [vmem:[#allocation8 + $0xe0] sm:$0xff]
    %v2840 = vld [vmem:[#allocation8 + $0xe8] sm:$0xff]
    %v2841 = vld [vmem:[#allocation8 + $0xf0] sm:$0xff]
    %v2842 = vld [vmem:[#allocation8 + $0xf8] sm:$0xff]
    %v2843 = vld [vmem:[#allocation8 + $0x100] sm:$0xff]
    %v2844 = vld [vmem:[#allocation8 + $0x108] sm:$0xff]
    %v2845 = vld [vmem:[#allocation8 + $0x110] sm:$0xff]
    %v2846 = vld [vmem:[#allocation8 + $0x118] sm:$0xff]
    %v2847 = vld [vmem:[#allocation8 + $0x120] sm:$0xff]
    %v2848 = vld [vmem:[#allocation8 + $0x128] sm:$0xff]
    %v2849 = vld [vmem:[#allocation8 + $0x130] sm:$0xff]
    %v2850 = vld [vmem:[#allocation8 + $0x138] sm:$0xff]
    %v2851 = vld [vmem:[#allocation8 + $0x140] sm:$0xff]
    %v2852 = vld [vmem:[#allocation8 + $0x148] sm:$0xff]
    %v2853 = vld [vmem:[#allocation8 + $0x150] sm:$0xff]
    %v2854 = vld [vmem:[#allocation8 + $0x158] sm:$0xff]
    %v2855 = vld [vmem:[#allocation8 + $0x160] sm:$0xff]
    %v2856 = vld [vmem:[#allocation8 + $0x168] sm:$0xff]
    %v2857 = vld [vmem:[#allocation8 + $0x170] sm:$0xff]
    %v2858 = vld [vmem:[#allocation8 + $0x178] sm:$0xff]
    %v2859 = vld [vmem:[#allocation8 + $0x180] sm:$0xff]
    %v2860 = vld [vmem:[#allocation8 + $0x188] sm:$0xff]
    %v2861 = vld [vmem:[#allocation8 + $0x190] sm:$0xff]
    %v2862 = vld [vmem:[#allocation8 + $0x198] sm:$0xff]
    %v2863 = vld [vmem:[#allocation8 + $0x1a0] sm:$0xff]
    %v2864 = vld [vmem:[#allocation8 + $0x1a8] sm:$0xff]
    %v2865 = vld [vmem:[#allocation8 + $0x1b0] sm:$0xff]
    %v2866 = vld [vmem:[#allocation8 + $0x1b8] sm:$0xff]
    %v2867 = vld [vmem:[#allocation8 + $0x1c0] sm:$0xff]
    %v2868 = vld [vmem:[#allocation8 + $0x1c8] sm:$0xff]
    %v2869 = vld [vmem:[#allocation8 + $0x1d0] sm:$0xff]
    %v2870 = vld [vmem:[#allocation8 + $0x1d8] sm:$0xff]
    %v2871 = vld [vmem:[#allocation8 + $0x1e0] sm:$0xff]
    %v2872 = vld [vmem:[#allocation8 + $0x1e8] sm:$0xff]
    %v2873 = vld [vmem:[#allocation8 + $0x1f0] sm:$0xff]
    %v2874 = vld [vmem:[#allocation8 + $0x1f8] sm:$0xff]
    %v2875 = vld [vmem:[#allocation8 + $0x200] sm:$0xff]
    %v2876 = vld [vmem:[#allocation8 + $0x208] sm:$0xff]
    %v2877 = vld [vmem:[#allocation8 + $0x210] sm:$0xff]
    %v2878 = vld [vmem:[#allocation8 + $0x218] sm:$0xff]
    %v2879 = vld [vmem:[#allocation8 + $0x220] sm:$0xff]
    %v2880 = vld [vmem:[#allocation8 + $0x228] sm:$0xff]
    %v2881 = vld [vmem:[#allocation8 + $0x230] sm:$0xff]
    %v2882 = vld [vmem:[#allocation8 + $0x238] sm:$0xff]
    %v2883 = vld [vmem:[#allocation8 + $0x240] sm:$0xff]
    %v2884 = vld [vmem:[#allocation8 + $0x248] sm:$0xff]
    %v2885 = vld [vmem:[#allocation8 + $0x250] sm:$0xff]
    %v2886 = vld [vmem:[#allocation8 + $0x258] sm:$0xff]
    %v2887 = vld [vmem:[#allocation8 + $0x260] sm:$0xff]
    %v2888 = vld [vmem:[#allocation8 + $0x268] sm:$0xff]
    %v2889 = vld [vmem:[#allocation8 + $0x270] sm:$0xff]
    %v2890 = vld [vmem:[#allocation8 + $0x278] sm:$0xff]
    %v2891 = vld [vmem:[#allocation8 + $0x280] sm:$0xff]
    %v2892 = vld [vmem:[#allocation8 + $0x288] sm:$0xff]
    %v2893 = vld [vmem:[#allocation8 + $0x290] sm:$0xff]
    %v2894 = vld [vmem:[#allocation8 + $0x298] sm:$0xff]
    %v2895 = vld [vmem:[#allocation8 + $0x2a0] sm:$0xff]
    %v2896 = vld [vmem:[#allocation8 + $0x2a8] sm:$0xff]
    %v2897 = vld [vmem:[#allocation8 + $0x2b0] sm:$0xff]
    %v2898 = vld [vmem:[#allocation8 + $0x2b8] sm:$0xff]
    %v2899 = vld [vmem:[#allocation8 + $0x2c0] sm:$0xff]
    %v2900 = vld [vmem:[#allocation8 + $0x2c8] sm:$0xff]
    %v2901 = vld [vmem:[#allocation8 + $0x2d0] sm:$0xff]
    %v2902 = vld [vmem:[#allocation8 + $0x2d8] sm:$0xff]
    %v2903 = vld [vmem:[#allocation8 + $0x2e0] sm:$0xff]
    %v2904 = vld [vmem:[#allocation8 + $0x2e8] sm:$0xff]
    %v2905 = vld [vmem:[#allocation8 + $0x2f0] sm:$0xff]
    %v2906 = vld [vmem:[#allocation8 + $0x2f8] sm:$0xff]
    %v2907 = vld [vmem:[#allocation8 + $0x300] sm:$0xff]
    %v2908 = vld [vmem:[#allocation8 + $0x308] sm:$0xff]
    %v2909 = vld [vmem:[#allocation8 + $0x310] sm:$0xff]
    %v2910 = vld [vmem:[#allocation8 + $0x318] sm:$0xff]
    %v2911 = vld [vmem:[#allocation8 + $0x320] sm:$0xff]
    %v2912 = vld [vmem:[#allocation8 + $0x328] sm:$0xff]
    %v2913 = vld [vmem:[#allocation8 + $0x330] sm:$0xff]
    %v2914 = vld [vmem:[#allocation8 + $0x338] sm:$0xff]
    %v2915 = vld [vmem:[#allocation8 + $0x340] sm:$0xff]
    %v2916 = vld [vmem:[#allocation8 + $0x348] sm:$0xff]
    %v2917 = vld [vmem:[#allocation8 + $0x350] sm:$0xff]
    %v2918 = vld [vmem:[#allocation8 + $0x358] sm:$0xff]
    %v2919 = vld [vmem:[#allocation8 + $0x360] sm:$0xff]
    %v2920 = vld [vmem:[#allocation8 + $0x368] sm:$0xff]
    %v2921 = vld [vmem:[#allocation8 + $0x370] sm:$0xff]
    %v2922 = vld [vmem:[#allocation8 + $0x378] sm:$0xff]
    %v2923 = vld [vmem:[#allocation8 + $0x380] sm:$0xff]
    %v2924 = vld [vmem:[#allocation8 + $0x388] sm:$0xff]
    %v2925 = vld [vmem:[#allocation8 + $0x390] sm:$0xff]
    %v2926 = vld [vmem:[#allocation8 + $0x398] sm:$0xff]
    %v2927 = vld [vmem:[#allocation8 + $0x3a0] sm:$0xff]
    %v2928 = vld [vmem:[#allocation8 + $0x3a8] sm:$0xff]
    %v2929 = vld [vmem:[#allocation8 + $0x3b0] sm:$0xff]
    %v2930 = vld [vmem:[#allocation8 + $0x3b8] sm:$0xff]
    %v2931 = vld [vmem:[#allocation8 + $0x3c0] sm:$0xff]
    %v2932 = vld [vmem:[#allocation8 + $0x3c8] sm:$0xff]
    %v2933 = vld [vmem:[#allocation8 + $0x3d0] sm:$0xff]
    %v2934 = vld [vmem:[#allocation8 + $0x3d8] sm:$0xff]
    %v2935 = vld [vmem:[#allocation8 + $0x3e0] sm:$0xff]
    %v2936 = vld [vmem:[#allocation8 + $0x3e8] sm:$0xff]
    %v2937 = vld [vmem:[#allocation8 + $0x3f0] sm:$0xff]
    %v2938 = vld [vmem:[#allocation8 + $0x3f8] sm:$0xff]
    %v2939 = vld [vmem:[#allocation8 + $0x400] sm:$0xff]
    %v2940 = vld [vmem:[#allocation8 + $0x408] sm:$0xff]
    %v2941 = vld [vmem:[#allocation8 + $0x410] sm:$0xff]
    %v2942 = vld [vmem:[#allocation8 + $0x418] sm:$0xff]
    %v2943 = vld [vmem:[#allocation8 + $0x420] sm:$0xff]
    %v2944 = vld [vmem:[#allocation8 + $0x428] sm:$0xff]
    %v2945 = vld [vmem:[#allocation8 + $0x430] sm:$0xff]
    %v2946 = vld [vmem:[#allocation8 + $0x438] sm:$0xff]
    %v2947 = vld [vmem:[#allocation8 + $0x440] sm:$0xff]
    %v2948 = vld [vmem:[#allocation8 + $0x448] sm:$0xff]
    %v2949 = vld [vmem:[#allocation8 + $0x450] sm:$0xff]
    %v2950 = vld [vmem:[#allocation8 + $0x458] sm:$0xff]
    %v2951 = vld [vmem:[#allocation8 + $0x460] sm:$0xff]
    %v2952 = vld [vmem:[#allocation8 + $0x468] sm:$0xff]
    %v2953 = vld [vmem:[#allocation8 + $0x470] sm:$0xff]
    %v2954 = vld [vmem:[#allocation8 + $0x478] sm:$0xff]
    %v2955 = vld [vmem:[#allocation8 + $0x480] sm:$0xff]
    %v2956 = vld [vmem:[#allocation8 + $0x488] sm:$0xff]
    %v2957 = vld [vmem:[#allocation8 + $0x490] sm:$0xff]
    %v2958 = vld [vmem:[#allocation8 + $0x498] sm:$0xff]
    %v2959 = vld [vmem:[#allocation8 + $0x4a0] sm:$0xff]
    %v2960 = vld [vmem:[#allocation8 + $0x4a8] sm:$0xff]
    %v2961 = vld [vmem:[#allocation8 + $0x4b0] sm:$0xff]
    %v2962 = vld [vmem:[#allocation8 + $0x4b8] sm:$0xff]
    %v2963 = vld [vmem:[#allocation8 + $0x4c0] sm:$0xff]
    %v2964 = vld [vmem:[#allocation8 + $0x4c8] sm:$0xff]
    %v2965 = vld [vmem:[#allocation8 + $0x4d0] sm:$0xff]
    %v2966 = vld [vmem:[#allocation8 + $0x4d8] sm:$0xff]
    %v2967 = vld [vmem:[#allocation8 + $0x4e0] sm:$0xff]
    %v2968 = vld [vmem:[#allocation8 + $0x4e8] sm:$0xff]
    %v2969 = vld [vmem:[#allocation8 + $0x4f0] sm:$0xff]
    %v2970 = vld [vmem:[#allocation8 + $0x4f8] sm:$0xff]
    %v2971 = vld [vmem:[#allocation8 + $0x500] sm:$0xff]
    %v2972 = vld [vmem:[#allocation8 + $0x508] sm:$0xff]
    %v2973 = vld [vmem:[#allocation8 + $0x510] sm:$0xff]
    %v2974 = vld [vmem:[#allocation8 + $0x518] sm:$0xff]
    %v2975 = vld [vmem:[#allocation8 + $0x520] sm:$0xff]
    %v2976 = vld [vmem:[#allocation8 + $0x528] sm:$0xff]
    %v2977 = vld [vmem:[#allocation8 + $0x530] sm:$0xff]
    %v2978 = vld [vmem:[#allocation8 + $0x538] sm:$0xff]
    %v2979 = vld [vmem:[#allocation8 + $0x540] sm:$0xff]
    %v2980 = vld [vmem:[#allocation8 + $0x548] sm:$0xff]
    %v2981 = vld [vmem:[#allocation8 + $0x550] sm:$0xff]
    %v2982 = vld [vmem:[#allocation8 + $0x558] sm:$0xff]
    %v2983 = vld [vmem:[#allocation8 + $0x560] sm:$0xff]
    %v2984 = vld [vmem:[#allocation8 + $0x568] sm:$0xff]
    %v2985 = vld [vmem:[#allocation8 + $0x570] sm:$0xff]
    %v2986 = vld [vmem:[#allocation8 + $0x578] sm:$0xff]
    %v2987 = vld [vmem:[#allocation8 + $0x580] sm:$0xff]
    %v2988 = vld [vmem:[#allocation8 + $0x588] sm:$0xff]
    %v2989 = vld [vmem:[#allocation8 + $0x590] sm:$0xff]
    %v2990 = vld [vmem:[#allocation8 + $0x598] sm:$0xff]
    %v2991 = vld [vmem:[#allocation8 + $0x5a0] sm:$0xff]
    %v2992 = vld [vmem:[#allocation8 + $0x5a8] sm:$0xff]
    %v2993 = vld [vmem:[#allocation8 + $0x5b0] sm:$0xff]
    %v2994 = vld [vmem:[#allocation8 + $0x5b8] sm:$0xff]
    %v2995 = vld [vmem:[#allocation8 + $0x5c0] sm:$0xff]
    %v2996 = vld [vmem:[#allocation8 + $0x5c8] sm:$0xff]
    %v2997 = vld [vmem:[#allocation8 + $0x5d0] sm:$0xff]
    %v2998 = vld [vmem:[#allocation8 + $0x5d8] sm:$0xff]
    %v2999 = vld [vmem:[#allocation8 + $0x5e0] sm:$0xff]
    %v3000 = vld [vmem:[#allocation8 + $0x5e8] sm:$0xff]
    %v3001 = vld [vmem:[#allocation8 + $0x5f0] sm:$0xff]
    %v3002 = vld [vmem:[#allocation8 + $0x5f8] sm:$0xff]
    %v3003 = vld [vmem:[#allocation10] sm:$0xf]
    %v3005 = vperm.slane %v3003, 0
    %v3006 = vperm.slane %v3003, 1
    %v3007 = vperm.slane %v3003, 2
    %v3008 = vperm.slane %v3003, 3
    %v3205 = vunpack.c.l.b16 %v2811
    %v3206 = vunpack.c.h.b16 %v2811
    %v3207 = vunpack.c.l.b16 %v2812
    %v3208 = vunpack.c.h.b16 %v2812
    %v3209 = vunpack.c.l.b16 %v2813
    %v3210 = vunpack.c.h.b16 %v2813
    %v3211 = vunpack.c.l.b16 %v2814
    %v3212 = vunpack.c.h.b16 %v2814
    %v3213 = vunpack.c.l.b16 %v2815
    %v3214 = vunpack.c.h.b16 %v2815
    %v3215 = vunpack.c.l.b16 %v2816
    %v3216 = vunpack.c.h.b16 %v2816
    %v3217 = vunpack.c.l.b16 %v2817
    %v3218 = vunpack.c.h.b16 %v2817
    %v3219 = vunpack.c.l.b16 %v2818
    %v3220 = vunpack.c.h.b16 %v2818
    %v3221 = vunpack.c.l.b16 %v2819
    %v3222 = vunpack.c.h.b16 %v2819
    %v3223 = vunpack.c.l.b16 %v2820
    %v3224 = vunpack.c.h.b16 %v2820
    %v3225 = vunpack.c.l.b16 %v2821
    %v3226 = vunpack.c.h.b16 %v2821
    %v3227 = vunpack.c.l.b16 %v2822
    %v3228 = vunpack.c.h.b16 %v2822
    %v3229 = vunpack.c.l.b16 %v2823
    %v3230 = vunpack.c.h.b16 %v2823
    %v3231 = vunpack.c.l.b16 %v2824
    %v3232 = vunpack.c.h.b16 %v2824
    %v3233 = vunpack.c.l.b16 %v2825
    %v3234 = vunpack.c.h.b16 %v2825
    %v3235 = vunpack.c.l.b16 %v2826
    %v3236 = vunpack.c.h.b16 %v2826
    %v3237 = vunpack.c.l.b16 %v2827
    %v3238 = vunpack.c.h.b16 %v2827
    %v3239 = vunpack.c.l.b16 %v2828
    %v3240 = vunpack.c.h.b16 %v2828
    %v3241 = vunpack.c.l.b16 %v2829
    %v3242 = vunpack.c.h.b16 %v2829
    %v3243 = vunpack.c.l.b16 %v2830
    %v3244 = vunpack.c.h.b16 %v2830
    %v3245 = vunpack.c.l.b16 %v2831
    %v3246 = vunpack.c.h.b16 %v2831
    %v3247 = vunpack.c.l.b16 %v2832
    %v3248 = vunpack.c.h.b16 %v2832
    %v3249 = vunpack.c.l.b16 %v2833
    %v3250 = vunpack.c.h.b16 %v2833
    %v3251 = vunpack.c.l.b16 %v2834
    %v3252 = vunpack.c.h.b16 %v2834
    %v3253 = vunpack.c.l.b16 %v2835
    %v3254 = vunpack.c.h.b16 %v2835
    %v3255 = vunpack.c.l.b16 %v2836
    %v3256 = vunpack.c.h.b16 %v2836
    %v3257 = vunpack.c.l.b16 %v2837
    %v3258 = vunpack.c.h.b16 %v2837
    %v3259 = vunpack.c.l.b16 %v2838
    %v3260 = vunpack.c.h.b16 %v2838
    %v3261 = vunpack.c.l.b16 %v2839
    %v3262 = vunpack.c.h.b16 %v2839
    %v3263 = vunpack.c.l.b16 %v2840
    %v3264 = vunpack.c.h.b16 %v2840
    %v3265 = vunpack.c.l.b16 %v2841
    %v3266 = vunpack.c.h.b16 %v2841
    %v3267 = vunpack.c.l.b16 %v2842
    %v3268 = vunpack.c.h.b16 %v2842
    %v3269 = vunpack.c.l.b16 %v2843
    %v3270 = vunpack.c.h.b16 %v2843
    %v3271 = vunpack.c.l.b16 %v2844
    %v3272 = vunpack.c.h.b16 %v2844
    %v3273 = vunpack.c.l.b16 %v2845
    %v3274 = vunpack.c.h.b16 %v2845
    %v3275 = vunpack.c.l.b16 %v2846
    %v3276 = vunpack.c.h.b16 %v2846
    %v3277 = vunpack.c.l.b16 %v2847
    %v3278 = vunpack.c.h.b16 %v2847
    %v3279 = vunpack.c.l.b16 %v2848
    %v3280 = vunpack.c.h.b16 %v2848
    %v3281 = vunpack.c.l.b16 %v2849
    %v3282 = vunpack.c.h.b16 %v2849
    %v3283 = vunpack.c.l.b16 %v2850
    %v3284 = vunpack.c.h.b16 %v2850
    %v3285 = vunpack.c.l.b16 %v2851
    %v3286 = vunpack.c.h.b16 %v2851
    %v3287 = vunpack.c.l.b16 %v2852
    %v3288 = vunpack.c.h.b16 %v2852
    %v3289 = vunpack.c.l.b16 %v2853
    %v3290 = vunpack.c.h.b16 %v2853
    %v3291 = vunpack.c.l.b16 %v2854
    %v3292 = vunpack.c.h.b16 %v2854
    %v3293 = vunpack.c.l.b16 %v2855
    %v3294 = vunpack.c.h.b16 %v2855
    %v3295 = vunpack.c.l.b16 %v2856
    %v3296 = vunpack.c.h.b16 %v2856
    %v3297 = vunpack.c.l.b16 %v2857
    %v3298 = vunpack.c.h.b16 %v2857
    %v3299 = vunpack.c.l.b16 %v2858
    %v3300 = vunpack.c.h.b16 %v2858
    %v3301 = vunpack.c.l.b16 %v2859
    %v3302 = vunpack.c.h.b16 %v2859
    %v3303 = vunpack.c.l.b16 %v2860
    %v3304 = vunpack.c.h.b16 %v2860
    %v3305 = vunpack.c.l.b16 %v2861
    %v3306 = vunpack.c.h.b16 %v2861
    %v3307 = vunpack.c.l.b16 %v2862
    %v3308 = vunpack.c.h.b16 %v2862
    %v3309 = vunpack.c.l.b16 %v2863
    %v3310 = vunpack.c.h.b16 %v2863
    %v3311 = vunpack.c.l.b16 %v2864
    %v3312 = vunpack.c.h.b16 %v2864
    %v3313 = vunpack.c.l.b16 %v2865
    %v3314 = vunpack.c.h.b16 %v2865
    %v3315 = vunpack.c.l.b16 %v2866
    %v3316 = vunpack.c.h.b16 %v2866
    %v3317 = vunpack.c.l.b16 %v2867
    %v3318 = vunpack.c.h.b16 %v2867
    %v3319 = vunpack.c.l.b16 %v2868
    %v3320 = vunpack.c.h.b16 %v2868
    %v3321 = vunpack.c.l.b16 %v2869
    %v3322 = vunpack.c.h.b16 %v2869
    %v3323 = vunpack.c.l.b16 %v2870
    %v3324 = vunpack.c.h.b16 %v2870
    %v3325 = vunpack.c.l.b16 %v2871
    %v3326 = vunpack.c.h.b16 %v2871
    %v3327 = vunpack.c.l.b16 %v2872
    %v3328 = vunpack.c.h.b16 %v2872
    %v3329 = vunpack.c.l.b16 %v2873
    %v3330 = vunpack.c.h.b16 %v2873
    %v3331 = vunpack.c.l.b16 %v2874
    %v3332 = vunpack.c.h.b16 %v2874
    %v3333 = vunpack.c.l.b16 %v2875
    %v3334 = vunpack.c.h.b16 %v2875
    %v3335 = vunpack.c.l.b16 %v2876
    %v3336 = vunpack.c.h.b16 %v2876
    %v3337 = vunpack.c.l.b16 %v2877
    %v3338 = vunpack.c.h.b16 %v2877
    %v3339 = vunpack.c.l.b16 %v2878
    %v3340 = vunpack.c.h.b16 %v2878
    %v3341 = vunpack.c.l.b16 %v2879
    %v3342 = vunpack.c.h.b16 %v2879
    %v3343 = vunpack.c.l.b16 %v2880
    %v3344 = vunpack.c.h.b16 %v2880
    %v3345 = vunpack.c.l.b16 %v2881
    %v3346 = vunpack.c.h.b16 %v2881
    %v3347 = vunpack.c.l.b16 %v2882
    %v3348 = vunpack.c.h.b16 %v2882
    %v3349 = vunpack.c.l.b16 %v2883
    %v3350 = vunpack.c.h.b16 %v2883
    %v3351 = vunpack.c.l.b16 %v2884
    %v3352 = vunpack.c.h.b16 %v2884
    %v3353 = vunpack.c.l.b16 %v2885
    %v3354 = vunpack.c.h.b16 %v2885
    %v3355 = vunpack.c.l.b16 %v2886
    %v3356 = vunpack.c.h.b16 %v2886
    %v3357 = vunpack.c.l.b16 %v2887
    %v3358 = vunpack.c.h.b16 %v2887
    %v3359 = vunpack.c.l.b16 %v2888
    %v3360 = vunpack.c.h.b16 %v2888
    %v3361 = vunpack.c.l.b16 %v2889
    %v3362 = vunpack.c.h.b16 %v2889
    %v3363 = vunpack.c.l.b16 %v2890
    %v3364 = vunpack.c.h.b16 %v2890
    %v3365 = vunpack.c.l.b16 %v2891
    %v3366 = vunpack.c.h.b16 %v2891
    %v3367 = vunpack.c.l.b16 %v2892
    %v3368 = vunpack.c.h.b16 %v2892
    %v3369 = vunpack.c.l.b16 %v2893
    %v3370 = vunpack.c.h.b16 %v2893
    %v3371 = vunpack.c.l.b16 %v2894
    %v3372 = vunpack.c.h.b16 %v2894
    %v3373 = vunpack.c.l.b16 %v2895
    %v3374 = vunpack.c.h.b16 %v2895
    %v3375 = vunpack.c.l.b16 %v2896
    %v3376 = vunpack.c.h.b16 %v2896
    %v3377 = vunpack.c.l.b16 %v2897
    %v3378 = vunpack.c.h.b16 %v2897
    %v3379 = vunpack.c.l.b16 %v2898
    %v3380 = vunpack.c.h.b16 %v2898
    %v3381 = vunpack.c.l.b16 %v2899
    %v3382 = vunpack.c.h.b16 %v2899
    %v3383 = vunpack.c.l.b16 %v2900
    %v3384 = vunpack.c.h.b16 %v2900
    %v3385 = vunpack.c.l.b16 %v2901
    %v3386 = vunpack.c.h.b16 %v2901
    %v3387 = vunpack.c.l.b16 %v2902
    %v3388 = vunpack.c.h.b16 %v2902
    %v3389 = vunpack.c.l.b16 %v2903
    %v3390 = vunpack.c.h.b16 %v2903
    %v3391 = vunpack.c.l.b16 %v2904
    %v3392 = vunpack.c.h.b16 %v2904
    %v3393 = vunpack.c.l.b16 %v2905
    %v3394 = vunpack.c.h.b16 %v2905
    %v3395 = vunpack.c.l.b16 %v2906
    %v3396 = vunpack.c.h.b16 %v2906
    %v3397 = vunpack.c.l.b16 %v2907
    %v3398 = vunpack.c.h.b16 %v2907
    %v3399 = vunpack.c.l.b16 %v2908
    %v3400 = vunpack.c.h.b16 %v2908
    %v3401 = vunpack.c.l.b16 %v2909
    %v3402 = vunpack.c.h.b16 %v2909
    %v3403 = vunpack.c.l.b16 %v2910
    %v3404 = vunpack.c.h.b16 %v2910
    %v3405 = vunpack.c.l.b16 %v2911
    %v3406 = vunpack.c.h.b16 %v2911
    %v3407 = vunpack.c.l.b16 %v2912
    %v3408 = vunpack.c.h.b16 %v2912
    %v3409 = vunpack.c.l.b16 %v2913
    %v3410 = vunpack.c.h.b16 %v2913
    %v3411 = vunpack.c.l.b16 %v2914
    %v3412 = vunpack.c.h.b16 %v2914
    %v3413 = vunpack.c.l.b16 %v2915
    %v3414 = vunpack.c.h.b16 %v2915
    %v3415 = vunpack.c.l.b16 %v2916
    %v3416 = vunpack.c.h.b16 %v2916
    %v3417 = vunpack.c.l.b16 %v2917
    %v3418 = vunpack.c.h.b16 %v2917
    %v3419 = vunpack.c.l.b16 %v2918
    %v3420 = vunpack.c.h.b16 %v2918
    %v3421 = vunpack.c.l.b16 %v2919
    %v3422 = vunpack.c.h.b16 %v2919
    %v3423 = vunpack.c.l.b16 %v2920
    %v3424 = vunpack.c.h.b16 %v2920
    %v3425 = vunpack.c.l.b16 %v2921
    %v3426 = vunpack.c.h.b16 %v2921
    %v3427 = vunpack.c.l.b16 %v2922
    %v3428 = vunpack.c.h.b16 %v2922
    %v3429 = vunpack.c.l.b16 %v2923
    %v3430 = vunpack.c.h.b16 %v2923
    %v3431 = vunpack.c.l.b16 %v2924
    %v3432 = vunpack.c.h.b16 %v2924
    %v3433 = vunpack.c.l.b16 %v2925
    %v3434 = vunpack.c.h.b16 %v2925
    %v3435 = vunpack.c.l.b16 %v2926
    %v3436 = vunpack.c.h.b16 %v2926
    %v3437 = vunpack.c.l.b16 %v2927
    %v3438 = vunpack.c.h.b16 %v2927
    %v3439 = vunpack.c.l.b16 %v2928
    %v3440 = vunpack.c.h.b16 %v2928
    %v3441 = vunpack.c.l.b16 %v2929
    %v3442 = vunpack.c.h.b16 %v2929
    %v3443 = vunpack.c.l.b16 %v2930
    %v3444 = vunpack.c.h.b16 %v2930
    %v3445 = vunpack.c.l.b16 %v2931
    %v3446 = vunpack.c.h.b16 %v2931
    %v3447 = vunpack.c.l.b16 %v2932
    %v3448 = vunpack.c.h.b16 %v2932
    %v3449 = vunpack.c.l.b16 %v2933
    %v3450 = vunpack.c.h.b16 %v2933
    %v3451 = vunpack.c.l.b16 %v2934
    %v3452 = vunpack.c.h.b16 %v2934
    %v3453 = vunpack.c.l.b16 %v2935
    %v3454 = vunpack.c.h.b16 %v2935
    %v3455 = vunpack.c.l.b16 %v2936
    %v3456 = vunpack.c.h.b16 %v2936
    %v3457 = vunpack.c.l.b16 %v2937
    %v3458 = vunpack.c.h.b16 %v2937
    %v3459 = vunpack.c.l.b16 %v2938
    %v3460 = vunpack.c.h.b16 %v2938
    %v3461 = vunpack.c.l.b16 %v2939
    %v3462 = vunpack.c.h.b16 %v2939
    %v3463 = vunpack.c.l.b16 %v2940
    %v3464 = vunpack.c.h.b16 %v2940
    %v3465 = vunpack.c.l.b16 %v2941
    %v3466 = vunpack.c.h.b16 %v2941
    %v3467 = vunpack.c.l.b16 %v2942
    %v3468 = vunpack.c.h.b16 %v2942
    %v3469 = vunpack.c.l.b16 %v2943
    %v3470 = vunpack.c.h.b16 %v2943
    %v3471 = vunpack.c.l.b16 %v2944
    %v3472 = vunpack.c.h.b16 %v2944
    %v3473 = vunpack.c.l.b16 %v2945
    %v3474 = vunpack.c.h.b16 %v2945
    %v3475 = vunpack.c.l.b16 %v2946
    %v3476 = vunpack.c.h.b16 %v2946
    %v3477 = vunpack.c.l.b16 %v2947
    %v3478 = vunpack.c.h.b16 %v2947
    %v3479 = vunpack.c.l.b16 %v2948
    %v3480 = vunpack.c.h.b16 %v2948
    %v3481 = vunpack.c.l.b16 %v2949
    %v3482 = vunpack.c.h.b16 %v2949
    %v3483 = vunpack.c.l.b16 %v2950
    %v3484 = vunpack.c.h.b16 %v2950
    %v3485 = vunpack.c.l.b16 %v2951
    %v3486 = vunpack.c.h.b16 %v2951
    %v3487 = vunpack.c.l.b16 %v2952
    %v3488 = vunpack.c.h.b16 %v2952
    %v3489 = vunpack.c.l.b16 %v2953
    %v3490 = vunpack.c.h.b16 %v2953
    %v3491 = vunpack.c.l.b16 %v2954
    %v3492 = vunpack.c.h.b16 %v2954
    %v3493 = vunpack.c.l.b16 %v2955
    %v3494 = vunpack.c.h.b16 %v2955
    %v3495 = vunpack.c.l.b16 %v2956
    %v3496 = vunpack.c.h.b16 %v2956
    %v3497 = vunpack.c.l.b16 %v2957
    %v3498 = vunpack.c.h.b16 %v2957
    %v3499 = vunpack.c.l.b16 %v2958
    %v3500 = vunpack.c.h.b16 %v2958
    %v3501 = vunpack.c.l.b16 %v2959
    %v3502 = vunpack.c.h.b16 %v2959
    %v3503 = vunpack.c.l.b16 %v2960
    %v3504 = vunpack.c.h.b16 %v2960
    %v3505 = vunpack.c.l.b16 %v2961
    %v3506 = vunpack.c.h.b16 %v2961
    %v3507 = vunpack.c.l.b16 %v2962
    %v3508 = vunpack.c.h.b16 %v2962
    %v3509 = vunpack.c.l.b16 %v2963
    %v3510 = vunpack.c.h.b16 %v2963
    %v3511 = vunpack.c.l.b16 %v2964
    %v3512 = vunpack.c.h.b16 %v2964
    %v3513 = vunpack.c.l.b16 %v2965
    %v3514 = vunpack.c.h.b16 %v2965
    %v3515 = vunpack.c.l.b16 %v2966
    %v3516 = vunpack.c.h.b16 %v2966
    %v3517 = vunpack.c.l.b16 %v2967
    %v3518 = vunpack.c.h.b16 %v2967
    %v3519 = vunpack.c.l.b16 %v2968
    %v3520 = vunpack.c.h.b16 %v2968
    %v3521 = vunpack.c.l.b16 %v2969
    %v3522 = vunpack.c.h.b16 %v2969
    %v3523 = vunpack.c.l.b16 %v2970
    %v3524 = vunpack.c.h.b16 %v2970
    %v3525 = vunpack.c.l.b16 %v2971
    %v3526 = vunpack.c.h.b16 %v2971
    %v3527 = vunpack.c.l.b16 %v2972
    %v3528 = vunpack.c.h.b16 %v2972
    %v3529 = vunpack.c.l.b16 %v2973
    %v3530 = vunpack.c.h.b16 %v2973
    %v3531 = vunpack.c.l.b16 %v2974
    %v3532 = vunpack.c.h.b16 %v2974
    %v3533 = vunpack.c.l.b16 %v2975
    %v3534 = vunpack.c.h.b16 %v2975
    %v3535 = vunpack.c.l.b16 %v2976
    %v3536 = vunpack.c.h.b16 %v2976
    %v3537 = vunpack.c.l.b16 %v2977
    %v3538 = vunpack.c.h.b16 %v2977
    %v3539 = vunpack.c.l.b16 %v2978
    %v3540 = vunpack.c.h.b16 %v2978
    %v3541 = vunpack.c.l.b16 %v2979
    %v3542 = vunpack.c.h.b16 %v2979
    %v3543 = vunpack.c.l.b16 %v2980
    %v3544 = vunpack.c.h.b16 %v2980
    %v3545 = vunpack.c.l.b16 %v2981
    %v3546 = vunpack.c.h.b16 %v2981
    %v3547 = vunpack.c.l.b16 %v2982
    %v3548 = vunpack.c.h.b16 %v2982
    %v3549 = vunpack.c.l.b16 %v2983
    %v3550 = vunpack.c.h.b16 %v2983
    %v3551 = vunpack.c.l.b16 %v2984
    %v3552 = vunpack.c.h.b16 %v2984
    %v3553 = vunpack.c.l.b16 %v2985
    %v3554 = vunpack.c.h.b16 %v2985
    %v3555 = vunpack.c.l.b16 %v2986
    %v3556 = vunpack.c.h.b16 %v2986
    %v3557 = vunpack.c.l.b16 %v2987
    %v3558 = vunpack.c.h.b16 %v2987
    %v3559 = vunpack.c.l.b16 %v2988
    %v3560 = vunpack.c.h.b16 %v2988
    %v3561 = vunpack.c.l.b16 %v2989
    %v3562 = vunpack.c.h.b16 %v2989
    %v3563 = vunpack.c.l.b16 %v2990
    %v3564 = vunpack.c.h.b16 %v2990
    %v3565 = vunpack.c.l.b16 %v2991
    %v3566 = vunpack.c.h.b16 %v2991
    %v3567 = vunpack.c.l.b16 %v2992
    %v3568 = vunpack.c.h.b16 %v2992
    %v3569 = vunpack.c.l.b16 %v2993
    %v3570 = vunpack.c.h.b16 %v2993
    %v3571 = vunpack.c.l.b16 %v2994
    %v3572 = vunpack.c.h.b16 %v2994
    %v3573 = vunpack.c.l.b16 %v2995
    %v3574 = vunpack.c.h.b16 %v2995
    %v3575 = vunpack.c.l.b16 %v2996
    %v3576 = vunpack.c.h.b16 %v2996
    %v3577 = vunpack.c.l.b16 %v2997
    %v3578 = vunpack.c.h.b16 %v2997
    %v3579 = vunpack.c.l.b16 %v2998
    %v3580 = vunpack.c.h.b16 %v2998
    %v3581 = vunpack.c.l.b16 %v2999
    %v3582 = vunpack.c.h.b16 %v2999
    %v3583 = vunpack.c.l.b16 %v3000
    %v3584 = vunpack.c.h.b16 %v3000
    %v3585 = vunpack.c.l.b16 %v3001
    %v3586 = vunpack.c.h.b16 %v3001
    %v3587 = vunpack.c.l.b16 %v3002
    %v3588 = vunpack.c.h.b16 %v3002
    %v3589 = vpack.c.b16 %v3209, %v3205
    %v3590 = vpack.c.b16 %v3210, %v3206
    %v3591 = vpack.c.b16 %v3211, %v3207
    %v3592 = vpack.c.b16 %v3212, %v3208
    %v3593 = vpack.c.b16 %v3217, %v3213
    %v3594 = vpack.c.b16 %v3218, %v3214
    %v3595 = vpack.c.b16 %v3219, %v3215
    %v3596 = vpack.c.b16 %v3220, %v3216
    %v3597 = vpack.c.b16 %v3225, %v3221
    %v3598 = vpack.c.b16 %v3226, %v3222
    %v3599 = vpack.c.b16 %v3227, %v3223
    %v3600 = vpack.c.b16 %v3228, %v3224
    %v3601 = vpack.c.b16 %v3233, %v3229
    %v3602 = vpack.c.b16 %v3234, %v3230
    %v3603 = vpack.c.b16 %v3235, %v3231
    %v3604 = vpack.c.b16 %v3236, %v3232
    %v3605 = vpack.c.b16 %v3241, %v3237
    %v3606 = vpack.c.b16 %v3242, %v3238
    %v3607 = vpack.c.b16 %v3243, %v3239
    %v3608 = vpack.c.b16 %v3244, %v3240
    %v3609 = vpack.c.b16 %v3249, %v3245
    %v3610 = vpack.c.b16 %v3250, %v3246
    %v3611 = vpack.c.b16 %v3251, %v3247
    %v3612 = vpack.c.b16 %v3252, %v3248
    %v3613 = vpack.c.b16 %v3257, %v3253
    %v3614 = vpack.c.b16 %v3258, %v3254
    %v3615 = vpack.c.b16 %v3259, %v3255
    %v3616 = vpack.c.b16 %v3260, %v3256
    %v3617 = vpack.c.b16 %v3265, %v3261
    %v3618 = vpack.c.b16 %v3266, %v3262
    %v3619 = vpack.c.b16 %v3267, %v3263
    %v3620 = vpack.c.b16 %v3268, %v3264
    %v3621 = vpack.c.b16 %v3273, %v3269
    %v3622 = vpack.c.b16 %v3274, %v3270
    %v3623 = vpack.c.b16 %v3275, %v3271
    %v3624 = vpack.c.b16 %v3276, %v3272
    %v3625 = vpack.c.b16 %v3281, %v3277
    %v3626 = vpack.c.b16 %v3282, %v3278
    %v3627 = vpack.c.b16 %v3283, %v3279
    %v3628 = vpack.c.b16 %v3284, %v3280
    %v3629 = vpack.c.b16 %v3289, %v3285
    %v3630 = vpack.c.b16 %v3290, %v3286
    %v3631 = vpack.c.b16 %v3291, %v3287
    %v3632 = vpack.c.b16 %v3292, %v3288
    %v3633 = vpack.c.b16 %v3297, %v3293
    %v3634 = vpack.c.b16 %v3298, %v3294
    %v3635 = vpack.c.b16 %v3299, %v3295
    %v3636 = vpack.c.b16 %v3300, %v3296
    %v3637 = vpack.c.b16 %v3305, %v3301
    %v3638 = vpack.c.b16 %v3306, %v3302
    %v3639 = vpack.c.b16 %v3307, %v3303
    %v3640 = vpack.c.b16 %v3308, %v3304
    %v3641 = vpack.c.b16 %v3313, %v3309
    %v3642 = vpack.c.b16 %v3314, %v3310
    %v3643 = vpack.c.b16 %v3315, %v3311
    %v3644 = vpack.c.b16 %v3316, %v3312
    %v3645 = vpack.c.b16 %v3321, %v3317
    %v3646 = vpack.c.b16 %v3322, %v3318
    %v3647 = vpack.c.b16 %v3323, %v3319
    %v3648 = vpack.c.b16 %v3324, %v3320
    %v3649 = vpack.c.b16 %v3329, %v3325
    %v3650 = vpack.c.b16 %v3330, %v3326
    %v3651 = vpack.c.b16 %v3331, %v3327
    %v3652 = vpack.c.b16 %v3332, %v3328
    %v3653 = vpack.c.b16 %v3337, %v3333
    %v3654 = vpack.c.b16 %v3338, %v3334
    %v3655 = vpack.c.b16 %v3339, %v3335
    %v3656 = vpack.c.b16 %v3340, %v3336
    %v3657 = vpack.c.b16 %v3345, %v3341
    %v3658 = vpack.c.b16 %v3346, %v3342
    %v3659 = vpack.c.b16 %v3347, %v3343
    %v3660 = vpack.c.b16 %v3348, %v3344
    %v3661 = vpack.c.b16 %v3353, %v3349
    %v3662 = vpack.c.b16 %v3354, %v3350
    %v3663 = vpack.c.b16 %v3355, %v3351
    %v3664 = vpack.c.b16 %v3356, %v3352
    %v3665 = vpack.c.b16 %v3361, %v3357
    %v3666 = vpack.c.b16 %v3362, %v3358
    %v3667 = vpack.c.b16 %v3363, %v3359
    %v3668 = vpack.c.b16 %v3364, %v3360
    %v3669 = vpack.c.b16 %v3369, %v3365
    %v3670 = vpack.c.b16 %v3370, %v3366
    %v3671 = vpack.c.b16 %v3371, %v3367
    %v3672 = vpack.c.b16 %v3372, %v3368
    %v3673 = vpack.c.b16 %v3377, %v3373
    %v3674 = vpack.c.b16 %v3378, %v3374
    %v3675 = vpack.c.b16 %v3379, %v3375
    %v3676 = vpack.c.b16 %v3380, %v3376
    %v3677 = vpack.c.b16 %v3385, %v3381
    %v3678 = vpack.c.b16 %v3386, %v3382
    %v3679 = vpack.c.b16 %v3387, %v3383
    %v3680 = vpack.c.b16 %v3388, %v3384
    %v3681 = vpack.c.b16 %v3393, %v3389
    %v3682 = vpack.c.b16 %v3394, %v3390
    %v3683 = vpack.c.b16 %v3395, %v3391
    %v3684 = vpack.c.b16 %v3396, %v3392
    %v3685 = vpack.c.b16 %v3401, %v3397
    %v3686 = vpack.c.b16 %v3402, %v3398
    %v3687 = vpack.c.b16 %v3403, %v3399
    %v3688 = vpack.c.b16 %v3404, %v3400
    %v3689 = vpack.c.b16 %v3409, %v3405
    %v3690 = vpack.c.b16 %v3410, %v3406
    %v3691 = vpack.c.b16 %v3411, %v3407
    %v3692 = vpack.c.b16 %v3412, %v3408
    %v3693 = vpack.c.b16 %v3417, %v3413
    %v3694 = vpack.c.b16 %v3418, %v3414
    %v3695 = vpack.c.b16 %v3419, %v3415
    %v3696 = vpack.c.b16 %v3420, %v3416
    %v3697 = vpack.c.b16 %v3425, %v3421
    %v3698 = vpack.c.b16 %v3426, %v3422
    %v3699 = vpack.c.b16 %v3427, %v3423
    %v3700 = vpack.c.b16 %v3428, %v3424
    %v3701 = vpack.c.b16 %v3433, %v3429
    %v3702 = vpack.c.b16 %v3434, %v3430
    %v3703 = vpack.c.b16 %v3435, %v3431
    %v3704 = vpack.c.b16 %v3436, %v3432
    %v3705 = vpack.c.b16 %v3441, %v3437
    %v3706 = vpack.c.b16 %v3442, %v3438
    %v3707 = vpack.c.b16 %v3443, %v3439
    %v3708 = vpack.c.b16 %v3444, %v3440
    %v3709 = vpack.c.b16 %v3449, %v3445
    %v3710 = vpack.c.b16 %v3450, %v3446
    %v3711 = vpack.c.b16 %v3451, %v3447
    %v3712 = vpack.c.b16 %v3452, %v3448
    %v3713 = vpack.c.b16 %v3457, %v3453
    %v3714 = vpack.c.b16 %v3458, %v3454
    %v3715 = vpack.c.b16 %v3459, %v3455
    %v3716 = vpack.c.b16 %v3460, %v3456
    %v3717 = vpack.c.b16 %v3465, %v3461
    %v3718 = vpack.c.b16 %v3466, %v3462
    %v3719 = vpack.c.b16 %v3467, %v3463
    %v3720 = vpack.c.b16 %v3468, %v3464
    %v3721 = vpack.c.b16 %v3473, %v3469
    %v3722 = vpack.c.b16 %v3474, %v3470
    %v3723 = vpack.c.b16 %v3475, %v3471
    %v3724 = vpack.c.b16 %v3476, %v3472
    %v3725 = vpack.c.b16 %v3481, %v3477
    %v3726 = vpack.c.b16 %v3482, %v3478
    %v3727 = vpack.c.b16 %v3483, %v3479
    %v3728 = vpack.c.b16 %v3484, %v3480
    %v3729 = vpack.c.b16 %v3489, %v3485
    %v3730 = vpack.c.b16 %v3490, %v3486
    %v3731 = vpack.c.b16 %v3491, %v3487
    %v3732 = vpack.c.b16 %v3492, %v3488
    %v3733 = vpack.c.b16 %v3497, %v3493
    %v3734 = vpack.c.b16 %v3498, %v3494
    %v3735 = vpack.c.b16 %v3499, %v3495
    %v3736 = vpack.c.b16 %v3500, %v3496
    %v3737 = vpack.c.b16 %v3505, %v3501
    %v3738 = vpack.c.b16 %v3506, %v3502
    %v3739 = vpack.c.b16 %v3507, %v3503
    %v3740 = vpack.c.b16 %v3508, %v3504
    %v3741 = vpack.c.b16 %v3513, %v3509
    %v3742 = vpack.c.b16 %v3514, %v3510
    %v3743 = vpack.c.b16 %v3515, %v3511
    %v3744 = vpack.c.b16 %v3516, %v3512
    %v3745 = vpack.c.b16 %v3521, %v3517
    %v3746 = vpack.c.b16 %v3522, %v3518
    %v3747 = vpack.c.b16 %v3523, %v3519
    %v3748 = vpack.c.b16 %v3524, %v3520
    %v3749 = vpack.c.b16 %v3529, %v3525
    %v3750 = vpack.c.b16 %v3530, %v3526
    %v3751 = vpack.c.b16 %v3531, %v3527
    %v3752 = vpack.c.b16 %v3532, %v3528
    %v3753 = vpack.c.b16 %v3537, %v3533
    %v3754 = vpack.c.b16 %v3538, %v3534
    %v3755 = vpack.c.b16 %v3539, %v3535
    %v3756 = vpack.c.b16 %v3540, %v3536
    %v3757 = vpack.c.b16 %v3545, %v3541
    %v3758 = vpack.c.b16 %v3546, %v3542
    %v3759 = vpack.c.b16 %v3547, %v3543
    %v3760 = vpack.c.b16 %v3548, %v3544
    %v3761 = vpack.c.b16 %v3553, %v3549
    %v3762 = vpack.c.b16 %v3554, %v3550
    %v3763 = vpack.c.b16 %v3555, %v3551
    %v3764 = vpack.c.b16 %v3556, %v3552
    %v3765 = vpack.c.b16 %v3561, %v3557
    %v3766 = vpack.c.b16 %v3562, %v3558
    %v3767 = vpack.c.b16 %v3563, %v3559
    %v3768 = vpack.c.b16 %v3564, %v3560
    %v3769 = vpack.c.b16 %v3569, %v3565
    %v3770 = vpack.c.b16 %v3570, %v3566
    %v3771 = vpack.c.b16 %v3571, %v3567
    %v3772 = vpack.c.b16 %v3572, %v3568
    %v3773 = vpack.c.b16 %v3577, %v3573
    %v3774 = vpack.c.b16 %v3578, %v3574
    %v3775 = vpack.c.b16 %v3579, %v3575
    %v3776 = vpack.c.b16 %v3580, %v3576
    %v3777 = vpack.c.b16 %v3585, %v3581
    %v3778 = vpack.c.b16 %v3586, %v3582
    %v3779 = vpack.c.b16 %v3587, %v3583
    %v3780 = vpack.c.b16 %v3588, %v3584
    %3973 = vmatpush.bf16.msra.mxu0 %v3617
    %3974 = vmatpush.bf16.msra.mxu0 %v3613
    %3975 = vmatpush.bf16.msra.mxu0 %v3609
    %3976 = vmatpush.bf16.msra.mxu0 %v3605
    %3977 = vmatpush.bf16.msra.mxu0 %v3601
    %3978 = vmatpush.bf16.msra.mxu0 %v3597
    %3979 = vmatpush.bf16.msra.mxu0 %v3593
    %3980 = vmatpush.bf16.msra.mxu0 %v3589
    %3981 = vmatmul.bf16.gmra.mxu0 %v2805
    %v3982 = vpop.f32.mrf.mxu0
    %v3983 = vadd.f32 %v3005, %v3982
    %v3984 = vpop.f32.mrf.mxu0
    %v3985 = vadd.f32 %v3005, %v3984
    %3986 = vdwg.mxu0
    %3987 = vmatpush.bf16.msra.mxu0 %v3649
    %3988 = vmatpush.bf16.msra.mxu0 %v3645
    %3989 = vmatpush.bf16.msra.mxu0 %v3641
    %3990 = vmatpush.bf16.msra.mxu0 %v3637
    %3991 = vmatpush.bf16.msra.mxu0 %v3633
    %3992 = vmatpush.bf16.msra.mxu0 %v3629
    %3993 = vmatpush.bf16.msra.mxu0 %v3625
    %3994 = vmatpush.bf16.msra.mxu0 %v3621
    %3995 = vmatmul.bf16.gmra.mxu0 %v2806
    %v3996 = vpop.f32.mrf.mxu0
    %v3997 = vadd.f32 %v3983, %v3996
    %v3998 = vpop.f32.mrf.mxu0
    %v3999 = vadd.f32 %v3985, %v3998
    %4000 = vdwg.mxu0
    %4001 = vmatpush.bf16.msra.mxu0 %v3681
    %4002 = vmatpush.bf16.msra.mxu0 %v3677
    %4003 = vmatpush.bf16.msra.mxu0 %v3673
    %4004 = vmatpush.bf16.msra.mxu0 %v3669
    %4005 = vmatpush.bf16.msra.mxu0 %v3665
    %4006 = vmatpush.bf16.msra.mxu0 %v3661
    %4007 = vmatpush.bf16.msra.mxu0 %v3657
    %4008 = vmatpush.bf16.msra.mxu0 %v3653
    %4009 = vmatmul.bf16.gmra.mxu0 %v2807
    %v4010 = vpop.f32.mrf.mxu0
    %v4011 = vadd.f32 %v3997, %v4010
    %v4012 = vpop.f32.mrf.mxu0
    %v4013 = vadd.f32 %v3999, %v4012
    %4014 = vdwg.mxu0
    %4015 = vmatpush.bf16.msra.mxu0 %v3713
    %4016 = vmatpush.bf16.msra.mxu0 %v3709
    %4017 = vmatpush.bf16.msra.mxu0 %v3705
    %4018 = vmatpush.bf16.msra.mxu0 %v3701
    %4019 = vmatpush.bf16.msra.mxu0 %v3697
    %4020 = vmatpush.bf16.msra.mxu0 %v3693
    %4021 = vmatpush.bf16.msra.mxu0 %v3689
    %4022 = vmatpush.bf16.msra.mxu0 %v3685
    %4023 = vmatmul.bf16.gmra.mxu0 %v2808
    %v4024 = vpop.f32.mrf.mxu0
    %v4025 = vadd.f32 %v4011, %v4024
    %v4026 = vpop.f32.mrf.mxu0
    %v4027 = vadd.f32 %v4013, %v4026
    %4028 = vdwg.mxu0
    %4029 = vmatpush.bf16.msra.mxu0 %v3745
    %4030 = vmatpush.bf16.msra.mxu0 %v3741
    %4031 = vmatpush.bf16.msra.mxu0 %v3737
    %4032 = vmatpush.bf16.msra.mxu0 %v3733
    %4033 = vmatpush.bf16.msra.mxu0 %v3729
    %4034 = vmatpush.bf16.msra.mxu0 %v3725
    %4035 = vmatpush.bf16.msra.mxu0 %v3721
    %4036 = vmatpush.bf16.msra.mxu0 %v3717
    %4037 = vmatmul.bf16.gmra.mxu0 %v2809
    %v4038 = vpop.f32.mrf.mxu0
    %v4039 = vadd.f32 %v4025, %v4038
    %v4040 = vpop.f32.mrf.mxu0
    %v4041 = vadd.f32 %v4027, %v4040
    %4042 = vdwg.mxu0
    %4043 = vmatpush.bf16.msra.mxu0 %v3777
    %4044 = vmatpush.bf16.msra.mxu0 %v3773
    %4045 = vmatpush.bf16.msra.mxu0 %v3769
    %4046 = vmatpush.bf16.msra.mxu0 %v3765
    %4047 = vmatpush.bf16.msra.mxu0 %v3761
    %4048 = vmatpush.bf16.msra.mxu0 %v3757
    %4049 = vmatpush.bf16.msra.mxu0 %v3753
    %4050 = vmatpush.bf16.msra.mxu0 %v3749
    %4051 = vmatmul.bf16.gmra.mxu0 %v2810
    %v4052 = vpop.f32.mrf.mxu0
    %v4053 = vadd.f32 %v4039, %v4052
    %v4054 = vpop.f32.mrf.mxu0
    %v4055 = vadd.f32 %v4041, %v4054
    %4056 = vdwg.mxu0
    %4057 = vmatpush.bf16.msra.mxu0 %v3618
    %4058 = vmatpush.bf16.msra.mxu0 %v3614
    %4059 = vmatpush.bf16.msra.mxu0 %v3610
    %4060 = vmatpush.bf16.msra.mxu0 %v3606
    %4061 = vmatpush.bf16.msra.mxu0 %v3602
    %4062 = vmatpush.bf16.msra.mxu0 %v3598
    %4063 = vmatpush.bf16.msra.mxu0 %v3594
    %4064 = vmatpush.bf16.msra.mxu0 %v3590
    %4065 = vmatmul.bf16.gmra.mxu0 %v2805
    %v4066 = vpop.f32.mrf.mxu0
    %v4067 = vadd.f32 %v3006, %v4066
    %v4068 = vpop.f32.mrf.mxu0
    %v4069 = vadd.f32 %v3006, %v4068
    %4070 = vdwg.mxu0
    %4071 = vmatpush.bf16.msra.mxu0 %v3650
    %4072 = vmatpush.bf16.msra.mxu0 %v3646
    %4073 = vmatpush.bf16.msra.mxu0 %v3642
    %4074 = vmatpush.bf16.msra.mxu0 %v3638
    %4075 = vmatpush.bf16.msra.mxu0 %v3634
    %4076 = vmatpush.bf16.msra.mxu0 %v3630
    %4077 = vmatpush.bf16.msra.mxu0 %v3626
    %4078 = vmatpush.bf16.msra.mxu0 %v3622
    %4079 = vmatmul.bf16.gmra.mxu0 %v2806
    %v4080 = vpop.f32.mrf.mxu0
    %v4081 = vadd.f32 %v4067, %v4080
    %v4082 = vpop.f32.mrf.mxu0
    %v4083 = vadd.f32 %v4069, %v4082
    %4084 = vdwg.mxu0
    %4085 = vmatpush.bf16.msra.mxu0 %v3682
    %4086 = vmatpush.bf16.msra.mxu0 %v3678
    %4087 = vmatpush.bf16.msra.mxu0 %v3674
    %4088 = vmatpush.bf16.msra.mxu0 %v3670
    %4089 = vmatpush.bf16.msra.mxu0 %v3666
    %4090 = vmatpush.bf16.msra.mxu0 %v3662
    %4091 = vmatpush.bf16.msra.mxu0 %v3658
    %4092 = vmatpush.bf16.msra.mxu0 %v3654
    %4093 = vmatmul.bf16.gmra.mxu0 %v2807
    %v4094 = vpop.f32.mrf.mxu0
    %v4095 = vadd.f32 %v4081, %v4094
    %v4096 = vpop.f32.mrf.mxu0
    %v4097 = vadd.f32 %v4083, %v4096
    %4098 = vdwg.mxu0
    %4099 = vmatpush.bf16.msra.mxu0 %v3714
    %4100 = vmatpush.bf16.msra.mxu0 %v3710
    %4101 = vmatpush.bf16.msra.mxu0 %v3706
    %4102 = vmatpush.bf16.msra.mxu0 %v3702
    %4103 = vmatpush.bf16.msra.mxu0 %v3698
    %4104 = vmatpush.bf16.msra.mxu0 %v3694
    %4105 = vmatpush.bf16.msra.mxu0 %v3690
    %4106 = vmatpush.bf16.msra.mxu0 %v3686
    %4107 = vmatmul.bf16.gmra.mxu0 %v2808
    %v4108 = vpop.f32.mrf.mxu0
    %v4109 = vadd.f32 %v4095, %v4108
    %v4110 = vpop.f32.mrf.mxu0
    %v4111 = vadd.f32 %v4097, %v4110
    %4112 = vdwg.mxu0
    %4113 = vmatpush.bf16.msra.mxu0 %v3746
    %4114 = vmatpush.bf16.msra.mxu0 %v3742
    %4115 = vmatpush.bf16.msra.mxu0 %v3738
    %4116 = vmatpush.bf16.msra.mxu0 %v3734
    %4117 = vmatpush.bf16.msra.mxu0 %v3730
    %4118 = vmatpush.bf16.msra.mxu0 %v3726
    %4119 = vmatpush.bf16.msra.mxu0 %v3722
    %4120 = vmatpush.bf16.msra.mxu0 %v3718
    %4121 = vmatmul.bf16.gmra.mxu0 %v2809
    %v4122 = vpop.f32.mrf.mxu0
    %v4123 = vadd.f32 %v4109, %v4122
    %v4124 = vpop.f32.mrf.mxu0
    %v4125 = vadd.f32 %v4111, %v4124
    %4126 = vdwg.mxu0
    %4127 = vmatpush.bf16.msra.mxu0 %v3778
    %4128 = vmatpush.bf16.msra.mxu0 %v3774
    %4129 = vmatpush.bf16.msra.mxu0 %v3770
    %4130 = vmatpush.bf16.msra.mxu0 %v3766
    %4131 = vmatpush.bf16.msra.mxu0 %v3762
    %4132 = vmatpush.bf16.msra.mxu0 %v3758
    %4133 = vmatpush.bf16.msra.mxu0 %v3754
    %4134 = vmatpush.bf16.msra.mxu0 %v3750
    %4135 = vmatmul.bf16.gmra.mxu0 %v2810
    %v4136 = vpop.f32.mrf.mxu0
    %v4137 = vadd.f32 %v4123, %v4136
    %v4138 = vpop.f32.mrf.mxu0
    %v4139 = vadd.f32 %v4125, %v4138
    %4140 = vdwg.mxu0
    %4141 = vmatpush.bf16.msra.mxu0 %v3619
    %4142 = vmatpush.bf16.msra.mxu0 %v3615
    %4143 = vmatpush.bf16.msra.mxu0 %v3611
    %4144 = vmatpush.bf16.msra.mxu0 %v3607
    %4145 = vmatpush.bf16.msra.mxu0 %v3603
    %4146 = vmatpush.bf16.msra.mxu0 %v3599
    %4147 = vmatpush.bf16.msra.mxu0 %v3595
    %4148 = vmatpush.bf16.msra.mxu0 %v3591
    %4149 = vmatmul.bf16.gmra.mxu0 %v2805
    %v4150 = vpop.f32.mrf.mxu0
    %v4151 = vadd.f32 %v3007, %v4150
    %v4152 = vpop.f32.mrf.mxu0
    %v4153 = vadd.f32 %v3007, %v4152
    %4154 = vdwg.mxu0
    %4155 = vmatpush.bf16.msra.mxu0 %v3651
    %4156 = vmatpush.bf16.msra.mxu0 %v3647
    %4157 = vmatpush.bf16.msra.mxu0 %v3643
    %4158 = vmatpush.bf16.msra.mxu0 %v3639
    %4159 = vmatpush.bf16.msra.mxu0 %v3635
    %4160 = vmatpush.bf16.msra.mxu0 %v3631
    %4161 = vmatpush.bf16.msra.mxu0 %v3627
    %4162 = vmatpush.bf16.msra.mxu0 %v3623
    %4163 = vmatmul.bf16.gmra.mxu0 %v2806
    %v4164 = vpop.f32.mrf.mxu0
    %v4165 = vadd.f32 %v4151, %v4164
    %v4166 = vpop.f32.mrf.mxu0
    %v4167 = vadd.f32 %v4153, %v4166
    %4168 = vdwg.mxu0
    %4169 = vmatpush.bf16.msra.mxu0 %v3683
    %4170 = vmatpush.bf16.msra.mxu0 %v3679
    %4171 = vmatpush.bf16.msra.mxu0 %v3675
    %4172 = vmatpush.bf16.msra.mxu0 %v3671
    %4173 = vmatpush.bf16.msra.mxu0 %v3667
    %4174 = vmatpush.bf16.msra.mxu0 %v3663
    %4175 = vmatpush.bf16.msra.mxu0 %v3659
    %4176 = vmatpush.bf16.msra.mxu0 %v3655
    %4177 = vmatmul.bf16.gmra.mxu0 %v2807
    %v4178 = vpop.f32.mrf.mxu0
    %v4179 = vadd.f32 %v4165, %v4178
    %v4180 = vpop.f32.mrf.mxu0
    %v4181 = vadd.f32 %v4167, %v4180
    %4182 = vdwg.mxu0
    %4183 = vmatpush.bf16.msra.mxu0 %v3715
    %4184 = vmatpush.bf16.msra.mxu0 %v3711
    %4185 = vmatpush.bf16.msra.mxu0 %v3707
    %4186 = vmatpush.bf16.msra.mxu0 %v3703
    %4187 = vmatpush.bf16.msra.mxu0 %v3699
    %4188 = vmatpush.bf16.msra.mxu0 %v3695
    %4189 = vmatpush.bf16.msra.mxu0 %v3691
    %4190 = vmatpush.bf16.msra.mxu0 %v3687
    %4191 = vmatmul.bf16.gmra.mxu0 %v2808
    %v4192 = vpop.f32.mrf.mxu0
    %v4193 = vadd.f32 %v4179, %v4192
    %v4194 = vpop.f32.mrf.mxu0
    %v4195 = vadd.f32 %v4181, %v4194
    %4196 = vdwg.mxu0
    %4197 = vmatpush.bf16.msra.mxu0 %v3747
    %4198 = vmatpush.bf16.msra.mxu0 %v3743
    %4199 = vmatpush.bf16.msra.mxu0 %v3739
    %4200 = vmatpush.bf16.msra.mxu0 %v3735
    %4201 = vmatpush.bf16.msra.mxu0 %v3731
    %4202 = vmatpush.bf16.msra.mxu0 %v3727
    %4203 = vmatpush.bf16.msra.mxu0 %v3723
    %4204 = vmatpush.bf16.msra.mxu0 %v3719
    %4205 = vmatmul.bf16.gmra.mxu0 %v2809
    %v4206 = vpop.f32.mrf.mxu0
    %v4207 = vadd.f32 %v4193, %v4206
    %v4208 = vpop.f32.mrf.mxu0
    %v4209 = vadd.f32 %v4195, %v4208
    %4210 = vdwg.mxu0
    %4211 = vmatpush.bf16.msra.mxu0 %v3779
    %4212 = vmatpush.bf16.msra.mxu0 %v3775
    %4213 = vmatpush.bf16.msra.mxu0 %v3771
    %4214 = vmatpush.bf16.msra.mxu0 %v3767
    %4215 = vmatpush.bf16.msra.mxu0 %v3763
    %4216 = vmatpush.bf16.msra.mxu0 %v3759
    %4217 = vmatpush.bf16.msra.mxu0 %v3755
    %4218 = vmatpush.bf16.msra.mxu0 %v3751
    %4219 = vmatmul.bf16.gmra.mxu0 %v2810
    %v4220 = vpop.f32.mrf.mxu0
    %v4221 = vadd.f32 %v4207, %v4220
    %v4222 = vpop.f32.mrf.mxu0
    %v4223 = vadd.f32 %v4209, %v4222
    %4224 = vdwg.mxu0
    %4225 = vmatpush.bf16.msra.mxu0 %v3620
    %4226 = vmatpush.bf16.msra.mxu0 %v3616
    %4227 = vmatpush.bf16.msra.mxu0 %v3612
    %4228 = vmatpush.bf16.msra.mxu0 %v3608
    %4229 = vmatpush.bf16.msra.mxu0 %v3604
    %4230 = vmatpush.bf16.msra.mxu0 %v3600
    %4231 = vmatpush.bf16.msra.mxu0 %v3596
    %4232 = vmatpush.bf16.msra.mxu0 %v3592
    %4233 = vmatmul.bf16.gmra.mxu0 %v2805
    %v4234 = vpop.f32.mrf.mxu0
    %v4235 = vadd.f32 %v3008, %v4234
    %v4236 = vpop.f32.mrf.mxu0
    %v4237 = vadd.f32 %v3008, %v4236
    %4238 = vdwg.mxu0
    %4239 = vmatpush.bf16.msra.mxu0 %v3652
    %4240 = vmatpush.bf16.msra.mxu0 %v3648
    %4241 = vmatpush.bf16.msra.mxu0 %v3644
    %4242 = vmatpush.bf16.msra.mxu0 %v3640
    %4243 = vmatpush.bf16.msra.mxu0 %v3636
    %4244 = vmatpush.bf16.msra.mxu0 %v3632
    %4245 = vmatpush.bf16.msra.mxu0 %v3628
    %4246 = vmatpush.bf16.msra.mxu0 %v3624
    %4247 = vmatmul.bf16.gmra.mxu0 %v2806
    %v4248 = vpop.f32.mrf.mxu0
    %v4249 = vadd.f32 %v4235, %v4248
    %v4250 = vpop.f32.mrf.mxu0
    %v4251 = vadd.f32 %v4237, %v4250
    %4252 = vdwg.mxu0
    %4253 = vmatpush.bf16.msra.mxu0 %v3684
    %4254 = vmatpush.bf16.msra.mxu0 %v3680
    %4255 = vmatpush.bf16.msra.mxu0 %v3676
    %4256 = vmatpush.bf16.msra.mxu0 %v3672
    %4257 = vmatpush.bf16.msra.mxu0 %v3668
    %4258 = vmatpush.bf16.msra.mxu0 %v3664
    %4259 = vmatpush.bf16.msra.mxu0 %v3660
    %4260 = vmatpush.bf16.msra.mxu0 %v3656
    %4261 = vmatmul.bf16.gmra.mxu0 %v2807
    %v4262 = vpop.f32.mrf.mxu0
    %v4263 = vadd.f32 %v4249, %v4262
    %v4264 = vpop.f32.mrf.mxu0
    %v4265 = vadd.f32 %v4251, %v4264
    %4266 = vdwg.mxu0
    %4267 = vmatpush.bf16.msra.mxu0 %v3716
    %4268 = vmatpush.bf16.msra.mxu0 %v3712
    %4269 = vmatpush.bf16.msra.mxu0 %v3708
    %4270 = vmatpush.bf16.msra.mxu0 %v3704
    %4271 = vmatpush.bf16.msra.mxu0 %v3700
    %4272 = vmatpush.bf16.msra.mxu0 %v3696
    %4273 = vmatpush.bf16.msra.mxu0 %v3692
    %4274 = vmatpush.bf16.msra.mxu0 %v3688
    %4275 = vmatmul.bf16.gmra.mxu0 %v2808
    %v4276 = vpop.f32.mrf.mxu0
    %v4277 = vadd.f32 %v4263, %v4276
    %v4278 = vpop.f32.mrf.mxu0
    %v4279 = vadd.f32 %v4265, %v4278
    %4280 = vdwg.mxu0
    %4281 = vmatpush.bf16.msra.mxu0 %v3748
    %4282 = vmatpush.bf16.msra.mxu0 %v3744
    %4283 = vmatpush.bf16.msra.mxu0 %v3740
    %4284 = vmatpush.bf16.msra.mxu0 %v3736
    %4285 = vmatpush.bf16.msra.mxu0 %v3732
    %4286 = vmatpush.bf16.msra.mxu0 %v3728
    %4287 = vmatpush.bf16.msra.mxu0 %v3724
    %4288 = vmatpush.bf16.msra.mxu0 %v3720
    %4289 = vmatmul.bf16.gmra.mxu0 %v2809
    %v4290 = vpop.f32.mrf.mxu0
    %v4291 = vadd.f32 %v4277, %v4290
    %v4292 = vpop.f32.mrf.mxu0
    %v4293 = vadd.f32 %v4279, %v4292
    %4294 = vdwg.mxu0
    %4295 = vmatpush.bf16.msra.mxu0 %v3780
    %4296 = vmatpush.bf16.msra.mxu0 %v3776
    %4297 = vmatpush.bf16.msra.mxu0 %v3772
    %4298 = vmatpush.bf16.msra.mxu0 %v3768
    %4299 = vmatpush.bf16.msra.mxu0 %v3764
    %4300 = vmatpush.bf16.msra.mxu0 %v3760
    %4301 = vmatpush.bf16.msra.mxu0 %v3756
    %4302 = vmatpush.bf16.msra.mxu0 %v3752
    %4303 = vmatmul.bf16.gmra.mxu0 %v2810
    %v4304 = vpop.f32.mrf.mxu0
    %v4305 = vadd.f32 %v4291, %v4304
    %v4306 = vpop.f32.mrf.mxu0
    %v4307 = vadd.f32 %v4293, %v4306
    %4308 = vdwg.mxu0
    %v4309 = vmax.f32 %v4053, 0.0
    %v4310 = vmax.f32 %v4137, 0.0
    %v4311 = vmax.f32 %v4221, 0.0
    %v4312 = vmax.f32 %v4305, 0.0
    %v4313 = vmax.f32 %v4055, 0.0
    %v4314 = vmax.f32 %v4139, 0.0
    %v4315 = vmax.f32 %v4223, 0.0
    %v4316 = vmax.f32 %v4307, 0.0
    %v4317 = vpack.c.bf16 %v4313, %v4309
    %v4318 = vpack.c.bf16 %v4314, %v4310
    %v4319 = vpack.c.bf16 %v4315, %v4311
    %v4320 = vpack.c.bf16 %v4316, %v4312
    %v4321 = vld [vmem:[#allocation11] sm:$0xff]
    %v4322 = vld [vmem:[#allocation11 + $0x8] sm:$0xff]
    %v4323 = vld [vmem:[#allocation11 + $0x10] sm:$0xff]
    %v4324 = vld [vmem:[#allocation11 + $0x18] sm:$0xff]
    %v4325 = vld [vmem:[#allocation11 + $0x20] sm:$0xff]
    %v4326 = vld [vmem:[#allocation11 + $0x28] sm:$0xff]
    %v4327 = vld [vmem:[#allocation11 + $0x30] sm:$0xff]
    %v4328 = vld [vmem:[#allocation11 + $0x38] sm:$0xff]
    %v4329 = vld [vmem:[#allocation11 + $0x40] sm:$0xff]
    %v4330 = vld [vmem:[#allocation11 + $0x48] sm:$0xff]
    %v4331 = vld [vmem:[#allocation11 + $0x50] sm:$0xff]
    %v4332 = vld [vmem:[#allocation11 + $0x58] sm:$0xff]
    %v4333 = vld [vmem:[#allocation11 + $0x60] sm:$0xff]
    %v4334 = vld [vmem:[#allocation11 + $0x68] sm:$0xff]
    %v4335 = vld [vmem:[#allocation11 + $0x70] sm:$0xff]
    %v4336 = vld [vmem:[#allocation11 + $0x78] sm:$0xff]
    %v4337 = vld [vmem:[#allocation11 + $0x80] sm:$0xff]
    %v4338 = vld [vmem:[#allocation11 + $0x88] sm:$0xff]
    %v4339 = vld [vmem:[#allocation11 + $0x90] sm:$0xff]
    %v4340 = vld [vmem:[#allocation11 + $0x98] sm:$0xff]
    %v4341 = vld [vmem:[#allocation11 + $0xa0] sm:$0xff]
    %v4342 = vld [vmem:[#allocation11 + $0xa8] sm:$0xff]
    %v4343 = vld [vmem:[#allocation11 + $0xb0] sm:$0xff]
    %v4344 = vld [vmem:[#allocation11 + $0xb8] sm:$0xff]
    %v4345 = vld [vmem:[#allocation11 + $0xc0] sm:$0xff]
    %v4346 = vld [vmem:[#allocation11 + $0xc8] sm:$0xff]
    %v4347 = vld [vmem:[#allocation11 + $0xd0] sm:$0xff]
    %v4348 = vld [vmem:[#allocation11 + $0xd8] sm:$0xff]
    %v4349 = vld [vmem:[#allocation11 + $0xe0] sm:$0xff]
    %v4350 = vld [vmem:[#allocation11 + $0xe8] sm:$0xff]
    %v4351 = vld [vmem:[#allocation11 + $0xf0] sm:$0xff]
    %v4352 = vld [vmem:[#allocation11 + $0xf8] sm:$0xff]
    %v4353 = vld [vmem:[#allocation11 + $0x100] sm:$0xff]
    %v4354 = vld [vmem:[#allocation11 + $0x108] sm:$0xff]
    %v4355 = vld [vmem:[#allocation11 + $0x110] sm:$0xff]
    %v4356 = vld [vmem:[#allocation11 + $0x118] sm:$0xff]
    %v4357 = vld [vmem:[#allocation11 + $0x120] sm:$0xff]
    %v4358 = vld [vmem:[#allocation11 + $0x128] sm:$0xff]
    %v4359 = vld [vmem:[#allocation11 + $0x130] sm:$0xff]
    %v4360 = vld [vmem:[#allocation11 + $0x138] sm:$0xff]
    %v4361 = vld [vmem:[#allocation11 + $0x140] sm:$0xff]
    %v4362 = vld [vmem:[#allocation11 + $0x148] sm:$0xff]
    %v4363 = vld [vmem:[#allocation11 + $0x150] sm:$0xff]
    %v4364 = vld [vmem:[#allocation11 + $0x158] sm:$0xff]
    %v4365 = vld [vmem:[#allocation11 + $0x160] sm:$0xff]
    %v4366 = vld [vmem:[#allocation11 + $0x168] sm:$0xff]
    %v4367 = vld [vmem:[#allocation11 + $0x170] sm:$0xff]
    %v4368 = vld [vmem:[#allocation11 + $0x178] sm:$0xff]
    %v4369 = vld [vmem:[#allocation11 + $0x180] sm:$0xff]
    %v4370 = vld [vmem:[#allocation11 + $0x188] sm:$0xff]
    %v4371 = vld [vmem:[#allocation11 + $0x190] sm:$0xff]
    %v4372 = vld [vmem:[#allocation11 + $0x198] sm:$0xff]
    %v4373 = vld [vmem:[#allocation11 + $0x1a0] sm:$0xff]
    %v4374 = vld [vmem:[#allocation11 + $0x1a8] sm:$0xff]
    %v4375 = vld [vmem:[#allocation11 + $0x1b0] sm:$0xff]
    %v4376 = vld [vmem:[#allocation11 + $0x1b8] sm:$0xff]
    %v4377 = vld [vmem:[#allocation11 + $0x1c0] sm:$0xff]
    %v4378 = vld [vmem:[#allocation11 + $0x1c8] sm:$0xff]
    %v4379 = vld [vmem:[#allocation11 + $0x1d0] sm:$0xff]
    %v4380 = vld [vmem:[#allocation11 + $0x1d8] sm:$0xff]
    %v4381 = vld [vmem:[#allocation11 + $0x1e0] sm:$0xff]
    %v4382 = vld [vmem:[#allocation11 + $0x1e8] sm:$0xff]
    %v4383 = vld [vmem:[#allocation11 + $0x1f0] sm:$0xff]
    %v4384 = vld [vmem:[#allocation11 + $0x1f8] sm:$0xff]
    %v4385 = vld [vmem:[#allocation13] sm:$0x3]
    %v4387 = vperm.slane %v4385, 0
    %v4388 = vperm.slane %v4385, 1
    %v4455 = vunpack.c.l.b16 %v4321
    %v4456 = vunpack.c.h.b16 %v4321
    %v4457 = vunpack.c.l.b16 %v4322
    %v4458 = vunpack.c.h.b16 %v4322
    %v4459 = vunpack.c.l.b16 %v4323
    %v4460 = vunpack.c.h.b16 %v4323
    %v4461 = vunpack.c.l.b16 %v4324
    %v4462 = vunpack.c.h.b16 %v4324
    %v4463 = vunpack.c.l.b16 %v4325
    %v4464 = vunpack.c.h.b16 %v4325
    %v4465 = vunpack.c.l.b16 %v4326
    %v4466 = vunpack.c.h.b16 %v4326
    %v4467 = vunpack.c.l.b16 %v4327
    %v4468 = vunpack.c.h.b16 %v4327
    %v4469 = vunpack.c.l.b16 %v4328
    %v4470 = vunpack.c.h.b16 %v4328
    %v4471 = vunpack.c.l.b16 %v4329
    %v4472 = vunpack.c.h.b16 %v4329
    %v4473 = vunpack.c.l.b16 %v4330
    %v4474 = vunpack.c.h.b16 %v4330
    %v4475 = vunpack.c.l.b16 %v4331
    %v4476 = vunpack.c.h.b16 %v4331
    %v4477 = vunpack.c.l.b16 %v4332
    %v4478 = vunpack.c.h.b16 %v4332
    %v4479 = vunpack.c.l.b16 %v4333
    %v4480 = vunpack.c.h.b16 %v4333
    %v4481 = vunpack.c.l.b16 %v4334
    %v4482 = vunpack.c.h.b16 %v4334
    %v4483 = vunpack.c.l.b16 %v4335
    %v4484 = vunpack.c.h.b16 %v4335
    %v4485 = vunpack.c.l.b16 %v4336
    %v4486 = vunpack.c.h.b16 %v4336
    %v4487 = vunpack.c.l.b16 %v4337
    %v4488 = vunpack.c.h.b16 %v4337
    %v4489 = vunpack.c.l.b16 %v4338
    %v4490 = vunpack.c.h.b16 %v4338
    %v4491 = vunpack.c.l.b16 %v4339
    %v4492 = vunpack.c.h.b16 %v4339
    %v4493 = vunpack.c.l.b16 %v4340
    %v4494 = vunpack.c.h.b16 %v4340
    %v4495 = vunpack.c.l.b16 %v4341
    %v4496 = vunpack.c.h.b16 %v4341
    %v4497 = vunpack.c.l.b16 %v4342
    %v4498 = vunpack.c.h.b16 %v4342
    %v4499 = vunpack.c.l.b16 %v4343
    %v4500 = vunpack.c.h.b16 %v4343
    %v4501 = vunpack.c.l.b16 %v4344
    %v4502 = vunpack.c.h.b16 %v4344
    %v4503 = vunpack.c.l.b16 %v4345
    %v4504 = vunpack.c.h.b16 %v4345
    %v4505 = vunpack.c.l.b16 %v4346
    %v4506 = vunpack.c.h.b16 %v4346
    %v4507 = vunpack.c.l.b16 %v4347
    %v4508 = vunpack.c.h.b16 %v4347
    %v4509 = vunpack.c.l.b16 %v4348
    %v4510 = vunpack.c.h.b16 %v4348
    %v4511 = vunpack.c.l.b16 %v4349
    %v4512 = vunpack.c.h.b16 %v4349
    %v4513 = vunpack.c.l.b16 %v4350
    %v4514 = vunpack.c.h.b16 %v4350
    %v4515 = vunpack.c.l.b16 %v4351
    %v4516 = vunpack.c.h.b16 %v4351
    %v4517 = vunpack.c.l.b16 %v4352
    %v4518 = vunpack.c.h.b16 %v4352
    %v4519 = vunpack.c.l.b16 %v4353
    %v4520 = vunpack.c.h.b16 %v4353
    %v4521 = vunpack.c.l.b16 %v4354
    %v4522 = vunpack.c.h.b16 %v4354
    %v4523 = vunpack.c.l.b16 %v4355
    %v4524 = vunpack.c.h.b16 %v4355
    %v4525 = vunpack.c.l.b16 %v4356
    %v4526 = vunpack.c.h.b16 %v4356
    %v4527 = vunpack.c.l.b16 %v4357
    %v4528 = vunpack.c.h.b16 %v4357
    %v4529 = vunpack.c.l.b16 %v4358
    %v4530 = vunpack.c.h.b16 %v4358
    %v4531 = vunpack.c.l.b16 %v4359
    %v4532 = vunpack.c.h.b16 %v4359
    %v4533 = vunpack.c.l.b16 %v4360
    %v4534 = vunpack.c.h.b16 %v4360
    %v4535 = vunpack.c.l.b16 %v4361
    %v4536 = vunpack.c.h.b16 %v4361
    %v4537 = vunpack.c.l.b16 %v4362
    %v4538 = vunpack.c.h.b16 %v4362
    %v4539 = vunpack.c.l.b16 %v4363
    %v4540 = vunpack.c.h.b16 %v4363
    %v4541 = vunpack.c.l.b16 %v4364
    %v4542 = vunpack.c.h.b16 %v4364
    %v4543 = vunpack.c.l.b16 %v4365
    %v4544 = vunpack.c.h.b16 %v4365
    %v4545 = vunpack.c.l.b16 %v4366
    %v4546 = vunpack.c.h.b16 %v4366
    %v4547 = vunpack.c.l.b16 %v4367
    %v4548 = vunpack.c.h.b16 %v4367
    %v4549 = vunpack.c.l.b16 %v4368
    %v4550 = vunpack.c.h.b16 %v4368
    %v4551 = vunpack.c.l.b16 %v4369
    %v4552 = vunpack.c.h.b16 %v4369
    %v4553 = vunpack.c.l.b16 %v4370
    %v4554 = vunpack.c.h.b16 %v4370
    %v4555 = vunpack.c.l.b16 %v4371
    %v4556 = vunpack.c.h.b16 %v4371
    %v4557 = vunpack.c.l.b16 %v4372
    %v4558 = vunpack.c.h.b16 %v4372
    %v4559 = vunpack.c.l.b16 %v4373
    %v4560 = vunpack.c.h.b16 %v4373
    %v4561 = vunpack.c.l.b16 %v4374
    %v4562 = vunpack.c.h.b16 %v4374
    %v4563 = vunpack.c.l.b16 %v4375
    %v4564 = vunpack.c.h.b16 %v4375
    %v4565 = vunpack.c.l.b16 %v4376
    %v4566 = vunpack.c.h.b16 %v4376
    %v4567 = vunpack.c.l.b16 %v4377
    %v4568 = vunpack.c.h.b16 %v4377
    %v4569 = vunpack.c.l.b16 %v4378
    %v4570 = vunpack.c.h.b16 %v4378
    %v4571 = vunpack.c.l.b16 %v4379
    %v4572 = vunpack.c.h.b16 %v4379
    %v4573 = vunpack.c.l.b16 %v4380
    %v4574 = vunpack.c.h.b16 %v4380
    %v4575 = vunpack.c.l.b16 %v4381
    %v4576 = vunpack.c.h.b16 %v4381
    %v4577 = vunpack.c.l.b16 %v4382
    %v4578 = vunpack.c.h.b16 %v4382
    %v4579 = vunpack.c.l.b16 %v4383
    %v4580 = vunpack.c.h.b16 %v4383
    %v4581 = vunpack.c.l.b16 %v4384
    %v4582 = vunpack.c.h.b16 %v4384
    %v4583 = vpack.c.b16 %v4457, %v4455
    %v4584 = vpack.c.b16 %v4458, %v4456
    %v4585 = vpack.c.b16 %v4461, %v4459
    %v4586 = vpack.c.b16 %v4462, %v4460
    %v4587 = vpack.c.b16 %v4465, %v4463
    %v4588 = vpack.c.b16 %v4466, %v4464
    %v4589 = vpack.c.b16 %v4469, %v4467
    %v4590 = vpack.c.b16 %v4470, %v4468
    %v4591 = vpack.c.b16 %v4473, %v4471
    %v4592 = vpack.c.b16 %v4474, %v4472
    %v4593 = vpack.c.b16 %v4477, %v4475
    %v4594 = vpack.c.b16 %v4478, %v4476
    %v4595 = vpack.c.b16 %v4481, %v4479
    %v4596 = vpack.c.b16 %v4482, %v4480
    %v4597 = vpack.c.b16 %v4485, %v4483
    %v4598 = vpack.c.b16 %v4486, %v4484
    %v4599 = vpack.c.b16 %v4489, %v4487
    %v4600 = vpack.c.b16 %v4490, %v4488
    %v4601 = vpack.c.b16 %v4493, %v4491
    %v4602 = vpack.c.b16 %v4494, %v4492
    %v4603 = vpack.c.b16 %v4497, %v4495
    %v4604 = vpack.c.b16 %v4498, %v4496
    %v4605 = vpack.c.b16 %v4501, %v4499
    %v4606 = vpack.c.b16 %v4502, %v4500
    %v4607 = vpack.c.b16 %v4505, %v4503
    %v4608 = vpack.c.b16 %v4506, %v4504
    %v4609 = vpack.c.b16 %v4509, %v4507
    %v4610 = vpack.c.b16 %v4510, %v4508
    %v4611 = vpack.c.b16 %v4513, %v4511
    %v4612 = vpack.c.b16 %v4514, %v4512
    %v4613 = vpack.c.b16 %v4517, %v4515
    %v4614 = vpack.c.b16 %v4518, %v4516
    %v4615 = vpack.c.b16 %v4521, %v4519
    %v4616 = vpack.c.b16 %v4522, %v4520
    %v4617 = vpack.c.b16 %v4525, %v4523
    %v4618 = vpack.c.b16 %v4526, %v4524
    %v4619 = vpack.c.b16 %v4529, %v4527
    %v4620 = vpack.c.b16 %v4530, %v4528
    %v4621 = vpack.c.b16 %v4533, %v4531
    %v4622 = vpack.c.b16 %v4534, %v4532
    %v4623 = vpack.c.b16 %v4537, %v4535
    %v4624 = vpack.c.b16 %v4538, %v4536
    %v4625 = vpack.c.b16 %v4541, %v4539
    %v4626 = vpack.c.b16 %v4542, %v4540
    %v4627 = vpack.c.b16 %v4545, %v4543
    %v4628 = vpack.c.b16 %v4546, %v4544
    %v4629 = vpack.c.b16 %v4549, %v4547
    %v4630 = vpack.c.b16 %v4550, %v4548
    %v4631 = vpack.c.b16 %v4553, %v4551
    %v4632 = vpack.c.b16 %v4554, %v4552
    %v4633 = vpack.c.b16 %v4557, %v4555
    %v4634 = vpack.c.b16 %v4558, %v4556
    %v4635 = vpack.c.b16 %v4561, %v4559
    %v4636 = vpack.c.b16 %v4562, %v4560
    %v4637 = vpack.c.b16 %v4565, %v4563
    %v4638 = vpack.c.b16 %v4566, %v4564
    %v4639 = vpack.c.b16 %v4569, %v4567
    %v4640 = vpack.c.b16 %v4570, %v4568
    %v4641 = vpack.c.b16 %v4573, %v4571
    %v4642 = vpack.c.b16 %v4574, %v4572
    %v4643 = vpack.c.b16 %v4577, %v4575
    %v4644 = vpack.c.b16 %v4578, %v4576
    %v4645 = vpack.c.b16 %v4581, %v4579
    %v4646 = vpack.c.b16 %v4582, %v4580
    %4711 = vmatpush.bf16.msra.mxu0 %v4597
    %4712 = vmatpush.bf16.msra.mxu0 %v4595
    %4713 = vmatpush.bf16.msra.mxu0 %v4593
    %4714 = vmatpush.bf16.msra.mxu0 %v4591
    %4715 = vmatpush.bf16.msra.mxu0 %v4589
    %4716 = vmatpush.bf16.msra.mxu0 %v4587
    %4717 = vmatpush.bf16.msra.mxu0 %v4585
    %4718 = vmatpush.bf16.msra.mxu0 %v4583
    %4719 = vmatmul.bf16.gmra.mxu0 %v4317
    %v4720 = vpop.f32.mrf.mxu0
    %v4721 = vadd.f32 %v4387, %v4720
    %v4722 = vpop.f32.mrf.mxu0
    %v4723 = vadd.f32 %v4387, %v4722
    %4724 = vdwg.mxu0
    %4725 = vmatpush.bf16.msra.mxu0 %v4613
    %4726 = vmatpush.bf16.msra.mxu0 %v4611
    %4727 = vmatpush.bf16.msra.mxu0 %v4609
    %4728 = vmatpush.bf16.msra.mxu0 %v4607
    %4729 = vmatpush.bf16.msra.mxu0 %v4605
    %4730 = vmatpush.bf16.msra.mxu0 %v4603
    %4731 = vmatpush.bf16.msra.mxu0 %v4601
    %4732 = vmatpush.bf16.msra.mxu0 %v4599
    %4733 = vmatmul.bf16.gmra.mxu0 %v4318
    %v4734 = vpop.f32.mrf.mxu0
    %v4735 = vadd.f32 %v4721, %v4734
    %v4736 = vpop.f32.mrf.mxu0
    %v4737 = vadd.f32 %v4723, %v4736
    %4738 = vdwg.mxu0
    %4739 = vmatpush.bf16.msra.mxu0 %v4629
    %4740 = vmatpush.bf16.msra.mxu0 %v4627
    %4741 = vmatpush.bf16.msra.mxu0 %v4625
    %4742 = vmatpush.bf16.msra.mxu0 %v4623
    %4743 = vmatpush.bf16.msra.mxu0 %v4621
    %4744 = vmatpush.bf16.msra.mxu0 %v4619
    %4745 = vmatpush.bf16.msra.mxu0 %v4617
    %4746 = vmatpush.bf16.msra.mxu0 %v4615
    %4747 = vmatmul.bf16.gmra.mxu0 %v4319
    %v4748 = vpop.f32.mrf.mxu0
    %v4749 = vadd.f32 %v4735, %v4748
    %v4750 = vpop.f32.mrf.mxu0
    %v4751 = vadd.f32 %v4737, %v4750
    %4752 = vdwg.mxu0
    %4753 = vmatpush.bf16.msra.mxu0 %v4645
    %4754 = vmatpush.bf16.msra.mxu0 %v4643
    %4755 = vmatpush.bf16.msra.mxu0 %v4641
    %4756 = vmatpush.bf16.msra.mxu0 %v4639
    %4757 = vmatpush.bf16.msra.mxu0 %v4637
    %4758 = vmatpush.bf16.msra.mxu0 %v4635
    %4759 = vmatpush.bf16.msra.mxu0 %v4633
    %4760 = vmatpush.bf16.msra.mxu0 %v4631
    %4761 = vmatmul.bf16.gmra.mxu0 %v4320
    %v4762 = vpop.f32.mrf.mxu0
    %v4763 = vadd.f32 %v4749, %v4762
    %v4764 = vpop.f32.mrf.mxu0
    %v4765 = vadd.f32 %v4751, %v4764
    %4766 = vdwg.mxu0
    %4767 = vmatpush.bf16.msra.mxu0 %v4598
    %4768 = vmatpush.bf16.msra.mxu0 %v4596
    %4769 = vmatpush.bf16.msra.mxu0 %v4594
    %4770 = vmatpush.bf16.msra.mxu0 %v4592
    %4771 = vmatpush.bf16.msra.mxu0 %v4590
    %4772 = vmatpush.bf16.msra.mxu0 %v4588
    %4773 = vmatpush.bf16.msra.mxu0 %v4586
    %4774 = vmatpush.bf16.msra.mxu0 %v4584
    %4775 = vmatmul.bf16.gmra.mxu0 %v4317
    %v4776 = vpop.f32.mrf.mxu0
    %v4777 = vadd.f32 %v4388, %v4776
    %v4778 = vpop.f32.mrf.mxu0
    %v4779 = vadd.f32 %v4388, %v4778
    %4780 = vdwg.mxu0
    %4781 = vmatpush.bf16.msra.mxu0 %v4614
    %4782 = vmatpush.bf16.msra.mxu0 %v4612
    %4783 = vmatpush.bf16.msra.mxu0 %v4610
    %4784 = vmatpush.bf16.msra.mxu0 %v4608
    %4785 = vmatpush.bf16.msra.mxu0 %v4606
    %4786 = vmatpush.bf16.msra.mxu0 %v4604
    %4787 = vmatpush.bf16.msra.mxu0 %v4602
    %4788 = vmatpush.bf16.msra.mxu0 %v4600
    %4789 = vmatmul.bf16.gmra.mxu0 %v4318
    %v4790 = vpop.f32.mrf.mxu0
    %v4791 = vadd.f32 %v4777, %v4790
    %v4792 = vpop.f32.mrf.mxu0
    %v4793 = vadd.f32 %v4779, %v4792
    %4794 = vdwg.mxu0
    %4795 = vmatpush.bf16.msra.mxu0 %v4630
    %4796 = vmatpush.bf16.msra.mxu0 %v4628
    %4797 = vmatpush.bf16.msra.mxu0 %v4626
    %4798 = vmatpush.bf16.msra.mxu0 %v4624
    %4799 = vmatpush.bf16.msra.mxu0 %v4622
    %4800 = vmatpush.bf16.msra.mxu0 %v4620
    %4801 = vmatpush.bf16.msra.mxu0 %v4618
    %4802 = vmatpush.bf16.msra.mxu0 %v4616
    %4803 = vmatmul.bf16.gmra.mxu0 %v4319
    %v4804 = vpop.f32.mrf.mxu0
    %v4805 = vadd.f32 %v4791, %v4804
    %v4806 = vpop.f32.mrf.mxu0
    %v4807 = vadd.f32 %v4793, %v4806
    %4808 = vdwg.mxu0
    %4809 = vmatpush.bf16.msra.mxu0 %v4646
    %4810 = vmatpush.bf16.msra.mxu0 %v4644
    %4811 = vmatpush.bf16.msra.mxu0 %v4642
    %4812 = vmatpush.bf16.msra.mxu0 %v4640
    %4813 = vmatpush.bf16.msra.mxu0 %v4638
    %4814 = vmatpush.bf16.msra.mxu0 %v4636
    %4815 = vmatpush.bf16.msra.mxu0 %v4634
    %4816 = vmatpush.bf16.msra.mxu0 %v4632
    %4817 = vmatmul.bf16.gmra.mxu0 %v4320
    %v4818 = vpop.f32.mrf.mxu0
    %v4819 = vadd.f32 %v4805, %v4818
    %v4820 = vpop.f32.mrf.mxu0
    %v4821 = vadd.f32 %v4807, %v4820
    %4822 = vdwg.mxu0
    %v4823 = vmax.f32 %v4763, 0.0
    %v4824 = vmax.f32 %v4819, 0.0
    %v4825 = vmax.f32 %v4765, 0.0
    %v4826 = vmax.f32 %v4821, 0.0
    %v4827 = vpack.c.bf16 %v4825, %v4823
    %v4828 = vpack.c.bf16 %v4826, %v4824
    %v4829 = vld [vmem:[%s9] sm:$0xf]
    %v4830 = vld [vmem:[%s9 + $0x4] sm:$0xf]
    %v4831 = vld [vmem:[%s9 + $0x8] sm:$0xf]
    %v4832 = vld [vmem:[%s9 + $0xc] sm:$0xf]
    %v4833 = vld [vmem:[%s9 + $0x10] sm:$0xf]
    %v4834 = vld [vmem:[%s9 + $0x14] sm:$0xf]
    %v4835 = vld [vmem:[%s9 + $0x18] sm:$0xf]
    %v4836 = vld [vmem:[%s9 + $0x1c] sm:$0xf]
    %v4837 = vld [vmem:[%s9 + $0x20] sm:$0xf]
    %v4838 = vld [vmem:[%s9 + $0x24] sm:$0xf]
    %v4839 = vld [vmem:[%s9 + $0x28] sm:$0xf]
    %v4840 = vld [vmem:[%s9 + $0x2c] sm:$0xf]
    %v4841 = vld [vmem:[%s9 + $0x30] sm:$0xf]
    %v4842 = vld [vmem:[%s9 + $0x34] sm:$0xf]
    %v4843 = vld [vmem:[%s9 + $0x38] sm:$0xf]
    %v4844 = vld [vmem:[%s9 + $0x3c] sm:$0xf]
    %v4845 = vld [vmem:[%s9 + $0x40] sm:$0xf]
    %v4846 = vld [vmem:[%s9 + $0x44] sm:$0xf]
    %v4847 = vld [vmem:[%s9 + $0x48] sm:$0xf]
    %v4848 = vld [vmem:[%s9 + $0x4c] sm:$0xf]
    %v4849 = vld [vmem:[%s9 + $0x50] sm:$0xf]
    %v4850 = vld [vmem:[%s9 + $0x54] sm:$0xf]
    %v4851 = vld [vmem:[%s9 + $0x58] sm:$0xf]
    %v4852 = vld [vmem:[%s9 + $0x5c] sm:$0xf]
    %v4853 = vld [vmem:[%s9 + $0x60] sm:$0xf]
    %v4854 = vld [vmem:[%s9 + $0x64] sm:$0xf]
    %v4855 = vld [vmem:[%s9 + $0x68] sm:$0xf]
    %v4856 = vld [vmem:[%s9 + $0x6c] sm:$0xf]
    %v4857 = vld [vmem:[%s9 + $0x70] sm:$0xf]
    %v4858 = vld [vmem:[%s9 + $0x74] sm:$0xf]
    %v4859 = vld [vmem:[%s9 + $0x78] sm:$0xf]
    %v4860 = vld [vmem:[%s9 + $0x7c] sm:$0xf]
    %v4861 = vld [vmem:[%s10] sm:$0x1]
    %v4863 = vperm.slane %v4861, 0
    %v4897 = vunpack.c.l.b16 %v4829
    %v4898 = vunpack.c.l.b16 %v4830
    %v4899 = vunpack.c.l.b16 %v4831
    %v4900 = vunpack.c.l.b16 %v4832
    %v4901 = vunpack.c.l.b16 %v4833
    %v4902 = vunpack.c.l.b16 %v4834
    %v4903 = vunpack.c.l.b16 %v4835
    %v4904 = vunpack.c.l.b16 %v4836
    %v4905 = vunpack.c.l.b16 %v4837
    %v4906 = vunpack.c.l.b16 %v4838
    %v4907 = vunpack.c.l.b16 %v4839
    %v4908 = vunpack.c.l.b16 %v4840
    %v4909 = vunpack.c.l.b16 %v4841
    %v4910 = vunpack.c.l.b16 %v4842
    %v4911 = vunpack.c.l.b16 %v4843
    %v4912 = vunpack.c.l.b16 %v4844
    %v4913 = vunpack.c.l.b16 %v4845
    %v4914 = vunpack.c.l.b16 %v4846
    %v4915 = vunpack.c.l.b16 %v4847
    %v4916 = vunpack.c.l.b16 %v4848
    %v4917 = vunpack.c.l.b16 %v4849
    %v4918 = vunpack.c.l.b16 %v4850
    %v4919 = vunpack.c.l.b16 %v4851
    %v4920 = vunpack.c.l.b16 %v4852
    %v4921 = vunpack.c.l.b16 %v4853
    %v4922 = vunpack.c.l.b16 %v4854
    %v4923 = vunpack.c.l.b16 %v4855
    %v4924 = vunpack.c.l.b16 %v4856
    %v4925 = vunpack.c.l.b16 %v4857
    %v4926 = vunpack.c.l.b16 %v4858
    %v4927 = vunpack.c.l.b16 %v4859
    %v4928 = vunpack.c.l.b16 %v4860
    %v4929 = vpack.c.b16 %v4898, %v4897
    %v4930 = vpack.c.b16 %v4900, %v4899
    %v4931 = vpack.c.b16 %v4902, %v4901
    %v4932 = vpack.c.b16 %v4904, %v4903
    %v4933 = vpack.c.b16 %v4906, %v4905
    %v4934 = vpack.c.b16 %v4908, %v4907
    %v4935 = vpack.c.b16 %v4910, %v4909
    %v4936 = vpack.c.b16 %v4912, %v4911
    %v4937 = vpack.c.b16 %v4914, %v4913
    %v4938 = vpack.c.b16 %v4916, %v4915
    %v4939 = vpack.c.b16 %v4918, %v4917
    %v4940 = vpack.c.b16 %v4920, %v4919
    %v4941 = vpack.c.b16 %v4922, %v4921
    %v4942 = vpack.c.b16 %v4924, %v4923
    %v4943 = vpack.c.b16 %v4926, %v4925
    %v4944 = vpack.c.b16 %v4928, %v4927
    %4961 = vmatpush.bf16.msra.mxu0 %v4936
    %4962 = vmatpush.bf16.msra.mxu0 %v4935
    %4963 = vmatpush.bf16.msra.mxu0 %v4934
    %4964 = vmatpush.bf16.msra.mxu0 %v4933
    %4965 = vmatpush.bf16.msra.mxu0 %v4932
    %4966 = vmatpush.bf16.msra.mxu0 %v4931
    %4967 = vmatpush.bf16.msra.mxu0 %v4930
    %4968 = vmatpush.bf16.msra.mxu0 %v4929
    %4969 = vmatmul.bf16.gmra.mxu0 %v4827
    %v4970 = vpop.f32.mrf.mxu0
    %v4971 = vadd.f32 %v4863, %v4970
    %v4972 = vpop.f32.mrf.mxu0
    %v4973 = vadd.f32 %v4863, %v4972
    %4974 = vdwg.mxu0
    %4975 = vmatpush.bf16.msra.mxu0 %v4944
    %4976 = vmatpush.bf16.msra.mxu0 %v4943
    %4977 = vmatpush.bf16.msra.mxu0 %v4942
    %4978 = vmatpush.bf16.msra.mxu0 %v4941
    %4979 = vmatpush.bf16.msra.mxu0 %v4940
    %4980 = vmatpush.bf16.msra.mxu0 %v4939
    %4981 = vmatpush.bf16.msra.mxu0 %v4938
    %4982 = vmatpush.bf16.msra.mxu0 %v4937
    %4983 = vmatmul.bf16.gmra.mxu0 %v4828
    %v4984 = vpop.f32.mrf.mxu0
    %v4985 = vadd.f32 %v4971, %v4984
    %v4986 = vpop.f32.mrf.mxu0
    %v4987 = vadd.f32 %v4973, %v4986
    %4988 = vdwg.mxu0
    %v4989 = vmax.f32 %v4985, 0.0
    %v4990 = vmax.f32 %v4987, 0.0
    %4991 = vst [vmem:[#allocation14] sm:$0xff] %v4989
    %4992 = vst [vmem:[#allocation14 + $0x8] sm:$0xff] %v4990
    // Predicated region
    $region74: #{_path_decoder_medium_impl.1} parent=1 // pred_check
      _
    $region75: #{_path_decoder_medium_impl.1} parent=1 // pred_check_branch
      %4994 = sbr.rel (0) target = $region77
    $region76: #{_path_decoder_medium_impl.1} parent=1 // pred_region
      %4996 = vsyncadd [#allocation4], 0
      %s4997 = sshll.u32 [#allocation14], 4
      %s4998 = int_to_ptr.vmem [resolvable:$true] %s4997
      %s4999 = sshll.u32 %s11, 4
      %s5000 = int_to_ptr.hbm [resolvable:$true] %s4999
      %5005 = dma.vmem_to_hbm [thread:$0]  %s4998, 256, %s5000, [#allocation4], 128, 128, 8
    $region77: #{_path_decoder_medium_impl.1} parent=1 // pred_fallthru
      _
    // Predicated region
    $region78: #{_path_decoder_medium_impl.1} parent=1 // pred_check
      _
    $region79: #{_path_decoder_medium_impl.1} parent=1 // pred_check_branch
      %5007 = sbr.rel (0) target = $region81
    $region80: #{_path_decoder_medium_impl.1} parent=1 // pred_region
      %5009 = dma.done [#allocation4], 256
    $region81: #{_path_decoder_medium_impl.1} parent=1 // pred_fallthru
      _
    %5010 = vsyncpa [#allocation3], 1
    %5011 = vsyncpa [#allocation6], 1
    %5012 = vsyncpa [#allocation9], 1
    %5013 = vsyncpa [#allocation12], 1
    %5014 = vsyncpa [#allocation4], 1

// kernel: _path_decoder_medium_impl.1
$region0: #{_path_decoder_medium_impl.1}
  #allocation0 [shape = 'u32[]', space=smem, size = 0x4, offset = 0x4, fixed_abs, tag = 'smem constant byte address 0x4 - core index']
  #allocation1 [shape = 'u32[72,128]{1,0:T(1,128)}', space=vmem, size = 0x9000, scoped, tag = 'internal scratch']
  %s0 = inlined_call_operand.vmem [shape: f32[16,128], index: 0, kind: input, shape index: {}]
  %s1 = inlined_call_operand.vmem [shape: bf16[128,768], index: 1, kind: input, shape index: {}]
  %s2 = inlined_call_operand.hbm [shape: f32[1,768], index: 2, kind: input, shape index: {}]
  %s3 = inlined_call_operand.hbm [shape: bf16[768,768], index: 3, kind: input, shape index: {}]
  %s4 = inlined_call_operand.hbm [shape: f32[1,768], index: 4, kind: input, shape index: {}]
  %s5 = inlined_call_operand.hbm [shape: bf16[768,512], index: 5, kind: input, shape index: {}]
  %s6 = inlined_call_operand.hbm [shape: f32[1,512], index: 6, kind: input, shape index: {}]
  %s7 = inlined_call_operand.hbm [shape: bf16[512,256], index: 7, kind: input, shape index: {}]
  %s8 = inlined_call_operand.hbm [shape: f32[1,256], index: 8, kind: input, shape index: {}]
  %s9 = inlined_call_operand.vmem [shape: bf16[256,128], index: 9, kind: input, shape index: {}]
  %s10 = inlined_call_operand.vmem [shape: f32[1,128], index: 10, kind: input, shape index: {}]
  %s11 = inlined_call_operand.hbm [shape: f32[16,128], index: 11, kind: output, shape index: {}]
  %s12 = sld [smem:[#allocation0]]
  $region82: #{_path_decoder_medium_impl.1} parent=0
    _
  %s14 = ssub.s32 1, %s12
  %s15 = scalar_select 0, %s14, %s12
  $region1: #{_path_decoder_medium_impl.1} parent=0
    #allocation2 [shape = 'u8[3072]{0}', space=vmem, size = 0xc00, scoped, tag = 'input window, operand 2, single buffered']
    #allocation3 [shape = 's32[1]{0}', space=sflag, size = 0x4, scoped, tag = 'scoped memory for _path_decoder_medium_impl.1']
    #allocation4 [shape = 's32[1]{0}', space=sflag, size = 0x4, scoped, tag = 'scoped memory for _path_decoder_medium_impl.1']
    #allocation5 [shape = 'u8[1179648]{0}', space=vmem, size = 0x120000, scoped, tag = 'input window, operand 3, single buffered']
    #allocation6 [shape = 's32[1]{0}', space=sflag, size = 0x4, scoped, tag = 'scoped memory for _path_decoder_medium_impl.1']
    #allocation7 [shape = 'u8[3072]{0}', space=vmem, size = 0xc00, scoped, tag = 'input window, operand 4, single buffered']
    #allocation8 [shape = 'u8[786432]{0}', space=vmem, size = 0xc0000, scoped, tag = 'input window, operand 5, single buffered']
    #allocation9 [shape = 's32[1]{0}', space=sflag, size = 0x4, scoped, tag = 'scoped memory for _path_decoder_medium_impl.1']
    #allocation10 [shape = 'u8[2048]{0}', space=vmem, size = 0x800, scoped, tag = 'input window, operand 6, single buffered']
    #allocation11 [shape = 'u8[262144]{0}', space=vmem, size = 0x40000, scoped, tag = 'input window, operand 7, single buffered']
    #allocation12 [shape = 's32[1]{0}', space=sflag, size = 0x4, scoped, tag = 'scoped memory for _path_decoder_medium_impl.1']
    #allocation13 [shape = 'u8[1024]{0}', space=vmem, size = 0x400, scoped, tag = 'input window, operand 8, single buffered']
    #allocation14 [shape = 'u8[8192]{0}', space=vmem, size = 0x2000, scoped, tag = 'output window, operand 0, single buffered']
    %16 = vsyncpa [#allocation3], 0
    %17 = vsyncpa [#allocation6], 0
    %18 = vsyncpa [#allocation9], 0
    %19 = vsyncpa [#allocation12], 0
    %20 = vsyncpa [#allocation4], 0
    // Predicated region
    $region2: #{_path_decoder_medium_impl.1} parent=1 // pred_check
      _
    $region3: #{_path_decoder_medium_impl.1} parent=1 // pred_check_branch
      %22 = sbr.rel (0) target = $region5
    $region4: #{_path_decoder_medium_impl.1} parent=1 // pred_region
      _
    $region5: #{_path_decoder_medium_impl.1} parent=1 // pred_fallthru
      _
    // Predicated region
    $region6: #{_path_decoder_medium_impl.1} parent=1 // pred_check
      _
    $region7: #{_path_decoder_medium_impl.1} parent=1 // pred_check_branch
      %24 = sbr.rel (0) target = $region9
    $region8: #{_path_decoder_medium_impl.1} parent=1 // pred_region
      _
    $region9: #{_path_decoder_medium_impl.1} parent=1 // pred_fallthru
      _
    // Predicated region
    $region10: #{_path_decoder_medium_impl.1} parent=1 // pred_check
      _
    $region11: #{_path_decoder_medium_impl.1} parent=1 // pred_check_branch
      %26 = sbr.rel (0) target = $region13
    $region12: #{_path_decoder_medium_impl.1} parent=1 // pred_region
      %28 = vsyncadd [#allocation3], 0
      %s30 = sshll.u32 %s2, 4
      %s31 = int_to_ptr.hbm [resolvable:$true] %s30
      %s32 = sshll.u32 [#allocation2], 4
      %s33 = int_to_ptr.vmem [resolvable:$true] %s32
      %35 = dma.hbm_to_vmem [thread:$0]  %s31, 96, %s33, [#allocation3]
    $region13: #{_path_decoder_medium_impl.1} parent=1 // pred_fallthru
      _
    // Predicated region
    $region14: #{_path_decoder_medium_impl.1} parent=1 // pred_check
      _
    $region15: #{_path_decoder_medium_impl.1} parent=1 // pred_check_branch
      %37 = sbr.rel (0) target = $region17
    $region16: #{_path_decoder_medium_impl.1} parent=1 // pred_region
      %39 = vsyncadd [#allocation6], 0
      %s40 = sshll.u32 %s3, 4
      %s41 = int_to_ptr.hbm [resolvable:$true] %s40
      %s42 = sshll.u32 [#allocation5], 4
      %s43 = int_to_ptr.vmem [resolvable:$true] %s42
      %48 = dma.hbm_to_vmem [thread:$0]  %s41, 36864, %s43, [#allocation6], 384, 384, 24
    $region17: #{_path_decoder_medium_impl.1} parent=1 // pred_fallthru
      _
    // Predicated region
    $region18: #{_path_decoder_medium_impl.1} parent=1 // pred_check
      _
    $region19: #{_path_decoder_medium_impl.1} parent=1 // pred_check_branch
      %50 = sbr.rel (0) target = $region21
    $region20: #{_path_decoder_medium_impl.1} parent=1 // pred_region
      %52 = vsyncadd [#allocation6], 0
      %s54 = sshll.u32 %s4, 4
      %s55 = int_to_ptr.hbm [resolvable:$true] %s54
      %s56 = sshll.u32 [#allocation7], 4
      %s57 = int_to_ptr.vmem [resolvable:$true] %s56
      %59 = dma.hbm_to_vmem [thread:$0]  %s55, 96, %s57, [#allocation6]
    $region21: #{_path_decoder_medium_impl.1} parent=1 // pred_fallthru
      _
    // Predicated region
    $region22: #{_path_decoder_medium_impl.1} parent=1 // pred_check
      _
    $region23: #{_path_decoder_medium_impl.1} parent=1 // pred_check_branch
      %61 = sbr.rel (0) target = $region25
    $region24: #{_path_decoder_medium_impl.1} parent=1 // pred_region
      %63 = vsyncadd [#allocation9], 0
      %s64 = sshll.u32 %s5, 4
      %s65 = int_to_ptr.hbm [resolvable:$true] %s64
      %s66 = sshll.u32 [#allocation8], 4
      %s67 = int_to_ptr.vmem [resolvable:$true] %s66
      %72 = dma.hbm_to_vmem [thread:$0]  %s65, 24576, %s67, [#allocation9], 256, 256, 16
    $region25: #{_path_decoder_medium_impl.1} parent=1 // pred_fallthru
      _
    // Predicated region
    $region26: #{_path_decoder_medium_impl.1} parent=1 // pred_check
      _
    $region27: #{_path_decoder_medium_impl.1} parent=1 // pred_check_branch
      %74 = sbr.rel (0) target = $region29
    $region28: #{_path_decoder_medium_impl.1} parent=1 // pred_region
      %76 = vsyncadd [#allocation9], 0
      %s78 = sshll.u32 %s6, 4
      %s79 = int_to_ptr.hbm [resolvable:$true] %s78
      %s80 = sshll.u32 [#allocation10], 4
      %s81 = int_to_ptr.vmem [resolvable:$true] %s80
      %83 = dma.hbm_to_vmem [thread:$0]  %s79, 64, %s81, [#allocation9]
    $region29: #{_path_decoder_medium_impl.1} parent=1 // pred_fallthru
      _
    // Predicated region
    $region30: #{_path_decoder_medium_impl.1} parent=1 // pred_check
      _
    $region31: #{_path_decoder_medium_impl.1} parent=1 // pred_check_branch
      %85 = sbr.rel (0) target = $region33
    $region32: #{_path_decoder_medium_impl.1} parent=1 // pred_region
      %87 = vsyncadd [#allocation12], 0
      %s88 = sshll.u32 %s7, 4
      %s89 = int_to_ptr.hbm [resolvable:$true] %s88
      %s90 = sshll.u32 [#allocation11], 4
      %s91 = int_to_ptr.vmem [resolvable:$true] %s90
      %96 = dma.hbm_to_vmem [thread:$0]  %s89, 8192, %s91, [#allocation12], 128, 128, 8
    $region33: #{_path_decoder_medium_impl.1} parent=1 // pred_fallthru
      _
    // Predicated region
    $region34: #{_path_decoder_medium_impl.1} parent=1 // pred_check
      _
    $region35: #{_path_decoder_medium_impl.1} parent=1 // pred_check_branch
      %98 = sbr.rel (0) target = $region37
    $region36: #{_path_decoder_medium_impl.1} parent=1 // pred_region
      %100 = vsyncadd [#allocation12], 0
      %s102 = sshll.u32 %s8, 4
      %s103 = int_to_ptr.hbm [resolvable:$true] %s102
      %s104 = sshll.u32 [#allocation13], 4
      %s105 = int_to_ptr.vmem [resolvable:$true] %s104
      %107 = dma.hbm_to_vmem [thread:$0]  %s103, 32, %s105, [#allocation12]
    $region37: #{_path_decoder_medium_impl.1} parent=1 // pred_fallthru
      _
    // Predicated region
    $region38: #{_path_decoder_medium_impl.1} parent=1 // pred_check
      _
    $region39: #{_path_decoder_medium_impl.1} parent=1 // pred_check_branch
      %109 = sbr.rel (0) target = $region41
    $region40: #{_path_decoder_medium_impl.1} parent=1 // pred_region
      _
    $region41: #{_path_decoder_medium_impl.1} parent=1 // pred_fallthru
      _
    // Predicated region
    $region42: #{_path_decoder_medium_impl.1} parent=1 // pred_check
      _
    $region43: #{_path_decoder_medium_impl.1} parent=1 // pred_check_branch
      %111 = sbr.rel (0) target = $region45
    $region44: #{_path_decoder_medium_impl.1} parent=1 // pred_region
      _
    $region45: #{_path_decoder_medium_impl.1} parent=1 // pred_fallthru
      _
    // Predicated region
    $region46: #{_path_decoder_medium_impl.1} parent=1 // pred_check
      _
    $region47: #{_path_decoder_medium_impl.1} parent=1 // pred_check_branch
      %113 = sbr.rel (0) target = $region49
    $region48: #{_path_decoder_medium_impl.1} parent=1 // pred_region
      %115 = dma.done [#allocation3], 96
    $region49: #{_path_decoder_medium_impl.1} parent=1 // pred_fallthru
      _
    // Predicated region
    $region50: #{_path_decoder_medium_impl.1} parent=1 // pred_check
      _
    $region51: #{_path_decoder_medium_impl.1} parent=1 // pred_check_branch
      %117 = sbr.rel (0) target = $region53
    $region52: #{_path_decoder_medium_impl.1} parent=1 // pred_region
      %119 = dma.done [#allocation6], 36864
    $region53: #{_path_decoder_medium_impl.1} parent=1 // pred_fallthru
      _
    // Predicated region
    $region54: #{_path_decoder_medium_impl.1} parent=1 // pred_check
      _
    $region55: #{_path_decoder_medium_impl.1} parent=1 // pred_check_branch
      %121 = sbr.rel (0) target = $region57
    $region56: #{_path_decoder_medium_impl.1} parent=1 // pred_region
      %123 = dma.done [#allocation6], 96
    $region57: #{_path_decoder_medium_impl.1} parent=1 // pred_fallthru
      _
    // Predicated region
    $region58: #{_path_decoder_medium_impl.1} parent=1 // pred_check
      _
    $region59: #{_path_decoder_medium_impl.1} parent=1 // pred_check_branch
      %125 = sbr.rel (0) target = $region61
    $region60: #{_path_decoder_medium_impl.1} parent=1 // pred_region
      %127 = dma.done [#allocation9], 24576
    $region61: #{_path_decoder_medium_impl.1} parent=1 // pred_fallthru
      _
    // Predicated region
    $region62: #{_path_decoder_medium_impl.1} parent=1 // pred_check
      _
    $region63: #{_path_decoder_medium_impl.1} parent=1 // pred_check_branch
      %129 = sbr.rel (0) target = $region65
    $region64: #{_path_decoder_medium_impl.1} parent=1 // pred_region
      %131 = dma.done [#allocation9], 64
    $region65: #{_path_decoder_medium_impl.1} parent=1 // pred_fallthru
      _
    // Predicated region
    $region66: #{_path_decoder_medium_impl.1} parent=1 // pred_check
      _
    $region67: #{_path_decoder_medium_impl.1} parent=1 // pred_check_branch
      %133 = sbr.rel (0) target = $region69
    $region68: #{_path_decoder_medium_impl.1} parent=1 // pred_region
      %135 = dma.done [#allocation12], 8192
    $region69: #{_path_decoder_medium_impl.1} parent=1 // pred_fallthru
      _
    // Predicated region
    $region70: #{_path_decoder_medium_impl.1} parent=1 // pred_check
      _
    $region71: #{_path_decoder_medium_impl.1} parent=1 // pred_check_branch
      %137 = sbr.rel (0) target = $region73
    $region72: #{_path_decoder_medium_impl.1} parent=1 // pred_region
      %139 = dma.done [#allocation12], 32
    $region73: #{_path_decoder_medium_impl.1} parent=1 // pred_fallthru
      _
    %v140 = vld [vmem:[%s0] sm:$0xff]
    %v141 = vld [vmem:[%s0 + $0x8] sm:$0xff]
    %v142 = vpack.c.bf16 %v141, %v140
    %v143 = vld [vmem:[%s1] sm:$0xff]
    %v144 = vld [vmem:[%s1 + $0x8] sm:$0xff]
    %v145 = vld [vmem:[%s1 + $0x10] sm:$0xff]
    %v146 = vld [vmem:[%s1 + $0x18] sm:$0xff]
    %v147 = vld [vmem:[%s1 + $0x20] sm:$0xff]
    %v148 = vld [vmem:[%s1 + $0x28] sm:$0xff]
    %v149 = vld [vmem:[%s1 + $0x30] sm:$0xff]
    %v150 = vld [vmem:[%s1 + $0x38] sm:$0xff]
    %v151 = vld [vmem:[%s1 + $0x40] sm:$0xff]
    %v152 = vld [vmem:[%s1 + $0x48] sm:$0xff]
    %v153 = vld [vmem:[%s1 + $0x50] sm:$0xff]
    %v154 = vld [vmem:[%s1 + $0x58] sm:$0xff]
    %v155 = vld [vmem:[%s1 + $0x60] sm:$0xff]
    %v156 = vld [vmem:[%s1 + $0x68] sm:$0xff]
    %v157 = vld [vmem:[%s1 + $0x70] sm:$0xff]
    %v158 = vld [vmem:[%s1 + $0x78] sm:$0xff]
    %v159 = vld [vmem:[%s1 + $0x80] sm:$0xff]
    %v160 = vld [vmem:[%s1 + $0x88] sm:$0xff]
    %v161 = vld [vmem:[%s1 + $0x90] sm:$0xff]
    %v162 = vld [vmem:[%s1 + $0x98] sm:$0xff]
    %v163 = vld [vmem:[%s1 + $0xa0] sm:$0xff]
    %v164 = vld [vmem:[%s1 + $0xa8] sm:$0xff]
    %v165 = vld [vmem:[%s1 + $0xb0] sm:$0xff]
    %v166 = vld [vmem:[%s1 + $0xb8] sm:$0xff]
    %v167 = vld [vmem:[%s1 + $0xc0] sm:$0xff]
    %v168 = vld [vmem:[%s1 + $0xc8] sm:$0xff]
    %v169 = vld [vmem:[%s1 + $0xd0] sm:$0xff]
    %v170 = vld [vmem:[%s1 + $0xd8] sm:$0xff]
    %v171 = vld [vmem:[%s1 + $0xe0] sm:$0xff]
    %v172 = vld [vmem:[%s1 + $0xe8] sm:$0xff]
    %v173 = vld [vmem:[%s1 + $0xf0] sm:$0xff]
    %v174 = vld [vmem:[%s1 + $0xf8] sm:$0xff]
    %v175 = vld [vmem:[%s1 + $0x100] sm:$0xff]
    %v176 = vld [vmem:[%s1 + $0x108] sm:$0xff]
    %v177 = vld [vmem:[%s1 + $0x110] sm:$0xff]
    %v178 = vld [vmem:[%s1 + $0x118] sm:$0xff]
    %v179 = vld [vmem:[%s1 + $0x120] sm:$0xff]
    %v180 = vld [vmem:[%s1 + $0x128] sm:$0xff]
    %v181 = vld [vmem:[%s1 + $0x130] sm:$0xff]
    %v182 = vld [vmem:[%s1 + $0x138] sm:$0xff]
    %v183 = vld [vmem:[%s1 + $0x140] sm:$0xff]
    %v184 = vld [vmem:[%s1 + $0x148] sm:$0xff]
    %v185 = vld [vmem:[%s1 + $0x150] sm:$0xff]
    %v186 = vld [vmem:[%s1 + $0x158] sm:$0xff]
    %v187 = vld [vmem:[%s1 + $0x160] sm:$0xff]
    %v188 = vld [vmem:[%s1 + $0x168] sm:$0xff]
    %v189 = vld [vmem:[%s1 + $0x170] sm:$0xff]
    %v190 = vld [vmem:[%s1 + $0x178] sm:$0xff]
    %v191 = vld [vmem:[#allocation2] sm:$0x3f]
    %v193 = vperm.slane %v191, 0
    %v194 = vperm.slane %v191, 1
    %v195 = vperm.slane %v191, 2
    %v196 = vperm.slane %v191, 3
    %v197 = vperm.slane %v191, 4
    %v198 = vperm.slane %v191, 5
    %v253 = vunpack.c.l.b16 %v143
    %v254 = vunpack.c.h.b16 %v143
    %v255 = vunpack.c.l.b16 %v144
    %v256 = vunpack.c.h.b16 %v144
    %v257 = vunpack.c.l.b16 %v145
    %v258 = vunpack.c.h.b16 %v145
    %v259 = vunpack.c.l.b16 %v146
    %v260 = vunpack.c.h.b16 %v146
    %v261 = vunpack.c.l.b16 %v147
    %v262 = vunpack.c.h.b16 %v147
    %v263 = vunpack.c.l.b16 %v148
    %v264 = vunpack.c.h.b16 %v148
    %v265 = vunpack.c.l.b16 %v149
    %v266 = vunpack.c.h.b16 %v149
    %v267 = vunpack.c.l.b16 %v150
    %v268 = vunpack.c.h.b16 %v150
    %v269 = vunpack.c.l.b16 %v151
    %v270 = vunpack.c.h.b16 %v151
    %v271 = vunpack.c.l.b16 %v152
    %v272 = vunpack.c.h.b16 %v152
    %v273 = vunpack.c.l.b16 %v153
    %v274 = vunpack.c.h.b16 %v153
    %v275 = vunpack.c.l.b16 %v154
    %v276 = vunpack.c.h.b16 %v154
    %v277 = vunpack.c.l.b16 %v155
    %v278 = vunpack.c.h.b16 %v155
    %v279 = vunpack.c.l.b16 %v156
    %v280 = vunpack.c.h.b16 %v156
    %v281 = vunpack.c.l.b16 %v157
    %v282 = vunpack.c.h.b16 %v157
    %v283 = vunpack.c.l.b16 %v158
    %v284 = vunpack.c.h.b16 %v158
    %v285 = vunpack.c.l.b16 %v159
    %v286 = vunpack.c.h.b16 %v159
    %v287 = vunpack.c.l.b16 %v160
    %v288 = vunpack.c.h.b16 %v160
    %v289 = vunpack.c.l.b16 %v161
    %v290 = vunpack.c.h.b16 %v161
    %v291 = vunpack.c.l.b16 %v162
    %v292 = vunpack.c.h.b16 %v162
    %v293 = vunpack.c.l.b16 %v163
    %v294 = vunpack.c.h.b16 %v163
    %v295 = vunpack.c.l.b16 %v164
    %v296 = vunpack.c.h.b16 %v164
    %v297 = vunpack.c.l.b16 %v165
    %v298 = vunpack.c.h.b16 %v165
    %v299 = vunpack.c.l.b16 %v166
    %v300 = vunpack.c.h.b16 %v166
    %v301 = vunpack.c.l.b16 %v167
    %v302 = vunpack.c.h.b16 %v167
    %v303 = vunpack.c.l.b16 %v168
    %v304 = vunpack.c.h.b16 %v168
    %v305 = vunpack.c.l.b16 %v169
    %v306 = vunpack.c.h.b16 %v169
    %v307 = vunpack.c.l.b16 %v170
    %v308 = vunpack.c.h.b16 %v170
    %v309 = vunpack.c.l.b16 %v171
    %v310 = vunpack.c.h.b16 %v171
    %v311 = vunpack.c.l.b16 %v172
    %v312 = vunpack.c.h.b16 %v172
    %v313 = vunpack.c.l.b16 %v173
    %v314 = vunpack.c.h.b16 %v173
    %v315 = vunpack.c.l.b16 %v174
    %v316 = vunpack.c.h.b16 %v174
    %v317 = vunpack.c.l.b16 %v175
    %v318 = vunpack.c.h.b16 %v175
    %v319 = vunpack.c.l.b16 %v176
    %v320 = vunpack.c.h.b16 %v176
    %v321 = vunpack.c.l.b16 %v177
    %v322 = vunpack.c.h.b16 %v177
    %v323 = vunpack.c.l.b16 %v178
    %v324 = vunpack.c.h.b16 %v178
    %v325 = vunpack.c.l.b16 %v179
    %v326 = vunpack.c.h.b16 %v179
    %v327 = vunpack.c.l.b16 %v180
    %v328 = vunpack.c.h.b16 %v180
    %v329 = vunpack.c.l.b16 %v181
    %v330 = vunpack.c.h.b16 %v181
    %v331 = vunpack.c.l.b16 %v182
    %v332 = vunpack.c.h.b16 %v182
    %v333 = vunpack.c.l.b16 %v183
    %v334 = vunpack.c.h.b16 %v183
    %v335 = vunpack.c.l.b16 %v184
    %v336 = vunpack.c.h.b16 %v184
    %v337 = vunpack.c.l.b16 %v185
    %v338 = vunpack.c.h.b16 %v185
    %v339 = vunpack.c.l.b16 %v186
    %v340 = vunpack.c.h.b16 %v186
    %v341 = vunpack.c.l.b16 %v187
    %v342 = vunpack.c.h.b16 %v187
    %v343 = vunpack.c.l.b16 %v188
    %v344 = vunpack.c.h.b16 %v188
    %v345 = vunpack.c.l.b16 %v189
    %v346 = vunpack.c.h.b16 %v189
    %v347 = vunpack.c.l.b16 %v190
    %v348 = vunpack.c.h.b16 %v190
    %v349 = vpack.c.b16 %v259, %v253
    %v350 = vpack.c.b16 %v260, %v254
    %v351 = vpack.c.b16 %v261, %v255
    %v352 = vpack.c.b16 %v262, %v256
    %v353 = vpack.c.b16 %v263, %v257
    %v354 = vpack.c.b16 %v264, %v258
    %v355 = vpack.c.b16 %v271, %v265
    %v356 = vpack.c.b16 %v272, %v266
    %v357 = vpack.c.b16 %v273, %v267
    %v358 = vpack.c.b16 %v274, %v268
    %v359 = vpack.c.b16 %v275, %v269
    %v360 = vpack.c.b16 %v276, %v270
    %v361 = vpack.c.b16 %v283, %v277
    %v362 = vpack.c.b16 %v284, %v278
    %v363 = vpack.c.b16 %v285, %v279
    %v364 = vpack.c.b16 %v286, %v280
    %v365 = vpack.c.b16 %v287, %v281
    %v366 = vpack.c.b16 %v288, %v282
    %v367 = vpack.c.b16 %v295, %v289
    %v368 = vpack.c.b16 %v296, %v290
    %v369 = vpack.c.b16 %v297, %v291
    %v370 = vpack.c.b16 %v298, %v292
    %v371 = vpack.c.b16 %v299, %v293
    %v372 = vpack.c.b16 %v300, %v294
    %v373 = vpack.c.b16 %v307, %v301
    %v374 = vpack.c.b16 %v308, %v302
    %v375 = vpack.c.b16 %v309, %v303
    %v376 = vpack.c.b16 %v310, %v304
    %v377 = vpack.c.b16 %v311, %v305
    %v378 = vpack.c.b16 %v312, %v306
    %v379 = vpack.c.b16 %v319, %v313
    %v380 = vpack.c.b16 %v320, %v314
    %v381 = vpack.c.b16 %v321, %v315
    %v382 = vpack.c.b16 %v322, %v316
    %v383 = vpack.c.b16 %v323, %v317
    %v384 = vpack.c.b16 %v324, %v318
    %v385 = vpack.c.b16 %v331, %v325
    %v386 = vpack.c.b16 %v332, %v326
    %v387 = vpack.c.b16 %v333, %v327
    %v388 = vpack.c.b16 %v334, %v328
    %v389 = vpack.c.b16 %v335, %v329
    %v390 = vpack.c.b16 %v336, %v330
    %v391 = vpack.c.b16 %v343, %v337
    %v392 = vpack.c.b16 %v344, %v338
    %v393 = vpack.c.b16 %v345, %v339
    %v394 = vpack.c.b16 %v346, %v340
    %v395 = vpack.c.b16 %v347, %v341
    %v396 = vpack.c.b16 %v348, %v342
    %445 = vmatpush.bf16.msra.mxu0 %v391
    %446 = vmatpush.bf16.msra.mxu0 %v385
    %447 = vmatpush.bf16.msra.mxu0 %v379
    %448 = vmatpush.bf16.msra.mxu0 %v373
    %449 = vmatpush.bf16.msra.mxu0 %v367
    %450 = vmatpush.bf16.msra.mxu0 %v361
    %451 = vmatpush.bf16.msra.mxu0 %v355
    %452 = vmatpush.bf16.msra.mxu0 %v349
    %453 = vmatmul.bf16.gmra.mxu0 %v142
    %v454 = vpop.f32.mrf.mxu0
    %v455 = vadd.f32 %v193, %v454
    %v456 = vpop.f32.mrf.mxu0
    %v457 = vadd.f32 %v193, %v456
    %458 = vdwg.mxu0
    %459 = vmatpush.bf16.msra.mxu0 %v392
    %460 = vmatpush.bf16.msra.mxu0 %v386
    %461 = vmatpush.bf16.msra.mxu0 %v380
    %462 = vmatpush.bf16.msra.mxu0 %v374
    %463 = vmatpush.bf16.msra.mxu0 %v368
    %464 = vmatpush.bf16.msra.mxu0 %v362
    %465 = vmatpush.bf16.msra.mxu0 %v356
    %466 = vmatpush.bf16.msra.mxu0 %v350
    %467 = vmatmul.bf16.gmra.mxu0 %v142
    %v468 = vpop.f32.mrf.mxu0
    %v469 = vadd.f32 %v194, %v468
    %v470 = vpop.f32.mrf.mxu0
    %v471 = vadd.f32 %v194, %v470
    %472 = vdwg.mxu0
    %473 = vmatpush.bf16.msra.mxu0 %v393
    %474 = vmatpush.bf16.msra.mxu0 %v387
    %475 = vmatpush.bf16.msra.mxu0 %v381
    %476 = vmatpush.bf16.msra.mxu0 %v375
    %477 = vmatpush.bf16.msra.mxu0 %v369
    %478 = vmatpush.bf16.msra.mxu0 %v363
    %479 = vmatpush.bf16.msra.mxu0 %v357
    %480 = vmatpush.bf16.msra.mxu0 %v351
    %481 = vmatmul.bf16.gmra.mxu0 %v142
    %v482 = vpop.f32.mrf.mxu0
    %v483 = vadd.f32 %v195, %v482
    %v484 = vpop.f32.mrf.mxu0
    %v485 = vadd.f32 %v195, %v484
    %486 = vdwg.mxu0
    %487 = vmatpush.bf16.msra.mxu0 %v394
    %488 = vmatpush.bf16.msra.mxu0 %v388
    %489 = vmatpush.bf16.msra.mxu0 %v382
    %490 = vmatpush.bf16.msra.mxu0 %v376
    %491 = vmatpush.bf16.msra.mxu0 %v370
    %492 = vmatpush.bf16.msra.mxu0 %v364
    %493 = vmatpush.bf16.msra.mxu0 %v358
    %494 = vmatpush.bf16.msra.mxu0 %v352
    %495 = vmatmul.bf16.gmra.mxu0 %v142
    %v496 = vpop.f32.mrf.mxu0
    %v497 = vadd.f32 %v196, %v496
    %v498 = vpop.f32.mrf.mxu0
    %v499 = vadd.f32 %v196, %v498
    %500 = vdwg.mxu0
    %501 = vmatpush.bf16.msra.mxu0 %v395
    %502 = vmatpush.bf16.msra.mxu0 %v389
    %503 = vmatpush.bf16.msra.mxu0 %v383
    %504 = vmatpush.bf16.msra.mxu0 %v377
    %505 = vmatpush.bf16.msra.mxu0 %v371
    %506 = vmatpush.bf16.msra.mxu0 %v365
    %507 = vmatpush.bf16.msra.mxu0 %v359
    %508 = vmatpush.bf16.msra.mxu0 %v353
    %509 = vmatmul.bf16.gmra.mxu0 %v142
    %v510 = vpop.f32.mrf.mxu0
    %v511 = vadd.f32 %v197, %v510
    %v512 = vpop.f32.mrf.mxu0
    %v513 = vadd.f32 %v197, %v512
    %514 = vdwg.mxu0
    %515 = vmatpush.bf16.msra.mxu0 %v396
    %516 = vmatpush.bf16.msra.mxu0 %v390
    %517 = vmatpush.bf16.msra.mxu0 %v384
    %518 = vmatpush.bf16.msra.mxu0 %v378
    %519 = vmatpush.bf16.msra.mxu0 %v372
    %520 = vmatpush.bf16.msra.mxu0 %v366
    %521 = vmatpush.bf16.msra.mxu0 %v360
    %522 = vmatpush.bf16.msra.mxu0 %v354
    %523 = vmatmul.bf16.gmra.mxu0 %v142
    %v524 = vpop.f32.mrf.mxu0
    %v525 = vadd.f32 %v198, %v524
    %v526 = vpop.f32.mrf.mxu0
    %v527 = vadd.f32 %v198, %v526
    %528 = vdwg.mxu0
    %v529 = vmax.f32 %v455, 0.0
    %v530 = vmax.f32 %v469, 0.0
    %v531 = vmax.f32 %v483, 0.0
    %v532 = vmax.f32 %v497, 0.0
    %v533 = vmax.f32 %v511, 0.0
    %v534 = vmax.f32 %v525, 0.0
    %v535 = vmax.f32 %v457, 0.0
    %v536 = vmax.f32 %v471, 0.0
    %v537 = vmax.f32 %v485, 0.0
    %v538 = vmax.f32 %v499, 0.0
    %v539 = vmax.f32 %v513, 0.0
    %v540 = vmax.f32 %v527, 0.0
    %v541 = vpack.c.bf16 %v535, %v529
    %v542 = vpack.c.bf16 %v536, %v530
    %v543 = vpack.c.bf16 %v537, %v531
    %v544 = vpack.c.bf16 %v538, %v532
    %v545 = vpack.c.bf16 %v539, %v533
    %v546 = vpack.c.bf16 %v540, %v534
    %v547 = vld [vmem:[#allocation5] sm:$0xff]
    %v548 = vld [vmem:[#allocation5 + $0x8] sm:$0xff]
    %v549 = vld [vmem:[#allocation5 + $0x10] sm:$0xff]
    %v550 = vld [vmem:[#allocation5 + $0x18] sm:$0xff]
    %v551 = vld [vmem:[#allocation5 + $0x20] sm:$0xff]
    %v552 = vld [vmem:[#allocation5 + $0x28] sm:$0xff]
    %v553 = vld [vmem:[#allocation5 + $0x30] sm:$0xff]
    %v554 = vld [vmem:[#allocation5 + $0x38] sm:$0xff]
    %v555 = vld [vmem:[#allocation5 + $0x40] sm:$0xff]
    %v556 = vld [vmem:[#allocation5 + $0x48] sm:$0xff]
    %v557 = vld [vmem:[#allocation5 + $0x50] sm:$0xff]
    %v558 = vld [vmem:[#allocation5 + $0x58] sm:$0xff]
    %v559 = vld [vmem:[#allocation5 + $0x60] sm:$0xff]
    %v560 = vld [vmem:[#allocation5 + $0x68] sm:$0xff]
    %v561 = vld [vmem:[#allocation5 + $0x70] sm:$0xff]
    %v562 = vld [vmem:[#allocation5 + $0x78] sm:$0xff]
    %v563 = vld [vmem:[#allocation5 + $0x80] sm:$0xff]
    %v564 = vld [vmem:[#allocation5 + $0x88] sm:$0xff]
    %v565 = vld [vmem:[#allocation5 + $0x90] sm:$0xff]
    %v566 = vld [vmem:[#allocation5 + $0x98] sm:$0xff]
    %v567 = vld [vmem:[#allocation5 + $0xa0] sm:$0xff]
    %v568 = vld [vmem:[#allocation5 + $0xa8] sm:$0xff]
    %v569 = vld [vmem:[#allocation5 + $0xb0] sm:$0xff]
    %v570 = vld [vmem:[#allocation5 + $0xb8] sm:$0xff]
    %v571 = vld [vmem:[#allocation5 + $0xc0] sm:$0xff]
    %v572 = vld [vmem:[#allocation5 + $0xc8] sm:$0xff]
    %v573 = vld [vmem:[#allocation5 + $0xd0] sm:$0xff]
    %v574 = vld [vmem:[#allocation5 + $0xd8] sm:$0xff]
    %v575 = vld [vmem:[#allocation5 + $0xe0] sm:$0xff]
    %v576 = vld [vmem:[#allocation5 + $0xe8] sm:$0xff]
    %v577 = vld [vmem:[#allocation5 + $0xf0] sm:$0xff]
    %v578 = vld [vmem:[#allocation5 + $0xf8] sm:$0xff]
    %v579 = vld [vmem:[#allocation5 + $0x100] sm:$0xff]
    %v580 = vld [vmem:[#allocation5 + $0x108] sm:$0xff]
    %v581 = vld [vmem:[#allocation5 + $0x110] sm:$0xff]
    %v582 = vld [vmem:[#allocation5 + $0x118] sm:$0xff]
    %v583 = vld [vmem:[#allocation5 + $0x120] sm:$0xff]
    %v584 = vld [vmem:[#allocation5 + $0x128] sm:$0xff]
    %v585 = vld [vmem:[#allocation5 + $0x130] sm:$0xff]
    %v586 = vld [vmem:[#allocation5 + $0x138] sm:$0xff]
    %v587 = vld [vmem:[#allocation5 + $0x140] sm:$0xff]
    %v588 = vld [vmem:[#allocation5 + $0x148] sm:$0xff]
    %v589 = vld [vmem:[#allocation5 + $0x150] sm:$0xff]
    %v590 = vld [vmem:[#allocation5 + $0x158] sm:$0xff]
    %v591 = vld [vmem:[#allocation5 + $0x160] sm:$0xff]
    %v592 = vld [vmem:[#allocation5 + $0x168] sm:$0xff]
    %v593 = vld [vmem:[#allocation5 + $0x170] sm:$0xff]
    %v594 = vld [vmem:[#allocation5 + $0x178] sm:$0xff]
    %v595 = vld [vmem:[#allocation5 + $0x180] sm:$0xff]
    %v596 = vld [vmem:[#allocation5 + $0x188] sm:$0xff]
    %v597 = vld [vmem:[#allocation5 + $0x190] sm:$0xff]
    %v598 = vld [vmem:[#allocation5 + $0x198] sm:$0xff]
    %v599 = vld [vmem:[#allocation5 + $0x1a0] sm:$0xff]
    %v600 = vld [vmem:[#allocation5 + $0x1a8] sm:$0xff]
    %v601 = vld [vmem:[#allocation5 + $0x1b0] sm:$0xff]
    %v602 = vld [vmem:[#allocation5 + $0x1b8] sm:$0xff]
    %v603 = vld [vmem:[#allocation5 + $0x1c0] sm:$0xff]
    %v604 = vld [vmem:[#allocation5 + $0x1c8] sm:$0xff]
    %v605 = vld [vmem:[#allocation5 + $0x1d0] sm:$0xff]
    %v606 = vld [vmem:[#allocation5 + $0x1d8] sm:$0xff]
    %v607 = vld [vmem:[#allocation5 + $0x1e0] sm:$0xff]
    %v608 = vld [vmem:[#allocation5 + $0x1e8] sm:$0xff]
    %v609 = vld [vmem:[#allocation5 + $0x1f0] sm:$0xff]
    %v610 = vld [vmem:[#allocation5 + $0x1f8] sm:$0xff]
    %v611 = vld [vmem:[#allocation5 + $0x200] sm:$0xff]
    %v612 = vld [vmem:[#allocation5 + $0x208] sm:$0xff]
    %v613 = vld [vmem:[#allocation5 + $0x210] sm:$0xff]
    %v614 = vld [vmem:[#allocation5 + $0x218] sm:$0xff]
    %v615 = vld [vmem:[#allocation5 + $0x220] sm:$0xff]
    %v616 = vld [vmem:[#allocation5 + $0x228] sm:$0xff]
    %v617 = vld [vmem:[#allocation5 + $0x230] sm:$0xff]
    %v618 = vld [vmem:[#allocation5 + $0x238] sm:$0xff]
    %v619 = vld [vmem:[#allocation5 + $0x240] sm:$0xff]
    %v620 = vld [vmem:[#allocation5 + $0x248] sm:$0xff]
    %v621 = vld [vmem:[#allocation5 + $0x250] sm:$0xff]
    %v622 = vld [vmem:[#allocation5 + $0x258] sm:$0xff]
    %v623 = vld [vmem:[#allocation5 + $0x260] sm:$0xff]
    %v624 = vld [vmem:[#allocation5 + $0x268] sm:$0xff]
    %v625 = vld [vmem:[#allocation5 + $0x270] sm:$0xff]
    %v626 = vld [vmem:[#allocation5 + $0x278] sm:$0xff]
    %v627 = vld [vmem:[#allocation5 + $0x280] sm:$0xff]
    %v628 = vld [vmem:[#allocation5 + $0x288] sm:$0xff]
    %v629 = vld [vmem:[#allocation5 + $0x290] sm:$0xff]
    %v630 = vld [vmem:[#allocation5 + $0x298] sm:$0xff]
    %v631 = vld [vmem:[#allocation5 + $0x2a0] sm:$0xff]
    %v632 = vld [vmem:[#allocation5 + $0x2a8] sm:$0xff]
    %v633 = vld [vmem:[#allocation5 + $0x2b0] sm:$0xff]
    %v634 = vld [vmem:[#allocation5 + $0x2b8] sm:$0xff]
    %v635 = vld [vmem:[#allocation5 + $0x2c0] sm:$0xff]
    %v636 = vld [vmem:[#allocation5 + $0x2c8] sm:$0xff]
    %v637 = vld [vmem:[#allocation5 + $0x2d0] sm:$0xff]
    %v638 = vld [vmem:[#allocation5 + $0x2d8] sm:$0xff]
    %v639 = vld [vmem:[#allocation5 + $0x2e0] sm:$0xff]
    %v640 = vld [vmem:[#allocation5 + $0x2e8] sm:$0xff]
    %v641 = vld [vmem:[#allocation5 + $0x2f0] sm:$0xff]
    %v642 = vld [vmem:[#allocation5 + $0x2f8] sm:$0xff]
    %v643 = vld [vmem:[#allocation5 + $0x300] sm:$0xff]
    %v644 = vld [vmem:[#allocation5 + $0x308] sm:$0xff]
    %v645 = vld [vmem:[#allocation5 + $0x310] sm:$0xff]
    %v646 = vld [vmem:[#allocation5 + $0x318] sm:$0xff]
    %v647 = vld [vmem:[#allocation5 + $0x320] sm:$0xff]
    %v648 = vld [vmem:[#allocation5 + $0x328] sm:$0xff]
    %v649 = vld [vmem:[#allocation5 + $0x330] sm:$0xff]
    %v650 = vld [vmem:[#allocation5 + $0x338] sm:$0xff]
    %v651 = vld [vmem:[#allocation5 + $0x340] sm:$0xff]
    %v652 = vld [vmem:[#allocation5 + $0x348] sm:$0xff]
    %v653 = vld [vmem:[#allocation5 + $0x350] sm:$0xff]
    %v654 = vld [vmem:[#allocation5 + $0x358] sm:$0xff]
    %v655 = vld [vmem:[#allocation5 + $0x360] sm:$0xff]
    %v656 = vld [vmem:[#allocation5 + $0x368] sm:$0xff]
    %v657 = vld [vmem:[#allocation5 + $0x370] sm:$0xff]
    %v658 = vld [vmem:[#allocation5 + $0x378] sm:$0xff]
    %v659 = vld [vmem:[#allocation5 + $0x380] sm:$0xff]
    %v660 = vld [vmem:[#allocation5 + $0x388] sm:$0xff]
    %v661 = vld [vmem:[#allocation5 + $0x390] sm:$0xff]
    %v662 = vld [vmem:[#allocation5 + $0x398] sm:$0xff]
    %v663 = vld [vmem:[#allocation5 + $0x3a0] sm:$0xff]
    %v664 = vld [vmem:[#allocation5 + $0x3a8] sm:$0xff]
    %v665 = vld [vmem:[#allocation5 + $0x3b0] sm:$0xff]
    %v666 = vld [vmem:[#allocation5 + $0x3b8] sm:$0xff]
    %v667 = vld [vmem:[#allocation5 + $0x3c0] sm:$0xff]
    %v668 = vld [vmem:[#allocation5 + $0x3c8] sm:$0xff]
    %v669 = vld [vmem:[#allocation5 + $0x3d0] sm:$0xff]
    %v670 = vld [vmem:[#allocation5 + $0x3d8] sm:$0xff]
    %v671 = vld [vmem:[#allocation5 + $0x3e0] sm:$0xff]
    %v672 = vld [vmem:[#allocation5 + $0x3e8] sm:$0xff]
    %v673 = vld [vmem:[#allocation5 + $0x3f0] sm:$0xff]
    %v674 = vld [vmem:[#allocation5 + $0x3f8] sm:$0xff]
    %v675 = vld [vmem:[#allocation5 + $0x400] sm:$0xff]
    %v676 = vld [vmem:[#allocation5 + $0x408] sm:$0xff]
    %v677 = vld [vmem:[#allocation5 + $0x410] sm:$0xff]
    %v678 = vld [vmem:[#allocation5 + $0x418] sm:$0xff]
    %v679 = vld [vmem:[#allocation5 + $0x420] sm:$0xff]
    %v680 = vld [vmem:[#allocation5 + $0x428] sm:$0xff]
    %v681 = vld [vmem:[#allocation5 + $0x430] sm:$0xff]
    %v682 = vld [vmem:[#allocation5 + $0x438] sm:$0xff]
    %v683 = vld [vmem:[#allocation5 + $0x440] sm:$0xff]
    %v684 = vld [vmem:[#allocation5 + $0x448] sm:$0xff]
    %v685 = vld [vmem:[#allocation5 + $0x450] sm:$0xff]
    %v686 = vld [vmem:[#allocation5 + $0x458] sm:$0xff]
    %v687 = vld [vmem:[#allocation5 + $0x460] sm:$0xff]
    %v688 = vld [vmem:[#allocation5 + $0x468] sm:$0xff]
    %v689 = vld [vmem:[#allocation5 + $0x470] sm:$0xff]
    %v690 = vld [vmem:[#allocation5 + $0x478] sm:$0xff]
    %v691 = vld [vmem:[#allocation5 + $0x480] sm:$0xff]
    %v692 = vld [vmem:[#allocation5 + $0x488] sm:$0xff]
    %v693 = vld [vmem:[#allocation5 + $0x490] sm:$0xff]
    %v694 = vld [vmem:[#allocation5 + $0x498] sm:$0xff]
    %v695 = vld [vmem:[#allocation5 + $0x4a0] sm:$0xff]
    %v696 = vld [vmem:[#allocation5 + $0x4a8] sm:$0xff]
    %v697 = vld [vmem:[#allocation5 + $0x4b0] sm:$0xff]
    %v698 = vld [vmem:[#allocation5 + $0x4b8] sm:$0xff]
    %v699 = vld [vmem:[#allocation5 + $0x4c0] sm:$0xff]
    %v700 = vld [vmem:[#allocation5 + $0x4c8] sm:$0xff]
    %v701 = vld [vmem:[#allocation5 + $0x4d0] sm:$0xff]
    %v702 = vld [vmem:[#allocation5 + $0x4d8] sm:$0xff]
    %v703 = vld [vmem:[#allocation5 + $0x4e0] sm:$0xff]
    %v704 = vld [vmem:[#allocation5 + $0x4e8] sm:$0xff]
    %v705 = vld [vmem:[#allocation5 + $0x4f0] sm:$0xff]
    %v706 = vld [vmem:[#allocation5 + $0x4f8] sm:$0xff]
    %v707 = vld [vmem:[#allocation5 + $0x500] sm:$0xff]
    %v708 = vld [vmem:[#allocation5 + $0x508] sm:$0xff]
    %v709 = vld [vmem:[#allocation5 + $0x510] sm:$0xff]
    %v710 = vld [vmem:[#allocation5 + $0x518] sm:$0xff]
    %v711 = vld [vmem:[#allocation5 + $0x520] sm:$0xff]
    %v712 = vld [vmem:[#allocation5 + $0x528] sm:$0xff]
    %v713 = vld [vmem:[#allocation5 + $0x530] sm:$0xff]
    %v714 = vld [vmem:[#allocation5 + $0x538] sm:$0xff]
    %v715 = vld [vmem:[#allocation5 + $0x540] sm:$0xff]
    %v716 = vld [vmem:[#allocation5 + $0x548] sm:$0xff]
    %v717 = vld [vmem:[#allocation5 + $0x550] sm:$0xff]
    %v718 = vld [vmem:[#allocation5 + $0x558] sm:$0xff]
    %v719 = vld [vmem:[#allocation5 + $0x560] sm:$0xff]
    %v720 = vld [vmem:[#allocation5 + $0x568] sm:$0xff]
    %v721 = vld [vmem:[#allocation5 + $0x570] sm:$0xff]
    %v722 = vld [vmem:[#allocation5 + $0x578] sm:$0xff]
    %v723 = vld [vmem:[#allocation5 + $0x580] sm:$0xff]
    %v724 = vld [vmem:[#allocation5 + $0x588] sm:$0xff]
    %v725 = vld [vmem:[#allocation5 + $0x590] sm:$0xff]
    %v726 = vld [vmem:[#allocation5 + $0x598] sm:$0xff]
    %v727 = vld [vmem:[#allocation5 + $0x5a0] sm:$0xff]
    %v728 = vld [vmem:[#allocation5 + $0x5a8] sm:$0xff]
    %v729 = vld [vmem:[#allocation5 + $0x5b0] sm:$0xff]
    %v730 = vld [vmem:[#allocation5 + $0x5b8] sm:$0xff]
    %v731 = vld [vmem:[#allocation5 + $0x5c0] sm:$0xff]
    %v732 = vld [vmem:[#allocation5 + $0x5c8] sm:$0xff]
    %v733 = vld [vmem:[#allocation5 + $0x5d0] sm:$0xff]
    %v734 = vld [vmem:[#allocation5 + $0x5d8] sm:$0xff]
    %v735 = vld [vmem:[#allocation5 + $0x5e0] sm:$0xff]
    %v736 = vld [vmem:[#allocation5 + $0x5e8] sm:$0xff]
    %v737 = vld [vmem:[#allocation5 + $0x5f0] sm:$0xff]
    %v738 = vld [vmem:[#allocation5 + $0x5f8] sm:$0xff]
    %v739 = vld [vmem:[#allocation5 + $0x600] sm:$0xff]
    %v740 = vld [vmem:[#allocation5 + $0x608] sm:$0xff]
    %v741 = vld [vmem:[#allocation5 + $0x610] sm:$0xff]
    %v742 = vld [vmem:[#allocation5 + $0x618] sm:$0xff]
    %v743 = vld [vmem:[#allocation5 + $0x620] sm:$0xff]
    %v744 = vld [vmem:[#allocation5 + $0x628] sm:$0xff]
    %v745 = vld [vmem:[#allocation5 + $0x630] sm:$0xff]
    %v746 = vld [vmem:[#allocation5 + $0x638] sm:$0xff]
    %v747 = vld [vmem:[#allocation5 + $0x640] sm:$0xff]
    %v748 = vld [vmem:[#allocation5 + $0x648] sm:$0xff]
    %v749 = vld [vmem:[#allocation5 + $0x650] sm:$0xff]
    %v750 = vld [vmem:[#allocation5 + $0x658] sm:$0xff]
    %v751 = vld [vmem:[#allocation5 + $0x660] sm:$0xff]
    %v752 = vld [vmem:[#allocation5 + $0x668] sm:$0xff]
    %v753 = vld [vmem:[#allocation5 + $0x670] sm:$0xff]
    %v754 = vld [vmem:[#allocation5 + $0x678] sm:$0xff]
    %v755 = vld [vmem:[#allocation5 + $0x680] sm:$0xff]
    %v756 = vld [vmem:[#allocation5 + $0x688] sm:$0xff]
    %v757 = vld [vmem:[#allocation5 + $0x690] sm:$0xff]
    %v758 = vld [vmem:[#allocation5 + $0x698] sm:$0xff]
    %v759 = vld [vmem:[#allocation5 + $0x6a0] sm:$0xff]
    %v760 = vld [vmem:[#allocation5 + $0x6a8] sm:$0xff]
    %v761 = vld [vmem:[#allocation5 + $0x6b0] sm:$0xff]
    %v762 = vld [vmem:[#allocation5 + $0x6b8] sm:$0xff]
    %v763 = vld [vmem:[#allocation5 + $0x6c0] sm:$0xff]
    %v764 = vld [vmem:[#allocation5 + $0x6c8] sm:$0xff]
    %v765 = vld [vmem:[#allocation5 + $0x6d0] sm:$0xff]
    %v766 = vld [vmem:[#allocation5 + $0x6d8] sm:$0xff]
    %v767 = vld [vmem:[#allocation5 + $0x6e0] sm:$0xff]
    %v768 = vld [vmem:[#allocation5 + $0x6e8] sm:$0xff]
    %v769 = vld [vmem:[#allocation5 + $0x6f0] sm:$0xff]
    %v770 = vld [vmem:[#allocation5 + $0x6f8] sm:$0xff]
    %v771 = vld [vmem:[#allocation5 + $0x700] sm:$0xff]
    %v772 = vld [vmem:[#allocation5 + $0x708] sm:$0xff]
    %v773 = vld [vmem:[#allocation5 + $0x710] sm:$0xff]
    %v774 = vld [vmem:[#allocation5 + $0x718] sm:$0xff]
    %v775 = vld [vmem:[#allocation5 + $0x720] sm:$0xff]
    %v776 = vld [vmem:[#allocation5 + $0x728] sm:$0xff]
    %v777 = vld [vmem:[#allocation5 + $0x730] sm:$0xff]
    %v778 = vld [vmem:[#allocation5 + $0x738] sm:$0xff]
    %v779 = vld [vmem:[#allocation5 + $0x740] sm:$0xff]
    %v780 = vld [vmem:[#allocation5 + $0x748] sm:$0xff]
    %v781 = vld [vmem:[#allocation5 + $0x750] sm:$0xff]
    %v782 = vld [vmem:[#allocation5 + $0x758] sm:$0xff]
    %v783 = vld [vmem:[#allocation5 + $0x760] sm:$0xff]
    %v784 = vld [vmem:[#allocation5 + $0x768] sm:$0xff]
    %v785 = vld [vmem:[#allocation5 + $0x770] sm:$0xff]
    %v786 = vld [vmem:[#allocation5 + $0x778] sm:$0xff]
    %v787 = vld [vmem:[#allocation5 + $0x780] sm:$0xff]
    %v788 = vld [vmem:[#allocation5 + $0x788] sm:$0xff]
    %v789 = vld [vmem:[#allocation5 + $0x790] sm:$0xff]
    %v790 = vld [vmem:[#allocation5 + $0x798] sm:$0xff]
    %v791 = vld [vmem:[#allocation5 + $0x7a0] sm:$0xff]
    %v792 = vld [vmem:[#allocation5 + $0x7a8] sm:$0xff]
    %v793 = vld [vmem:[#allocation5 + $0x7b0] sm:$0xff]
    %v794 = vld [vmem:[#allocation5 + $0x7b8] sm:$0xff]
    %v795 = vld [vmem:[#allocation5 + $0x7c0] sm:$0xff]
    %v796 = vld [vmem:[#allocation5 + $0x7c8] sm:$0xff]
    %v797 = vld [vmem:[#allocation5 + $0x7d0] sm:$0xff]
    %v798 = vld [vmem:[#allocation5 + $0x7d8] sm:$0xff]
    %v799 = vld [vmem:[#allocation5 + $0x7e0] sm:$0xff]
    %v800 = vld [vmem:[#allocation5 + $0x7e8] sm:$0xff]
    %v801 = vld [vmem:[#allocation5 + $0x7f0] sm:$0xff]
    %v802 = vld [vmem:[#allocation5 + $0x7f8] sm:$0xff]
    %v803 = vld [vmem:[#allocation5 + $0x800] sm:$0xff]
    %v804 = vld [vmem:[#allocation5 + $0x808] sm:$0xff]
    %v805 = vld [vmem:[#allocation5 + $0x810] sm:$0xff]
    %v806 = vld [vmem:[#allocation5 + $0x818] sm:$0xff]
    %v807 = vld [vmem:[#allocation5 + $0x820] sm:$0xff]
    %v808 = vld [vmem:[#allocation5 + $0x828] sm:$0xff]
    %v809 = vld [vmem:[#allocation5 + $0x830] sm:$0xff]
    %v810 = vld [vmem:[#allocation5 + $0x838] sm:$0xff]
    %v811 = vld [vmem:[#allocation5 + $0x840] sm:$0xff]
    %v812 = vld [vmem:[#allocation5 + $0x848] sm:$0xff]
    %v813 = vld [vmem:[#allocation5 + $0x850] sm:$0xff]
    %v814 = vld [vmem:[#allocation5 + $0x858] sm:$0xff]
    %v815 = vld [vmem:[#allocation5 + $0x860] sm:$0xff]
    %v816 = vld [vmem:[#allocation5 + $0x868] sm:$0xff]
    %v817 = vld [vmem:[#allocation5 + $0x870] sm:$0xff]
    %v818 = vld [vmem:[#allocation5 + $0x878] sm:$0xff]
    %v819 = vld [vmem:[#allocation5 + $0x880] sm:$0xff]
    %v820 = vld [vmem:[#allocation5 + $0x888] sm:$0xff]
    %v821 = vld [vmem:[#allocation5 + $0x890] sm:$0xff]
    %v822 = vld [vmem:[#allocation5 + $0x898] sm:$0xff]
    %v823 = vld [vmem:[#allocation5 + $0x8a0] sm:$0xff]
    %v824 = vld [vmem:[#allocation5 + $0x8a8] sm:$0xff]
    %v825 = vld [vmem:[#allocation5 + $0x8b0] sm:$0xff]
    %v826 = vld [vmem:[#allocation5 + $0x8b8] sm:$0xff]
    %v827 = vld [vmem:[#allocation5 + $0x8c0] sm:$0xff]
    %v828 = vld [vmem:[#allocation5 + $0x8c8] sm:$0xff]
    %v829 = vld [vmem:[#allocation5 + $0x8d0] sm:$0xff]
    %v830 = vld [vmem:[#allocation5 + $0x8d8] sm:$0xff]
    %v831 = vld [vmem:[#allocation5 + $0x8e0] sm:$0xff]
    %v832 = vld [vmem:[#allocation5 + $0x8e8] sm:$0xff]
    %v833 = vld [vmem:[#allocation5 + $0x8f0] sm:$0xff]
    %v834 = vld [vmem:[#allocation5 + $0x8f8] sm:$0xff]
    %v835 = vld [vmem:[#allocation7] sm:$0x3f]
    %v837 = vperm.slane %v835, 0
    %v838 = vperm.slane %v835, 1
    %v839 = vperm.slane %v835, 2
    %v840 = vperm.slane %v835, 3
    %v841 = vperm.slane %v835, 4
    %v842 = vperm.slane %v835, 5
    %v1137 = vunpack.c.l.b16 %v547
    %v1138 = vunpack.c.h.b16 %v547
    %v1139 = vunpack.c.l.b16 %v548
    %v1140 = vunpack.c.h.b16 %v548
    %v1141 = vunpack.c.l.b16 %v549
    %v1142 = vunpack.c.h.b16 %v549
    %v1143 = vunpack.c.l.b16 %v550
    %v1144 = vunpack.c.h.b16 %v550
    %v1145 = vunpack.c.l.b16 %v551
    %v1146 = vunpack.c.h.b16 %v551
    %v1147 = vunpack.c.l.b16 %v552
    %v1148 = vunpack.c.h.b16 %v552
    %v1149 = vunpack.c.l.b16 %v553
    %v1150 = vunpack.c.h.b16 %v553
    %v1151 = vunpack.c.l.b16 %v554
    %v1152 = vunpack.c.h.b16 %v554
    %v1153 = vunpack.c.l.b16 %v555
    %v1154 = vunpack.c.h.b16 %v555
    %v1155 = vunpack.c.l.b16 %v556
    %v1156 = vunpack.c.h.b16 %v556
    %v1157 = vunpack.c.l.b16 %v557
    %v1158 = vunpack.c.h.b16 %v557
    %v1159 = vunpack.c.l.b16 %v558
    %v1160 = vunpack.c.h.b16 %v558
    %v1161 = vunpack.c.l.b16 %v559
    %v1162 = vunpack.c.h.b16 %v559
    %v1163 = vunpack.c.l.b16 %v560
    %v1164 = vunpack.c.h.b16 %v560
    %v1165 = vunpack.c.l.b16 %v561
    %v1166 = vunpack.c.h.b16 %v561
    %v1167 = vunpack.c.l.b16 %v562
    %v1168 = vunpack.c.h.b16 %v562
    %v1169 = vunpack.c.l.b16 %v563
    %v1170 = vunpack.c.h.b16 %v563
    %v1171 = vunpack.c.l.b16 %v564
    %v1172 = vunpack.c.h.b16 %v564
    %v1173 = vunpack.c.l.b16 %v565
    %v1174 = vunpack.c.h.b16 %v565
    %v1175 = vunpack.c.l.b16 %v566
    %v1176 = vunpack.c.h.b16 %v566
    %v1177 = vunpack.c.l.b16 %v567
    %v1178 = vunpack.c.h.b16 %v567
    %v1179 = vunpack.c.l.b16 %v568
    %v1180 = vunpack.c.h.b16 %v568
    %v1181 = vunpack.c.l.b16 %v569
    %v1182 = vunpack.c.h.b16 %v569
    %v1183 = vunpack.c.l.b16 %v570
    %v1184 = vunpack.c.h.b16 %v570
    %v1185 = vunpack.c.l.b16 %v571
    %v1186 = vunpack.c.h.b16 %v571
    %v1187 = vunpack.c.l.b16 %v572
    %v1188 = vunpack.c.h.b16 %v572
    %v1189 = vunpack.c.l.b16 %v573
    %v1190 = vunpack.c.h.b16 %v573
    %v1191 = vunpack.c.l.b16 %v574
    %v1192 = vunpack.c.h.b16 %v574
    %v1193 = vunpack.c.l.b16 %v575
    %v1194 = vunpack.c.h.b16 %v575
    %v1195 = vunpack.c.l.b16 %v576
    %v1196 = vunpack.c.h.b16 %v576
    %v1197 = vunpack.c.l.b16 %v577
    %v1198 = vunpack.c.h.b16 %v577
    %v1199 = vunpack.c.l.b16 %v578
    %v1200 = vunpack.c.h.b16 %v578
    %v1201 = vunpack.c.l.b16 %v579
    %v1202 = vunpack.c.h.b16 %v579
    %v1203 = vunpack.c.l.b16 %v580
    %v1204 = vunpack.c.h.b16 %v580
    %v1205 = vunpack.c.l.b16 %v581
    %v1206 = vunpack.c.h.b16 %v581
    %v1207 = vunpack.c.l.b16 %v582
    %v1208 = vunpack.c.h.b16 %v582
    %v1209 = vunpack.c.l.b16 %v583
    %v1210 = vunpack.c.h.b16 %v583
    %v1211 = vunpack.c.l.b16 %v584
    %v1212 = vunpack.c.h.b16 %v584
    %v1213 = vunpack.c.l.b16 %v585
    %v1214 = vunpack.c.h.b16 %v585
    %v1215 = vunpack.c.l.b16 %v586
    %v1216 = vunpack.c.h.b16 %v586
    %v1217 = vunpack.c.l.b16 %v587
    %v1218 = vunpack.c.h.b16 %v587
    %v1219 = vunpack.c.l.b16 %v588
    %v1220 = vunpack.c.h.b16 %v588
    %v1221 = vunpack.c.l.b16 %v589
    %v1222 = vunpack.c.h.b16 %v589
    %v1223 = vunpack.c.l.b16 %v590
    %v1224 = vunpack.c.h.b16 %v590
    %v1225 = vunpack.c.l.b16 %v591
    %v1226 = vunpack.c.h.b16 %v591
    %v1227 = vunpack.c.l.b16 %v592
    %v1228 = vunpack.c.h.b16 %v592
    %v1229 = vunpack.c.l.b16 %v593
    %v1230 = vunpack.c.h.b16 %v593
    %v1231 = vunpack.c.l.b16 %v594
    %v1232 = vunpack.c.h.b16 %v594
    %v1233 = vunpack.c.l.b16 %v595
    %v1234 = vunpack.c.h.b16 %v595
    %v1235 = vunpack.c.l.b16 %v596
    %v1236 = vunpack.c.h.b16 %v596
    %v1237 = vunpack.c.l.b16 %v597
    %v1238 = vunpack.c.h.b16 %v597
    %v1239 = vunpack.c.l.b16 %v598
    %v1240 = vunpack.c.h.b16 %v598
    %v1241 = vunpack.c.l.b16 %v599
    %v1242 = vunpack.c.h.b16 %v599
    %v1243 = vunpack.c.l.b16 %v600
    %v1244 = vunpack.c.h.b16 %v600
    %v1245 = vunpack.c.l.b16 %v601
    %v1246 = vunpack.c.h.b16 %v601
    %v1247 = vunpack.c.l.b16 %v602
    %v1248 = vunpack.c.h.b16 %v602
    %v1249 = vunpack.c.l.b16 %v603
    %v1250 = vunpack.c.h.b16 %v603
    %v1251 = vunpack.c.l.b16 %v604
    %v1252 = vunpack.c.h.b16 %v604
    %v1253 = vunpack.c.l.b16 %v605
    %v1254 = vunpack.c.h.b16 %v605
    %v1255 = vunpack.c.l.b16 %v606
    %v1256 = vunpack.c.h.b16 %v606
    %v1257 = vunpack.c.l.b16 %v607
    %v1258 = vunpack.c.h.b16 %v607
    %v1259 = vunpack.c.l.b16 %v608
    %v1260 = vunpack.c.h.b16 %v608
    %v1261 = vunpack.c.l.b16 %v609
    %v1262 = vunpack.c.h.b16 %v609
    %v1263 = vunpack.c.l.b16 %v610
    %v1264 = vunpack.c.h.b16 %v610
    %v1265 = vunpack.c.l.b16 %v611
    %v1266 = vunpack.c.h.b16 %v611
    %v1267 = vunpack.c.l.b16 %v612
    %v1268 = vunpack.c.h.b16 %v612
    %v1269 = vunpack.c.l.b16 %v613
    %v1270 = vunpack.c.h.b16 %v613
    %v1271 = vunpack.c.l.b16 %v614
    %v1272 = vunpack.c.h.b16 %v614
    %v1273 = vunpack.c.l.b16 %v615
    %v1274 = vunpack.c.h.b16 %v615
    %v1275 = vunpack.c.l.b16 %v616
    %v1276 = vunpack.c.h.b16 %v616
    %v1277 = vunpack.c.l.b16 %v617
    %v1278 = vunpack.c.h.b16 %v617
    %v1279 = vunpack.c.l.b16 %v618
    %v1280 = vunpack.c.h.b16 %v618
    %v1281 = vunpack.c.l.b16 %v619
    %v1282 = vunpack.c.h.b16 %v619
    %v1283 = vunpack.c.l.b16 %v620
    %v1284 = vunpack.c.h.b16 %v620
    %v1285 = vunpack.c.l.b16 %v621
    %v1286 = vunpack.c.h.b16 %v621
    %v1287 = vunpack.c.l.b16 %v622
    %v1288 = vunpack.c.h.b16 %v622
    %v1289 = vunpack.c.l.b16 %v623
    %v1290 = vunpack.c.h.b16 %v623
    %v1291 = vunpack.c.l.b16 %v624
    %v1292 = vunpack.c.h.b16 %v624
    %v1293 = vunpack.c.l.b16 %v625
    %v1294 = vunpack.c.h.b16 %v625
    %v1295 = vunpack.c.l.b16 %v626
    %v1296 = vunpack.c.h.b16 %v626
    %v1297 = vunpack.c.l.b16 %v627
    %v1298 = vunpack.c.h.b16 %v627
    %v1299 = vunpack.c.l.b16 %v628
    %v1300 = vunpack.c.h.b16 %v628
    %v1301 = vunpack.c.l.b16 %v629
    %v1302 = vunpack.c.h.b16 %v629
    %v1303 = vunpack.c.l.b16 %v630
    %v1304 = vunpack.c.h.b16 %v630
    %v1305 = vunpack.c.l.b16 %v631
    %v1306 = vunpack.c.h.b16 %v631
    %v1307 = vunpack.c.l.b16 %v632
    %v1308 = vunpack.c.h.b16 %v632
    %v1309 = vunpack.c.l.b16 %v633
    %v1310 = vunpack.c.h.b16 %v633
    %v1311 = vunpack.c.l.b16 %v634
    %v1312 = vunpack.c.h.b16 %v634
    %v1313 = vunpack.c.l.b16 %v635
    %v1314 = vunpack.c.h.b16 %v635
    %v1315 = vunpack.c.l.b16 %v636
    %v1316 = vunpack.c.h.b16 %v636
    %v1317 = vunpack.c.l.b16 %v637
    %v1318 = vunpack.c.h.b16 %v637
    %v1319 = vunpack.c.l.b16 %v638
    %v1320 = vunpack.c.h.b16 %v638
    %v1321 = vunpack.c.l.b16 %v639
    %v1322 = vunpack.c.h.b16 %v639
    %v1323 = vunpack.c.l.b16 %v640
    %v1324 = vunpack.c.h.b16 %v640
    %v1325 = vunpack.c.l.b16 %v641
    %v1326 = vunpack.c.h.b16 %v641
    %v1327 = vunpack.c.l.b16 %v642
    %v1328 = vunpack.c.h.b16 %v642
    %v1329 = vunpack.c.l.b16 %v643
    %v1330 = vunpack.c.h.b16 %v643
    %v1331 = vunpack.c.l.b16 %v644
    %v1332 = vunpack.c.h.b16 %v644
    %v1333 = vunpack.c.l.b16 %v645
    %v1334 = vunpack.c.h.b16 %v645
    %v1335 = vunpack.c.l.b16 %v646
    %v1336 = vunpack.c.h.b16 %v646
    %v1337 = vunpack.c.l.b16 %v647
    %v1338 = vunpack.c.h.b16 %v647
    %v1339 = vunpack.c.l.b16 %v648
    %v1340 = vunpack.c.h.b16 %v648
    %v1341 = vunpack.c.l.b16 %v649
    %v1342 = vunpack.c.h.b16 %v649
    %v1343 = vunpack.c.l.b16 %v650
    %v1344 = vunpack.c.h.b16 %v650
    %v1345 = vunpack.c.l.b16 %v651
    %v1346 = vunpack.c.h.b16 %v651
    %v1347 = vunpack.c.l.b16 %v652
    %v1348 = vunpack.c.h.b16 %v652
    %v1349 = vunpack.c.l.b16 %v653
    %v1350 = vunpack.c.h.b16 %v653
    %v1351 = vunpack.c.l.b16 %v654
    %v1352 = vunpack.c.h.b16 %v654
    %v1353 = vunpack.c.l.b16 %v655
    %v1354 = vunpack.c.h.b16 %v655
    %v1355 = vunpack.c.l.b16 %v656
    %v1356 = vunpack.c.h.b16 %v656
    %v1357 = vunpack.c.l.b16 %v657
    %v1358 = vunpack.c.h.b16 %v657
    %v1359 = vunpack.c.l.b16 %v658
    %v1360 = vunpack.c.h.b16 %v658
    %v1361 = vunpack.c.l.b16 %v659
    %v1362 = vunpack.c.h.b16 %v659
    %v1363 = vunpack.c.l.b16 %v660
    %v1364 = vunpack.c.h.b16 %v660
    %v1365 = vunpack.c.l.b16 %v661
    %v1366 = vunpack.c.h.b16 %v661
    %v1367 = vunpack.c.l.b16 %v662
    %v1368 = vunpack.c.h.b16 %v662
    %v1369 = vunpack.c.l.b16 %v663
    %v1370 = vunpack.c.h.b16 %v663
    %v1371 = vunpack.c.l.b16 %v664
    %v1372 = vunpack.c.h.b16 %v664
    %v1373 = vunpack.c.l.b16 %v665
    %v1374 = vunpack.c.h.b16 %v665
    %v1375 = vunpack.c.l.b16 %v666
    %v1376 = vunpack.c.h.b16 %v666
    %v1377 = vunpack.c.l.b16 %v667
    %v1378 = vunpack.c.h.b16 %v667
    %v1379 = vunpack.c.l.b16 %v668
    %v1380 = vunpack.c.h.b16 %v668
    %v1381 = vunpack.c.l.b16 %v669
    %v1382 = vunpack.c.h.b16 %v669
    %v1383 = vunpack.c.l.b16 %v670
    %v1384 = vunpack.c.h.b16 %v670
    %v1385 = vunpack.c.l.b16 %v671
    %v1386 = vunpack.c.h.b16 %v671
    %v1387 = vunpack.c.l.b16 %v672
    %v1388 = vunpack.c.h.b16 %v672
    %v1389 = vunpack.c.l.b16 %v673
    %v1390 = vunpack.c.h.b16 %v673
    %v1391 = vunpack.c.l.b16 %v674
    %v1392 = vunpack.c.h.b16 %v674
    %v1393 = vunpack.c.l.b16 %v675
    %v1394 = vunpack.c.h.b16 %v675
    %v1395 = vunpack.c.l.b16 %v676
    %v1396 = vunpack.c.h.b16 %v676
    %v1397 = vunpack.c.l.b16 %v677
    %v1398 = vunpack.c.h.b16 %v677
    %v1399 = vunpack.c.l.b16 %v678
    %v1400 = vunpack.c.h.b16 %v678
    %v1401 = vunpack.c.l.b16 %v679
    %v1402 = vunpack.c.h.b16 %v679
    %v1403 = vunpack.c.l.b16 %v680
    %v1404 = vunpack.c.h.b16 %v680
    %v1405 = vunpack.c.l.b16 %v681
    %v1406 = vunpack.c.h.b16 %v681
    %v1407 = vunpack.c.l.b16 %v682
    %v1408 = vunpack.c.h.b16 %v682
    %v1409 = vunpack.c.l.b16 %v683
    %v1410 = vunpack.c.h.b16 %v683
    %v1411 = vunpack.c.l.b16 %v684
    %v1412 = vunpack.c.h.b16 %v684
    %v1413 = vunpack.c.l.b16 %v685
    %v1414 = vunpack.c.h.b16 %v685
    %v1415 = vunpack.c.l.b16 %v686
    %v1416 = vunpack.c.h.b16 %v686
    %v1417 = vunpack.c.l.b16 %v687
    %v1418 = vunpack.c.h.b16 %v687
    %v1419 = vunpack.c.l.b16 %v688
    %v1420 = vunpack.c.h.b16 %v688
    %v1421 = vunpack.c.l.b16 %v689
    %v1422 = vunpack.c.h.b16 %v689
    %v1423 = vunpack.c.l.b16 %v690
    %v1424 = vunpack.c.h.b16 %v690
    %v1425 = vunpack.c.l.b16 %v691
    %v1426 = vunpack.c.h.b16 %v691
    %v1427 = vunpack.c.l.b16 %v692
    %v1428 = vunpack.c.h.b16 %v692
    %v1429 = vunpack.c.l.b16 %v693
    %v1430 = vunpack.c.h.b16 %v693
    %v1431 = vunpack.c.l.b16 %v694
    %v1432 = vunpack.c.h.b16 %v694
    %v1433 = vunpack.c.l.b16 %v695
    %v1434 = vunpack.c.h.b16 %v695
    %v1435 = vunpack.c.l.b16 %v696
    %v1436 = vunpack.c.h.b16 %v696
    %v1437 = vunpack.c.l.b16 %v697
    %v1438 = vunpack.c.h.b16 %v697
    %v1439 = vunpack.c.l.b16 %v698
    %v1440 = vunpack.c.h.b16 %v698
    %v1441 = vunpack.c.l.b16 %v699
    %v1442 = vunpack.c.h.b16 %v699
    %v1443 = vunpack.c.l.b16 %v700
    %v1444 = vunpack.c.h.b16 %v700
    %v1445 = vunpack.c.l.b16 %v701
    %v1446 = vunpack.c.h.b16 %v701
    %v1447 = vunpack.c.l.b16 %v702
    %v1448 = vunpack.c.h.b16 %v702
    %v1449 = vunpack.c.l.b16 %v703
    %v1450 = vunpack.c.h.b16 %v703
    %v1451 = vunpack.c.l.b16 %v704
    %v1452 = vunpack.c.h.b16 %v704
    %v1453 = vunpack.c.l.b16 %v705
    %v1454 = vunpack.c.h.b16 %v705
    %v1455 = vunpack.c.l.b16 %v706
    %v1456 = vunpack.c.h.b16 %v706
    %v1457 = vunpack.c.l.b16 %v707
    %v1458 = vunpack.c.h.b16 %v707
    %v1459 = vunpack.c.l.b16 %v708
    %v1460 = vunpack.c.h.b16 %v708
    %v1461 = vunpack.c.l.b16 %v709
    %v1462 = vunpack.c.h.b16 %v709
    %v1463 = vunpack.c.l.b16 %v710
    %v1464 = vunpack.c.h.b16 %v710
    %v1465 = vunpack.c.l.b16 %v711
    %v1466 = vunpack.c.h.b16 %v711
    %v1467 = vunpack.c.l.b16 %v712
    %v1468 = vunpack.c.h.b16 %v712
    %v1469 = vunpack.c.l.b16 %v713
    %v1470 = vunpack.c.h.b16 %v713
    %v1471 = vunpack.c.l.b16 %v714
    %v1472 = vunpack.c.h.b16 %v714
    %v1473 = vunpack.c.l.b16 %v715
    %v1474 = vunpack.c.h.b16 %v715
    %v1475 = vunpack.c.l.b16 %v716
    %v1476 = vunpack.c.h.b16 %v716
    %v1477 = vunpack.c.l.b16 %v717
    %v1478 = vunpack.c.h.b16 %v717
    %v1479 = vunpack.c.l.b16 %v718
    %v1480 = vunpack.c.h.b16 %v718
    %v1481 = vunpack.c.l.b16 %v719
    %v1482 = vunpack.c.h.b16 %v719
    %v1483 = vunpack.c.l.b16 %v720
    %v1484 = vunpack.c.h.b16 %v720
    %v1485 = vunpack.c.l.b16 %v721
    %v1486 = vunpack.c.h.b16 %v721
    %v1487 = vunpack.c.l.b16 %v722
    %v1488 = vunpack.c.h.b16 %v722
    %v1489 = vunpack.c.l.b16 %v723
    %v1490 = vunpack.c.h.b16 %v723
    %v1491 = vunpack.c.l.b16 %v724
    %v1492 = vunpack.c.h.b16 %v724
    %v1493 = vunpack.c.l.b16 %v725
    %v1494 = vunpack.c.h.b16 %v725
    %v1495 = vunpack.c.l.b16 %v726
    %v1496 = vunpack.c.h.b16 %v726
    %v1497 = vunpack.c.l.b16 %v727
    %v1498 = vunpack.c.h.b16 %v727
    %v1499 = vunpack.c.l.b16 %v728
    %v1500 = vunpack.c.h.b16 %v728
    %v1501 = vunpack.c.l.b16 %v729
    %v1502 = vunpack.c.h.b16 %v729
    %v1503 = vunpack.c.l.b16 %v730
    %v1504 = vunpack.c.h.b16 %v730
    %v1505 = vunpack.c.l.b16 %v731
    %v1506 = vunpack.c.h.b16 %v731
    %v1507 = vunpack.c.l.b16 %v732
    %v1508 = vunpack.c.h.b16 %v732
    %v1509 = vunpack.c.l.b16 %v733
    %v1510 = vunpack.c.h.b16 %v733
    %v1511 = vunpack.c.l.b16 %v734
    %v1512 = vunpack.c.h.b16 %v734
    %v1513 = vunpack.c.l.b16 %v735
    %v1514 = vunpack.c.h.b16 %v735
    %v1515 = vunpack.c.l.b16 %v736
    %v1516 = vunpack.c.h.b16 %v736
    %v1517 = vunpack.c.l.b16 %v737
    %v1518 = vunpack.c.h.b16 %v737
    %v1519 = vunpack.c.l.b16 %v738
    %v1520 = vunpack.c.h.b16 %v738
    %v1521 = vunpack.c.l.b16 %v739
    %v1522 = vunpack.c.h.b16 %v739
    %v1523 = vunpack.c.l.b16 %v740
    %v1524 = vunpack.c.h.b16 %v740
    %v1525 = vunpack.c.l.b16 %v741
    %v1526 = vunpack.c.h.b16 %v741
    %v1527 = vunpack.c.l.b16 %v742
    %v1528 = vunpack.c.h.b16 %v742
    %v1529 = vunpack.c.l.b16 %v743
    %v1530 = vunpack.c.h.b16 %v743
    %v1531 = vunpack.c.l.b16 %v744
    %v1532 = vunpack.c.h.b16 %v744
    %v1533 = vunpack.c.l.b16 %v745
    %v1534 = vunpack.c.h.b16 %v745
    %v1535 = vunpack.c.l.b16 %v746
    %v1536 = vunpack.c.h.b16 %v746
    %v1537 = vunpack.c.l.b16 %v747
    %v1538 = vunpack.c.h.b16 %v747
    %v1539 = vunpack.c.l.b16 %v748
    %v1540 = vunpack.c.h.b16 %v748
    %v1541 = vunpack.c.l.b16 %v749
    %v1542 = vunpack.c.h.b16 %v749
    %v1543 = vunpack.c.l.b16 %v750
    %v1544 = vunpack.c.h.b16 %v750
    %v1545 = vunpack.c.l.b16 %v751
    %v1546 = vunpack.c.h.b16 %v751
    %v1547 = vunpack.c.l.b16 %v752
    %v1548 = vunpack.c.h.b16 %v752
    %v1549 = vunpack.c.l.b16 %v753
    %v1550 = vunpack.c.h.b16 %v753
    %v1551 = vunpack.c.l.b16 %v754
    %v1552 = vunpack.c.h.b16 %v754
    %v1553 = vunpack.c.l.b16 %v755
    %v1554 = vunpack.c.h.b16 %v755
    %v1555 = vunpack.c.l.b16 %v756
    %v1556 = vunpack.c.h.b16 %v756
    %v1557 = vunpack.c.l.b16 %v757
    %v1558 = vunpack.c.h.b16 %v757
    %v1559 = vunpack.c.l.b16 %v758
    %v1560 = vunpack.c.h.b16 %v758
    %v1561 = vunpack.c.l.b16 %v759
    %v1562 = vunpack.c.h.b16 %v759
    %v1563 = vunpack.c.l.b16 %v760
    %v1564 = vunpack.c.h.b16 %v760
    %v1565 = vunpack.c.l.b16 %v761
    %v1566 = vunpack.c.h.b16 %v761
    %v1567 = vunpack.c.l.b16 %v762
    %v1568 = vunpack.c.h.b16 %v762
    %v1569 = vunpack.c.l.b16 %v763
    %v1570 = vunpack.c.h.b16 %v763
    %v1571 = vunpack.c.l.b16 %v764
    %v1572 = vunpack.c.h.b16 %v764
    %v1573 = vunpack.c.l.b16 %v765
    %v1574 = vunpack.c.h.b16 %v765
    %v1575 = vunpack.c.l.b16 %v766
    %v1576 = vunpack.c.h.b16 %v766
    %v1577 = vunpack.c.l.b16 %v767
    %v1578 = vunpack.c.h.b16 %v767
    %v1579 = vunpack.c.l.b16 %v768
    %v1580 = vunpack.c.h.b16 %v768
    %v1581 = vunpack.c.l.b16 %v769
    %v1582 = vunpack.c.h.b16 %v769
    %v1583 = vunpack.c.l.b16 %v770
    %v1584 = vunpack.c.h.b16 %v770
    %v1585 = vunpack.c.l.b16 %v771
    %v1586 = vunpack.c.h.b16 %v771
    %v1587 = vunpack.c.l.b16 %v772
    %v1588 = vunpack.c.h.b16 %v772
    %v1589 = vunpack.c.l.b16 %v773
    %v1590 = vunpack.c.h.b16 %v773
    %v1591 = vunpack.c.l.b16 %v774
    %v1592 = vunpack.c.h.b16 %v774
    %v1593 = vunpack.c.l.b16 %v775
    %v1594 = vunpack.c.h.b16 %v775
    %v1595 = vunpack.c.l.b16 %v776
    %v1596 = vunpack.c.h.b16 %v776
    %v1597 = vunpack.c.l.b16 %v777
    %v1598 = vunpack.c.h.b16 %v777
    %v1599 = vunpack.c.l.b16 %v778
    %v1600 = vunpack.c.h.b16 %v778
    %v1601 = vunpack.c.l.b16 %v779
    %v1602 = vunpack.c.h.b16 %v779
    %v1603 = vunpack.c.l.b16 %v780
    %v1604 = vunpack.c.h.b16 %v780
    %v1605 = vunpack.c.l.b16 %v781
    %v1606 = vunpack.c.h.b16 %v781
    %v1607 = vunpack.c.l.b16 %v782
    %v1608 = vunpack.c.h.b16 %v782
    %v1609 = vunpack.c.l.b16 %v783
    %v1610 = vunpack.c.h.b16 %v783
    %v1611 = vunpack.c.l.b16 %v784
    %v1612 = vunpack.c.h.b16 %v784
    %v1613 = vunpack.c.l.b16 %v785
    %v1614 = vunpack.c.h.b16 %v785
    %v1615 = vunpack.c.l.b16 %v786
    %v1616 = vunpack.c.h.b16 %v786
    %v1617 = vunpack.c.l.b16 %v787
    %v1618 = vunpack.c.h.b16 %v787
    %v1619 = vunpack.c.l.b16 %v788
    %v1620 = vunpack.c.h.b16 %v788
    %v1621 = vunpack.c.l.b16 %v789
    %v1622 = vunpack.c.h.b16 %v789
    %v1623 = vunpack.c.l.b16 %v790
    %v1624 = vunpack.c.h.b16 %v790
    %v1625 = vunpack.c.l.b16 %v791
    %v1626 = vunpack.c.h.b16 %v791
    %v1627 = vunpack.c.l.b16 %v792
    %v1628 = vunpack.c.h.b16 %v792
    %v1629 = vunpack.c.l.b16 %v793
    %v1630 = vunpack.c.h.b16 %v793
    %v1631 = vunpack.c.l.b16 %v794
    %v1632 = vunpack.c.h.b16 %v794
    %v1633 = vunpack.c.l.b16 %v795
    %v1634 = vunpack.c.h.b16 %v795
    %v1635 = vunpack.c.l.b16 %v796
    %v1636 = vunpack.c.h.b16 %v796
    %v1637 = vunpack.c.l.b16 %v797
    %v1638 = vunpack.c.h.b16 %v797
    %v1639 = vunpack.c.l.b16 %v798
    %v1640 = vunpack.c.h.b16 %v798
    %v1641 = vunpack.c.l.b16 %v799
    %v1642 = vunpack.c.h.b16 %v799
    %v1643 = vunpack.c.l.b16 %v800
    %v1644 = vunpack.c.h.b16 %v800
    %v1645 = vunpack.c.l.b16 %v801
    %v1646 = vunpack.c.h.b16 %v801
    %v1647 = vunpack.c.l.b16 %v802
    %v1648 = vunpack.c.h.b16 %v802
    %v1649 = vunpack.c.l.b16 %v803
    %v1650 = vunpack.c.h.b16 %v803
    %v1651 = vunpack.c.l.b16 %v804
    %v1652 = vunpack.c.h.b16 %v804
    %v1653 = vunpack.c.l.b16 %v805
    %v1654 = vunpack.c.h.b16 %v805
    %v1655 = vunpack.c.l.b16 %v806
    %v1656 = vunpack.c.h.b16 %v806
    %v1657 = vunpack.c.l.b16 %v807
    %v1658 = vunpack.c.h.b16 %v807
    %v1659 = vunpack.c.l.b16 %v808
    %v1660 = vunpack.c.h.b16 %v808
    %v1661 = vunpack.c.l.b16 %v809
    %v1662 = vunpack.c.h.b16 %v809
    %v1663 = vunpack.c.l.b16 %v810
    %v1664 = vunpack.c.h.b16 %v810
    %v1665 = vunpack.c.l.b16 %v811
    %v1666 = vunpack.c.h.b16 %v811
    %v1667 = vunpack.c.l.b16 %v812
    %v1668 = vunpack.c.h.b16 %v812
    %v1669 = vunpack.c.l.b16 %v813
    %v1670 = vunpack.c.h.b16 %v813
    %v1671 = vunpack.c.l.b16 %v814
    %v1672 = vunpack.c.h.b16 %v814
    %v1673 = vunpack.c.l.b16 %v815
    %v1674 = vunpack.c.h.b16 %v815
    %v1675 = vunpack.c.l.b16 %v816
    %v1676 = vunpack.c.h.b16 %v816
    %v1677 = vunpack.c.l.b16 %v817
    %v1678 = vunpack.c.h.b16 %v817
    %v1679 = vunpack.c.l.b16 %v818
    %v1680 = vunpack.c.h.b16 %v818
    %v1681 = vunpack.c.l.b16 %v819
    %v1682 = vunpack.c.h.b16 %v819
    %v1683 = vunpack.c.l.b16 %v820
    %v1684 = vunpack.c.h.b16 %v820
    %v1685 = vunpack.c.l.b16 %v821
    %v1686 = vunpack.c.h.b16 %v821
    %v1687 = vunpack.c.l.b16 %v822
    %v1688 = vunpack.c.h.b16 %v822
    %v1689 = vunpack.c.l.b16 %v823
    %v1690 = vunpack.c.h.b16 %v823
    %v1691 = vunpack.c.l.b16 %v824
    %v1692 = vunpack.c.h.b16 %v824
    %v1693 = vunpack.c.l.b16 %v825
    %v1694 = vunpack.c.h.b16 %v825
    %v1695 = vunpack.c.l.b16 %v826
    %v1696 = vunpack.c.h.b16 %v826
    %v1697 = vunpack.c.l.b16 %v827
    %v1698 = vunpack.c.h.b16 %v827
    %v1699 = vunpack.c.l.b16 %v828
    %v1700 = vunpack.c.h.b16 %v828
    %v1701 = vunpack.c.l.b16 %v829
    %v1702 = vunpack.c.h.b16 %v829
    %v1703 = vunpack.c.l.b16 %v830
    %v1704 = vunpack.c.h.b16 %v830
    %v1705 = vunpack.c.l.b16 %v831
    %v1706 = vunpack.c.h.b16 %v831
    %v1707 = vunpack.c.l.b16 %v832
    %v1708 = vunpack.c.h.b16 %v832
    %v1709 = vunpack.c.l.b16 %v833
    %v1710 = vunpack.c.h.b16 %v833
    %v1711 = vunpack.c.l.b16 %v834
    %v1712 = vunpack.c.h.b16 %v834
    %v1713 = vpack.c.b16 %v1143, %v1137
    %v1714 = vpack.c.b16 %v1144, %v1138
    %v1715 = vpack.c.b16 %v1145, %v1139
    %v1716 = vpack.c.b16 %v1146, %v1140
    %v1717 = vpack.c.b16 %v1147, %v1141
    %v1718 = vpack.c.b16 %v1148, %v1142
    %v1719 = vpack.c.b16 %v1155, %v1149
    %v1720 = vpack.c.b16 %v1156, %v1150
    %v1721 = vpack.c.b16 %v1157, %v1151
    %v1722 = vpack.c.b16 %v1158, %v1152
    %v1723 = vpack.c.b16 %v1159, %v1153
    %v1724 = vpack.c.b16 %v1160, %v1154
    %v1725 = vpack.c.b16 %v1167, %v1161
    %v1726 = vpack.c.b16 %v1168, %v1162
    %v1727 = vpack.c.b16 %v1169, %v1163
    %v1728 = vpack.c.b16 %v1170, %v1164
    %v1729 = vpack.c.b16 %v1171, %v1165
    %v1730 = vpack.c.b16 %v1172, %v1166
    %v1731 = vpack.c.b16 %v1179, %v1173
    %v1732 = vpack.c.b16 %v1180, %v1174
    %v1733 = vpack.c.b16 %v1181, %v1175
    %v1734 = vpack.c.b16 %v1182, %v1176
    %v1735 = vpack.c.b16 %v1183, %v1177
    %v1736 = vpack.c.b16 %v1184, %v1178
    %v1737 = vpack.c.b16 %v1191, %v1185
    %v1738 = vpack.c.b16 %v1192, %v1186
    %v1739 = vpack.c.b16 %v1193, %v1187
    %v1740 = vpack.c.b16 %v1194, %v1188
    %v1741 = vpack.c.b16 %v1195, %v1189
    %v1742 = vpack.c.b16 %v1196, %v1190
    %v1743 = vpack.c.b16 %v1203, %v1197
    %v1744 = vpack.c.b16 %v1204, %v1198
    %v1745 = vpack.c.b16 %v1205, %v1199
    %v1746 = vpack.c.b16 %v1206, %v1200
    %v1747 = vpack.c.b16 %v1207, %v1201
    %v1748 = vpack.c.b16 %v1208, %v1202
    %v1749 = vpack.c.b16 %v1215, %v1209
    %v1750 = vpack.c.b16 %v1216, %v1210
    %v1751 = vpack.c.b16 %v1217, %v1211
    %v1752 = vpack.c.b16 %v1218, %v1212
    %v1753 = vpack.c.b16 %v1219, %v1213
    %v1754 = vpack.c.b16 %v1220, %v1214
    %v1755 = vpack.c.b16 %v1227, %v1221
    %v1756 = vpack.c.b16 %v1228, %v1222
    %v1757 = vpack.c.b16 %v1229, %v1223
    %v1758 = vpack.c.b16 %v1230, %v1224
    %v1759 = vpack.c.b16 %v1231, %v1225
    %v1760 = vpack.c.b16 %v1232, %v1226
    %v1761 = vpack.c.b16 %v1239, %v1233
    %v1762 = vpack.c.b16 %v1240, %v1234
    %v1763 = vpack.c.b16 %v1241, %v1235
    %v1764 = vpack.c.b16 %v1242, %v1236
    %v1765 = vpack.c.b16 %v1243, %v1237
    %v1766 = vpack.c.b16 %v1244, %v1238
    %v1767 = vpack.c.b16 %v1251, %v1245
    %v1768 = vpack.c.b16 %v1252, %v1246
    %v1769 = vpack.c.b16 %v1253, %v1247
    %v1770 = vpack.c.b16 %v1254, %v1248
    %v1771 = vpack.c.b16 %v1255, %v1249
    %v1772 = vpack.c.b16 %v1256, %v1250
    %v1773 = vpack.c.b16 %v1263, %v1257
    %v1774 = vpack.c.b16 %v1264, %v1258
    %v1775 = vpack.c.b16 %v1265, %v1259
    %v1776 = vpack.c.b16 %v1266, %v1260
    %v1777 = vpack.c.b16 %v1267, %v1261
    %v1778 = vpack.c.b16 %v1268, %v1262
    %v1779 = vpack.c.b16 %v1275, %v1269
    %v1780 = vpack.c.b16 %v1276, %v1270
    %v1781 = vpack.c.b16 %v1277, %v1271
    %v1782 = vpack.c.b16 %v1278, %v1272
    %v1783 = vpack.c.b16 %v1279, %v1273
    %v1784 = vpack.c.b16 %v1280, %v1274
    %v1785 = vpack.c.b16 %v1287, %v1281
    %v1786 = vpack.c.b16 %v1288, %v1282
    %v1787 = vpack.c.b16 %v1289, %v1283
    %v1788 = vpack.c.b16 %v1290, %v1284
    %v1789 = vpack.c.b16 %v1291, %v1285
    %v1790 = vpack.c.b16 %v1292, %v1286
    %v1791 = vpack.c.b16 %v1299, %v1293
    %v1792 = vpack.c.b16 %v1300, %v1294
    %v1793 = vpack.c.b16 %v1301, %v1295
    %v1794 = vpack.c.b16 %v1302, %v1296
    %v1795 = vpack.c.b16 %v1303, %v1297
    %v1796 = vpack.c.b16 %v1304, %v1298
    %v1797 = vpack.c.b16 %v1311, %v1305
    %v1798 = vpack.c.b16 %v1312, %v1306
    %v1799 = vpack.c.b16 %v1313, %v1307
    %v1800 = vpack.c.b16 %v1314, %v1308
    %v1801 = vpack.c.b16 %v1315, %v1309
    %v1802 = vpack.c.b16 %v1316, %v1310
    %v1803 = vpack.c.b16 %v1323, %v1317
    %v1804 = vpack.c.b16 %v1324, %v1318
    %v1805 = vpack.c.b16 %v1325, %v1319
    %v1806 = vpack.c.b16 %v1326, %v1320
    %v1807 = vpack.c.b16 %v1327, %v1321
    %v1808 = vpack.c.b16 %v1328, %v1322
    %v1809 = vpack.c.b16 %v1335, %v1329
    %v1810 = vpack.c.b16 %v1336, %v1330
    %v1811 = vpack.c.b16 %v1337, %v1331
    %v1812 = vpack.c.b16 %v1338, %v1332
    %v1813 = vpack.c.b16 %v1339, %v1333
    %v1814 = vpack.c.b16 %v1340, %v1334
    %v1815 = vpack.c.b16 %v1347, %v1341
    %v1816 = vpack.c.b16 %v1348, %v1342
    %v1817 = vpack.c.b16 %v1349, %v1343
    %v1818 = vpack.c.b16 %v1350, %v1344
    %v1819 = vpack.c.b16 %v1351, %v1345
    %v1820 = vpack.c.b16 %v1352, %v1346
    %v1821 = vpack.c.b16 %v1359, %v1353
    %v1822 = vpack.c.b16 %v1360, %v1354
    %v1823 = vpack.c.b16 %v1361, %v1355
    %v1824 = vpack.c.b16 %v1362, %v1356
    %v1825 = vpack.c.b16 %v1363, %v1357
    %v1826 = vpack.c.b16 %v1364, %v1358
    %v1827 = vpack.c.b16 %v1371, %v1365
    %v1828 = vpack.c.b16 %v1372, %v1366
    %v1829 = vpack.c.b16 %v1373, %v1367
    %v1830 = vpack.c.b16 %v1374, %v1368
    %v1831 = vpack.c.b16 %v1375, %v1369
    %v1832 = vpack.c.b16 %v1376, %v1370
    %v1833 = vpack.c.b16 %v1383, %v1377
    %v1834 = vpack.c.b16 %v1384, %v1378
    %v1835 = vpack.c.b16 %v1385, %v1379
    %v1836 = vpack.c.b16 %v1386, %v1380
    %v1837 = vpack.c.b16 %v1387, %v1381
    %v1838 = vpack.c.b16 %v1388, %v1382
    %v1839 = vpack.c.b16 %v1395, %v1389
    %v1840 = vpack.c.b16 %v1396, %v1390
    %v1841 = vpack.c.b16 %v1397, %v1391
    %v1842 = vpack.c.b16 %v1398, %v1392
    %v1843 = vpack.c.b16 %v1399, %v1393
    %v1844 = vpack.c.b16 %v1400, %v1394
    %v1845 = vpack.c.b16 %v1407, %v1401
    %v1846 = vpack.c.b16 %v1408, %v1402
    %v1847 = vpack.c.b16 %v1409, %v1403
    %v1848 = vpack.c.b16 %v1410, %v1404
    %v1849 = vpack.c.b16 %v1411, %v1405
    %v1850 = vpack.c.b16 %v1412, %v1406
    %v1851 = vpack.c.b16 %v1419, %v1413
    %v1852 = vpack.c.b16 %v1420, %v1414
    %v1853 = vpack.c.b16 %v1421, %v1415
    %v1854 = vpack.c.b16 %v1422, %v1416
    %v1855 = vpack.c.b16 %v1423, %v1417
    %v1856 = vpack.c.b16 %v1424, %v1418
    %v1857 = vpack.c.b16 %v1431, %v1425
    %v1858 = vpack.c.b16 %v1432, %v1426
    %v1859 = vpack.c.b16 %v1433, %v1427
    %v1860 = vpack.c.b16 %v1434, %v1428
    %v1861 = vpack.c.b16 %v1435, %v1429
    %v1862 = vpack.c.b16 %v1436, %v1430
    %v1863 = vpack.c.b16 %v1443, %v1437
    %v1864 = vpack.c.b16 %v1444, %v1438
    %v1865 = vpack.c.b16 %v1445, %v1439
    %v1866 = vpack.c.b16 %v1446, %v1440
    %v1867 = vpack.c.b16 %v1447, %v1441
    %v1868 = vpack.c.b16 %v1448, %v1442
    %v1869 = vpack.c.b16 %v1455, %v1449
    %v1870 = vpack.c.b16 %v1456, %v1450
    %v1871 = vpack.c.b16 %v1457, %v1451
    %v1872 = vpack.c.b16 %v1458, %v1452
    %v1873 = vpack.c.b16 %v1459, %v1453
    %v1874 = vpack.c.b16 %v1460, %v1454
    %v1875 = vpack.c.b16 %v1467, %v1461
    %v1876 = vpack.c.b16 %v1468, %v1462
    %v1877 = vpack.c.b16 %v1469, %v1463
    %v1878 = vpack.c.b16 %v1470, %v1464
    %v1879 = vpack.c.b16 %v1471, %v1465
    %v1880 = vpack.c.b16 %v1472, %v1466
    %v1881 = vpack.c.b16 %v1479, %v1473
    %v1882 = vpack.c.b16 %v1480, %v1474
    %v1883 = vpack.c.b16 %v1481, %v1475
    %v1884 = vpack.c.b16 %v1482, %v1476
    %v1885 = vpack.c.b16 %v1483, %v1477
    %v1886 = vpack.c.b16 %v1484, %v1478
    %v1887 = vpack.c.b16 %v1491, %v1485
    %v1888 = vpack.c.b16 %v1492, %v1486
    %v1889 = vpack.c.b16 %v1493, %v1487
    %v1890 = vpack.c.b16 %v1494, %v1488
    %v1891 = vpack.c.b16 %v1495, %v1489
    %v1892 = vpack.c.b16 %v1496, %v1490
    %v1893 = vpack.c.b16 %v1503, %v1497
    %v1894 = vpack.c.b16 %v1504, %v1498
    %v1895 = vpack.c.b16 %v1505, %v1499
    %v1896 = vpack.c.b16 %v1506, %v1500
    %v1897 = vpack.c.b16 %v1507, %v1501
    %v1898 = vpack.c.b16 %v1508, %v1502
    %v1899 = vpack.c.b16 %v1515, %v1509
    %v1900 = vpack.c.b16 %v1516, %v1510
    %v1901 = vpack.c.b16 %v1517, %v1511
    %v1902 = vpack.c.b16 %v1518, %v1512
    %v1903 = vpack.c.b16 %v1519, %v1513
    %v1904 = vpack.c.b16 %v1520, %v1514
    %v1905 = vpack.c.b16 %v1527, %v1521
    %v1906 = vpack.c.b16 %v1528, %v1522
    %v1907 = vpack.c.b16 %v1529, %v1523
    %v1908 = vpack.c.b16 %v1530, %v1524
    %v1909 = vpack.c.b16 %v1531, %v1525
    %v1910 = vpack.c.b16 %v1532, %v1526
    %v1911 = vpack.c.b16 %v1539, %v1533
    %v1912 = vpack.c.b16 %v1540, %v1534
    %v1913 = vpack.c.b16 %v1541, %v1535
    %v1914 = vpack.c.b16 %v1542, %v1536
    %v1915 = vpack.c.b16 %v1543, %v1537
    %v1916 = vpack.c.b16 %v1544, %v1538
    %v1917 = vpack.c.b16 %v1551, %v1545
    %v1918 = vpack.c.b16 %v1552, %v1546
    %v1919 = vpack.c.b16 %v1553, %v1547
    %v1920 = vpack.c.b16 %v1554, %v1548
    %v1921 = vpack.c.b16 %v1555, %v1549
    %v1922 = vpack.c.b16 %v1556, %v1550
    %v1923 = vpack.c.b16 %v1563, %v1557
    %v1924 = vpack.c.b16 %v1564, %v1558
    %v1925 = vpack.c.b16 %v1565, %v1559
    %v1926 = vpack.c.b16 %v1566, %v1560
    %v1927 = vpack.c.b16 %v1567, %v1561
    %v1928 = vpack.c.b16 %v1568, %v1562
    %v1929 = vpack.c.b16 %v1575, %v1569
    %v1930 = vpack.c.b16 %v1576, %v1570
    %v1931 = vpack.c.b16 %v1577, %v1571
    %v1932 = vpack.c.b16 %v1578, %v1572
    %v1933 = vpack.c.b16 %v1579, %v1573
    %v1934 = vpack.c.b16 %v1580, %v1574
    %v1935 = vpack.c.b16 %v1587, %v1581
    %v1936 = vpack.c.b16 %v1588, %v1582
    %v1937 = vpack.c.b16 %v1589, %v1583
    %v1938 = vpack.c.b16 %v1590, %v1584
    %v1939 = vpack.c.b16 %v1591, %v1585
    %v1940 = vpack.c.b16 %v1592, %v1586
    %v1941 = vpack.c.b16 %v1599, %v1593
    %v1942 = vpack.c.b16 %v1600, %v1594
    %v1943 = vpack.c.b16 %v1601, %v1595
    %v1944 = vpack.c.b16 %v1602, %v1596
    %v1945 = vpack.c.b16 %v1603, %v1597
    %v1946 = vpack.c.b16 %v1604, %v1598
    %v1947 = vpack.c.b16 %v1611, %v1605
    %v1948 = vpack.c.b16 %v1612, %v1606
    %v1949 = vpack.c.b16 %v1613, %v1607
    %v1950 = vpack.c.b16 %v1614, %v1608
    %v1951 = vpack.c.b16 %v1615, %v1609
    %v1952 = vpack.c.b16 %v1616, %v1610
    %v1953 = vpack.c.b16 %v1623, %v1617
    %v1954 = vpack.c.b16 %v1624, %v1618
    %v1955 = vpack.c.b16 %v1625, %v1619
    %v1956 = vpack.c.b16 %v1626, %v1620
    %v1957 = vpack.c.b16 %v1627, %v1621
    %v1958 = vpack.c.b16 %v1628, %v1622
    %v1959 = vpack.c.b16 %v1635, %v1629
    %v1960 = vpack.c.b16 %v1636, %v1630
    %v1961 = vpack.c.b16 %v1637, %v1631
    %v1962 = vpack.c.b16 %v1638, %v1632
    %v1963 = vpack.c.b16 %v1639, %v1633
    %v1964 = vpack.c.b16 %v1640, %v1634
    %v1965 = vpack.c.b16 %v1647, %v1641
    %v1966 = vpack.c.b16 %v1648, %v1642
    %v1967 = vpack.c.b16 %v1649, %v1643
    %v1968 = vpack.c.b16 %v1650, %v1644
    %v1969 = vpack.c.b16 %v1651, %v1645
    %v1970 = vpack.c.b16 %v1652, %v1646
    %v1971 = vpack.c.b16 %v1659, %v1653
    %v1972 = vpack.c.b16 %v1660, %v1654
    %v1973 = vpack.c.b16 %v1661, %v1655
    %v1974 = vpack.c.b16 %v1662, %v1656
    %v1975 = vpack.c.b16 %v1663, %v1657
    %v1976 = vpack.c.b16 %v1664, %v1658
    %v1977 = vpack.c.b16 %v1671, %v1665
    %v1978 = vpack.c.b16 %v1672, %v1666
    %v1979 = vpack.c.b16 %v1673, %v1667
    %v1980 = vpack.c.b16 %v1674, %v1668
    %v1981 = vpack.c.b16 %v1675, %v1669
    %v1982 = vpack.c.b16 %v1676, %v1670
    %v1983 = vpack.c.b16 %v1683, %v1677
    %v1984 = vpack.c.b16 %v1684, %v1678
    %v1985 = vpack.c.b16 %v1685, %v1679
    %v1986 = vpack.c.b16 %v1686, %v1680
    %v1987 = vpack.c.b16 %v1687, %v1681
    %v1988 = vpack.c.b16 %v1688, %v1682
    %v1989 = vpack.c.b16 %v1695, %v1689
    %v1990 = vpack.c.b16 %v1696, %v1690
    %v1991 = vpack.c.b16 %v1697, %v1691
    %v1992 = vpack.c.b16 %v1698, %v1692
    %v1993 = vpack.c.b16 %v1699, %v1693
    %v1994 = vpack.c.b16 %v1700, %v1694
    %v1995 = vpack.c.b16 %v1707, %v1701
    %v1996 = vpack.c.b16 %v1708, %v1702
    %v1997 = vpack.c.b16 %v1709, %v1703
    %v1998 = vpack.c.b16 %v1710, %v1704
    %v1999 = vpack.c.b16 %v1711, %v1705
    %v2000 = vpack.c.b16 %v1712, %v1706
    %2289 = vmatpush.bf16.msra.mxu0 %v1755
    %2290 = vmatpush.bf16.msra.mxu0 %v1749
    %2291 = vmatpush.bf16.msra.mxu0 %v1743
    %2292 = vmatpush.bf16.msra.mxu0 %v1737
    %2293 = vmatpush.bf16.msra.mxu0 %v1731
    %2294 = vmatpush.bf16.msra.mxu0 %v1725
    %2295 = vmatpush.bf16.msra.mxu0 %v1719
    %2296 = vmatpush.bf16.msra.mxu0 %v1713
    %2297 = vmatmul.bf16.gmra.mxu0 %v541
    %v2298 = vpop.f32.mrf.mxu0
    %v2299 = vadd.f32 %v837, %v2298
    %v2300 = vpop.f32.mrf.mxu0
    %v2301 = vadd.f32 %v837, %v2300
    %2302 = vdwg.mxu0
    %2303 = vmatpush.bf16.msra.mxu0 %v1803
    %2304 = vmatpush.bf16.msra.mxu0 %v1797
    %2305 = vmatpush.bf16.msra.mxu0 %v1791
    %2306 = vmatpush.bf16.msra.mxu0 %v1785
    %2307 = vmatpush.bf16.msra.mxu0 %v1779
    %2308 = vmatpush.bf16.msra.mxu0 %v1773
    %2309 = vmatpush.bf16.msra.mxu0 %v1767
    %2310 = vmatpush.bf16.msra.mxu0 %v1761
    %2311 = vmatmul.bf16.gmra.mxu0 %v542
    %v2312 = vpop.f32.mrf.mxu0
    %v2313 = vadd.f32 %v2299, %v2312
    %v2314 = vpop.f32.mrf.mxu0
    %v2315 = vadd.f32 %v2301, %v2314
    %2316 = vdwg.mxu0
    %2317 = vmatpush.bf16.msra.mxu0 %v1851
    %2318 = vmatpush.bf16.msra.mxu0 %v1845
    %2319 = vmatpush.bf16.msra.mxu0 %v1839
    %2320 = vmatpush.bf16.msra.mxu0 %v1833
    %2321 = vmatpush.bf16.msra.mxu0 %v1827
    %2322 = vmatpush.bf16.msra.mxu0 %v1821
    %2323 = vmatpush.bf16.msra.mxu0 %v1815
    %2324 = vmatpush.bf16.msra.mxu0 %v1809
    %2325 = vmatmul.bf16.gmra.mxu0 %v543
    %v2326 = vpop.f32.mrf.mxu0
    %v2327 = vadd.f32 %v2313, %v2326
    %v2328 = vpop.f32.mrf.mxu0
    %v2329 = vadd.f32 %v2315, %v2328
    %2330 = vdwg.mxu0
    %2331 = vmatpush.bf16.msra.mxu0 %v1899
    %2332 = vmatpush.bf16.msra.mxu0 %v1893
    %2333 = vmatpush.bf16.msra.mxu0 %v1887
    %2334 = vmatpush.bf16.msra.mxu0 %v1881
    %2335 = vmatpush.bf16.msra.mxu0 %v1875
    %2336 = vmatpush.bf16.msra.mxu0 %v1869
    %2337 = vmatpush.bf16.msra.mxu0 %v1863
    %2338 = vmatpush.bf16.msra.mxu0 %v1857
    %2339 = vmatmul.bf16.gmra.mxu0 %v544
    %v2340 = vpop.f32.mrf.mxu0
    %v2341 = vadd.f32 %v2327, %v2340
    %v2342 = vpop.f32.mrf.mxu0
    %v2343 = vadd.f32 %v2329, %v2342
    %2344 = vdwg.mxu0
    %2345 = vmatpush.bf16.msra.mxu0 %v1947
    %2346 = vmatpush.bf16.msra.mxu0 %v1941
    %2347 = vmatpush.bf16.msra.mxu0 %v1935
    %2348 = vmatpush.bf16.msra.mxu0 %v1929
    %2349 = vmatpush.bf16.msra.mxu0 %v1923
    %2350 = vmatpush.bf16.msra.mxu0 %v1917
    %2351 = vmatpush.bf16.msra.mxu0 %v1911
    %2352 = vmatpush.bf16.msra.mxu0 %v1905
    %2353 = vmatmul.bf16.gmra.mxu0 %v545
    %v2354 = vpop.f32.mrf.mxu0
    %v2355 = vadd.f32 %v2341, %v2354
    %v2356 = vpop.f32.mrf.mxu0
    %v2357 = vadd.f32 %v2343, %v2356
    %2358 = vdwg.mxu0
    %2359 = vmatpush.bf16.msra.mxu0 %v1995
    %2360 = vmatpush.bf16.msra.mxu0 %v1989
    %2361 = vmatpush.bf16.msra.mxu0 %v1983
    %2362 = vmatpush.bf16.msra.mxu0 %v1977
    %2363 = vmatpush.bf16.msra.mxu0 %v1971
    %2364 = vmatpush.bf16.msra.mxu0 %v1965
    %2365 = vmatpush.bf16.msra.mxu0 %v1959
    %2366 = vmatpush.bf16.msra.mxu0 %v1953
    %2367 = vmatmul.bf16.gmra.mxu0 %v546
    %v2368 = vpop.f32.mrf.mxu0
    %v2369 = vadd.f32 %v2355, %v2368
    %v2370 = vpop.f32.mrf.mxu0
    %v2371 = vadd.f32 %v2357, %v2370
    %2372 = vdwg.mxu0
    %2373 = vmatpush.bf16.msra.mxu0 %v1756
    %2374 = vmatpush.bf16.msra.mxu0 %v1750
    %2375 = vmatpush.bf16.msra.mxu0 %v1744
    %2376 = vmatpush.bf16.msra.mxu0 %v1738
    %2377 = vmatpush.bf16.msra.mxu0 %v1732
    %2378 = vmatpush.bf16.msra.mxu0 %v1726
    %2379 = vmatpush.bf16.msra.mxu0 %v1720
    %2380 = vmatpush.bf16.msra.mxu0 %v1714
    %2381 = vmatmul.bf16.gmra.mxu0 %v541
    %v2382 = vpop.f32.mrf.mxu0
    %v2383 = vadd.f32 %v838, %v2382
    %v2384 = vpop.f32.mrf.mxu0
    %v2385 = vadd.f32 %v838, %v2384
    %2386 = vdwg.mxu0
    %2387 = vmatpush.bf16.msra.mxu0 %v1804
    %2388 = vmatpush.bf16.msra.mxu0 %v1798
    %2389 = vmatpush.bf16.msra.mxu0 %v1792
    %2390 = vmatpush.bf16.msra.mxu0 %v1786
    %2391 = vmatpush.bf16.msra.mxu0 %v1780
    %2392 = vmatpush.bf16.msra.mxu0 %v1774
    %2393 = vmatpush.bf16.msra.mxu0 %v1768
    %2394 = vmatpush.bf16.msra.mxu0 %v1762
    %2395 = vmatmul.bf16.gmra.mxu0 %v542
    %v2396 = vpop.f32.mrf.mxu0
    %v2397 = vadd.f32 %v2383, %v2396
    %v2398 = vpop.f32.mrf.mxu0
    %v2399 = vadd.f32 %v2385, %v2398
    %2400 = vdwg.mxu0
    %2401 = vmatpush.bf16.msra.mxu0 %v1852
    %2402 = vmatpush.bf16.msra.mxu0 %v1846
    %2403 = vmatpush.bf16.msra.mxu0 %v1840
    %2404 = vmatpush.bf16.msra.mxu0 %v1834
    %2405 = vmatpush.bf16.msra.mxu0 %v1828
    %2406 = vmatpush.bf16.msra.mxu0 %v1822
    %2407 = vmatpush.bf16.msra.mxu0 %v1816
    %2408 = vmatpush.bf16.msra.mxu0 %v1810
    %2409 = vmatmul.bf16.gmra.mxu0 %v543
    %v2410 = vpop.f32.mrf.mxu0
    %v2411 = vadd.f32 %v2397, %v2410
    %v2412 = vpop.f32.mrf.mxu0
    %v2413 = vadd.f32 %v2399, %v2412
    %2414 = vdwg.mxu0
    %2415 = vmatpush.bf16.msra.mxu0 %v1900
    %2416 = vmatpush.bf16.msra.mxu0 %v1894
    %2417 = vmatpush.bf16.msra.mxu0 %v1888
    %2418 = vmatpush.bf16.msra.mxu0 %v1882
    %2419 = vmatpush.bf16.msra.mxu0 %v1876
    %2420 = vmatpush.bf16.msra.mxu0 %v1870
    %2421 = vmatpush.bf16.msra.mxu0 %v1864
    %2422 = vmatpush.bf16.msra.mxu0 %v1858
    %2423 = vmatmul.bf16.gmra.mxu0 %v544
    %v2424 = vpop.f32.mrf.mxu0
    %v2425 = vadd.f32 %v2411, %v2424
    %v2426 = vpop.f32.mrf.mxu0
    %v2427 = vadd.f32 %v2413, %v2426
    %2428 = vdwg.mxu0
    %2429 = vmatpush.bf16.msra.mxu0 %v1948
    %2430 = vmatpush.bf16.msra.mxu0 %v1942
    %2431 = vmatpush.bf16.msra.mxu0 %v1936
    %2432 = vmatpush.bf16.msra.mxu0 %v1930
    %2433 = vmatpush.bf16.msra.mxu0 %v1924
    %2434 = vmatpush.bf16.msra.mxu0 %v1918
    %2435 = vmatpush.bf16.msra.mxu0 %v1912
    %2436 = vmatpush.bf16.msra.mxu0 %v1906
    %2437 = vmatmul.bf16.gmra.mxu0 %v545
    %v2438 = vpop.f32.mrf.mxu0
    %v2439 = vadd.f32 %v2425, %v2438
    %v2440 = vpop.f32.mrf.mxu0
    %v2441 = vadd.f32 %v2427, %v2440
    %2442 = vdwg.mxu0
    %2443 = vmatpush.bf16.msra.mxu0 %v1996
    %2444 = vmatpush.bf16.msra.mxu0 %v1990
    %2445 = vmatpush.bf16.msra.mxu0 %v1984
    %2446 = vmatpush.bf16.msra.mxu0 %v1978
    %2447 = vmatpush.bf16.msra.mxu0 %v1972
    %2448 = vmatpush.bf16.msra.mxu0 %v1966
    %2449 = vmatpush.bf16.msra.mxu0 %v1960
    %2450 = vmatpush.bf16.msra.mxu0 %v1954
    %2451 = vmatmul.bf16.gmra.mxu0 %v546
    %v2452 = vpop.f32.mrf.mxu0
    %v2453 = vadd.f32 %v2439, %v2452
    %v2454 = vpop.f32.mrf.mxu0
    %v2455 = vadd.f32 %v2441, %v2454
    %2456 = vdwg.mxu0
    %2457 = vmatpush.bf16.msra.mxu0 %v1757
    %2458 = vmatpush.bf16.msra.mxu0 %v1751
    %2459 = vmatpush.bf16.msra.mxu0 %v1745
    %2460 = vmatpush.bf16.msra.mxu0 %v1739
    %2461 = vmatpush.bf16.msra.mxu0 %v1733
    %2462 = vmatpush.bf16.msra.mxu0 %v1727
    %2463 = vmatpush.bf16.msra.mxu0 %v1721
    %2464 = vmatpush.bf16.msra.mxu0 %v1715
    %2465 = vmatmul.bf16.gmra.mxu0 %v541
    %v2466 = vpop.f32.mrf.mxu0
    %v2467 = vadd.f32 %v839, %v2466
    %v2468 = vpop.f32.mrf.mxu0
    %v2469 = vadd.f32 %v839, %v2468
    %2470 = vdwg.mxu0
    %2471 = vmatpush.bf16.msra.mxu0 %v1805
    %2472 = vmatpush.bf16.msra.mxu0 %v1799
    %2473 = vmatpush.bf16.msra.mxu0 %v1793
    %2474 = vmatpush.bf16.msra.mxu0 %v1787
    %2475 = vmatpush.bf16.msra.mxu0 %v1781
    %2476 = vmatpush.bf16.msra.mxu0 %v1775
    %2477 = vmatpush.bf16.msra.mxu0 %v1769
    %2478 = vmatpush.bf16.msra.mxu0 %v1763
    %2479 = vmatmul.bf16.gmra.mxu0 %v542
    %v2480 = vpop.f32.mrf.mxu0
    %v2481 = vadd.f32 %v2467, %v2480
    %v2482 = vpop.f32.mrf.mxu0
    %v2483 = vadd.f32 %v2469, %v2482
    %2484 = vdwg.mxu0
    %2485 = vmatpush.bf16.msra.mxu0 %v1853
    %2486 = vmatpush.bf16.msra.mxu0 %v1847
    %2487 = vmatpush.bf16.msra.mxu0 %v1841
    %2488 = vmatpush.bf16.msra.mxu0 %v1835
    %2489 = vmatpush.bf16.msra.mxu0 %v1829
    %2490 = vmatpush.bf16.msra.mxu0 %v1823
    %2491 = vmatpush.bf16.msra.mxu0 %v1817
    %2492 = vmatpush.bf16.msra.mxu0 %v1811
    %2493 = vmatmul.bf16.gmra.mxu0 %v543
    %v2494 = vpop.f32.mrf.mxu0
    %v2495 = vadd.f32 %v2481, %v2494
    %v2496 = vpop.f32.mrf.mxu0
    %v2497 = vadd.f32 %v2483, %v2496
    %2498 = vdwg.mxu0
    %2499 = vmatpush.bf16.msra.mxu0 %v1901
    %2500 = vmatpush.bf16.msra.mxu0 %v1895
    %2501 = vmatpush.bf16.msra.mxu0 %v1889
    %2502 = vmatpush.bf16.msra.mxu0 %v1883
    %2503 = vmatpush.bf16.msra.mxu0 %v1877
    %2504 = vmatpush.bf16.msra.mxu0 %v1871
    %2505 = vmatpush.bf16.msra.mxu0 %v1865
    %2506 = vmatpush.bf16.msra.mxu0 %v1859
    %2507 = vmatmul.bf16.gmra.mxu0 %v544
    %v2508 = vpop.f32.mrf.mxu0
    %v2509 = vadd.f32 %v2495, %v2508
    %v2510 = vpop.f32.mrf.mxu0
    %v2511 = vadd.f32 %v2497, %v2510
    %2512 = vdwg.mxu0
    %2513 = vmatpush.bf16.msra.mxu0 %v1949
    %2514 = vmatpush.bf16.msra.mxu0 %v1943
    %2515 = vmatpush.bf16.msra.mxu0 %v1937
    %2516 = vmatpush.bf16.msra.mxu0 %v1931
    %2517 = vmatpush.bf16.msra.mxu0 %v1925
    %2518 = vmatpush.bf16.msra.mxu0 %v1919
    %2519 = vmatpush.bf16.msra.mxu0 %v1913
    %2520 = vmatpush.bf16.msra.mxu0 %v1907
    %2521 = vmatmul.bf16.gmra.mxu0 %v545
    %v2522 = vpop.f32.mrf.mxu0
    %v2523 = vadd.f32 %v2509, %v2522
    %v2524 = vpop.f32.mrf.mxu0
    %v2525 = vadd.f32 %v2511, %v2524
    %2526 = vdwg.mxu0
    %2527 = vmatpush.bf16.msra.mxu0 %v1997
    %2528 = vmatpush.bf16.msra.mxu0 %v1991
    %2529 = vmatpush.bf16.msra.mxu0 %v1985
    %2530 = vmatpush.bf16.msra.mxu0 %v1979
    %2531 = vmatpush.bf16.msra.mxu0 %v1973
    %2532 = vmatpush.bf16.msra.mxu0 %v1967
    %2533 = vmatpush.bf16.msra.mxu0 %v1961
    %2534 = vmatpush.bf16.msra.mxu0 %v1955
    %2535 = vmatmul.bf16.gmra.mxu0 %v546
    %v2536 = vpop.f32.mrf.mxu0
    %v2537 = vadd.f32 %v2523, %v2536
    %v2538 = vpop.f32.mrf.mxu0
    %v2539 = vadd.f32 %v2525, %v2538
    %2540 = vdwg.mxu0
    %2541 = vmatpush.bf16.msra.mxu0 %v1758
    %2542 = vmatpush.bf16.msra.mxu0 %v1752
    %2543 = vmatpush.bf16.msra.mxu0 %v1746
    %2544 = vmatpush.bf16.msra.mxu0 %v1740
    %2545 = vmatpush.bf16.msra.mxu0 %v1734
    %2546 = vmatpush.bf16.msra.mxu0 %v1728
    %2547 = vmatpush.bf16.msra.mxu0 %v1722
    %2548 = vmatpush.bf16.msra.mxu0 %v1716
    %2549 = vmatmul.bf16.gmra.mxu0 %v541
    %v2550 = vpop.f32.mrf.mxu0
    %v2551 = vadd.f32 %v840, %v2550
    %v2552 = vpop.f32.mrf.mxu0
    %v2553 = vadd.f32 %v840, %v2552
    %2554 = vdwg.mxu0
    %2555 = vmatpush.bf16.msra.mxu0 %v1806
    %2556 = vmatpush.bf16.msra.mxu0 %v1800
    %2557 = vmatpush.bf16.msra.mxu0 %v1794
    %2558 = vmatpush.bf16.msra.mxu0 %v1788
    %2559 = vmatpush.bf16.msra.mxu0 %v1782
    %2560 = vmatpush.bf16.msra.mxu0 %v1776
    %2561 = vmatpush.bf16.msra.mxu0 %v1770
    %2562 = vmatpush.bf16.msra.mxu0 %v1764
    %2563 = vmatmul.bf16.gmra.mxu0 %v542
    %v2564 = vpop.f32.mrf.mxu0
    %v2565 = vadd.f32 %v2551, %v2564
    %v2566 = vpop.f32.mrf.mxu0
    %v2567 = vadd.f32 %v2553, %v2566
    %2568 = vdwg.mxu0
    %2569 = vmatpush.bf16.msra.mxu0 %v1854
    %2570 = vmatpush.bf16.msra.mxu0 %v1848
    %2571 = vmatpush.bf16.msra.mxu0 %v1842
    %2572 = vmatpush.bf16.msra.mxu0 %v1836
    %2573 = vmatpush.bf16.msra.mxu0 %v1830
    %2574 = vmatpush.bf16.msra.mxu0 %v1824
    %2575 = vmatpush.bf16.msra.mxu0 %v1818
    %2576 = vmatpush.bf16.msra.mxu0 %v1812
    %2577 = vmatmul.bf16.gmra.mxu0 %v543
    %v2578 = vpop.f32.mrf.mxu0
    %v2579 = vadd.f32 %v2565, %v2578
    %v2580 = vpop.f32.mrf.mxu0
    %v2581 = vadd.f32 %v2567, %v2580
    %2582 = vdwg.mxu0
    %2583 = vmatpush.bf16.msra.mxu0 %v1902
    %2584 = vmatpush.bf16.msra.mxu0 %v1896
    %2585 = vmatpush.bf16.msra.mxu0 %v1890
    %2586 = vmatpush.bf16.msra.mxu0 %v1884
    %2587 = vmatpush.bf16.msra.mxu0 %v1878
    %2588 = vmatpush.bf16.msra.mxu0 %v1872
    %2589 = vmatpush.bf16.msra.mxu0 %v1866
    %2590 = vmatpush.bf16.msra.mxu0 %v1860
    %2591 = vmatmul.bf16.gmra.mxu0 %v544
    %v2592 = vpop.f32.mrf.mxu0
    %v2593 = vadd.f32 %v2579, %v2592
    %v2594 = vpop.f32.mrf.mxu0
    %v2595 = vadd.f32 %v2581, %v2594
    %2596 = vdwg.mxu0
    %2597 = vmatpush.bf16.msra.mxu0 %v1950
    %2598 = vmatpush.bf16.msra.mxu0 %v1944
    %2599 = vmatpush.bf16.msra.mxu0 %v1938
    %2600 = vmatpush.bf16.msra.mxu0 %v1932
    %2601 = vmatpush.bf16.msra.mxu0 %v1926
    %2602 = vmatpush.bf16.msra.mxu0 %v1920
    %2603 = vmatpush.bf16.msra.mxu0 %v1914
    %2604 = vmatpush.bf16.msra.mxu0 %v1908
    %2605 = vmatmul.bf16.gmra.mxu0 %v545
    %v2606 = vpop.f32.mrf.mxu0
    %v2607 = vadd.f32 %v2593, %v2606
    %v2608 = vpop.f32.mrf.mxu0
    %v2609 = vadd.f32 %v2595, %v2608
    %2610 = vdwg.mxu0
    %2611 = vmatpush.bf16.msra.mxu0 %v1998
    %2612 = vmatpush.bf16.msra.mxu0 %v1992
    %2613 = vmatpush.bf16.msra.mxu0 %v1986
    %2614 = vmatpush.bf16.msra.mxu0 %v1980
    %2615 = vmatpush.bf16.msra.mxu0 %v1974
    %2616 = vmatpush.bf16.msra.mxu0 %v1968
    %2617 = vmatpush.bf16.msra.mxu0 %v1962
    %2618 = vmatpush.bf16.msra.mxu0 %v1956
    %2619 = vmatmul.bf16.gmra.mxu0 %v546
    %v2620 = vpop.f32.mrf.mxu0
    %v2621 = vadd.f32 %v2607, %v2620
    %v2622 = vpop.f32.mrf.mxu0
    %v2623 = vadd.f32 %v2609, %v2622
    %2624 = vdwg.mxu0
    %2625 = vmatpush.bf16.msra.mxu0 %v1759
    %2626 = vmatpush.bf16.msra.mxu0 %v1753
    %2627 = vmatpush.bf16.msra.mxu0 %v1747
    %2628 = vmatpush.bf16.msra.mxu0 %v1741
    %2629 = vmatpush.bf16.msra.mxu0 %v1735
    %2630 = vmatpush.bf16.msra.mxu0 %v1729
    %2631 = vmatpush.bf16.msra.mxu0 %v1723
    %2632 = vmatpush.bf16.msra.mxu0 %v1717
    %2633 = vmatmul.bf16.gmra.mxu0 %v541
    %v2634 = vpop.f32.mrf.mxu0
    %v2635 = vadd.f32 %v841, %v2634
    %v2636 = vpop.f32.mrf.mxu0
    %v2637 = vadd.f32 %v841, %v2636
    %2638 = vdwg.mxu0
    %2639 = vmatpush.bf16.msra.mxu0 %v1807
    %2640 = vmatpush.bf16.msra.mxu0 %v1801
    %2641 = vmatpush.bf16.msra.mxu0 %v1795
    %2642 = vmatpush.bf16.msra.mxu0 %v1789
    %2643 = vmatpush.bf16.msra.mxu0 %v1783
    %2644 = vmatpush.bf16.msra.mxu0 %v1777
    %2645 = vmatpush.bf16.msra.mxu0 %v1771
    %2646 = vmatpush.bf16.msra.mxu0 %v1765
    %2647 = vmatmul.bf16.gmra.mxu0 %v542
    %v2648 = vpop.f32.mrf.mxu0
    %v2649 = vadd.f32 %v2635, %v2648
    %v2650 = vpop.f32.mrf.mxu0
    %v2651 = vadd.f32 %v2637, %v2650
    %2652 = vdwg.mxu0
    %2653 = vmatpush.bf16.msra.mxu0 %v1855
    %2654 = vmatpush.bf16.msra.mxu0 %v1849
    %2655 = vmatpush.bf16.msra.mxu0 %v1843
    %2656 = vmatpush.bf16.msra.mxu0 %v1837
    %2657 = vmatpush.bf16.msra.mxu0 %v1831
    %2658 = vmatpush.bf16.msra.mxu0 %v1825
    %2659 = vmatpush.bf16.msra.mxu0 %v1819
    %2660 = vmatpush.bf16.msra.mxu0 %v1813
    %2661 = vmatmul.bf16.gmra.mxu0 %v543
    %v2662 = vpop.f32.mrf.mxu0
    %v2663 = vadd.f32 %v2649, %v2662
    %v2664 = vpop.f32.mrf.mxu0
    %v2665 = vadd.f32 %v2651, %v2664
    %2666 = vdwg.mxu0
    %2667 = vmatpush.bf16.msra.mxu0 %v1903
    %2668 = vmatpush.bf16.msra.mxu0 %v1897
    %2669 = vmatpush.bf16.msra.mxu0 %v1891
    %2670 = vmatpush.bf16.msra.mxu0 %v1885
    %2671 = vmatpush.bf16.msra.mxu0 %v1879
    %2672 = vmatpush.bf16.msra.mxu0 %v1873
    %2673 = vmatpush.bf16.msra.mxu0 %v1867
    %2674 = vmatpush.bf16.msra.mxu0 %v1861
    %2675 = vmatmul.bf16.gmra.mxu0 %v544
    %v2676 = vpop.f32.mrf.mxu0
    %v2677 = vadd.f32 %v2663, %v2676
    %v2678 = vpop.f32.mrf.mxu0
    %v2679 = vadd.f32 %v2665, %v2678
    %2680 = vdwg.mxu0
    %2681 = vmatpush.bf16.msra.mxu0 %v1951
    %2682 = vmatpush.bf16.msra.mxu0 %v1945
    %2683 = vmatpush.bf16.msra.mxu0 %v1939
    %2684 = vmatpush.bf16.msra.mxu0 %v1933
    %2685 = vmatpush.bf16.msra.mxu0 %v1927
    %2686 = vmatpush.bf16.msra.mxu0 %v1921
    %2687 = vmatpush.bf16.msra.mxu0 %v1915
    %2688 = vmatpush.bf16.msra.mxu0 %v1909
    %2689 = vmatmul.bf16.gmra.mxu0 %v545
    %v2690 = vpop.f32.mrf.mxu0
    %v2691 = vadd.f32 %v2677, %v2690
    %v2692 = vpop.f32.mrf.mxu0
    %v2693 = vadd.f32 %v2679, %v2692
    %2694 = vdwg.mxu0
    %2695 = vmatpush.bf16.msra.mxu0 %v1999
    %2696 = vmatpush.bf16.msra.mxu0 %v1993
    %2697 = vmatpush.bf16.msra.mxu0 %v1987
    %2698 = vmatpush.bf16.msra.mxu0 %v1981
    %2699 = vmatpush.bf16.msra.mxu0 %v1975
    %2700 = vmatpush.bf16.msra.mxu0 %v1969
    %2701 = vmatpush.bf16.msra.mxu0 %v1963
    %2702 = vmatpush.bf16.msra.mxu0 %v1957
    %2703 = vmatmul.bf16.gmra.mxu0 %v546
    %v2704 = vpop.f32.mrf.mxu0
    %v2705 = vadd.f32 %v2691, %v2704
    %v2706 = vpop.f32.mrf.mxu0
    %v2707 = vadd.f32 %v2693, %v2706
    %2708 = vdwg.mxu0
    %2709 = vmatpush.bf16.msra.mxu0 %v1760
    %2710 = vmatpush.bf16.msra.mxu0 %v1754
    %2711 = vmatpush.bf16.msra.mxu0 %v1748
    %2712 = vmatpush.bf16.msra.mxu0 %v1742
    %2713 = vmatpush.bf16.msra.mxu0 %v1736
    %2714 = vmatpush.bf16.msra.mxu0 %v1730
    %2715 = vmatpush.bf16.msra.mxu0 %v1724
    %2716 = vmatpush.bf16.msra.mxu0 %v1718
    %2717 = vmatmul.bf16.gmra.mxu0 %v541
    %v2718 = vpop.f32.mrf.mxu0
    %v2719 = vadd.f32 %v842, %v2718
    %v2720 = vpop.f32.mrf.mxu0
    %v2721 = vadd.f32 %v842, %v2720
    %2722 = vdwg.mxu0
    %2723 = vmatpush.bf16.msra.mxu0 %v1808
    %2724 = vmatpush.bf16.msra.mxu0 %v1802
    %2725 = vmatpush.bf16.msra.mxu0 %v1796
    %2726 = vmatpush.bf16.msra.mxu0 %v1790
    %2727 = vmatpush.bf16.msra.mxu0 %v1784
    %2728 = vmatpush.bf16.msra.mxu0 %v1778
    %2729 = vmatpush.bf16.msra.mxu0 %v1772
    %2730 = vmatpush.bf16.msra.mxu0 %v1766
    %2731 = vmatmul.bf16.gmra.mxu0 %v542
    %v2732 = vpop.f32.mrf.mxu0
    %v2733 = vadd.f32 %v2719, %v2732
    %v2734 = vpop.f32.mrf.mxu0
    %v2735 = vadd.f32 %v2721, %v2734
    %2736 = vdwg.mxu0
    %2737 = vmatpush.bf16.msra.mxu0 %v1856
    %2738 = vmatpush.bf16.msra.mxu0 %v1850
    %2739 = vmatpush.bf16.msra.mxu0 %v1844
    %2740 = vmatpush.bf16.msra.mxu0 %v1838
    %2741 = vmatpush.bf16.msra.mxu0 %v1832
    %2742 = vmatpush.bf16.msra.mxu0 %v1826
    %2743 = vmatpush.bf16.msra.mxu0 %v1820
    %2744 = vmatpush.bf16.msra.mxu0 %v1814
    %2745 = vmatmul.bf16.gmra.mxu0 %v543
    %v2746 = vpop.f32.mrf.mxu0
    %v2747 = vadd.f32 %v2733, %v2746
    %v2748 = vpop.f32.mrf.mxu0
    %v2749 = vadd.f32 %v2735, %v2748
    %2750 = vdwg.mxu0
    %2751 = vmatpush.bf16.msra.mxu0 %v1904
    %2752 = vmatpush.bf16.msra.mxu0 %v1898
    %2753 = vmatpush.bf16.msra.mxu0 %v1892
    %2754 = vmatpush.bf16.msra.mxu0 %v1886
    %2755 = vmatpush.bf16.msra.mxu0 %v1880
    %2756 = vmatpush.bf16.msra.mxu0 %v1874
    %2757 = vmatpush.bf16.msra.mxu0 %v1868
    %2758 = vmatpush.bf16.msra.mxu0 %v1862
    %2759 = vmatmul.bf16.gmra.mxu0 %v544
    %v2760 = vpop.f32.mrf.mxu0
    %v2761 = vadd.f32 %v2747, %v2760
    %v2762 = vpop.f32.mrf.mxu0
    %v2763 = vadd.f32 %v2749, %v2762
    %2764 = vdwg.mxu0
    %2765 = vmatpush.bf16.msra.mxu0 %v1952
    %2766 = vmatpush.bf16.msra.mxu0 %v1946
    %2767 = vmatpush.bf16.msra.mxu0 %v1940
    %2768 = vmatpush.bf16.msra.mxu0 %v1934
    %2769 = vmatpush.bf16.msra.mxu0 %v1928
    %2770 = vmatpush.bf16.msra.mxu0 %v1922
    %2771 = vmatpush.bf16.msra.mxu0 %v1916
    %2772 = vmatpush.bf16.msra.mxu0 %v1910
    %2773 = vmatmul.bf16.gmra.mxu0 %v545
    %v2774 = vpop.f32.mrf.mxu0
    %v2775 = vadd.f32 %v2761, %v2774
    %v2776 = vpop.f32.mrf.mxu0
    %v2777 = vadd.f32 %v2763, %v2776
    %2778 = vdwg.mxu0
    %2779 = vmatpush.bf16.msra.mxu0 %v2000
    %2780 = vmatpush.bf16.msra.mxu0 %v1994
    %2781 = vmatpush.bf16.msra.mxu0 %v1988
    %2782 = vmatpush.bf16.msra.mxu0 %v1982
    %2783 = vmatpush.bf16.msra.mxu0 %v1976
    %2784 = vmatpush.bf16.msra.mxu0 %v1970
    %2785 = vmatpush.bf16.msra.mxu0 %v1964
    %2786 = vmatpush.bf16.msra.mxu0 %v1958
    %2787 = vmatmul.bf16.gmra.mxu0 %v546
    %v2788 = vpop.f32.mrf.mxu0
    %v2789 = vadd.f32 %v2775, %v2788
    %v2790 = vpop.f32.mrf.mxu0
    %v2791 = vadd.f32 %v2777, %v2790
    %2792 = vdwg.mxu0
    %v2793 = vmax.f32 %v2369, 0.0
    %v2794 = vmax.f32 %v2453, 0.0
    %v2795 = vmax.f32 %v2537, 0.0
    %v2796 = vmax.f32 %v2621, 0.0
    %v2797 = vmax.f32 %v2705, 0.0
    %v2798 = vmax.f32 %v2789, 0.0
    %v2799 = vmax.f32 %v2371, 0.0
    %v2800 = vmax.f32 %v2455, 0.0
    %v2801 = vmax.f32 %v2539, 0.0
    %v2802 = vmax.f32 %v2623, 0.0
    %v2803 = vmax.f32 %v2707, 0.0
    %v2804 = vmax.f32 %v2791, 0.0
    %v2805 = vpack.c.bf16 %v2799, %v2793
    %v2806 = vpack.c.bf16 %v2800, %v2794
    %v2807 = vpack.c.bf16 %v2801, %v2795
    %v2808 = vpack.c.bf16 %v2802, %v2796
    %v2809 = vpack.c.bf16 %v2803, %v2797
    %v2810 = vpack.c.bf16 %v2804, %v2798
    %v2811 = vld [vmem:[#allocation8] sm:$0xff]
    %v2812 = vld [vmem:[#allocation8 + $0x8] sm:$0xff]
    %v2813 = vld [vmem:[#allocation8 + $0x10] sm:$0xff]
    %v2814 = vld [vmem:[#allocation8 + $0x18] sm:$0xff]
    %v2815 = vld [vmem:[#allocation8 + $0x20] sm:$0xff]
    %v2816 = vld [vmem:[#allocation8 + $0x28] sm:$0xff]
    %v2817 = vld [vmem:[#allocation8 + $0x30] sm:$0xff]
    %v2818 = vld [vmem:[#allocation8 + $0x38] sm:$0xff]
    %v2819 = vld [vmem:[#allocation8 + $0x40] sm:$0xff]
    %v2820 = vld [vmem:[#allocation8 + $0x48] sm:$0xff]
    %v2821 = vld [vmem:[#allocation8 + $0x50] sm:$0xff]
    %v2822 = vld [vmem:[#allocation8 + $0x58] sm:$0xff]
    %v2823 = vld [vmem:[#allocation8 + $0x60] sm:$0xff]
    %v2824 = vld [vmem:[#allocation8 + $0x68] sm:$0xff]
    %v2825 = vld [vmem:[#allocation8 + $0x70] sm:$0xff]
    %v2826 = vld [vmem:[#allocation8 + $0x78] sm:$0xff]
    %v2827 = vld [vmem:[#allocation8 + $0x80] sm:$0xff]
    %v2828 = vld [vmem:[#allocation8 + $0x88] sm:$0xff]
    %v2829 = vld [vmem:[#allocation8 + $0x90] sm:$0xff]
    %v2830 = vld [vmem:[#allocation8 + $0x98] sm:$0xff]
    %v2831 = vld [vmem:[#allocation8 + $0xa0] sm:$0xff]
    %v2832 = vld [vmem:[#allocation8 + $0xa8] sm:$0xff]
    %v2833 = vld [vmem:[#allocation8 + $0xb0] sm:$0xff]
    %v2834 = vld [vmem:[#allocation8 + $0xb8] sm:$0xff]
    %v2835 = vld [vmem:[#allocation8 + $0xc0] sm:$0xff]
    %v2836 = vld [vmem:[#allocation8 + $0xc8] sm:$0xff]
    %v2837 = vld [vmem:[#allocation8 + $0xd0] sm:$0xff]
    %v2838 = vld [vmem:[#allocation8 + $0xd8] sm:$0xff]
    %v2839 = vld [vmem:[#allocation8 + $0xe0] sm:$0xff]
    %v2840 = vld [vmem:[#allocation8 + $0xe8] sm:$0xff]
    %v2841 = vld [vmem:[#allocation8 + $0xf0] sm:$0xff]
    %v2842 = vld [vmem:[#allocation8 + $0xf8] sm:$0xff]
    %v2843 = vld [vmem:[#allocation8 + $0x100] sm:$0xff]
    %v2844 = vld [vmem:[#allocation8 + $0x108] sm:$0xff]
    %v2845 = vld [vmem:[#allocation8 + $0x110] sm:$0xff]
    %v2846 = vld [vmem:[#allocation8 + $0x118] sm:$0xff]
    %v2847 = vld [vmem:[#allocation8 + $0x120] sm:$0xff]
    %v2848 = vld [vmem:[#allocation8 + $0x128] sm:$0xff]
    %v2849 = vld [vmem:[#allocation8 + $0x130] sm:$0xff]
    %v2850 = vld [vmem:[#allocation8 + $0x138] sm:$0xff]
    %v2851 = vld [vmem:[#allocation8 + $0x140] sm:$0xff]
    %v2852 = vld [vmem:[#allocation8 + $0x148] sm:$0xff]
    %v2853 = vld [vmem:[#allocation8 + $0x150] sm:$0xff]
    %v2854 = vld [vmem:[#allocation8 + $0x158] sm:$0xff]
    %v2855 = vld [vmem:[#allocation8 + $0x160] sm:$0xff]
    %v2856 = vld [vmem:[#allocation8 + $0x168] sm:$0xff]
    %v2857 = vld [vmem:[#allocation8 + $0x170] sm:$0xff]
    %v2858 = vld [vmem:[#allocation8 + $0x178] sm:$0xff]
    %v2859 = vld [vmem:[#allocation8 + $0x180] sm:$0xff]
    %v2860 = vld [vmem:[#allocation8 + $0x188] sm:$0xff]
    %v2861 = vld [vmem:[#allocation8 + $0x190] sm:$0xff]
    %v2862 = vld [vmem:[#allocation8 + $0x198] sm:$0xff]
    %v2863 = vld [vmem:[#allocation8 + $0x1a0] sm:$0xff]
    %v2864 = vld [vmem:[#allocation8 + $0x1a8] sm:$0xff]
    %v2865 = vld [vmem:[#allocation8 + $0x1b0] sm:$0xff]
    %v2866 = vld [vmem:[#allocation8 + $0x1b8] sm:$0xff]
    %v2867 = vld [vmem:[#allocation8 + $0x1c0] sm:$0xff]
    %v2868 = vld [vmem:[#allocation8 + $0x1c8] sm:$0xff]
    %v2869 = vld [vmem:[#allocation8 + $0x1d0] sm:$0xff]
    %v2870 = vld [vmem:[#allocation8 + $0x1d8] sm:$0xff]
    %v2871 = vld [vmem:[#allocation8 + $0x1e0] sm:$0xff]
    %v2872 = vld [vmem:[#allocation8 + $0x1e8] sm:$0xff]
    %v2873 = vld [vmem:[#allocation8 + $0x1f0] sm:$0xff]
    %v2874 = vld [vmem:[#allocation8 + $0x1f8] sm:$0xff]
    %v2875 = vld [vmem:[#allocation8 + $0x200] sm:$0xff]
    %v2876 = vld [vmem:[#allocation8 + $0x208] sm:$0xff]
    %v2877 = vld [vmem:[#allocation8 + $0x210] sm:$0xff]
    %v2878 = vld [vmem:[#allocation8 + $0x218] sm:$0xff]
    %v2879 = vld [vmem:[#allocation8 + $0x220] sm:$0xff]
    %v2880 = vld [vmem:[#allocation8 + $0x228] sm:$0xff]
    %v2881 = vld [vmem:[#allocation8 + $0x230] sm:$0xff]
    %v2882 = vld [vmem:[#allocation8 + $0x238] sm:$0xff]
    %v2883 = vld [vmem:[#allocation8 + $0x240] sm:$0xff]
    %v2884 = vld [vmem:[#allocation8 + $0x248] sm:$0xff]
    %v2885 = vld [vmem:[#allocation8 + $0x250] sm:$0xff]
    %v2886 = vld [vmem:[#allocation8 + $0x258] sm:$0xff]
    %v2887 = vld [vmem:[#allocation8 + $0x260] sm:$0xff]
    %v2888 = vld [vmem:[#allocation8 + $0x268] sm:$0xff]
    %v2889 = vld [vmem:[#allocation8 + $0x270] sm:$0xff]
    %v2890 = vld [vmem:[#allocation8 + $0x278] sm:$0xff]
    %v2891 = vld [vmem:[#allocation8 + $0x280] sm:$0xff]
    %v2892 = vld [vmem:[#allocation8 + $0x288] sm:$0xff]
    %v2893 = vld [vmem:[#allocation8 + $0x290] sm:$0xff]
    %v2894 = vld [vmem:[#allocation8 + $0x298] sm:$0xff]
    %v2895 = vld [vmem:[#allocation8 + $0x2a0] sm:$0xff]
    %v2896 = vld [vmem:[#allocation8 + $0x2a8] sm:$0xff]
    %v2897 = vld [vmem:[#allocation8 + $0x2b0] sm:$0xff]
    %v2898 = vld [vmem:[#allocation8 + $0x2b8] sm:$0xff]
    %v2899 = vld [vmem:[#allocation8 + $0x2c0] sm:$0xff]
    %v2900 = vld [vmem:[#allocation8 + $0x2c8] sm:$0xff]
    %v2901 = vld [vmem:[#allocation8 + $0x2d0] sm:$0xff]
    %v2902 = vld [vmem:[#allocation8 + $0x2d8] sm:$0xff]
    %v2903 = vld [vmem:[#allocation8 + $0x2e0] sm:$0xff]
    %v2904 = vld [vmem:[#allocation8 + $0x2e8] sm:$0xff]
    %v2905 = vld [vmem:[#allocation8 + $0x2f0] sm:$0xff]
    %v2906 = vld [vmem:[#allocation8 + $0x2f8] sm:$0xff]
    %v2907 = vld [vmem:[#allocation8 + $0x300] sm:$0xff]
    %v2908 = vld [vmem:[#allocation8 + $0x308] sm:$0xff]
    %v2909 = vld [vmem:[#allocation8 + $0x310] sm:$0xff]
    %v2910 = vld [vmem:[#allocation8 + $0x318] sm:$0xff]
    %v2911 = vld [vmem:[#allocation8 + $0x320] sm:$0xff]
    %v2912 = vld [vmem:[#allocation8 + $0x328] sm:$0xff]
    %v2913 = vld [vmem:[#allocation8 + $0x330] sm:$0xff]
    %v2914 = vld [vmem:[#allocation8 + $0x338] sm:$0xff]
    %v2915 = vld [vmem:[#allocation8 + $0x340] sm:$0xff]
    %v2916 = vld [vmem:[#allocation8 + $0x348] sm:$0xff]
    %v2917 = vld [vmem:[#allocation8 + $0x350] sm:$0xff]
    %v2918 = vld [vmem:[#allocation8 + $0x358] sm:$0xff]
    %v2919 = vld [vmem:[#allocation8 + $0x360] sm:$0xff]
    %v2920 = vld [vmem:[#allocation8 + $0x368] sm:$0xff]
    %v2921 = vld [vmem:[#allocation8 + $0x370] sm:$0xff]
    %v2922 = vld [vmem:[#allocation8 + $0x378] sm:$0xff]
    %v2923 = vld [vmem:[#allocation8 + $0x380] sm:$0xff]
    %v2924 = vld [vmem:[#allocation8 + $0x388] sm:$0xff]
    %v2925 = vld [vmem:[#allocation8 + $0x390] sm:$0xff]
    %v2926 = vld [vmem:[#allocation8 + $0x398] sm:$0xff]
    %v2927 = vld [vmem:[#allocation8 + $0x3a0] sm:$0xff]
    %v2928 = vld [vmem:[#allocation8 + $0x3a8] sm:$0xff]
    %v2929 = vld [vmem:[#allocation8 + $0x3b0] sm:$0xff]
    %v2930 = vld [vmem:[#allocation8 + $0x3b8] sm:$0xff]
    %v2931 = vld [vmem:[#allocation8 + $0x3c0] sm:$0xff]
    %v2932 = vld [vmem:[#allocation8 + $0x3c8] sm:$0xff]
    %v2933 = vld [vmem:[#allocation8 + $0x3d0] sm:$0xff]
    %v2934 = vld [vmem:[#allocation8 + $0x3d8] sm:$0xff]
    %v2935 = vld [vmem:[#allocation8 + $0x3e0] sm:$0xff]
    %v2936 = vld [vmem:[#allocation8 + $0x3e8] sm:$0xff]
    %v2937 = vld [vmem:[#allocation8 + $0x3f0] sm:$0xff]
    %v2938 = vld [vmem:[#allocation8 + $0x3f8] sm:$0xff]
    %v2939 = vld [vmem:[#allocation8 + $0x400] sm:$0xff]
    %v2940 = vld [vmem:[#allocation8 + $0x408] sm:$0xff]
    %v2941 = vld [vmem:[#allocation8 + $0x410] sm:$0xff]
    %v2942 = vld [vmem:[#allocation8 + $0x418] sm:$0xff]
    %v2943 = vld [vmem:[#allocation8 + $0x420] sm:$0xff]
    %v2944 = vld [vmem:[#allocation8 + $0x428] sm:$0xff]
    %v2945 = vld [vmem:[#allocation8 + $0x430] sm:$0xff]
    %v2946 = vld [vmem:[#allocation8 + $0x438] sm:$0xff]
    %v2947 = vld [vmem:[#allocation8 + $0x440] sm:$0xff]
    %v2948 = vld [vmem:[#allocation8 + $0x448] sm:$0xff]
    %v2949 = vld [vmem:[#allocation8 + $0x450] sm:$0xff]
    %v2950 = vld [vmem:[#allocation8 + $0x458] sm:$0xff]
    %v2951 = vld [vmem:[#allocation8 + $0x460] sm:$0xff]
    %v2952 = vld [vmem:[#allocation8 + $0x468] sm:$0xff]
    %v2953 = vld [vmem:[#allocation8 + $0x470] sm:$0xff]
    %v2954 = vld [vmem:[#allocation8 + $0x478] sm:$0xff]
    %v2955 = vld [vmem:[#allocation8 + $0x480] sm:$0xff]
    %v2956 = vld [vmem:[#allocation8 + $0x488] sm:$0xff]
    %v2957 = vld [vmem:[#allocation8 + $0x490] sm:$0xff]
    %v2958 = vld [vmem:[#allocation8 + $0x498] sm:$0xff]
    %v2959 = vld [vmem:[#allocation8 + $0x4a0] sm:$0xff]
    %v2960 = vld [vmem:[#allocation8 + $0x4a8] sm:$0xff]
    %v2961 = vld [vmem:[#allocation8 + $0x4b0] sm:$0xff]
    %v2962 = vld [vmem:[#allocation8 + $0x4b8] sm:$0xff]
    %v2963 = vld [vmem:[#allocation8 + $0x4c0] sm:$0xff]
    %v2964 = vld [vmem:[#allocation8 + $0x4c8] sm:$0xff]
    %v2965 = vld [vmem:[#allocation8 + $0x4d0] sm:$0xff]
    %v2966 = vld [vmem:[#allocation8 + $0x4d8] sm:$0xff]
    %v2967 = vld [vmem:[#allocation8 + $0x4e0] sm:$0xff]
    %v2968 = vld [vmem:[#allocation8 + $0x4e8] sm:$0xff]
    %v2969 = vld [vmem:[#allocation8 + $0x4f0] sm:$0xff]
    %v2970 = vld [vmem:[#allocation8 + $0x4f8] sm:$0xff]
    %v2971 = vld [vmem:[#allocation8 + $0x500] sm:$0xff]
    %v2972 = vld [vmem:[#allocation8 + $0x508] sm:$0xff]
    %v2973 = vld [vmem:[#allocation8 + $0x510] sm:$0xff]
    %v2974 = vld [vmem:[#allocation8 + $0x518] sm:$0xff]
    %v2975 = vld [vmem:[#allocation8 + $0x520] sm:$0xff]
    %v2976 = vld [vmem:[#allocation8 + $0x528] sm:$0xff]
    %v2977 = vld [vmem:[#allocation8 + $0x530] sm:$0xff]
    %v2978 = vld [vmem:[#allocation8 + $0x538] sm:$0xff]
    %v2979 = vld [vmem:[#allocation8 + $0x540] sm:$0xff]
    %v2980 = vld [vmem:[#allocation8 + $0x548] sm:$0xff]
    %v2981 = vld [vmem:[#allocation8 + $0x550] sm:$0xff]
    %v2982 = vld [vmem:[#allocation8 + $0x558] sm:$0xff]
    %v2983 = vld [vmem:[#allocation8 + $0x560] sm:$0xff]
    %v2984 = vld [vmem:[#allocation8 + $0x568] sm:$0xff]
    %v2985 = vld [vmem:[#allocation8 + $0x570] sm:$0xff]
    %v2986 = vld [vmem:[#allocation8 + $0x578] sm:$0xff]
    %v2987 = vld [vmem:[#allocation8 + $0x580] sm:$0xff]
    %v2988 = vld [vmem:[#allocation8 + $0x588] sm:$0xff]
    %v2989 = vld [vmem:[#allocation8 + $0x590] sm:$0xff]
    %v2990 = vld [vmem:[#allocation8 + $0x598] sm:$0xff]
    %v2991 = vld [vmem:[#allocation8 + $0x5a0] sm:$0xff]
    %v2992 = vld [vmem:[#allocation8 + $0x5a8] sm:$0xff]
    %v2993 = vld [vmem:[#allocation8 + $0x5b0] sm:$0xff]
    %v2994 = vld [vmem:[#allocation8 + $0x5b8] sm:$0xff]
    %v2995 = vld [vmem:[#allocation8 + $0x5c0] sm:$0xff]
    %v2996 = vld [vmem:[#allocation8 + $0x5c8] sm:$0xff]
    %v2997 = vld [vmem:[#allocation8 + $0x5d0] sm:$0xff]
    %v2998 = vld [vmem:[#allocation8 + $0x5d8] sm:$0xff]
    %v2999 = vld [vmem:[#allocation8 + $0x5e0] sm:$0xff]
    %v3000 = vld [vmem:[#allocation8 + $0x5e8] sm:$0xff]
    %v3001 = vld [vmem:[#allocation8 + $0x5f0] sm:$0xff]
    %v3002 = vld [vmem:[#allocation8 + $0x5f8] sm:$0xff]
    %v3003 = vld [vmem:[#allocation10] sm:$0xf]
    %v3005 = vperm.slane %v3003, 0
    %v3006 = vperm.slane %v3003, 1
    %v3007 = vperm.slane %v3003, 2
    %v3008 = vperm.slane %v3003, 3
    %v3205 = vunpack.c.l.b16 %v2811
    %v3206 = vunpack.c.h.b16 %v2811
    %v3207 = vunpack.c.l.b16 %v2812
    %v3208 = vunpack.c.h.b16 %v2812
    %v3209 = vunpack.c.l.b16 %v2813
    %v3210 = vunpack.c.h.b16 %v2813
    %v3211 = vunpack.c.l.b16 %v2814
    %v3212 = vunpack.c.h.b16 %v2814
    %v3213 = vunpack.c.l.b16 %v2815
    %v3214 = vunpack.c.h.b16 %v2815
    %v3215 = vunpack.c.l.b16 %v2816
    %v3216 = vunpack.c.h.b16 %v2816
    %v3217 = vunpack.c.l.b16 %v2817
    %v3218 = vunpack.c.h.b16 %v2817
    %v3219 = vunpack.c.l.b16 %v2818
    %v3220 = vunpack.c.h.b16 %v2818
    %v3221 = vunpack.c.l.b16 %v2819
    %v3222 = vunpack.c.h.b16 %v2819
    %v3223 = vunpack.c.l.b16 %v2820
    %v3224 = vunpack.c.h.b16 %v2820
    %v3225 = vunpack.c.l.b16 %v2821
    %v3226 = vunpack.c.h.b16 %v2821
    %v3227 = vunpack.c.l.b16 %v2822
    %v3228 = vunpack.c.h.b16 %v2822
    %v3229 = vunpack.c.l.b16 %v2823
    %v3230 = vunpack.c.h.b16 %v2823
    %v3231 = vunpack.c.l.b16 %v2824
    %v3232 = vunpack.c.h.b16 %v2824
    %v3233 = vunpack.c.l.b16 %v2825
    %v3234 = vunpack.c.h.b16 %v2825
    %v3235 = vunpack.c.l.b16 %v2826
    %v3236 = vunpack.c.h.b16 %v2826
    %v3237 = vunpack.c.l.b16 %v2827
    %v3238 = vunpack.c.h.b16 %v2827
    %v3239 = vunpack.c.l.b16 %v2828
    %v3240 = vunpack.c.h.b16 %v2828
    %v3241 = vunpack.c.l.b16 %v2829
    %v3242 = vunpack.c.h.b16 %v2829
    %v3243 = vunpack.c.l.b16 %v2830
    %v3244 = vunpack.c.h.b16 %v2830
    %v3245 = vunpack.c.l.b16 %v2831
    %v3246 = vunpack.c.h.b16 %v2831
    %v3247 = vunpack.c.l.b16 %v2832
    %v3248 = vunpack.c.h.b16 %v2832
    %v3249 = vunpack.c.l.b16 %v2833
    %v3250 = vunpack.c.h.b16 %v2833
    %v3251 = vunpack.c.l.b16 %v2834
    %v3252 = vunpack.c.h.b16 %v2834
    %v3253 = vunpack.c.l.b16 %v2835
    %v3254 = vunpack.c.h.b16 %v2835
    %v3255 = vunpack.c.l.b16 %v2836
    %v3256 = vunpack.c.h.b16 %v2836
    %v3257 = vunpack.c.l.b16 %v2837
    %v3258 = vunpack.c.h.b16 %v2837
    %v3259 = vunpack.c.l.b16 %v2838
    %v3260 = vunpack.c.h.b16 %v2838
    %v3261 = vunpack.c.l.b16 %v2839
    %v3262 = vunpack.c.h.b16 %v2839
    %v3263 = vunpack.c.l.b16 %v2840
    %v3264 = vunpack.c.h.b16 %v2840
    %v3265 = vunpack.c.l.b16 %v2841
    %v3266 = vunpack.c.h.b16 %v2841
    %v3267 = vunpack.c.l.b16 %v2842
    %v3268 = vunpack.c.h.b16 %v2842
    %v3269 = vunpack.c.l.b16 %v2843
    %v3270 = vunpack.c.h.b16 %v2843
    %v3271 = vunpack.c.l.b16 %v2844
    %v3272 = vunpack.c.h.b16 %v2844
    %v3273 = vunpack.c.l.b16 %v2845
    %v3274 = vunpack.c.h.b16 %v2845
    %v3275 = vunpack.c.l.b16 %v2846
    %v3276 = vunpack.c.h.b16 %v2846
    %v3277 = vunpack.c.l.b16 %v2847
    %v3278 = vunpack.c.h.b16 %v2847
    %v3279 = vunpack.c.l.b16 %v2848
    %v3280 = vunpack.c.h.b16 %v2848
    %v3281 = vunpack.c.l.b16 %v2849
    %v3282 = vunpack.c.h.b16 %v2849
    %v3283 = vunpack.c.l.b16 %v2850
    %v3284 = vunpack.c.h.b16 %v2850
    %v3285 = vunpack.c.l.b16 %v2851
    %v3286 = vunpack.c.h.b16 %v2851
    %v3287 = vunpack.c.l.b16 %v2852
    %v3288 = vunpack.c.h.b16 %v2852
    %v3289 = vunpack.c.l.b16 %v2853
    %v3290 = vunpack.c.h.b16 %v2853
    %v3291 = vunpack.c.l.b16 %v2854
    %v3292 = vunpack.c.h.b16 %v2854
    %v3293 = vunpack.c.l.b16 %v2855
    %v3294 = vunpack.c.h.b16 %v2855
    %v3295 = vunpack.c.l.b16 %v2856
    %v3296 = vunpack.c.h.b16 %v2856
    %v3297 = vunpack.c.l.b16 %v2857
    %v3298 = vunpack.c.h.b16 %v2857
    %v3299 = vunpack.c.l.b16 %v2858
    %v3300 = vunpack.c.h.b16 %v2858
    %v3301 = vunpack.c.l.b16 %v2859
    %v3302 = vunpack.c.h.b16 %v2859
    %v3303 = vunpack.c.l.b16 %v2860
    %v3304 = vunpack.c.h.b16 %v2860
    %v3305 = vunpack.c.l.b16 %v2861
    %v3306 = vunpack.c.h.b16 %v2861
    %v3307 = vunpack.c.l.b16 %v2862
    %v3308 = vunpack.c.h.b16 %v2862
    %v3309 = vunpack.c.l.b16 %v2863
    %v3310 = vunpack.c.h.b16 %v2863
    %v3311 = vunpack.c.l.b16 %v2864
    %v3312 = vunpack.c.h.b16 %v2864
    %v3313 = vunpack.c.l.b16 %v2865
    %v3314 = vunpack.c.h.b16 %v2865
    %v3315 = vunpack.c.l.b16 %v2866
    %v3316 = vunpack.c.h.b16 %v2866
    %v3317 = vunpack.c.l.b16 %v2867
    %v3318 = vunpack.c.h.b16 %v2867
    %v3319 = vunpack.c.l.b16 %v2868
    %v3320 = vunpack.c.h.b16 %v2868
    %v3321 = vunpack.c.l.b16 %v2869
    %v3322 = vunpack.c.h.b16 %v2869
    %v3323 = vunpack.c.l.b16 %v2870
    %v3324 = vunpack.c.h.b16 %v2870
    %v3325 = vunpack.c.l.b16 %v2871
    %v3326 = vunpack.c.h.b16 %v2871
    %v3327 = vunpack.c.l.b16 %v2872
    %v3328 = vunpack.c.h.b16 %v2872
    %v3329 = vunpack.c.l.b16 %v2873
    %v3330 = vunpack.c.h.b16 %v2873
    %v3331 = vunpack.c.l.b16 %v2874
    %v3332 = vunpack.c.h.b16 %v2874
    %v3333 = vunpack.c.l.b16 %v2875
    %v3334 = vunpack.c.h.b16 %v2875
    %v3335 = vunpack.c.l.b16 %v2876
    %v3336 = vunpack.c.h.b16 %v2876
    %v3337 = vunpack.c.l.b16 %v2877
    %v3338 = vunpack.c.h.b16 %v2877
    %v3339 = vunpack.c.l.b16 %v2878
    %v3340 = vunpack.c.h.b16 %v2878
    %v3341 = vunpack.c.l.b16 %v2879
    %v3342 = vunpack.c.h.b16 %v2879
    %v3343 = vunpack.c.l.b16 %v2880
    %v3344 = vunpack.c.h.b16 %v2880
    %v3345 = vunpack.c.l.b16 %v2881
    %v3346 = vunpack.c.h.b16 %v2881
    %v3347 = vunpack.c.l.b16 %v2882
    %v3348 = vunpack.c.h.b16 %v2882
    %v3349 = vunpack.c.l.b16 %v2883
    %v3350 = vunpack.c.h.b16 %v2883
    %v3351 = vunpack.c.l.b16 %v2884
    %v3352 = vunpack.c.h.b16 %v2884
    %v3353 = vunpack.c.l.b16 %v2885
    %v3354 = vunpack.c.h.b16 %v2885
    %v3355 = vunpack.c.l.b16 %v2886
    %v3356 = vunpack.c.h.b16 %v2886
    %v3357 = vunpack.c.l.b16 %v2887
    %v3358 = vunpack.c.h.b16 %v2887
    %v3359 = vunpack.c.l.b16 %v2888
    %v3360 = vunpack.c.h.b16 %v2888
    %v3361 = vunpack.c.l.b16 %v2889
    %v3362 = vunpack.c.h.b16 %v2889
    %v3363 = vunpack.c.l.b16 %v2890
    %v3364 = vunpack.c.h.b16 %v2890
    %v3365 = vunpack.c.l.b16 %v2891
    %v3366 = vunpack.c.h.b16 %v2891
    %v3367 = vunpack.c.l.b16 %v2892
    %v3368 = vunpack.c.h.b16 %v2892
    %v3369 = vunpack.c.l.b16 %v2893
    %v3370 = vunpack.c.h.b16 %v2893
    %v3371 = vunpack.c.l.b16 %v2894
    %v3372 = vunpack.c.h.b16 %v2894
    %v3373 = vunpack.c.l.b16 %v2895
    %v3374 = vunpack.c.h.b16 %v2895
    %v3375 = vunpack.c.l.b16 %v2896
    %v3376 = vunpack.c.h.b16 %v2896
    %v3377 = vunpack.c.l.b16 %v2897
    %v3378 = vunpack.c.h.b16 %v2897
    %v3379 = vunpack.c.l.b16 %v2898
    %v3380 = vunpack.c.h.b16 %v2898
    %v3381 = vunpack.c.l.b16 %v2899
    %v3382 = vunpack.c.h.b16 %v2899
    %v3383 = vunpack.c.l.b16 %v2900
    %v3384 = vunpack.c.h.b16 %v2900
    %v3385 = vunpack.c.l.b16 %v2901
    %v3386 = vunpack.c.h.b16 %v2901
    %v3387 = vunpack.c.l.b16 %v2902
    %v3388 = vunpack.c.h.b16 %v2902
    %v3389 = vunpack.c.l.b16 %v2903
    %v3390 = vunpack.c.h.b16 %v2903
    %v3391 = vunpack.c.l.b16 %v2904
    %v3392 = vunpack.c.h.b16 %v2904
    %v3393 = vunpack.c.l.b16 %v2905
    %v3394 = vunpack.c.h.b16 %v2905
    %v3395 = vunpack.c.l.b16 %v2906
    %v3396 = vunpack.c.h.b16 %v2906
    %v3397 = vunpack.c.l.b16 %v2907
    %v3398 = vunpack.c.h.b16 %v2907
    %v3399 = vunpack.c.l.b16 %v2908
    %v3400 = vunpack.c.h.b16 %v2908
    %v3401 = vunpack.c.l.b16 %v2909
    %v3402 = vunpack.c.h.b16 %v2909
    %v3403 = vunpack.c.l.b16 %v2910
    %v3404 = vunpack.c.h.b16 %v2910
    %v3405 = vunpack.c.l.b16 %v2911
    %v3406 = vunpack.c.h.b16 %v2911
    %v3407 = vunpack.c.l.b16 %v2912
    %v3408 = vunpack.c.h.b16 %v2912
    %v3409 = vunpack.c.l.b16 %v2913
    %v3410 = vunpack.c.h.b16 %v2913
    %v3411 = vunpack.c.l.b16 %v2914
    %v3412 = vunpack.c.h.b16 %v2914
    %v3413 = vunpack.c.l.b16 %v2915
    %v3414 = vunpack.c.h.b16 %v2915
    %v3415 = vunpack.c.l.b16 %v2916
    %v3416 = vunpack.c.h.b16 %v2916
    %v3417 = vunpack.c.l.b16 %v2917
    %v3418 = vunpack.c.h.b16 %v2917
    %v3419 = vunpack.c.l.b16 %v2918
    %v3420 = vunpack.c.h.b16 %v2918
    %v3421 = vunpack.c.l.b16 %v2919
    %v3422 = vunpack.c.h.b16 %v2919
    %v3423 = vunpack.c.l.b16 %v2920
    %v3424 = vunpack.c.h.b16 %v2920
    %v3425 = vunpack.c.l.b16 %v2921
    %v3426 = vunpack.c.h.b16 %v2921
    %v3427 = vunpack.c.l.b16 %v2922
    %v3428 = vunpack.c.h.b16 %v2922
    %v3429 = vunpack.c.l.b16 %v2923
    %v3430 = vunpack.c.h.b16 %v2923
    %v3431 = vunpack.c.l.b16 %v2924
    %v3432 = vunpack.c.h.b16 %v2924
    %v3433 = vunpack.c.l.b16 %v2925
    %v3434 = vunpack.c.h.b16 %v2925
    %v3435 = vunpack.c.l.b16 %v2926
    %v3436 = vunpack.c.h.b16 %v2926
    %v3437 = vunpack.c.l.b16 %v2927
    %v3438 = vunpack.c.h.b16 %v2927
    %v3439 = vunpack.c.l.b16 %v2928
    %v3440 = vunpack.c.h.b16 %v2928
    %v3441 = vunpack.c.l.b16 %v2929
    %v3442 = vunpack.c.h.b16 %v2929
    %v3443 = vunpack.c.l.b16 %v2930
    %v3444 = vunpack.c.h.b16 %v2930
    %v3445 = vunpack.c.l.b16 %v2931
    %v3446 = vunpack.c.h.b16 %v2931
    %v3447 = vunpack.c.l.b16 %v2932
    %v3448 = vunpack.c.h.b16 %v2932
    %v3449 = vunpack.c.l.b16 %v2933
    %v3450 = vunpack.c.h.b16 %v2933
    %v3451 = vunpack.c.l.b16 %v2934
    %v3452 = vunpack.c.h.b16 %v2934
    %v3453 = vunpack.c.l.b16 %v2935
    %v3454 = vunpack.c.h.b16 %v2935
    %v3455 = vunpack.c.l.b16 %v2936
    %v3456 = vunpack.c.h.b16 %v2936
    %v3457 = vunpack.c.l.b16 %v2937
    %v3458 = vunpack.c.h.b16 %v2937
    %v3459 = vunpack.c.l.b16 %v2938
    %v3460 = vunpack.c.h.b16 %v2938
    %v3461 = vunpack.c.l.b16 %v2939
    %v3462 = vunpack.c.h.b16 %v2939
    %v3463 = vunpack.c.l.b16 %v2940
    %v3464 = vunpack.c.h.b16 %v2940
    %v3465 = vunpack.c.l.b16 %v2941
    %v3466 = vunpack.c.h.b16 %v2941
    %v3467 = vunpack.c.l.b16 %v2942
    %v3468 = vunpack.c.h.b16 %v2942
    %v3469 = vunpack.c.l.b16 %v2943
    %v3470 = vunpack.c.h.b16 %v2943
    %v3471 = vunpack.c.l.b16 %v2944
    %v3472 = vunpack.c.h.b16 %v2944
    %v3473 = vunpack.c.l.b16 %v2945
    %v3474 = vunpack.c.h.b16 %v2945
    %v3475 = vunpack.c.l.b16 %v2946
    %v3476 = vunpack.c.h.b16 %v2946
    %v3477 = vunpack.c.l.b16 %v2947
    %v3478 = vunpack.c.h.b16 %v2947
    %v3479 = vunpack.c.l.b16 %v2948
    %v3480 = vunpack.c.h.b16 %v2948
    %v3481 = vunpack.c.l.b16 %v2949
    %v3482 = vunpack.c.h.b16 %v2949
    %v3483 = vunpack.c.l.b16 %v2950
    %v3484 = vunpack.c.h.b16 %v2950
    %v3485 = vunpack.c.l.b16 %v2951
    %v3486 = vunpack.c.h.b16 %v2951
    %v3487 = vunpack.c.l.b16 %v2952
    %v3488 = vunpack.c.h.b16 %v2952
    %v3489 = vunpack.c.l.b16 %v2953
    %v3490 = vunpack.c.h.b16 %v2953
    %v3491 = vunpack.c.l.b16 %v2954
    %v3492 = vunpack.c.h.b16 %v2954
    %v3493 = vunpack.c.l.b16 %v2955
    %v3494 = vunpack.c.h.b16 %v2955
    %v3495 = vunpack.c.l.b16 %v2956
    %v3496 = vunpack.c.h.b16 %v2956
    %v3497 = vunpack.c.l.b16 %v2957
    %v3498 = vunpack.c.h.b16 %v2957
    %v3499 = vunpack.c.l.b16 %v2958
    %v3500 = vunpack.c.h.b16 %v2958
    %v3501 = vunpack.c.l.b16 %v2959
    %v3502 = vunpack.c.h.b16 %v2959
    %v3503 = vunpack.c.l.b16 %v2960
    %v3504 = vunpack.c.h.b16 %v2960
    %v3505 = vunpack.c.l.b16 %v2961
    %v3506 = vunpack.c.h.b16 %v2961
    %v3507 = vunpack.c.l.b16 %v2962
    %v3508 = vunpack.c.h.b16 %v2962
    %v3509 = vunpack.c.l.b16 %v2963
    %v3510 = vunpack.c.h.b16 %v2963
    %v3511 = vunpack.c.l.b16 %v2964
    %v3512 = vunpack.c.h.b16 %v2964
    %v3513 = vunpack.c.l.b16 %v2965
    %v3514 = vunpack.c.h.b16 %v2965
    %v3515 = vunpack.c.l.b16 %v2966
    %v3516 = vunpack.c.h.b16 %v2966
    %v3517 = vunpack.c.l.b16 %v2967
    %v3518 = vunpack.c.h.b16 %v2967
    %v3519 = vunpack.c.l.b16 %v2968
    %v3520 = vunpack.c.h.b16 %v2968
    %v3521 = vunpack.c.l.b16 %v2969
    %v3522 = vunpack.c.h.b16 %v2969
    %v3523 = vunpack.c.l.b16 %v2970
    %v3524 = vunpack.c.h.b16 %v2970
    %v3525 = vunpack.c.l.b16 %v2971
    %v3526 = vunpack.c.h.b16 %v2971
    %v3527 = vunpack.c.l.b16 %v2972
    %v3528 = vunpack.c.h.b16 %v2972
    %v3529 = vunpack.c.l.b16 %v2973
    %v3530 = vunpack.c.h.b16 %v2973
    %v3531 = vunpack.c.l.b16 %v2974
    %v3532 = vunpack.c.h.b16 %v2974
    %v3533 = vunpack.c.l.b16 %v2975
    %v3534 = vunpack.c.h.b16 %v2975
    %v3535 = vunpack.c.l.b16 %v2976
    %v3536 = vunpack.c.h.b16 %v2976
    %v3537 = vunpack.c.l.b16 %v2977
    %v3538 = vunpack.c.h.b16 %v2977
    %v3539 = vunpack.c.l.b16 %v2978
    %v3540 = vunpack.c.h.b16 %v2978
    %v3541 = vunpack.c.l.b16 %v2979
    %v3542 = vunpack.c.h.b16 %v2979
    %v3543 = vunpack.c.l.b16 %v2980
    %v3544 = vunpack.c.h.b16 %v2980
    %v3545 = vunpack.c.l.b16 %v2981
    %v3546 = vunpack.c.h.b16 %v2981
    %v3547 = vunpack.c.l.b16 %v2982
    %v3548 = vunpack.c.h.b16 %v2982
    %v3549 = vunpack.c.l.b16 %v2983
    %v3550 = vunpack.c.h.b16 %v2983
    %v3551 = vunpack.c.l.b16 %v2984
    %v3552 = vunpack.c.h.b16 %v2984
    %v3553 = vunpack.c.l.b16 %v2985
    %v3554 = vunpack.c.h.b16 %v2985
    %v3555 = vunpack.c.l.b16 %v2986
    %v3556 = vunpack.c.h.b16 %v2986
    %v3557 = vunpack.c.l.b16 %v2987
    %v3558 = vunpack.c.h.b16 %v2987
    %v3559 = vunpack.c.l.b16 %v2988
    %v3560 = vunpack.c.h.b16 %v2988
    %v3561 = vunpack.c.l.b16 %v2989
    %v3562 = vunpack.c.h.b16 %v2989
    %v3563 = vunpack.c.l.b16 %v2990
    %v3564 = vunpack.c.h.b16 %v2990
    %v3565 = vunpack.c.l.b16 %v2991
    %v3566 = vunpack.c.h.b16 %v2991
    %v3567 = vunpack.c.l.b16 %v2992
    %v3568 = vunpack.c.h.b16 %v2992
    %v3569 = vunpack.c.l.b16 %v2993
    %v3570 = vunpack.c.h.b16 %v2993
    %v3571 = vunpack.c.l.b16 %v2994
    %v3572 = vunpack.c.h.b16 %v2994
    %v3573 = vunpack.c.l.b16 %v2995
    %v3574 = vunpack.c.h.b16 %v2995
    %v3575 = vunpack.c.l.b16 %v2996
    %v3576 = vunpack.c.h.b16 %v2996
    %v3577 = vunpack.c.l.b16 %v2997
    %v3578 = vunpack.c.h.b16 %v2997
    %v3579 = vunpack.c.l.b16 %v2998
    %v3580 = vunpack.c.h.b16 %v2998
    %v3581 = vunpack.c.l.b16 %v2999
    %v3582 = vunpack.c.h.b16 %v2999
    %v3583 = vunpack.c.l.b16 %v3000
    %v3584 = vunpack.c.h.b16 %v3000
    %v3585 = vunpack.c.l.b16 %v3001
    %v3586 = vunpack.c.h.b16 %v3001
    %v3587 = vunpack.c.l.b16 %v3002
    %v3588 = vunpack.c.h.b16 %v3002
    %v3589 = vpack.c.b16 %v3209, %v3205
    %v3590 = vpack.c.b16 %v3210, %v3206
    %v3591 = vpack.c.b16 %v3211, %v3207
    %v3592 = vpack.c.b16 %v3212, %v3208
    %v3593 = vpack.c.b16 %v3217, %v3213
    %v3594 = vpack.c.b16 %v3218, %v3214
    %v3595 = vpack.c.b16 %v3219, %v3215
    %v3596 = vpack.c.b16 %v3220, %v3216
    %v3597 = vpack.c.b16 %v3225, %v3221
    %v3598 = vpack.c.b16 %v3226, %v3222
    %v3599 = vpack.c.b16 %v3227, %v3223
    %v3600 = vpack.c.b16 %v3228, %v3224
    %v3601 = vpack.c.b16 %v3233, %v3229
    %v3602 = vpack.c.b16 %v3234, %v3230
    %v3603 = vpack.c.b16 %v3235, %v3231
    %v3604 = vpack.c.b16 %v3236, %v3232
    %v3605 = vpack.c.b16 %v3241, %v3237
    %v3606 = vpack.c.b16 %v3242, %v3238
    %v3607 = vpack.c.b16 %v3243, %v3239
    %v3608 = vpack.c.b16 %v3244, %v3240
    %v3609 = vpack.c.b16 %v3249, %v3245
    %v3610 = vpack.c.b16 %v3250, %v3246
    %v3611 = vpack.c.b16 %v3251, %v3247
    %v3612 = vpack.c.b16 %v3252, %v3248
    %v3613 = vpack.c.b16 %v3257, %v3253
    %v3614 = vpack.c.b16 %v3258, %v3254
    %v3615 = vpack.c.b16 %v3259, %v3255
    %v3616 = vpack.c.b16 %v3260, %v3256
    %v3617 = vpack.c.b16 %v3265, %v3261
    %v3618 = vpack.c.b16 %v3266, %v3262
    %v3619 = vpack.c.b16 %v3267, %v3263
    %v3620 = vpack.c.b16 %v3268, %v3264
    %v3621 = vpack.c.b16 %v3273, %v3269
    %v3622 = vpack.c.b16 %v3274, %v3270
    %v3623 = vpack.c.b16 %v3275, %v3271
    %v3624 = vpack.c.b16 %v3276, %v3272
    %v3625 = vpack.c.b16 %v3281, %v3277
    %v3626 = vpack.c.b16 %v3282, %v3278
    %v3627 = vpack.c.b16 %v3283, %v3279
    %v3628 = vpack.c.b16 %v3284, %v3280
    %v3629 = vpack.c.b16 %v3289, %v3285
    %v3630 = vpack.c.b16 %v3290, %v3286
    %v3631 = vpack.c.b16 %v3291, %v3287
    %v3632 = vpack.c.b16 %v3292, %v3288
    %v3633 = vpack.c.b16 %v3297, %v3293
    %v3634 = vpack.c.b16 %v3298, %v3294
    %v3635 = vpack.c.b16 %v3299, %v3295
    %v3636 = vpack.c.b16 %v3300, %v3296
    %v3637 = vpack.c.b16 %v3305, %v3301
    %v3638 = vpack.c.b16 %v3306, %v3302
    %v3639 = vpack.c.b16 %v3307, %v3303
    %v3640 = vpack.c.b16 %v3308, %v3304
    %v3641 = vpack.c.b16 %v3313, %v3309
    %v3642 = vpack.c.b16 %v3314, %v3310
    %v3643 = vpack.c.b16 %v3315, %v3311
    %v3644 = vpack.c.b16 %v3316, %v3312
    %v3645 = vpack.c.b16 %v3321, %v3317
    %v3646 = vpack.c.b16 %v3322, %v3318
    %v3647 = vpack.c.b16 %v3323, %v3319
    %v3648 = vpack.c.b16 %v3324, %v3320
    %v3649 = vpack.c.b16 %v3329, %v3325
    %v3650 = vpack.c.b16 %v3330, %v3326
    %v3651 = vpack.c.b16 %v3331, %v3327
    %v3652 = vpack.c.b16 %v3332, %v3328
    %v3653 = vpack.c.b16 %v3337, %v3333
    %v3654 = vpack.c.b16 %v3338, %v3334
    %v3655 = vpack.c.b16 %v3339, %v3335
    %v3656 = vpack.c.b16 %v3340, %v3336
    %v3657 = vpack.c.b16 %v3345, %v3341
    %v3658 = vpack.c.b16 %v3346, %v3342
    %v3659 = vpack.c.b16 %v3347, %v3343
    %v3660 = vpack.c.b16 %v3348, %v3344
    %v3661 = vpack.c.b16 %v3353, %v3349
    %v3662 = vpack.c.b16 %v3354, %v3350
    %v3663 = vpack.c.b16 %v3355, %v3351
    %v3664 = vpack.c.b16 %v3356, %v3352
    %v3665 = vpack.c.b16 %v3361, %v3357
    %v3666 = vpack.c.b16 %v3362, %v3358
    %v3667 = vpack.c.b16 %v3363, %v3359
    %v3668 = vpack.c.b16 %v3364, %v3360
    %v3669 = vpack.c.b16 %v3369, %v3365
    %v3670 = vpack.c.b16 %v3370, %v3366
    %v3671 = vpack.c.b16 %v3371, %v3367
    %v3672 = vpack.c.b16 %v3372, %v3368
    %v3673 = vpack.c.b16 %v3377, %v3373
    %v3674 = vpack.c.b16 %v3378, %v3374
    %v3675 = vpack.c.b16 %v3379, %v3375
    %v3676 = vpack.c.b16 %v3380, %v3376
    %v3677 = vpack.c.b16 %v3385, %v3381
    %v3678 = vpack.c.b16 %v3386, %v3382
    %v3679 = vpack.c.b16 %v3387, %v3383
    %v3680 = vpack.c.b16 %v3388, %v3384
    %v3681 = vpack.c.b16 %v3393, %v3389
    %v3682 = vpack.c.b16 %v3394, %v3390
    %v3683 = vpack.c.b16 %v3395, %v3391
    %v3684 = vpack.c.b16 %v3396, %v3392
    %v3685 = vpack.c.b16 %v3401, %v3397
    %v3686 = vpack.c.b16 %v3402, %v3398
    %v3687 = vpack.c.b16 %v3403, %v3399
    %v3688 = vpack.c.b16 %v3404, %v3400
    %v3689 = vpack.c.b16 %v3409, %v3405
    %v3690 = vpack.c.b16 %v3410, %v3406
    %v3691 = vpack.c.b16 %v3411, %v3407
    %v3692 = vpack.c.b16 %v3412, %v3408
    %v3693 = vpack.c.b16 %v3417, %v3413
    %v3694 = vpack.c.b16 %v3418, %v3414
    %v3695 = vpack.c.b16 %v3419, %v3415
    %v3696 = vpack.c.b16 %v3420, %v3416
    %v3697 = vpack.c.b16 %v3425, %v3421
    %v3698 = vpack.c.b16 %v3426, %v3422
    %v3699 = vpack.c.b16 %v3427, %v3423
    %v3700 = vpack.c.b16 %v3428, %v3424
    %v3701 = vpack.c.b16 %v3433, %v3429
    %v3702 = vpack.c.b16 %v3434, %v3430
    %v3703 = vpack.c.b16 %v3435, %v3431
    %v3704 = vpack.c.b16 %v3436, %v3432
    %v3705 = vpack.c.b16 %v3441, %v3437
    %v3706 = vpack.c.b16 %v3442, %v3438
    %v3707 = vpack.c.b16 %v3443, %v3439
    %v3708 = vpack.c.b16 %v3444, %v3440
    %v3709 = vpack.c.b16 %v3449, %v3445
    %v3710 = vpack.c.b16 %v3450, %v3446
    %v3711 = vpack.c.b16 %v3451, %v3447
    %v3712 = vpack.c.b16 %v3452, %v3448
    %v3713 = vpack.c.b16 %v3457, %v3453
    %v3714 = vpack.c.b16 %v3458, %v3454
    %v3715 = vpack.c.b16 %v3459, %v3455
    %v3716 = vpack.c.b16 %v3460, %v3456
    %v3717 = vpack.c.b16 %v3465, %v3461
    %v3718 = vpack.c.b16 %v3466, %v3462
    %v3719 = vpack.c.b16 %v3467, %v3463
    %v3720 = vpack.c.b16 %v3468, %v3464
    %v3721 = vpack.c.b16 %v3473, %v3469
    %v3722 = vpack.c.b16 %v3474, %v3470
    %v3723 = vpack.c.b16 %v3475, %v3471
    %v3724 = vpack.c.b16 %v3476, %v3472
    %v3725 = vpack.c.b16 %v3481, %v3477
    %v3726 = vpack.c.b16 %v3482, %v3478
    %v3727 = vpack.c.b16 %v3483, %v3479
    %v3728 = vpack.c.b16 %v3484, %v3480
    %v3729 = vpack.c.b16 %v3489, %v3485
    %v3730 = vpack.c.b16 %v3490, %v3486
    %v3731 = vpack.c.b16 %v3491, %v3487
    %v3732 = vpack.c.b16 %v3492, %v3488
    %v3733 = vpack.c.b16 %v3497, %v3493
    %v3734 = vpack.c.b16 %v3498, %v3494
    %v3735 = vpack.c.b16 %v3499, %v3495
    %v3736 = vpack.c.b16 %v3500, %v3496
    %v3737 = vpack.c.b16 %v3505, %v3501
    %v3738 = vpack.c.b16 %v3506, %v3502
    %v3739 = vpack.c.b16 %v3507, %v3503
    %v3740 = vpack.c.b16 %v3508, %v3504
    %v3741 = vpack.c.b16 %v3513, %v3509
    %v3742 = vpack.c.b16 %v3514, %v3510
    %v3743 = vpack.c.b16 %v3515, %v3511
    %v3744 = vpack.c.b16 %v3516, %v3512
    %v3745 = vpack.c.b16 %v3521, %v3517
    %v3746 = vpack.c.b16 %v3522, %v3518
    %v3747 = vpack.c.b16 %v3523, %v3519
    %v3748 = vpack.c.b16 %v3524, %v3520
    %v3749 = vpack.c.b16 %v3529, %v3525
    %v3750 = vpack.c.b16 %v3530, %v3526
    %v3751 = vpack.c.b16 %v3531, %v3527
    %v3752 = vpack.c.b16 %v3532, %v3528
    %v3753 = vpack.c.b16 %v3537, %v3533
    %v3754 = vpack.c.b16 %v3538, %v3534
    %v3755 = vpack.c.b16 %v3539, %v3535
    %v3756 = vpack.c.b16 %v3540, %v3536
    %v3757 = vpack.c.b16 %v3545, %v3541
    %v3758 = vpack.c.b16 %v3546, %v3542
    %v3759 = vpack.c.b16 %v3547, %v3543
    %v3760 = vpack.c.b16 %v3548, %v3544
    %v3761 = vpack.c.b16 %v3553, %v3549
    %v3762 = vpack.c.b16 %v3554, %v3550
    %v3763 = vpack.c.b16 %v3555, %v3551
    %v3764 = vpack.c.b16 %v3556, %v3552
    %v3765 = vpack.c.b16 %v3561, %v3557
    %v3766 = vpack.c.b16 %v3562, %v3558
    %v3767 = vpack.c.b16 %v3563, %v3559
    %v3768 = vpack.c.b16 %v3564, %v3560
    %v3769 = vpack.c.b16 %v3569, %v3565
    %v3770 = vpack.c.b16 %v3570, %v3566
    %v3771 = vpack.c.b16 %v3571, %v3567
    %v3772 = vpack.c.b16 %v3572, %v3568
    %v3773 = vpack.c.b16 %v3577, %v3573
    %v3774 = vpack.c.b16 %v3578, %v3574
    %v3775 = vpack.c.b16 %v3579, %v3575
    %v3776 = vpack.c.b16 %v3580, %v3576
    %v3777 = vpack.c.b16 %v3585, %v3581
    %v3778 = vpack.c.b16 %v3586, %v3582
    %v3779 = vpack.c.b16 %v3587, %v3583
    %v3780 = vpack.c.b16 %v3588, %v3584
    %3973 = vmatpush.bf16.msra.mxu0 %v3617
    %3974 = vmatpush.bf16.msra.mxu0 %v3613
    %3975 = vmatpush.bf16.msra.mxu0 %v3609
    %3976 = vmatpush.bf16.msra.mxu0 %v3605
    %3977 = vmatpush.bf16.msra.mxu0 %v3601
    %3978 = vmatpush.bf16.msra.mxu0 %v3597
    %3979 = vmatpush.bf16.msra.mxu0 %v3593
    %3980 = vmatpush.bf16.msra.mxu0 %v3589
    %3981 = vmatmul.bf16.gmra.mxu0 %v2805
    %v3982 = vpop.f32.mrf.mxu0
    %v3983 = vadd.f32 %v3005, %v3982
    %v3984 = vpop.f32.mrf.mxu0
    %v3985 = vadd.f32 %v3005, %v3984
    %3986 = vdwg.mxu0
    %3987 = vmatpush.bf16.msra.mxu0 %v3649
    %3988 = vmatpush.bf16.msra.mxu0 %v3645
    %3989 = vmatpush.bf16.msra.mxu0 %v3641
    %3990 = vmatpush.bf16.msra.mxu0 %v3637
    %3991 = vmatpush.bf16.msra.mxu0 %v3633
    %3992 = vmatpush.bf16.msra.mxu0 %v3629
    %3993 = vmatpush.bf16.msra.mxu0 %v3625
    %3994 = vmatpush.bf16.msra.mxu0 %v3621
    %3995 = vmatmul.bf16.gmra.mxu0 %v2806
    %v3996 = vpop.f32.mrf.mxu0
    %v3997 = vadd.f32 %v3983, %v3996
    %v3998 = vpop.f32.mrf.mxu0
    %v3999 = vadd.f32 %v3985, %v3998
    %4000 = vdwg.mxu0
    %4001 = vmatpush.bf16.msra.mxu0 %v3681
    %4002 = vmatpush.bf16.msra.mxu0 %v3677
    %4003 = vmatpush.bf16.msra.mxu0 %v3673
    %4004 = vmatpush.bf16.msra.mxu0 %v3669
    %4005 = vmatpush.bf16.msra.mxu0 %v3665
    %4006 = vmatpush.bf16.msra.mxu0 %v3661
    %4007 = vmatpush.bf16.msra.mxu0 %v3657
    %4008 = vmatpush.bf16.msra.mxu0 %v3653
    %4009 = vmatmul.bf16.gmra.mxu0 %v2807
    %v4010 = vpop.f32.mrf.mxu0
    %v4011 = vadd.f32 %v3997, %v4010
    %v4012 = vpop.f32.mrf.mxu0
    %v4013 = vadd.f32 %v3999, %v4012
    %4014 = vdwg.mxu0
    %4015 = vmatpush.bf16.msra.mxu0 %v3713
    %4016 = vmatpush.bf16.msra.mxu0 %v3709
    %4017 = vmatpush.bf16.msra.mxu0 %v3705
    %4018 = vmatpush.bf16.msra.mxu0 %v3701
    %4019 = vmatpush.bf16.msra.mxu0 %v3697
    %4020 = vmatpush.bf16.msra.mxu0 %v3693
    %4021 = vmatpush.bf16.msra.mxu0 %v3689
    %4022 = vmatpush.bf16.msra.mxu0 %v3685
    %4023 = vmatmul.bf16.gmra.mxu0 %v2808
    %v4024 = vpop.f32.mrf.mxu0
    %v4025 = vadd.f32 %v4011, %v4024
    %v4026 = vpop.f32.mrf.mxu0
    %v4027 = vadd.f32 %v4013, %v4026
    %4028 = vdwg.mxu0
    %4029 = vmatpush.bf16.msra.mxu0 %v3745
    %4030 = vmatpush.bf16.msra.mxu0 %v3741
    %4031 = vmatpush.bf16.msra.mxu0 %v3737
    %4032 = vmatpush.bf16.msra.mxu0 %v3733
    %4033 = vmatpush.bf16.msra.mxu0 %v3729
    %4034 = vmatpush.bf16.msra.mxu0 %v3725
    %4035 = vmatpush.bf16.msra.mxu0 %v3721
    %4036 = vmatpush.bf16.msra.mxu0 %v3717
    %4037 = vmatmul.bf16.gmra.mxu0 %v2809
    %v4038 = vpop.f32.mrf.mxu0
    %v4039 = vadd.f32 %v4025, %v4038
    %v4040 = vpop.f32.mrf.mxu0
    %v4041 = vadd.f32 %v4027, %v4040
    %4042 = vdwg.mxu0
    %4043 = vmatpush.bf16.msra.mxu0 %v3777
    %4044 = vmatpush.bf16.msra.mxu0 %v3773
    %4045 = vmatpush.bf16.msra.mxu0 %v3769
    %4046 = vmatpush.bf16.msra.mxu0 %v3765
    %4047 = vmatpush.bf16.msra.mxu0 %v3761
    %4048 = vmatpush.bf16.msra.mxu0 %v3757
    %4049 = vmatpush.bf16.msra.mxu0 %v3753
    %4050 = vmatpush.bf16.msra.mxu0 %v3749
    %4051 = vmatmul.bf16.gmra.mxu0 %v2810
    %v4052 = vpop.f32.mrf.mxu0
    %v4053 = vadd.f32 %v4039, %v4052
    %v4054 = vpop.f32.mrf.mxu0
    %v4055 = vadd.f32 %v4041, %v4054
    %4056 = vdwg.mxu0
    %4057 = vmatpush.bf16.msra.mxu0 %v3618
    %4058 = vmatpush.bf16.msra.mxu0 %v3614
    %4059 = vmatpush.bf16.msra.mxu0 %v3610
    %4060 = vmatpush.bf16.msra.mxu0 %v3606
    %4061 = vmatpush.bf16.msra.mxu0 %v3602
    %4062 = vmatpush.bf16.msra.mxu0 %v3598
    %4063 = vmatpush.bf16.msra.mxu0 %v3594
    %4064 = vmatpush.bf16.msra.mxu0 %v3590
    %4065 = vmatmul.bf16.gmra.mxu0 %v2805
    %v4066 = vpop.f32.mrf.mxu0
    %v4067 = vadd.f32 %v3006, %v4066
    %v4068 = vpop.f32.mrf.mxu0
    %v4069 = vadd.f32 %v3006, %v4068
    %4070 = vdwg.mxu0
    %4071 = vmatpush.bf16.msra.mxu0 %v3650
    %4072 = vmatpush.bf16.msra.mxu0 %v3646
    %4073 = vmatpush.bf16.msra.mxu0 %v3642
    %4074 = vmatpush.bf16.msra.mxu0 %v3638
    %4075 = vmatpush.bf16.msra.mxu0 %v3634
    %4076 = vmatpush.bf16.msra.mxu0 %v3630
    %4077 = vmatpush.bf16.msra.mxu0 %v3626
    %4078 = vmatpush.bf16.msra.mxu0 %v3622
    %4079 = vmatmul.bf16.gmra.mxu0 %v2806
    %v4080 = vpop.f32.mrf.mxu0
    %v4081 = vadd.f32 %v4067, %v4080
    %v4082 = vpop.f32.mrf.mxu0
    %v4083 = vadd.f32 %v4069, %v4082
    %4084 = vdwg.mxu0
    %4085 = vmatpush.bf16.msra.mxu0 %v3682
    %4086 = vmatpush.bf16.msra.mxu0 %v3678
    %4087 = vmatpush.bf16.msra.mxu0 %v3674
    %4088 = vmatpush.bf16.msra.mxu0 %v3670
    %4089 = vmatpush.bf16.msra.mxu0 %v3666
    %4090 = vmatpush.bf16.msra.mxu0 %v3662
    %4091 = vmatpush.bf16.msra.mxu0 %v3658
    %4092 = vmatpush.bf16.msra.mxu0 %v3654
    %4093 = vmatmul.bf16.gmra.mxu0 %v2807
    %v4094 = vpop.f32.mrf.mxu0
    %v4095 = vadd.f32 %v4081, %v4094
    %v4096 = vpop.f32.mrf.mxu0
    %v4097 = vadd.f32 %v4083, %v4096
    %4098 = vdwg.mxu0
    %4099 = vmatpush.bf16.msra.mxu0 %v3714
    %4100 = vmatpush.bf16.msra.mxu0 %v3710
    %4101 = vmatpush.bf16.msra.mxu0 %v3706
    %4102 = vmatpush.bf16.msra.mxu0 %v3702
    %4103 = vmatpush.bf16.msra.mxu0 %v3698
    %4104 = vmatpush.bf16.msra.mxu0 %v3694
    %4105 = vmatpush.bf16.msra.mxu0 %v3690
    %4106 = vmatpush.bf16.msra.mxu0 %v3686
    %4107 = vmatmul.bf16.gmra.mxu0 %v2808
    %v4108 = vpop.f32.mrf.mxu0
    %v4109 = vadd.f32 %v4095, %v4108
    %v4110 = vpop.f32.mrf.mxu0
    %v4111 = vadd.f32 %v4097, %v4110
    %4112 = vdwg.mxu0
    %4113 = vmatpush.bf16.msra.mxu0 %v3746
    %4114 = vmatpush.bf16.msra.mxu0 %v3742
    %4115 = vmatpush.bf16.msra.mxu0 %v3738
    %4116 = vmatpush.bf16.msra.mxu0 %v3734
    %4117 = vmatpush.bf16.msra.mxu0 %v3730
    %4118 = vmatpush.bf16.msra.mxu0 %v3726
    %4119 = vmatpush.bf16.msra.mxu0 %v3722
    %4120 = vmatpush.bf16.msra.mxu0 %v3718
    %4121 = vmatmul.bf16.gmra.mxu0 %v2809
    %v4122 = vpop.f32.mrf.mxu0
    %v4123 = vadd.f32 %v4109, %v4122
    %v4124 = vpop.f32.mrf.mxu0
    %v4125 = vadd.f32 %v4111, %v4124
    %4126 = vdwg.mxu0
    %4127 = vmatpush.bf16.msra.mxu0 %v3778
    %4128 = vmatpush.bf16.msra.mxu0 %v3774
    %4129 = vmatpush.bf16.msra.mxu0 %v3770
    %4130 = vmatpush.bf16.msra.mxu0 %v3766
    %4131 = vmatpush.bf16.msra.mxu0 %v3762
    %4132 = vmatpush.bf16.msra.mxu0 %v3758
    %4133 = vmatpush.bf16.msra.mxu0 %v3754
    %4134 = vmatpush.bf16.msra.mxu0 %v3750
    %4135 = vmatmul.bf16.gmra.mxu0 %v2810
    %v4136 = vpop.f32.mrf.mxu0
    %v4137 = vadd.f32 %v4123, %v4136
    %v4138 = vpop.f32.mrf.mxu0
    %v4139 = vadd.f32 %v4125, %v4138
    %4140 = vdwg.mxu0
    %4141 = vmatpush.bf16.msra.mxu0 %v3619
    %4142 = vmatpush.bf16.msra.mxu0 %v3615
    %4143 = vmatpush.bf16.msra.mxu0 %v3611
    %4144 = vmatpush.bf16.msra.mxu0 %v3607
    %4145 = vmatpush.bf16.msra.mxu0 %v3603
    %4146 = vmatpush.bf16.msra.mxu0 %v3599
    %4147 = vmatpush.bf16.msra.mxu0 %v3595
    %4148 = vmatpush.bf16.msra.mxu0 %v3591
    %4149 = vmatmul.bf16.gmra.mxu0 %v2805
    %v4150 = vpop.f32.mrf.mxu0
    %v4151 = vadd.f32 %v3007, %v4150
    %v4152 = vpop.f32.mrf.mxu0
    %v4153 = vadd.f32 %v3007, %v4152
    %4154 = vdwg.mxu0
    %4155 = vmatpush.bf16.msra.mxu0 %v3651
    %4156 = vmatpush.bf16.msra.mxu0 %v3647
    %4157 = vmatpush.bf16.msra.mxu0 %v3643
    %4158 = vmatpush.bf16.msra.mxu0 %v3639
    %4159 = vmatpush.bf16.msra.mxu0 %v3635
    %4160 = vmatpush.bf16.msra.mxu0 %v3631
    %4161 = vmatpush.bf16.msra.mxu0 %v3627
    %4162 = vmatpush.bf16.msra.mxu0 %v3623
    %4163 = vmatmul.bf16.gmra.mxu0 %v2806
    %v4164 = vpop.f32.mrf.mxu0
    %v4165 = vadd.f32 %v4151, %v4164
    %v4166 = vpop.f32.mrf.mxu0
    %v4167 = vadd.f32 %v4153, %v4166
    %4168 = vdwg.mxu0
    %4169 = vmatpush.bf16.msra.mxu0 %v3683
    %4170 = vmatpush.bf16.msra.mxu0 %v3679
    %4171 = vmatpush.bf16.msra.mxu0 %v3675
    %4172 = vmatpush.bf16.msra.mxu0 %v3671
    %4173 = vmatpush.bf16.msra.mxu0 %v3667
    %4174 = vmatpush.bf16.msra.mxu0 %v3663
    %4175 = vmatpush.bf16.msra.mxu0 %v3659
    %4176 = vmatpush.bf16.msra.mxu0 %v3655
    %4177 = vmatmul.bf16.gmra.mxu0 %v2807
    %v4178 = vpop.f32.mrf.mxu0
    %v4179 = vadd.f32 %v4165, %v4178
    %v4180 = vpop.f32.mrf.mxu0
    %v4181 = vadd.f32 %v4167, %v4180
    %4182 = vdwg.mxu0
    %4183 = vmatpush.bf16.msra.mxu0 %v3715
    %4184 = vmatpush.bf16.msra.mxu0 %v3711
    %4185 = vmatpush.bf16.msra.mxu0 %v3707
    %4186 = vmatpush.bf16.msra.mxu0 %v3703
    %4187 = vmatpush.bf16.msra.mxu0 %v3699
    %4188 = vmatpush.bf16.msra.mxu0 %v3695
    %4189 = vmatpush.bf16.msra.mxu0 %v3691
    %4190 = vmatpush.bf16.msra.mxu0 %v3687
    %4191 = vmatmul.bf16.gmra.mxu0 %v2808
    %v4192 = vpop.f32.mrf.mxu0
    %v4193 = vadd.f32 %v4179, %v4192
    %v4194 = vpop.f32.mrf.mxu0
    %v4195 = vadd.f32 %v4181, %v4194
    %4196 = vdwg.mxu0
    %4197 = vmatpush.bf16.msra.mxu0 %v3747
    %4198 = vmatpush.bf16.msra.mxu0 %v3743
    %4199 = vmatpush.bf16.msra.mxu0 %v3739
    %4200 = vmatpush.bf16.msra.mxu0 %v3735
    %4201 = vmatpush.bf16.msra.mxu0 %v3731
    %4202 = vmatpush.bf16.msra.mxu0 %v3727
    %4203 = vmatpush.bf16.msra.mxu0 %v3723
    %4204 = vmatpush.bf16.msra.mxu0 %v3719
    %4205 = vmatmul.bf16.gmra.mxu0 %v2809
    %v4206 = vpop.f32.mrf.mxu0
    %v4207 = vadd.f32 %v4193, %v4206
    %v4208 = vpop.f32.mrf.mxu0
    %v4209 = vadd.f32 %v4195, %v4208
    %4210 = vdwg.mxu0
    %4211 = vmatpush.bf16.msra.mxu0 %v3779
    %4212 = vmatpush.bf16.msra.mxu0 %v3775
    %4213 = vmatpush.bf16.msra.mxu0 %v3771
    %4214 = vmatpush.bf16.msra.mxu0 %v3767
    %4215 = vmatpush.bf16.msra.mxu0 %v3763
    %4216 = vmatpush.bf16.msra.mxu0 %v3759
    %4217 = vmatpush.bf16.msra.mxu0 %v3755
    %4218 = vmatpush.bf16.msra.mxu0 %v3751
    %4219 = vmatmul.bf16.gmra.mxu0 %v2810
    %v4220 = vpop.f32.mrf.mxu0
    %v4221 = vadd.f32 %v4207, %v4220
    %v4222 = vpop.f32.mrf.mxu0
    %v4223 = vadd.f32 %v4209, %v4222
    %4224 = vdwg.mxu0
    %4225 = vmatpush.bf16.msra.mxu0 %v3620
    %4226 = vmatpush.bf16.msra.mxu0 %v3616
    %4227 = vmatpush.bf16.msra.mxu0 %v3612
    %4228 = vmatpush.bf16.msra.mxu0 %v3608
    %4229 = vmatpush.bf16.msra.mxu0 %v3604
    %4230 = vmatpush.bf16.msra.mxu0 %v3600
    %4231 = vmatpush.bf16.msra.mxu0 %v3596
    %4232 = vmatpush.bf16.msra.mxu0 %v3592
    %4233 = vmatmul.bf16.gmra.mxu0 %v2805
    %v4234 = vpop.f32.mrf.mxu0
    %v4235 = vadd.f32 %v3008, %v4234
    %v4236 = vpop.f32.mrf.mxu0
    %v4237 = vadd.f32 %v3008, %v4236
    %4238 = vdwg.mxu0
    %4239 = vmatpush.bf16.msra.mxu0 %v3652
    %4240 = vmatpush.bf16.msra.mxu0 %v3648
    %4241 = vmatpush.bf16.msra.mxu0 %v3644
    %4242 = vmatpush.bf16.msra.mxu0 %v3640
    %4243 = vmatpush.bf16.msra.mxu0 %v3636
    %4244 = vmatpush.bf16.msra.mxu0 %v3632
    %4245 = vmatpush.bf16.msra.mxu0 %v3628
    %4246 = vmatpush.bf16.msra.mxu0 %v3624
    %4247 = vmatmul.bf16.gmra.mxu0 %v2806
    %v4248 = vpop.f32.mrf.mxu0
    %v4249 = vadd.f32 %v4235, %v4248
    %v4250 = vpop.f32.mrf.mxu0
    %v4251 = vadd.f32 %v4237, %v4250
    %4252 = vdwg.mxu0
    %4253 = vmatpush.bf16.msra.mxu0 %v3684
    %4254 = vmatpush.bf16.msra.mxu0 %v3680
    %4255 = vmatpush.bf16.msra.mxu0 %v3676
    %4256 = vmatpush.bf16.msra.mxu0 %v3672
    %4257 = vmatpush.bf16.msra.mxu0 %v3668
    %4258 = vmatpush.bf16.msra.mxu0 %v3664
    %4259 = vmatpush.bf16.msra.mxu0 %v3660
    %4260 = vmatpush.bf16.msra.mxu0 %v3656
    %4261 = vmatmul.bf16.gmra.mxu0 %v2807
    %v4262 = vpop.f32.mrf.mxu0
    %v4263 = vadd.f32 %v4249, %v4262
    %v4264 = vpop.f32.mrf.mxu0
    %v4265 = vadd.f32 %v4251, %v4264
    %4266 = vdwg.mxu0
    %4267 = vmatpush.bf16.msra.mxu0 %v3716
    %4268 = vmatpush.bf16.msra.mxu0 %v3712
    %4269 = vmatpush.bf16.msra.mxu0 %v3708
    %4270 = vmatpush.bf16.msra.mxu0 %v3704
    %4271 = vmatpush.bf16.msra.mxu0 %v3700
    %4272 = vmatpush.bf16.msra.mxu0 %v3696
    %4273 = vmatpush.bf16.msra.mxu0 %v3692
    %4274 = vmatpush.bf16.msra.mxu0 %v3688
    %4275 = vmatmul.bf16.gmra.mxu0 %v2808
    %v4276 = vpop.f32.mrf.mxu0
    %v4277 = vadd.f32 %v4263, %v4276
    %v4278 = vpop.f32.mrf.mxu0
    %v4279 = vadd.f32 %v4265, %v4278
    %4280 = vdwg.mxu0
    %4281 = vmatpush.bf16.msra.mxu0 %v3748
    %4282 = vmatpush.bf16.msra.mxu0 %v3744
    %4283 = vmatpush.bf16.msra.mxu0 %v3740
    %4284 = vmatpush.bf16.msra.mxu0 %v3736
    %4285 = vmatpush.bf16.msra.mxu0 %v3732
    %4286 = vmatpush.bf16.msra.mxu0 %v3728
    %4287 = vmatpush.bf16.msra.mxu0 %v3724
    %4288 = vmatpush.bf16.msra.mxu0 %v3720
    %4289 = vmatmul.bf16.gmra.mxu0 %v2809
    %v4290 = vpop.f32.mrf.mxu0
    %v4291 = vadd.f32 %v4277, %v4290
    %v4292 = vpop.f32.mrf.mxu0
    %v4293 = vadd.f32 %v4279, %v4292
    %4294 = vdwg.mxu0
    %4295 = vmatpush.bf16.msra.mxu0 %v3780
    %4296 = vmatpush.bf16.msra.mxu0 %v3776
    %4297 = vmatpush.bf16.msra.mxu0 %v3772
    %4298 = vmatpush.bf16.msra.mxu0 %v3768
    %4299 = vmatpush.bf16.msra.mxu0 %v3764
    %4300 = vmatpush.bf16.msra.mxu0 %v3760
    %4301 = vmatpush.bf16.msra.mxu0 %v3756
    %4302 = vmatpush.bf16.msra.mxu0 %v3752
    %4303 = vmatmul.bf16.gmra.mxu0 %v2810
    %v4304 = vpop.f32.mrf.mxu0
    %v4305 = vadd.f32 %v4291, %v4304
    %v4306 = vpop.f32.mrf.mxu0
    %v4307 = vadd.f32 %v4293, %v4306
    %4308 = vdwg.mxu0
    %v4309 = vmax.f32 %v4053, 0.0
    %v4310 = vmax.f32 %v4137, 0.0
    %v4311 = vmax.f32 %v4221, 0.0
    %v4312 = vmax.f32 %v4305, 0.0
    %v4313 = vmax.f32 %v4055, 0.0
    %v4314 = vmax.f32 %v4139, 0.0
    %v4315 = vmax.f32 %v4223, 0.0
    %v4316 = vmax.f32 %v4307, 0.0
    %v4317 = vpack.c.bf16 %v4313, %v4309
    %v4318 = vpack.c.bf16 %v4314, %v4310
    %v4319 = vpack.c.bf16 %v4315, %v4311
    %v4320 = vpack.c.bf16 %v4316, %v4312
    %v4321 = vld [vmem:[#allocation11] sm:$0xff]
    %v4322 = vld [vmem:[#allocation11 + $0x8] sm:$0xff]
    %v4323 = vld [vmem:[#allocation11 + $0x10] sm:$0xff]
    %v4324 = vld [vmem:[#allocation11 + $0x18] sm:$0xff]
    %v4325 = vld [vmem:[#allocation11 + $0x20] sm:$0xff]
    %v4326 = vld [vmem:[#allocation11 + $0x28] sm:$0xff]
    %v4327 = vld [vmem:[#allocation11 + $0x30] sm:$0xff]
    %v4328 = vld [vmem:[#allocation11 + $0x38] sm:$0xff]
    %v4329 = vld [vmem:[#allocation11 + $0x40] sm:$0xff]
    %v4330 = vld [vmem:[#allocation11 + $0x48] sm:$0xff]
    %v4331 = vld [vmem:[#allocation11 + $0x50] sm:$0xff]
    %v4332 = vld [vmem:[#allocation11 + $0x58] sm:$0xff]
    %v4333 = vld [vmem:[#allocation11 + $0x60] sm:$0xff]
    %v4334 = vld [vmem:[#allocation11 + $0x68] sm:$0xff]
    %v4335 = vld [vmem:[#allocation11 + $0x70] sm:$0xff]
    %v4336 = vld [vmem:[#allocation11 + $0x78] sm:$0xff]
    %v4337 = vld [vmem:[#allocation11 + $0x80] sm:$0xff]
    %v4338 = vld [vmem:[#allocation11 + $0x88] sm:$0xff]
    %v4339 = vld [vmem:[#allocation11 + $0x90] sm:$0xff]
    %v4340 = vld [vmem:[#allocation11 + $0x98] sm:$0xff]
    %v4341 = vld [vmem:[#allocation11 + $0xa0] sm:$0xff]
    %v4342 = vld [vmem:[#allocation11 + $0xa8] sm:$0xff]
    %v4343 = vld [vmem:[#allocation11 + $0xb0] sm:$0xff]
    %v4344 = vld [vmem:[#allocation11 + $0xb8] sm:$0xff]
    %v4345 = vld [vmem:[#allocation11 + $0xc0] sm:$0xff]
    %v4346 = vld [vmem:[#allocation11 + $0xc8] sm:$0xff]
    %v4347 = vld [vmem:[#allocation11 + $0xd0] sm:$0xff]
    %v4348 = vld [vmem:[#allocation11 + $0xd8] sm:$0xff]
    %v4349 = vld [vmem:[#allocation11 + $0xe0] sm:$0xff]
    %v4350 = vld [vmem:[#allocation11 + $0xe8] sm:$0xff]
    %v4351 = vld [vmem:[#allocation11 + $0xf0] sm:$0xff]
    %v4352 = vld [vmem:[#allocation11 + $0xf8] sm:$0xff]
    %v4353 = vld [vmem:[#allocation11 + $0x100] sm:$0xff]
    %v4354 = vld [vmem:[#allocation11 + $0x108] sm:$0xff]
    %v4355 = vld [vmem:[#allocation11 + $0x110] sm:$0xff]
    %v4356 = vld [vmem:[#allocation11 + $0x118] sm:$0xff]
    %v4357 = vld [vmem:[#allocation11 + $0x120] sm:$0xff]
    %v4358 = vld [vmem:[#allocation11 + $0x128] sm:$0xff]
    %v4359 = vld [vmem:[#allocation11 + $0x130] sm:$0xff]
    %v4360 = vld [vmem:[#allocation11 + $0x138] sm:$0xff]
    %v4361 = vld [vmem:[#allocation11 + $0x140] sm:$0xff]
    %v4362 = vld [vmem:[#allocation11 + $0x148] sm:$0xff]
    %v4363 = vld [vmem:[#allocation11 + $0x150] sm:$0xff]
    %v4364 = vld [vmem:[#allocation11 + $0x158] sm:$0xff]
    %v4365 = vld [vmem:[#allocation11 + $0x160] sm:$0xff]
    %v4366 = vld [vmem:[#allocation11 + $0x168] sm:$0xff]
    %v4367 = vld [vmem:[#allocation11 + $0x170] sm:$0xff]
    %v4368 = vld [vmem:[#allocation11 + $0x178] sm:$0xff]
    %v4369 = vld [vmem:[#allocation11 + $0x180] sm:$0xff]
    %v4370 = vld [vmem:[#allocation11 + $0x188] sm:$0xff]
    %v4371 = vld [vmem:[#allocation11 + $0x190] sm:$0xff]
    %v4372 = vld [vmem:[#allocation11 + $0x198] sm:$0xff]
    %v4373 = vld [vmem:[#allocation11 + $0x1a0] sm:$0xff]
    %v4374 = vld [vmem:[#allocation11 + $0x1a8] sm:$0xff]
    %v4375 = vld [vmem:[#allocation11 + $0x1b0] sm:$0xff]
    %v4376 = vld [vmem:[#allocation11 + $0x1b8] sm:$0xff]
    %v4377 = vld [vmem:[#allocation11 + $0x1c0] sm:$0xff]
    %v4378 = vld [vmem:[#allocation11 + $0x1c8] sm:$0xff]
    %v4379 = vld [vmem:[#allocation11 + $0x1d0] sm:$0xff]
    %v4380 = vld [vmem:[#allocation11 + $0x1d8] sm:$0xff]
    %v4381 = vld [vmem:[#allocation11 + $0x1e0] sm:$0xff]
    %v4382 = vld [vmem:[#allocation11 + $0x1e8] sm:$0xff]
    %v4383 = vld [vmem:[#allocation11 + $0x1f0] sm:$0xff]
    %v4384 = vld [vmem:[#allocation11 + $0x1f8] sm:$0xff]
    %v4385 = vld [vmem:[#allocation13] sm:$0x3]
    %v4387 = vperm.slane %v4385, 0
    %v4388 = vperm.slane %v4385, 1
    %v4455 = vunpack.c.l.b16 %v4321
    %v4456 = vunpack.c.h.b16 %v4321
    %v4457 = vunpack.c.l.b16 %v4322
    %v4458 = vunpack.c.h.b16 %v4322
    %v4459 = vunpack.c.l.b16 %v4323
    %v4460 = vunpack.c.h.b16 %v4323
    %v4461 = vunpack.c.l.b16 %v4324
    %v4462 = vunpack.c.h.b16 %v4324
    %v4463 = vunpack.c.l.b16 %v4325
    %v4464 = vunpack.c.h.b16 %v4325
    %v4465 = vunpack.c.l.b16 %v4326
    %v4466 = vunpack.c.h.b16 %v4326
    %v4467 = vunpack.c.l.b16 %v4327
    %v4468 = vunpack.c.h.b16 %v4327
    %v4469 = vunpack.c.l.b16 %v4328
    %v4470 = vunpack.c.h.b16 %v4328
    %v4471 = vunpack.c.l.b16 %v4329
    %v4472 = vunpack.c.h.b16 %v4329
    %v4473 = vunpack.c.l.b16 %v4330
    %v4474 = vunpack.c.h.b16 %v4330
    %v4475 = vunpack.c.l.b16 %v4331
    %v4476 = vunpack.c.h.b16 %v4331
    %v4477 = vunpack.c.l.b16 %v4332
    %v4478 = vunpack.c.h.b16 %v4332
    %v4479 = vunpack.c.l.b16 %v4333
    %v4480 = vunpack.c.h.b16 %v4333
    %v4481 = vunpack.c.l.b16 %v4334
    %v4482 = vunpack.c.h.b16 %v4334
    %v4483 = vunpack.c.l.b16 %v4335
    %v4484 = vunpack.c.h.b16 %v4335
    %v4485 = vunpack.c.l.b16 %v4336
    %v4486 = vunpack.c.h.b16 %v4336
    %v4487 = vunpack.c.l.b16 %v4337
    %v4488 = vunpack.c.h.b16 %v4337
    %v4489 = vunpack.c.l.b16 %v4338
    %v4490 = vunpack.c.h.b16 %v4338
    %v4491 = vunpack.c.l.b16 %v4339
    %v4492 = vunpack.c.h.b16 %v4339
    %v4493 = vunpack.c.l.b16 %v4340
    %v4494 = vunpack.c.h.b16 %v4340
    %v4495 = vunpack.c.l.b16 %v4341
    %v4496 = vunpack.c.h.b16 %v4341
    %v4497 = vunpack.c.l.b16 %v4342
    %v4498 = vunpack.c.h.b16 %v4342
    %v4499 = vunpack.c.l.b16 %v4343
    %v4500 = vunpack.c.h.b16 %v4343
    %v4501 = vunpack.c.l.b16 %v4344
    %v4502 = vunpack.c.h.b16 %v4344
    %v4503 = vunpack.c.l.b16 %v4345
    %v4504 = vunpack.c.h.b16 %v4345
    %v4505 = vunpack.c.l.b16 %v4346
    %v4506 = vunpack.c.h.b16 %v4346
    %v4507 = vunpack.c.l.b16 %v4347
    %v4508 = vunpack.c.h.b16 %v4347
    %v4509 = vunpack.c.l.b16 %v4348
    %v4510 = vunpack.c.h.b16 %v4348
    %v4511 = vunpack.c.l.b16 %v4349
    %v4512 = vunpack.c.h.b16 %v4349
    %v4513 = vunpack.c.l.b16 %v4350
    %v4514 = vunpack.c.h.b16 %v4350
    %v4515 = vunpack.c.l.b16 %v4351
    %v4516 = vunpack.c.h.b16 %v4351
    %v4517 = vunpack.c.l.b16 %v4352
    %v4518 = vunpack.c.h.b16 %v4352
    %v4519 = vunpack.c.l.b16 %v4353
    %v4520 = vunpack.c.h.b16 %v4353
    %v4521 = vunpack.c.l.b16 %v4354
    %v4522 = vunpack.c.h.b16 %v4354
    %v4523 = vunpack.c.l.b16 %v4355
    %v4524 = vunpack.c.h.b16 %v4355
    %v4525 = vunpack.c.l.b16 %v4356
    %v4526 = vunpack.c.h.b16 %v4356
    %v4527 = vunpack.c.l.b16 %v4357
    %v4528 = vunpack.c.h.b16 %v4357
    %v4529 = vunpack.c.l.b16 %v4358
    %v4530 = vunpack.c.h.b16 %v4358
    %v4531 = vunpack.c.l.b16 %v4359
    %v4532 = vunpack.c.h.b16 %v4359
    %v4533 = vunpack.c.l.b16 %v4360
    %v4534 = vunpack.c.h.b16 %v4360
    %v4535 = vunpack.c.l.b16 %v4361
    %v4536 = vunpack.c.h.b16 %v4361
    %v4537 = vunpack.c.l.b16 %v4362
    %v4538 = vunpack.c.h.b16 %v4362
    %v4539 = vunpack.c.l.b16 %v4363
    %v4540 = vunpack.c.h.b16 %v4363
    %v4541 = vunpack.c.l.b16 %v4364
    %v4542 = vunpack.c.h.b16 %v4364
    %v4543 = vunpack.c.l.b16 %v4365
    %v4544 = vunpack.c.h.b16 %v4365
    %v4545 = vunpack.c.l.b16 %v4366
    %v4546 = vunpack.c.h.b16 %v4366
    %v4547 = vunpack.c.l.b16 %v4367
    %v4548 = vunpack.c.h.b16 %v4367
    %v4549 = vunpack.c.l.b16 %v4368
    %v4550 = vunpack.c.h.b16 %v4368
    %v4551 = vunpack.c.l.b16 %v4369
    %v4552 = vunpack.c.h.b16 %v4369
    %v4553 = vunpack.c.l.b16 %v4370
    %v4554 = vunpack.c.h.b16 %v4370
    %v4555 = vunpack.c.l.b16 %v4371
    %v4556 = vunpack.c.h.b16 %v4371
    %v4557 = vunpack.c.l.b16 %v4372
    %v4558 = vunpack.c.h.b16 %v4372
    %v4559 = vunpack.c.l.b16 %v4373
    %v4560 = vunpack.c.h.b16 %v4373
    %v4561 = vunpack.c.l.b16 %v4374
    %v4562 = vunpack.c.h.b16 %v4374
    %v4563 = vunpack.c.l.b16 %v4375
    %v4564 = vunpack.c.h.b16 %v4375
    %v4565 = vunpack.c.l.b16 %v4376
    %v4566 = vunpack.c.h.b16 %v4376
    %v4567 = vunpack.c.l.b16 %v4377
    %v4568 = vunpack.c.h.b16 %v4377
    %v4569 = vunpack.c.l.b16 %v4378
    %v4570 = vunpack.c.h.b16 %v4378
    %v4571 = vunpack.c.l.b16 %v4379
    %v4572 = vunpack.c.h.b16 %v4379
    %v4573 = vunpack.c.l.b16 %v4380
    %v4574 = vunpack.c.h.b16 %v4380
    %v4575 = vunpack.c.l.b16 %v4381
    %v4576 = vunpack.c.h.b16 %v4381
    %v4577 = vunpack.c.l.b16 %v4382
    %v4578 = vunpack.c.h.b16 %v4382
    %v4579 = vunpack.c.l.b16 %v4383
    %v4580 = vunpack.c.h.b16 %v4383
    %v4581 = vunpack.c.l.b16 %v4384
    %v4582 = vunpack.c.h.b16 %v4384
    %v4583 = vpack.c.b16 %v4457, %v4455
    %v4584 = vpack.c.b16 %v4458, %v4456
    %v4585 = vpack.c.b16 %v4461, %v4459
    %v4586 = vpack.c.b16 %v4462, %v4460
    %v4587 = vpack.c.b16 %v4465, %v4463
    %v4588 = vpack.c.b16 %v4466, %v4464
    %v4589 = vpack.c.b16 %v4469, %v4467
    %v4590 = vpack.c.b16 %v4470, %v4468
    %v4591 = vpack.c.b16 %v4473, %v4471
    %v4592 = vpack.c.b16 %v4474, %v4472
    %v4593 = vpack.c.b16 %v4477, %v4475
    %v4594 = vpack.c.b16 %v4478, %v4476
    %v4595 = vpack.c.b16 %v4481, %v4479
    %v4596 = vpack.c.b16 %v4482, %v4480
    %v4597 = vpack.c.b16 %v4485, %v4483
    %v4598 = vpack.c.b16 %v4486, %v4484
    %v4599 = vpack.c.b16 %v4489, %v4487
    %v4600 = vpack.c.b16 %v4490, %v4488
    %v4601 = vpack.c.b16 %v4493, %v4491
    %v4602 = vpack.c.b16 %v4494, %v4492
    %v4603 = vpack.c.b16 %v4497, %v4495
    %v4604 = vpack.c.b16 %v4498, %v4496
    %v4605 = vpack.c.b16 %v4501, %v4499
    %v4606 = vpack.c.b16 %v4502, %v4500
    %v4607 = vpack.c.b16 %v4505, %v4503
    %v4608 = vpack.c.b16 %v4506, %v4504
    %v4609 = vpack.c.b16 %v4509, %v4507
    %v4610 = vpack.c.b16 %v4510, %v4508
    %v4611 = vpack.c.b16 %v4513, %v4511
    %v4612 = vpack.c.b16 %v4514, %v4512
    %v4613 = vpack.c.b16 %v4517, %v4515
    %v4614 = vpack.c.b16 %v4518, %v4516
    %v4615 = vpack.c.b16 %v4521, %v4519
    %v4616 = vpack.c.b16 %v4522, %v4520
    %v4617 = vpack.c.b16 %v4525, %v4523
    %v4618 = vpack.c.b16 %v4526, %v4524
    %v4619 = vpack.c.b16 %v4529, %v4527
    %v4620 = vpack.c.b16 %v4530, %v4528
    %v4621 = vpack.c.b16 %v4533, %v4531
    %v4622 = vpack.c.b16 %v4534, %v4532
    %v4623 = vpack.c.b16 %v4537, %v4535
    %v4624 = vpack.c.b16 %v4538, %v4536
    %v4625 = vpack.c.b16 %v4541, %v4539
    %v4626 = vpack.c.b16 %v4542, %v4540
    %v4627 = vpack.c.b16 %v4545, %v4543
    %v4628 = vpack.c.b16 %v4546, %v4544
    %v4629 = vpack.c.b16 %v4549, %v4547
    %v4630 = vpack.c.b16 %v4550, %v4548
    %v4631 = vpack.c.b16 %v4553, %v4551
    %v4632 = vpack.c.b16 %v4554, %v4552
    %v4633 = vpack.c.b16 %v4557, %v4555
    %v4634 = vpack.c.b16 %v4558, %v4556
    %v4635 = vpack.c.b16 %v4561, %v4559
    %v4636 = vpack.c.b16 %v4562, %v4560
    %v4637 = vpack.c.b16 %v4565, %v4563
    %v4638 = vpack.c.b16 %v4566, %v4564
    %v4639 = vpack.c.b16 %v4569, %v4567
    %v4640 = vpack.c.b16 %v4570, %v4568
    %v4641 = vpack.c.b16 %v4573, %v4571
    %v4642 = vpack.c.b16 %v4574, %v4572
    %v4643 = vpack.c.b16 %v4577, %v4575
    %v4644 = vpack.c.b16 %v4578, %v4576
    %v4645 = vpack.c.b16 %v4581, %v4579
    %v4646 = vpack.c.b16 %v4582, %v4580
    %4711 = vmatpush.bf16.msra.mxu0 %v4597
    %4712 = vmatpush.bf16.msra.mxu0 %v4595
    %4713 = vmatpush.bf16.msra.mxu0 %v4593
    %4714 = vmatpush.bf16.msra.mxu0 %v4591
    %4715 = vmatpush.bf16.msra.mxu0 %v4589
    %4716 = vmatpush.bf16.msra.mxu0 %v4587
    %4717 = vmatpush.bf16.msra.mxu0 %v4585
    %4718 = vmatpush.bf16.msra.mxu0 %v4583
    %4719 = vmatmul.bf16.gmra.mxu0 %v4317
    %v4720 = vpop.f32.mrf.mxu0
    %v4721 = vadd.f32 %v4387, %v4720
    %v4722 = vpop.f32.mrf.mxu0
    %v4723 = vadd.f32 %v4387, %v4722
    %4724 = vdwg.mxu0
    %4725 = vmatpush.bf16.msra.mxu0 %v4613
    %4726 = vmatpush.bf16.msra.mxu0 %v4611
    %4727 = vmatpush.bf16.msra.mxu0 %v4609
    %4728 = vmatpush.bf16.msra.mxu0 %v4607
    %4729 = vmatpush.bf16.msra.mxu0 %v4605
    %4730 = vmatpush.bf16.msra.mxu0 %v4603
    %4731 = vmatpush.bf16.msra.mxu0 %v4601
    %4732 = vmatpush.bf16.msra.mxu0 %v4599
    %4733 = vmatmul.bf16.gmra.mxu0 %v4318
    %v4734 = vpop.f32.mrf.mxu0
    %v4735 = vadd.f32 %v4721, %v4734
    %v4736 = vpop.f32.mrf.mxu0
    %v4737 = vadd.f32 %v4723, %v4736
    %4738 = vdwg.mxu0
    %4739 = vmatpush.bf16.msra.mxu0 %v4629
    %4740 = vmatpush.bf16.msra.mxu0 %v4627
    %4741 = vmatpush.bf16.msra.mxu0 %v4625
    %4742 = vmatpush.bf16.msra.mxu0 %v4623
    %4743 = vmatpush.bf16.msra.mxu0 %v4621
    %4744 = vmatpush.bf16.msra.mxu0 %v4619
    %4745 = vmatpush.bf16.msra.mxu0 %v4617
    %4746 = vmatpush.bf16.msra.mxu0 %v4615
    %4747 = vmatmul.bf16.gmra.mxu0 %v4319
    %v4748 = vpop.f32.mrf.mxu0
    %v4749 = vadd.f32 %v4735, %v4748
    %v4750 = vpop.f32.mrf.mxu0
    %v4751 = vadd.f32 %v4737, %v4750
    %4752 = vdwg.mxu0
    %4753 = vmatpush.bf16.msra.mxu0 %v4645
    %4754 = vmatpush.bf16.msra.mxu0 %v4643
    %4755 = vmatpush.bf16.msra.mxu0 %v4641
    %4756 = vmatpush.bf16.msra.mxu0 %v4639
    %4757 = vmatpush.bf16.msra.mxu0 %v4637
    %4758 = vmatpush.bf16.msra.mxu0 %v4635
    %4759 = vmatpush.bf16.msra.mxu0 %v4633
    %4760 = vmatpush.bf16.msra.mxu0 %v4631
    %4761 = vmatmul.bf16.gmra.mxu0 %v4320
    %v4762 = vpop.f32.mrf.mxu0
    %v4763 = vadd.f32 %v4749, %v4762
    %v4764 = vpop.f32.mrf.mxu0
    %v4765 = vadd.f32 %v4751, %v4764
    %4766 = vdwg.mxu0
    %4767 = vmatpush.bf16.msra.mxu0 %v4598
    %4768 = vmatpush.bf16.msra.mxu0 %v4596
    %4769 = vmatpush.bf16.msra.mxu0 %v4594
    %4770 = vmatpush.bf16.msra.mxu0 %v4592
    %4771 = vmatpush.bf16.msra.mxu0 %v4590
    %4772 = vmatpush.bf16.msra.mxu0 %v4588
    %4773 = vmatpush.bf16.msra.mxu0 %v4586
    %4774 = vmatpush.bf16.msra.mxu0 %v4584
    %4775 = vmatmul.bf16.gmra.mxu0 %v4317
    %v4776 = vpop.f32.mrf.mxu0
    %v4777 = vadd.f32 %v4388, %v4776
    %v4778 = vpop.f32.mrf.mxu0
    %v4779 = vadd.f32 %v4388, %v4778
    %4780 = vdwg.mxu0
    %4781 = vmatpush.bf16.msra.mxu0 %v4614
    %4782 = vmatpush.bf16.msra.mxu0 %v4612
    %4783 = vmatpush.bf16.msra.mxu0 %v4610
    %4784 = vmatpush.bf16.msra.mxu0 %v4608
    %4785 = vmatpush.bf16.msra.mxu0 %v4606
    %4786 = vmatpush.bf16.msra.mxu0 %v4604
    %4787 = vmatpush.bf16.msra.mxu0 %v4602
    %4788 = vmatpush.bf16.msra.mxu0 %v4600
    %4789 = vmatmul.bf16.gmra.mxu0 %v4318
    %v4790 = vpop.f32.mrf.mxu0
    %v4791 = vadd.f32 %v4777, %v4790
    %v4792 = vpop.f32.mrf.mxu0
    %v4793 = vadd.f32 %v4779, %v4792
    %4794 = vdwg.mxu0
    %4795 = vmatpush.bf16.msra.mxu0 %v4630
    %4796 = vmatpush.bf16.msra.mxu0 %v4628
    %4797 = vmatpush.bf16.msra.mxu0 %v4626
    %4798 = vmatpush.bf16.msra.mxu0 %v4624
    %4799 = vmatpush.bf16.msra.mxu0 %v4622
    %4800 = vmatpush.bf16.msra.mxu0 %v4620
    %4801 = vmatpush.bf16.msra.mxu0 %v4618
    %4802 = vmatpush.bf16.msra.mxu0 %v4616
    %4803 = vmatmul.bf16.gmra.mxu0 %v4319
    %v4804 = vpop.f32.mrf.mxu0
    %v4805 = vadd.f32 %v4791, %v4804
    %v4806 = vpop.f32.mrf.mxu0
    %v4807 = vadd.f32 %v4793, %v4806
    %4808 = vdwg.mxu0
    %4809 = vmatpush.bf16.msra.mxu0 %v4646
    %4810 = vmatpush.bf16.msra.mxu0 %v4644
    %4811 = vmatpush.bf16.msra.mxu0 %v4642
    %4812 = vmatpush.bf16.msra.mxu0 %v4640
    %4813 = vmatpush.bf16.msra.mxu0 %v4638
    %4814 = vmatpush.bf16.msra.mxu0 %v4636
    %4815 = vmatpush.bf16.msra.mxu0 %v4634
    %4816 = vmatpush.bf16.msra.mxu0 %v4632
    %4817 = vmatmul.bf16.gmra.mxu0 %v4320
    %v4818 = vpop.f32.mrf.mxu0
    %v4819 = vadd.f32 %v4805, %v4818
    %v4820 = vpop.f32.mrf.mxu0
    %v4821 = vadd.f32 %v4807, %v4820
    %4822 = vdwg.mxu0
    %v4823 = vmax.f32 %v4763, 0.0
    %v4824 = vmax.f32 %v4819, 0.0
    %v4825 = vmax.f32 %v4765, 0.0
    %v4826 = vmax.f32 %v4821, 0.0
    %v4827 = vpack.c.bf16 %v4825, %v4823
    %v4828 = vpack.c.bf16 %v4826, %v4824
    %v4829 = vld [vmem:[%s9] sm:$0xf]
    %v4830 = vld [vmem:[%s9 + $0x4] sm:$0xf]
    %v4831 = vld [vmem:[%s9 + $0x8] sm:$0xf]
    %v4832 = vld [vmem:[%s9 + $0xc] sm:$0xf]
    %v4833 = vld [vmem:[%s9 + $0x10] sm:$0xf]
    %v4834 = vld [vmem:[%s9 + $0x14] sm:$0xf]
    %v4835 = vld [vmem:[%s9 + $0x18] sm:$0xf]
    %v4836 = vld [vmem:[%s9 + $0x1c] sm:$0xf]
    %v4837 = vld [vmem:[%s9 + $0x20] sm:$0xf]
    %v4838 = vld [vmem:[%s9 + $0x24] sm:$0xf]
    %v4839 = vld [vmem:[%s9 + $0x28] sm:$0xf]
    %v4840 = vld [vmem:[%s9 + $0x2c] sm:$0xf]
    %v4841 = vld [vmem:[%s9 + $0x30] sm:$0xf]
    %v4842 = vld [vmem:[%s9 + $0x34] sm:$0xf]
    %v4843 = vld [vmem:[%s9 + $0x38] sm:$0xf]
    %v4844 = vld [vmem:[%s9 + $0x3c] sm:$0xf]
    %v4845 = vld [vmem:[%s9 + $0x40] sm:$0xf]
    %v4846 = vld [vmem:[%s9 + $0x44] sm:$0xf]
    %v4847 = vld [vmem:[%s9 + $0x48] sm:$0xf]
    %v4848 = vld [vmem:[%s9 + $0x4c] sm:$0xf]
    %v4849 = vld [vmem:[%s9 + $0x50] sm:$0xf]
    %v4850 = vld [vmem:[%s9 + $0x54] sm:$0xf]
    %v4851 = vld [vmem:[%s9 + $0x58] sm:$0xf]
    %v4852 = vld [vmem:[%s9 + $0x5c] sm:$0xf]
    %v4853 = vld [vmem:[%s9 + $0x60] sm:$0xf]
    %v4854 = vld [vmem:[%s9 + $0x64] sm:$0xf]
    %v4855 = vld [vmem:[%s9 + $0x68] sm:$0xf]
    %v4856 = vld [vmem:[%s9 + $0x6c] sm:$0xf]
    %v4857 = vld [vmem:[%s9 + $0x70] sm:$0xf]
    %v4858 = vld [vmem:[%s9 + $0x74] sm:$0xf]
    %v4859 = vld [vmem:[%s9 + $0x78] sm:$0xf]
    %v4860 = vld [vmem:[%s9 + $0x7c] sm:$0xf]
    %v4861 = vld [vmem:[%s10] sm:$0x1]
    %v4863 = vperm.slane %v4861, 0
    %v4897 = vunpack.c.l.b16 %v4829
    %v4898 = vunpack.c.l.b16 %v4830
    %v4899 = vunpack.c.l.b16 %v4831
    %v4900 = vunpack.c.l.b16 %v4832
    %v4901 = vunpack.c.l.b16 %v4833
    %v4902 = vunpack.c.l.b16 %v4834
    %v4903 = vunpack.c.l.b16 %v4835
    %v4904 = vunpack.c.l.b16 %v4836
    %v4905 = vunpack.c.l.b16 %v4837
    %v4906 = vunpack.c.l.b16 %v4838
    %v4907 = vunpack.c.l.b16 %v4839
    %v4908 = vunpack.c.l.b16 %v4840
    %v4909 = vunpack.c.l.b16 %v4841
    %v4910 = vunpack.c.l.b16 %v4842
    %v4911 = vunpack.c.l.b16 %v4843
    %v4912 = vunpack.c.l.b16 %v4844
    %v4913 = vunpack.c.l.b16 %v4845
    %v4914 = vunpack.c.l.b16 %v4846
    %v4915 = vunpack.c.l.b16 %v4847
    %v4916 = vunpack.c.l.b16 %v4848
    %v4917 = vunpack.c.l.b16 %v4849
    %v4918 = vunpack.c.l.b16 %v4850
    %v4919 = vunpack.c.l.b16 %v4851
    %v4920 = vunpack.c.l.b16 %v4852
    %v4921 = vunpack.c.l.b16 %v4853
    %v4922 = vunpack.c.l.b16 %v4854
    %v4923 = vunpack.c.l.b16 %v4855
    %v4924 = vunpack.c.l.b16 %v4856
    %v4925 = vunpack.c.l.b16 %v4857
    %v4926 = vunpack.c.l.b16 %v4858
    %v4927 = vunpack.c.l.b16 %v4859
    %v4928 = vunpack.c.l.b16 %v4860
    %v4929 = vpack.c.b16 %v4898, %v4897
    %v4930 = vpack.c.b16 %v4900, %v4899
    %v4931 = vpack.c.b16 %v4902, %v4901
    %v4932 = vpack.c.b16 %v4904, %v4903
    %v4933 = vpack.c.b16 %v4906, %v4905
    %v4934 = vpack.c.b16 %v4908, %v4907
    %v4935 = vpack.c.b16 %v4910, %v4909
    %v4936 = vpack.c.b16 %v4912, %v4911
    %v4937 = vpack.c.b16 %v4914, %v4913
    %v4938 = vpack.c.b16 %v4916, %v4915
    %v4939 = vpack.c.b16 %v4918, %v4917
    %v4940 = vpack.c.b16 %v4920, %v4919
    %v4941 = vpack.c.b16 %v4922, %v4921
    %v4942 = vpack.c.b16 %v4924, %v4923
    %v4943 = vpack.c.b16 %v4926, %v4925
    %v4944 = vpack.c.b16 %v4928, %v4927
    %4961 = vmatpush.bf16.msra.mxu0 %v4936
    %4962 = vmatpush.bf16.msra.mxu0 %v4935
    %4963 = vmatpush.bf16.msra.mxu0 %v4934
    %4964 = vmatpush.bf16.msra.mxu0 %v4933
    %4965 = vmatpush.bf16.msra.mxu0 %v4932
    %4966 = vmatpush.bf16.msra.mxu0 %v4931
    %4967 = vmatpush.bf16.msra.mxu0 %v4930
    %4968 = vmatpush.bf16.msra.mxu0 %v4929
    %4969 = vmatmul.bf16.gmra.mxu0 %v4827
    %v4970 = vpop.f32.mrf.mxu0
    %v4971 = vadd.f32 %v4863, %v4970
    %v4972 = vpop.f32.mrf.mxu0
    %v4973 = vadd.f32 %v4863, %v4972
    %4974 = vdwg.mxu0
    %4975 = vmatpush.bf16.msra.mxu0 %v4944
    %4976 = vmatpush.bf16.msra.mxu0 %v4943
    %4977 = vmatpush.bf16.msra.mxu0 %v4942
    %4978 = vmatpush.bf16.msra.mxu0 %v4941
    %4979 = vmatpush.bf16.msra.mxu0 %v4940
    %4980 = vmatpush.bf16.msra.mxu0 %v4939
    %4981 = vmatpush.bf16.msra.mxu0 %v4938
    %4982 = vmatpush.bf16.msra.mxu0 %v4937
    %4983 = vmatmul.bf16.gmra.mxu0 %v4828
    %v4984 = vpop.f32.mrf.mxu0
    %v4985 = vadd.f32 %v4971, %v4984
    %v4986 = vpop.f32.mrf.mxu0
    %v4987 = vadd.f32 %v4973, %v4986
    %4988 = vdwg.mxu0
    %v4989 = vmax.f32 %v4985, 0.0
    %v4990 = vmax.f32 %v4987, 0.0
    %4991 = vst [vmem:[#allocation14] sm:$0xff] %v4989
    %4992 = vst [vmem:[#allocation14 + $0x8] sm:$0xff] %v4990
    // Predicated region
    $region74: #{_path_decoder_medium_impl.1} parent=1 // pred_check
      _
    $region75: #{_path_decoder_medium_impl.1} parent=1 // pred_check_branch
      %4994 = sbr.rel (0) target = $region77
    $region76: #{_path_decoder_medium_impl.1} parent=1 // pred_region
      %4996 = vsyncadd [#allocation4], 0
      %s4997 = sshll.u32 [#allocation14], 4
      %s4998 = int_to_ptr.vmem [resolvable:$true] %s4997
      %s4999 = sshll.u32 %s11, 4
      %s5000 = int_to_ptr.hbm [resolvable:$true] %s4999
      %5005 = dma.vmem_to_hbm [thread:$0]  %s4998, 256, %s5000, [#allocation4], 128, 128, 8
    $region77: #{_path_decoder_medium_impl.1} parent=1 // pred_fallthru
      _
    // Predicated region
    $region78: #{_path_decoder_medium_impl.1} parent=1 // pred_check
      _
    $region79: #{_path_decoder_medium_impl.1} parent=1 // pred_check_branch
      %5007 = sbr.rel (0) target = $region81
    $region80: #{_path_decoder_medium_impl.1} parent=1 // pred_region
      %5009 = dma.done [#allocation4], 256
    $region81: #{_path_decoder_medium_impl.1} parent=1 // pred_fallthru
      _
    %5010 = vsyncpa [#allocation3], 1
    %5011 = vsyncpa [#allocation6], 1
    %5012 = vsyncpa [#allocation9], 1
    %5013 = vsyncpa [#allocation12], 1
    %5014 = vsyncpa [#allocation4], 1

</llo_original>
